<compile_context>
chip_gen: v6e
topology: v6e:2x2x1
jax: 0.10.0
libtpu: 0.0.40
codegen_flags: <defaults>
</compile_context>

<pallas_src>
import functools

import numpy as np
import jax
import jax.numpy as jnp
from jax.experimental import pallas as pl
from jax.experimental.pallas import tpu as pltpu


# ----------------------------- static geometry ------------------------------
_XW = 1152    # padded flattened 32x32 input row (needs >= 896 + 132)
_A1 = 896     # conv1 full-res accumulator width (valid flat idx <= 27*32+27=891)
_C1S = 1024   # conv1 scratch width (>= 896 + 33 for pooling shifts)
_P1W = 256    # pooled1 compact width (196 valid 14x14 positions + zero pad)
_P1S = 384    # pooled1 scratch width (>= 256 + 30 for conv2 tap shifts)
_C2W = 256    # conv2 full-res width (valid flat idx <= 11*14+11=165)
_C2S = 384    # conv2 scratch width (>= 256 + 15 for pooling shifts)

_CONV1_OFFS = tuple(32 * i + j for i in range(5) for j in range(5))  # 5x5 taps
_CONV2_OFFS = tuple(14 * i + j for i in range(3) for j in range(3))  # 3x3 taps
_POOL1_OFFS = (0, 1, 32, 33)    # 2x2 window corners in 32-wide flat layout
_POOL2_OFFS = (0, 1, 14, 15)    # 2x2 window corners in 14-wide flat layout


# ------------------------------- fused kernel -------------------------------

def _cnn_fused_kernel(x_ref, w1_ref, b1_ref, sel1_ref, w2_ref, b2_ref,
                      sel2_ref, msk_ref, wf1_ref, bf1_ref, wf2_ref, bf2_ref,
                      wf3_ref, bf3_ref, o_ref,
                      c1s_ref, p1s_ref, c2s_ref, h0_ref, *, batch_tile):
    f32 = jnp.float32

    for n in range(batch_tile):
        # ---- conv1 (5x5, pad 2) + bias + ReLU at full 28x28 resolution.
        # Layout: (8 cout, 896 lanes) with flat = row*32 + col (lane-dense).
        # cin=1 -> no channel contraction, so 25 lane-shifted VPU FMAs.
        acc1 = jnp.zeros((8, _A1), f32)
        for t, off in enumerate(_CONV1_OFFS):
            xs = x_ref[n, :, off:off + _A1]           # (1, 896)
            acc1 = acc1 + w1_ref[t] * xs              # (8,1)*(1,896) -> (8,896)
        c1s_ref[:, 0:_A1] = jnp.maximum(acc1 + b1_ref[...], 0.0)
        c1s_ref[:, _A1:_C1S] = jnp.zeros((8, _C1S - _A1), f32)

        # ---- 2x2/2 max-pool: window corners are lane offsets {0,1,32,33}.
        # Then compact the strided pooled lattice (lane 64p+2q) to a dense
        # 14x14 row-major layout with a 0/1 selection matmul (MXU gather).
        m1 = c1s_ref[:, 0:_A1]
        for off in _POOL1_OFFS[1:]:
            m1 = jnp.maximum(m1, c1s_ref[:, off:off + _A1])
        p1 = jnp.dot(m1, sel1_ref[...], preferred_element_type=f32)  # (8, 256)
        p1s_ref[:, 0:_P1W] = p1
        p1s_ref[:, _P1W:_P1S] = jnp.zeros((8, _P1S - _P1W), f32)

        # ---- conv2 (3x3, valid) + bias + ReLU: 9 taps, each a (16,8)@(8,256)
        # channel-contraction matmul on a lane-shifted view of pooled1.
        acc2 = jnp.zeros((16, _C2W), f32)
        for t, off in enumerate(_CONV2_OFFS):
            xs = p1s_ref[:, off:off + _C2W]           # (8, 256)
            acc2 = acc2 + jnp.dot(w2_ref[t], xs, preferred_element_type=f32)
        c2s_ref[:, 0:_C2W] = jnp.maximum(acc2 + b2_ref[...], 0.0)
        c2s_ref[:, _C2W:_C2S] = jnp.zeros((16, _C2S - _C2W), f32)

        # ---- 2x2/2 max-pool (corner offsets {0,1,14,15}), then compact +
        # flatten directly into PyTorch's NCHW .view(B, 576) order via a
        # selection matmul + per-channel mask + sublane reduction.
        m2 = c2s_ref[:, 0:_C2W]
        for off in _POOL2_OFFS[1:]:
            m2 = jnp.maximum(m2, c2s_ref[:, off:off + _C2W])
        feat = jnp.dot(m2, sel2_ref[...], preferred_element_type=f32)  # (16,576)
        feat = jnp.sum(feat * msk_ref[...], axis=0, keepdims=True)     # (1,576)
        h0_ref[n:n + 1, :] = feat

    # ---- FC head, batched over the tile: fc1+ReLU -> (dropout=id) ->
    # fc2+ReLU -> fc3 -> masked log_softmax.  bf16 MXU operands, f32 accum.
    x0 = h0_ref[...].astype(jnp.bfloat16)                               # (Bt,576)
    h1 = jnp.dot(x0, wf1_ref[...], preferred_element_type=jnp.float32) + bf1_ref[...]
    h1 = jnp.maximum(h1, 0.0).astype(jnp.bfloat16)
    # TODO(synk): nn.Dropout modeled as identity (eval mode); training-mode
    # dropout would use pltpu.prng_seed / pltpu.prng_random_bits here.
    h2 = jnp.dot(h1, wf2_ref[...], preferred_element_type=jnp.float32) + bf2_ref[...]
    h2 = jnp.maximum(h2, 0.0).astype(jnp.bfloat16)
    logits = jnp.dot(h2, wf3_ref[...], preferred_element_type=jnp.float32) + bf3_ref[...]
    # classes zero-padded 10 -> 128: mask them out of the softmax normalizer.
    col = jax.lax.broadcasted_iota(jnp.int32, logits.shape, 1)
    logits = jnp.where(col < 10, logits, -1e30)
    mx = jnp.max(logits, axis=-1, keepdims=True)
    s = logits - mx
    lse = jnp.log(jnp.sum(jnp.exp(s), axis=-1, keepdims=True))
    o_ref[:, 0, :] = (s - lse).astype(o_ref.dtype)


# ------------------------------- JAX wrapper ---------------------------------

def _pick_batch_tile(B):
    """>=2 grid steps whenever B >= 2 (v7x: 2 TCs), amortize per-step overhead
    with 8-image tiles for larger batches (far under the v7x/v5e VMEM budget)."""
    if B >= 16:
        return 8
    return max(1, B // 2)


def cnn_forward(kp, x, *, batch_tile=None):
    """Forward pass matching CNN.forward (dropout eval-mode).  x: (B,1,28,28)."""
    B = x.shape[0]
    Bt = batch_tile or _pick_batch_tile(B)
    n_steps = pl.cdiv(B, Bt)
    Bp = n_steps * Bt

    # pad 28x28 -> 32x32 (conv1 padding=2), pad batch to the tile, flatten the
    # image row-major onto the lane axis with a zero tail (pure layout plumbing).
    xp = jnp.pad(x[:, 0], ((0, Bp - B), (2, 2), (2, 2)))            # (Bp,32,32)
    xflat = jnp.pad(xp.reshape(Bp, 1, 1024), ((0, 0), (0, 0), (0, _XW - 1024)))

    kern = functools.partial(_cnn_fused_kernel, batch_tile=Bt)
    const = lambda b: (0, 0)
    const3 = lambda b: (0, 0, 0)
    out = pl.pallas_call(
        kern,
        out_shape=jax.ShapeDtypeStruct((Bp, 1, 128), jnp.float32),
        grid=(n_steps,),
        in_specs=[
            pl.BlockSpec((Bt, 1, _XW), lambda b: (b, 0, 0)),   # input images
            pl.BlockSpec((25, 8, 1), const3),                  # conv1 taps
            pl.BlockSpec((8, 1), const),                       # conv1 bias
            pl.BlockSpec((_A1, _P1W), const),                  # pool1 compaction
            pl.BlockSpec((9, 16, 8), const3),                  # conv2 taps
            pl.BlockSpec((16, 1), const),                      # conv2 bias
            pl.BlockSpec((_C2W, 576), const),                  # pool2 compaction
            pl.BlockSpec((16, 576), const),                    # channel mask
            pl.BlockSpec((576, 640), const),                   # fc1 w (bf16)
            pl.BlockSpec((1, 640), const),
            pl.BlockSpec((640, 128), const),                   # fc2 w (bf16)
            pl.BlockSpec((1, 128), const),
            pl.BlockSpec((128, 128), const),                   # fc3 w (bf16)
            pl.BlockSpec((1, 128), const),
        ],
        out_specs=pl.BlockSpec((Bt, 1, 128), lambda b: (b, 0, 0)),
        scratch_shapes=[
            pltpu.VMEM((8, _C1S), jnp.float32),    # conv1 full-res map
            pltpu.VMEM((8, _P1S), jnp.float32),    # pooled1 (conv2 input)
            pltpu.VMEM((16, _C2S), jnp.float32),   # conv2 full-res map
            pltpu.VMEM((Bt, 576), jnp.float32),    # flattened features (fc in)
        ],
        compiler_params=pltpu.CompilerParams(
            dimension_semantics=("parallel",),
            vmem_limit_bytes=32 * 1024 * 1024),
    )(xflat, kp["conv1_w"], kp["conv1_b"], kp["sel1"], kp["conv2_w"],
      kp["conv2_b"], kp["sel2"], kp["msk"], kp["fc1_w"], kp["fc1_b"],
      kp["fc2_w"], kp["fc2_b"], kp["fc3_w"], kp["fc3_b"])
    return out[:B, 0, :10]


# ----------------------------- parameter prep --------------------------------

def init_params(key):
    """Deterministic synthetic parameters with the shapes from CNN.__init__."""
    keys = jax.random.split(key, 10)

    def u(k, shape, fan_in):
        bound = 1.0 / jnp.sqrt(fan_in)
        return jax.random.uniform(k, shape, jnp.float32, -bound, bound)

    return {
        "conv1_w": u(keys[0], (8, 1, 5, 5), 1 * 5 * 5),
        "conv1_b": u(keys[1], (8,), 1 * 5 * 5),
        "conv2_w": u(keys[2], (16, 8, 3, 3), 8 * 3 * 3),
        "conv2_b": u(keys[3], (16,), 8 * 3 * 3),
        "fc1_w": u(keys[4], (600, 16 * 6 * 6), 16 * 6 * 6),
        "fc1_b": u(keys[5], (600,), 16 * 6 * 6),
        "fc2_w": u(keys[6], (120, 600), 600),
        "fc2_b": u(keys[7], (120,), 600),
        "fc3_w": u(keys[8], (10, 120), 120),
        "fc3_b": u(keys[9], (10,), 120),
    }


def prepare_params(params):
    """One-time re-layout of PyTorch-convention parameters into kernel layouts
    (conv taps, 0/1 pooling-compaction matrices, padded bf16 FC weights)."""
    w1 = params["conv1_w"].reshape(8, 25).T.reshape(25, 8, 1).astype(jnp.float32)
    b1 = params["conv1_b"].reshape(8, 1).astype(jnp.float32)
    w2 = jnp.transpose(params["conv2_w"], (2, 3, 0, 1)).reshape(9, 16, 8)
    w2 = w2.astype(jnp.float32)
    b2 = params["conv2_b"].reshape(16, 1).astype(jnp.float32)

    # pooled1 compaction: lane 64p+2q of the 32-wide conv1 map -> col p*14+q.
    sel1 = np.zeros((_A1, _P1W), np.float32)
    for p in range(14):
        for q in range(14):
            sel1[64 * p + 2 * q, p * 14 + q] = 1.0
    # pooled2 compaction + NCHW flatten: lane 28p+2q of the 14-wide conv2 map
    # -> feature co*36 + p*6 + q, gated by the per-channel mask.
    sel2 = np.zeros((_C2W, 576), np.float32)
    msk = np.zeros((16, 576), np.float32)
    for co in range(16):
        for p in range(6):
            for q in range(6):
                j = co * 36 + p * 6 + q
                sel2[28 * p + 2 * q, j] = 1.0
                msk[co, j] = 1.0

    def fc(w, b, k_pad, n_pad):
        wt = jnp.pad(w.T, ((0, k_pad - w.shape[1]), (0, n_pad - w.shape[0])))
        bt = jnp.pad(b, (0, n_pad - b.shape[0])).reshape(1, n_pad)
        return wt.astype(jnp.bfloat16), bt.astype(jnp.float32)

    wf1, bf1 = fc(params["fc1_w"], params["fc1_b"], 576, 640)
    wf2, bf2 = fc(params["fc2_w"], params["fc2_b"], 640, 128)
    wf3, bf3 = fc(params["fc3_w"], params["fc3_b"], 128, 128)
    return dict(conv1_w=w1, conv1_b=b1, conv2_w=w2, conv2_b=b2,
                sel1=jnp.asarray(sel1), sel2=jnp.asarray(sel2),
                msk=jnp.asarray(msk),
                fc1_w=wf1, fc1_b=bf1, fc2_w=wf2, fc2_b=bf2,
                fc3_w=wf3, fc3_b=bf3)


# ------------------------------ pure-JAX reference ---------------------------

def cnn_forward_reference(params, x):
    """Pure-JAX f32 reference of the PyTorch module (sanity check)."""
    def conv(h, w, b, pad):
        out = jax.lax.conv_general_dilated(
            h, w, window_strides=(1, 1), padding=((pad, pad), (pad, pad)),
            dimension_numbers=("NCHW", "OIHW", "NCHW"))
        return out + b.reshape(1, -1, 1, 1)

    def pool(h):
        return jax.lax.reduce_window(h, -jnp.inf, jax.lax.max,
                                     (1, 1, 2, 2), (1, 1, 2, 2), "VALID")

    h = pool(jax.nn.relu(conv(x, params["conv1_w"], params["conv1_b"], 2)))
    h = pool(jax.nn.relu(conv(h, params["conv2_w"], params["conv2_b"], 0)))
    h = h.reshape(h.shape[0], -1)
    h = jax.nn.relu(h @ params["fc1_w"].T + params["fc1_b"])
    h = jax.nn.relu(h @ params["fc2_w"].T + params["fc2_b"])
    h = h @ params["fc3_w"].T + params["fc3_b"]
    return jax.nn.log_softmax(h, axis=-1)


if __name__ == "__main__":
    key = jax.random.PRNGKey(0)
    pkey, xkey = jax.random.split(key)
    params = init_params(pkey)
    kparams = prepare_params(params)
    # 28x28 input is required by the module (16*6*6 flatten); batch kept small.
    x = jax.random.normal(xkey, (2, 1, 28, 28), jnp.float32)

    out = jax.jit(cnn_forward)(kparams, x)
    out = jax.block_until_ready(out)

    assert out.shape == (2, 10)
    # log_softmax rows should (approximately) sum to 1 in prob space.
    assert jnp.allclose(jnp.sum(jnp.exp(out), axis=1), 1.0, atol=1e-4)
    # compare against the f32 reference (bf16 FC operands => small deviation).
    ref = cnn_forward_reference(params, x)
    max_err = float(jnp.max(jnp.abs(out - ref)))
    assert max_err < 0.1, f"mismatch vs reference: {max_err}"
    print("KERNEL_OK")
</pallas_src>

<mosaic_0001>
module attributes {stable_mosaic.version = 11 : i64} {
  func.func @_cnn_fused_kernel(%arg0: i32, %arg1: memref<1x1x1152xf32, #tpu.memory_space<vmem>>, %arg2: memref<25x8x1xf32, #tpu.memory_space<vmem>>, %arg3: memref<8x1xf32, #tpu.memory_space<vmem>>, %arg4: memref<896x256xf32, #tpu.memory_space<vmem>>, %arg5: memref<9x16x8xf32, #tpu.memory_space<vmem>>, %arg6: memref<16x1xf32, #tpu.memory_space<vmem>>, %arg7: memref<256x576xf32, #tpu.memory_space<vmem>>, %arg8: memref<16x576xf32, #tpu.memory_space<vmem>>, %arg9: memref<576x640xbf16, #tpu.memory_space<vmem>>, %arg10: memref<1x640xf32, #tpu.memory_space<vmem>>, %arg11: memref<640x128xbf16, #tpu.memory_space<vmem>>, %arg12: memref<1x128xf32, #tpu.memory_space<vmem>>, %arg13: memref<128x128xbf16, #tpu.memory_space<vmem>>, %arg14: memref<1x128xf32, #tpu.memory_space<vmem>>, %arg15: memref<1x1x128xf32, #tpu.memory_space<vmem>>, %arg16: memref<8x1024xf32, #tpu.memory_space<vmem>>, %arg17: memref<8x384xf32, #tpu.memory_space<vmem>>, %arg18: memref<16x384xf32, #tpu.memory_space<vmem>>, %arg19: memref<1x576xf32, #tpu.memory_space<vmem>>) attributes {dimension_semantics = [#tpu.dimension_semantics<parallel>], iteration_bounds = array<i64: 2>, scalar_prefetch = 0 : i64, scratch_operands = 4 : i64, tpu.core_type = #tpu.core_type<tc>, window_params = [{transform_indices = @transform_0, window_bounds = array<i64: 1, 1, 1152>}, {pipeline_mode = #tpu.pipeline_mode<synchronous>, transform_indices = @transform_1, window_bounds = array<i64: 25, 8, 1>}, {pipeline_mode = #tpu.pipeline_mode<synchronous>, transform_indices = @transform_2, window_bounds = array<i64: 8, 1>}, {pipeline_mode = #tpu.pipeline_mode<synchronous>, transform_indices = @transform_3, window_bounds = array<i64: 896, 256>}, {pipeline_mode = #tpu.pipeline_mode<synchronous>, transform_indices = @transform_4, window_bounds = array<i64: 9, 16, 8>}, {pipeline_mode = #tpu.pipeline_mode<synchronous>, transform_indices = @transform_5, window_bounds = array<i64: 16, 1>}, {pipeline_mode = #tpu.pipeline_mode<synchronous>, transform_indices = @transform_6, window_bounds = array<i64: 256, 576>}, {pipeline_mode = #tpu.pipeline_mode<synchronous>, transform_indices = @transform_7, window_bounds = array<i64: 16, 576>}, {pipeline_mode = #tpu.pipeline_mode<synchronous>, transform_indices = @transform_8, window_bounds = array<i64: 576, 640>}, {pipeline_mode = #tpu.pipeline_mode<synchronous>, transform_indices = @transform_9, window_bounds = array<i64: 1, 640>}, {pipeline_mode = #tpu.pipeline_mode<synchronous>, transform_indices = @transform_10, window_bounds = array<i64: 640, 128>}, {pipeline_mode = #tpu.pipeline_mode<synchronous>, transform_indices = @transform_11, window_bounds = array<i64: 1, 128>}, {pipeline_mode = #tpu.pipeline_mode<synchronous>, transform_indices = @transform_12, window_bounds = array<i64: 128, 128>}, {pipeline_mode = #tpu.pipeline_mode<synchronous>, transform_indices = @transform_13, window_bounds = array<i64: 1, 128>}, {transform_indices = @transform_14, window_bounds = array<i64: 1, 1, 128>}]} {
    %cst = arith.constant 0.000000e+00 : f32
    %0 = vector.broadcast %cst : f32 to vector<8x896xf32>
    %c0 = arith.constant 0 : index
    %c0_0 = arith.constant 0 : index
    %c0_1 = arith.constant 0 : index
    %1 = vector.load %arg1[%c0, %c0_0, %c0_1] : memref<1x1x1152xf32, #tpu.memory_space<vmem>>, vector<1x1x896xf32>
    %2 = vector.shape_cast %1 : vector<1x1x896xf32> to vector<1x896xf32>
    %c0_2 = arith.constant 0 : index
    %c0_3 = arith.constant 0 : index
    %c0_4 = arith.constant 0 : index
    %3 = vector.load %arg2[%c0_2, %c0_3, %c0_4] : memref<25x8x1xf32, #tpu.memory_space<vmem>>, vector<1x8x1xf32>
    %4 = vector.shape_cast %3 : vector<1x8x1xf32> to vector<8x1xf32>
    %5 = vector.broadcast %4 : vector<8x1xf32> to vector<8x896xf32>
    %6 = vector.broadcast %2 : vector<1x896xf32> to vector<8x896xf32>
    %7 = arith.mulf %5, %6 : vector<8x896xf32>
    %8 = arith.addf %0, %7 : vector<8x896xf32>
    %c0_5 = arith.constant 0 : index
    %c0_6 = arith.constant 0 : index
    %c1 = arith.constant 1 : index
    %9 = vector.load %arg1[%c0_5, %c0_6, %c1] : memref<1x1x1152xf32, #tpu.memory_space<vmem>>, vector<1x1x896xf32>
    %10 = vector.shape_cast %9 : vector<1x1x896xf32> to vector<1x896xf32>
    %c1_7 = arith.constant 1 : index
    %c0_8 = arith.constant 0 : index
    %c0_9 = arith.constant 0 : index
    %11 = vector.load %arg2[%c1_7, %c0_8, %c0_9] : memref<25x8x1xf32, #tpu.memory_space<vmem>>, vector<1x8x1xf32>
    %12 = vector.shape_cast %11 : vector<1x8x1xf32> to vector<8x1xf32>
    %13 = vector.broadcast %12 : vector<8x1xf32> to vector<8x896xf32>
    %14 = vector.broadcast %10 : vector<1x896xf32> to vector<8x896xf32>
    %15 = arith.mulf %13, %14 : vector<8x896xf32>
    %16 = arith.addf %8, %15 : vector<8x896xf32>
    %c0_10 = arith.constant 0 : index
    %c0_11 = arith.constant 0 : index
    %c2 = arith.constant 2 : index
    %17 = vector.load %arg1[%c0_10, %c0_11, %c2] : memref<1x1x1152xf32, #tpu.memory_space<vmem>>, vector<1x1x896xf32>
    %18 = vector.shape_cast %17 : vector<1x1x896xf32> to vector<1x896xf32>
    %c2_12 = arith.constant 2 : index
    %c0_13 = arith.constant 0 : index
    %c0_14 = arith.constant 0 : index
    %19 = vector.load %arg2[%c2_12, %c0_13, %c0_14] : memref<25x8x1xf32, #tpu.memory_space<vmem>>, vector<1x8x1xf32>
    %20 = vector.shape_cast %19 : vector<1x8x1xf32> to vector<8x1xf32>
    %21 = vector.broadcast %20 : vector<8x1xf32> to vector<8x896xf32>
    %22 = vector.broadcast %18 : vector<1x896xf32> to vector<8x896xf32>
    %23 = arith.mulf %21, %22 : vector<8x896xf32>
    %24 = arith.addf %16, %23 : vector<8x896xf32>
    %c0_15 = arith.constant 0 : index
    %c0_16 = arith.constant 0 : index
    %c3 = arith.constant 3 : index
    %25 = vector.load %arg1[%c0_15, %c0_16, %c3] : memref<1x1x1152xf32, #tpu.memory_space<vmem>>, vector<1x1x896xf32>
    %26 = vector.shape_cast %25 : vector<1x1x896xf32> to vector<1x896xf32>
    %c3_17 = arith.constant 3 : index
    %c0_18 = arith.constant 0 : index
    %c0_19 = arith.constant 0 : index
    %27 = vector.load %arg2[%c3_17, %c0_18, %c0_19] : memref<25x8x1xf32, #tpu.memory_space<vmem>>, vector<1x8x1xf32>
    %28 = vector.shape_cast %27 : vector<1x8x1xf32> to vector<8x1xf32>
    %29 = vector.broadcast %28 : vector<8x1xf32> to vector<8x896xf32>
    %30 = vector.broadcast %26 : vector<1x896xf32> to vector<8x896xf32>
    %31 = arith.mulf %29, %30 : vector<8x896xf32>
    %32 = arith.addf %24, %31 : vector<8x896xf32>
    %c0_20 = arith.constant 0 : index
    %c0_21 = arith.constant 0 : index
    %c4 = arith.constant 4 : index
    %33 = vector.load %arg1[%c0_20, %c0_21, %c4] : memref<1x1x1152xf32, #tpu.memory_space<vmem>>, vector<1x1x896xf32>
    %34 = vector.shape_cast %33 : vector<1x1x896xf32> to vector<1x896xf32>
    %c4_22 = arith.constant 4 : index
    %c0_23 = arith.constant 0 : index
    %c0_24 = arith.constant 0 : index
    %35 = vector.load %arg2[%c4_22, %c0_23, %c0_24] : memref<25x8x1xf32, #tpu.memory_space<vmem>>, vector<1x8x1xf32>
    %36 = vector.shape_cast %35 : vector<1x8x1xf32> to vector<8x1xf32>
    %37 = vector.broadcast %36 : vector<8x1xf32> to vector<8x896xf32>
    %38 = vector.broadcast %34 : vector<1x896xf32> to vector<8x896xf32>
    %39 = arith.mulf %37, %38 : vector<8x896xf32>
    %40 = arith.addf %32, %39 : vector<8x896xf32>
    %c0_25 = arith.constant 0 : index
    %c0_26 = arith.constant 0 : index
    %c32 = arith.constant 32 : index
    %41 = vector.load %arg1[%c0_25, %c0_26, %c32] : memref<1x1x1152xf32, #tpu.memory_space<vmem>>, vector<1x1x896xf32>
    %42 = vector.shape_cast %41 : vector<1x1x896xf32> to vector<1x896xf32>
    %c5 = arith.constant 5 : index
    %c0_27 = arith.constant 0 : index
    %c0_28 = arith.constant 0 : index
    %43 = vector.load %arg2[%c5, %c0_27, %c0_28] : memref<25x8x1xf32, #tpu.memory_space<vmem>>, vector<1x8x1xf32>
    %44 = vector.shape_cast %43 : vector<1x8x1xf32> to vector<8x1xf32>
    %45 = vector.broadcast %44 : vector<8x1xf32> to vector<8x896xf32>
    %46 = vector.broadcast %42 : vector<1x896xf32> to vector<8x896xf32>
    %47 = arith.mulf %45, %46 : vector<8x896xf32>
    %48 = arith.addf %40, %47 : vector<8x896xf32>
    %c0_29 = arith.constant 0 : index
    %c0_30 = arith.constant 0 : index
    %c33 = arith.constant 33 : index
    %49 = vector.load %arg1[%c0_29, %c0_30, %c33] : memref<1x1x1152xf32, #tpu.memory_space<vmem>>, vector<1x1x896xf32>
    %50 = vector.shape_cast %49 : vector<1x1x896xf32> to vector<1x896xf32>
    %c6 = arith.constant 6 : index
    %c0_31 = arith.constant 0 : index
    %c0_32 = arith.constant 0 : index
    %51 = vector.load %arg2[%c6, %c0_31, %c0_32] : memref<25x8x1xf32, #tpu.memory_space<vmem>>, vector<1x8x1xf32>
    %52 = vector.shape_cast %51 : vector<1x8x1xf32> to vector<8x1xf32>
    %53 = vector.broadcast %52 : vector<8x1xf32> to vector<8x896xf32>
    %54 = vector.broadcast %50 : vector<1x896xf32> to vector<8x896xf32>
    %55 = arith.mulf %53, %54 : vector<8x896xf32>
    %56 = arith.addf %48, %55 : vector<8x896xf32>
    %c0_33 = arith.constant 0 : index
    %c0_34 = arith.constant 0 : index
    %c34 = arith.constant 34 : index
    %57 = vector.load %arg1[%c0_33, %c0_34, %c34] : memref<1x1x1152xf32, #tpu.memory_space<vmem>>, vector<1x1x896xf32>
    %58 = vector.shape_cast %57 : vector<1x1x896xf32> to vector<1x896xf32>
    %c7 = arith.constant 7 : index
    %c0_35 = arith.constant 0 : index
    %c0_36 = arith.constant 0 : index
    %59 = vector.load %arg2[%c7, %c0_35, %c0_36] : memref<25x8x1xf32, #tpu.memory_space<vmem>>, vector<1x8x1xf32>
    %60 = vector.shape_cast %59 : vector<1x8x1xf32> to vector<8x1xf32>
    %61 = vector.broadcast %60 : vector<8x1xf32> to vector<8x896xf32>
    %62 = vector.broadcast %58 : vector<1x896xf32> to vector<8x896xf32>
    %63 = arith.mulf %61, %62 : vector<8x896xf32>
    %64 = arith.addf %56, %63 : vector<8x896xf32>
    %c0_37 = arith.constant 0 : index
    %c0_38 = arith.constant 0 : index
    %c35 = arith.constant 35 : index
    %65 = vector.load %arg1[%c0_37, %c0_38, %c35] : memref<1x1x1152xf32, #tpu.memory_space<vmem>>, vector<1x1x896xf32>
    %66 = vector.shape_cast %65 : vector<1x1x896xf32> to vector<1x896xf32>
    %c8 = arith.constant 8 : index
    %c0_39 = arith.constant 0 : index
    %c0_40 = arith.constant 0 : index
    %67 = vector.load %arg2[%c8, %c0_39, %c0_40] : memref<25x8x1xf32, #tpu.memory_space<vmem>>, vector<1x8x1xf32>
    %68 = vector.shape_cast %67 : vector<1x8x1xf32> to vector<8x1xf32>
    %69 = vector.broadcast %68 : vector<8x1xf32> to vector<8x896xf32>
    %70 = vector.broadcast %66 : vector<1x896xf32> to vector<8x896xf32>
    %71 = arith.mulf %69, %70 : vector<8x896xf32>
    %72 = arith.addf %64, %71 : vector<8x896xf32>
    %c0_41 = arith.constant 0 : index
    %c0_42 = arith.constant 0 : index
    %c36 = arith.constant 36 : index
    %73 = vector.load %arg1[%c0_41, %c0_42, %c36] : memref<1x1x1152xf32, #tpu.memory_space<vmem>>, vector<1x1x896xf32>
    %74 = vector.shape_cast %73 : vector<1x1x896xf32> to vector<1x896xf32>
    %c9 = arith.constant 9 : index
    %c0_43 = arith.constant 0 : index
    %c0_44 = arith.constant 0 : index
    %75 = vector.load %arg2[%c9, %c0_43, %c0_44] : memref<25x8x1xf32, #tpu.memory_space<vmem>>, vector<1x8x1xf32>
    %76 = vector.shape_cast %75 : vector<1x8x1xf32> to vector<8x1xf32>
    %77 = vector.broadcast %76 : vector<8x1xf32> to vector<8x896xf32>
    %78 = vector.broadcast %74 : vector<1x896xf32> to vector<8x896xf32>
    %79 = arith.mulf %77, %78 : vector<8x896xf32>
    %80 = arith.addf %72, %79 : vector<8x896xf32>
    %c0_45 = arith.constant 0 : index
    %c0_46 = arith.constant 0 : index
    %c64 = arith.constant 64 : index
    %81 = vector.load %arg1[%c0_45, %c0_46, %c64] : memref<1x1x1152xf32, #tpu.memory_space<vmem>>, vector<1x1x896xf32>
    %82 = vector.shape_cast %81 : vector<1x1x896xf32> to vector<1x896xf32>
    %c10 = arith.constant 10 : index
    %c0_47 = arith.constant 0 : index
    %c0_48 = arith.constant 0 : index
    %83 = vector.load %arg2[%c10, %c0_47, %c0_48] : memref<25x8x1xf32, #tpu.memory_space<vmem>>, vector<1x8x1xf32>
    %84 = vector.shape_cast %83 : vector<1x8x1xf32> to vector<8x1xf32>
    %85 = vector.broadcast %84 : vector<8x1xf32> to vector<8x896xf32>
    %86 = vector.broadcast %82 : vector<1x896xf32> to vector<8x896xf32>
    %87 = arith.mulf %85, %86 : vector<8x896xf32>
    %88 = arith.addf %80, %87 : vector<8x896xf32>
    %c0_49 = arith.constant 0 : index
    %c0_50 = arith.constant 0 : index
    %c65 = arith.constant 65 : index
    %89 = vector.load %arg1[%c0_49, %c0_50, %c65] : memref<1x1x1152xf32, #tpu.memory_space<vmem>>, vector<1x1x896xf32>
    %90 = vector.shape_cast %89 : vector<1x1x896xf32> to vector<1x896xf32>
    %c11 = arith.constant 11 : index
    %c0_51 = arith.constant 0 : index
    %c0_52 = arith.constant 0 : index
    %91 = vector.load %arg2[%c11, %c0_51, %c0_52] : memref<25x8x1xf32, #tpu.memory_space<vmem>>, vector<1x8x1xf32>
    %92 = vector.shape_cast %91 : vector<1x8x1xf32> to vector<8x1xf32>
    %93 = vector.broadcast %92 : vector<8x1xf32> to vector<8x896xf32>
    %94 = vector.broadcast %90 : vector<1x896xf32> to vector<8x896xf32>
    %95 = arith.mulf %93, %94 : vector<8x896xf32>
    %96 = arith.addf %88, %95 : vector<8x896xf32>
    %c0_53 = arith.constant 0 : index
    %c0_54 = arith.constant 0 : index
    %c66 = arith.constant 66 : index
    %97 = vector.load %arg1[%c0_53, %c0_54, %c66] : memref<1x1x1152xf32, #tpu.memory_space<vmem>>, vector<1x1x896xf32>
    %98 = vector.shape_cast %97 : vector<1x1x896xf32> to vector<1x896xf32>
    %c12 = arith.constant 12 : index
    %c0_55 = arith.constant 0 : index
    %c0_56 = arith.constant 0 : index
    %99 = vector.load %arg2[%c12, %c0_55, %c0_56] : memref<25x8x1xf32, #tpu.memory_space<vmem>>, vector<1x8x1xf32>
    %100 = vector.shape_cast %99 : vector<1x8x1xf32> to vector<8x1xf32>
    %101 = vector.broadcast %100 : vector<8x1xf32> to vector<8x896xf32>
    %102 = vector.broadcast %98 : vector<1x896xf32> to vector<8x896xf32>
    %103 = arith.mulf %101, %102 : vector<8x896xf32>
    %104 = arith.addf %96, %103 : vector<8x896xf32>
    %c0_57 = arith.constant 0 : index
    %c0_58 = arith.constant 0 : index
    %c67 = arith.constant 67 : index
    %105 = vector.load %arg1[%c0_57, %c0_58, %c67] : memref<1x1x1152xf32, #tpu.memory_space<vmem>>, vector<1x1x896xf32>
    %106 = vector.shape_cast %105 : vector<1x1x896xf32> to vector<1x896xf32>
    %c13 = arith.constant 13 : index
    %c0_59 = arith.constant 0 : index
    %c0_60 = arith.constant 0 : index
    %107 = vector.load %arg2[%c13, %c0_59, %c0_60] : memref<25x8x1xf32, #tpu.memory_space<vmem>>, vector<1x8x1xf32>
    %108 = vector.shape_cast %107 : vector<1x8x1xf32> to vector<8x1xf32>
    %109 = vector.broadcast %108 : vector<8x1xf32> to vector<8x896xf32>
    %110 = vector.broadcast %106 : vector<1x896xf32> to vector<8x896xf32>
    %111 = arith.mulf %109, %110 : vector<8x896xf32>
    %112 = arith.addf %104, %111 : vector<8x896xf32>
    %c0_61 = arith.constant 0 : index
    %c0_62 = arith.constant 0 : index
    %c68 = arith.constant 68 : index
    %113 = vector.load %arg1[%c0_61, %c0_62, %c68] : memref<1x1x1152xf32, #tpu.memory_space<vmem>>, vector<1x1x896xf32>
    %114 = vector.shape_cast %113 : vector<1x1x896xf32> to vector<1x896xf32>
    %c14 = arith.constant 14 : index
    %c0_63 = arith.constant 0 : index
    %c0_64 = arith.constant 0 : index
    %115 = vector.load %arg2[%c14, %c0_63, %c0_64] : memref<25x8x1xf32, #tpu.memory_space<vmem>>, vector<1x8x1xf32>
    %116 = vector.shape_cast %115 : vector<1x8x1xf32> to vector<8x1xf32>
    %117 = vector.broadcast %116 : vector<8x1xf32> to vector<8x896xf32>
    %118 = vector.broadcast %114 : vector<1x896xf32> to vector<8x896xf32>
    %119 = arith.mulf %117, %118 : vector<8x896xf32>
    %120 = arith.addf %112, %119 : vector<8x896xf32>
    %c0_65 = arith.constant 0 : index
    %c0_66 = arith.constant 0 : index
    %c96 = arith.constant 96 : index
    %121 = vector.load %arg1[%c0_65, %c0_66, %c96] : memref<1x1x1152xf32, #tpu.memory_space<vmem>>, vector<1x1x896xf32>
    %122 = vector.shape_cast %121 : vector<1x1x896xf32> to vector<1x896xf32>
    %c15 = arith.constant 15 : index
    %c0_67 = arith.constant 0 : index
    %c0_68 = arith.constant 0 : index
    %123 = vector.load %arg2[%c15, %c0_67, %c0_68] : memref<25x8x1xf32, #tpu.memory_space<vmem>>, vector<1x8x1xf32>
    %124 = vector.shape_cast %123 : vector<1x8x1xf32> to vector<8x1xf32>
    %125 = vector.broadcast %124 : vector<8x1xf32> to vector<8x896xf32>
    %126 = vector.broadcast %122 : vector<1x896xf32> to vector<8x896xf32>
    %127 = arith.mulf %125, %126 : vector<8x896xf32>
    %128 = arith.addf %120, %127 : vector<8x896xf32>
    %c0_69 = arith.constant 0 : index
    %c0_70 = arith.constant 0 : index
    %c97 = arith.constant 97 : index
    %129 = vector.load %arg1[%c0_69, %c0_70, %c97] : memref<1x1x1152xf32, #tpu.memory_space<vmem>>, vector<1x1x896xf32>
    %130 = vector.shape_cast %129 : vector<1x1x896xf32> to vector<1x896xf32>
    %c16 = arith.constant 16 : index
    %c0_71 = arith.constant 0 : index
    %c0_72 = arith.constant 0 : index
    %131 = vector.load %arg2[%c16, %c0_71, %c0_72] : memref<25x8x1xf32, #tpu.memory_space<vmem>>, vector<1x8x1xf32>
    %132 = vector.shape_cast %131 : vector<1x8x1xf32> to vector<8x1xf32>
    %133 = vector.broadcast %132 : vector<8x1xf32> to vector<8x896xf32>
    %134 = vector.broadcast %130 : vector<1x896xf32> to vector<8x896xf32>
    %135 = arith.mulf %133, %134 : vector<8x896xf32>
    %136 = arith.addf %128, %135 : vector<8x896xf32>
    %c0_73 = arith.constant 0 : index
    %c0_74 = arith.constant 0 : index
    %c98 = arith.constant 98 : index
    %137 = vector.load %arg1[%c0_73, %c0_74, %c98] : memref<1x1x1152xf32, #tpu.memory_space<vmem>>, vector<1x1x896xf32>
    %138 = vector.shape_cast %137 : vector<1x1x896xf32> to vector<1x896xf32>
    %c17 = arith.constant 17 : index
    %c0_75 = arith.constant 0 : index
    %c0_76 = arith.constant 0 : index
    %139 = vector.load %arg2[%c17, %c0_75, %c0_76] : memref<25x8x1xf32, #tpu.memory_space<vmem>>, vector<1x8x1xf32>
    %140 = vector.shape_cast %139 : vector<1x8x1xf32> to vector<8x1xf32>
    %141 = vector.broadcast %140 : vector<8x1xf32> to vector<8x896xf32>
    %142 = vector.broadcast %138 : vector<1x896xf32> to vector<8x896xf32>
    %143 = arith.mulf %141, %142 : vector<8x896xf32>
    %144 = arith.addf %136, %143 : vector<8x896xf32>
    %c0_77 = arith.constant 0 : index
    %c0_78 = arith.constant 0 : index
    %c99 = arith.constant 99 : index
    %145 = vector.load %arg1[%c0_77, %c0_78, %c99] : memref<1x1x1152xf32, #tpu.memory_space<vmem>>, vector<1x1x896xf32>
    %146 = vector.shape_cast %145 : vector<1x1x896xf32> to vector<1x896xf32>
    %c18 = arith.constant 18 : index
    %c0_79 = arith.constant 0 : index
    %c0_80 = arith.constant 0 : index
    %147 = vector.load %arg2[%c18, %c0_79, %c0_80] : memref<25x8x1xf32, #tpu.memory_space<vmem>>, vector<1x8x1xf32>
    %148 = vector.shape_cast %147 : vector<1x8x1xf32> to vector<8x1xf32>
    %149 = vector.broadcast %148 : vector<8x1xf32> to vector<8x896xf32>
    %150 = vector.broadcast %146 : vector<1x896xf32> to vector<8x896xf32>
    %151 = arith.mulf %149, %150 : vector<8x896xf32>
    %152 = arith.addf %144, %151 : vector<8x896xf32>
    %c0_81 = arith.constant 0 : index
    %c0_82 = arith.constant 0 : index
    %c100 = arith.constant 100 : index
    %153 = vector.load %arg1[%c0_81, %c0_82, %c100] : memref<1x1x1152xf32, #tpu.memory_space<vmem>>, vector<1x1x896xf32>
    %154 = vector.shape_cast %153 : vector<1x1x896xf32> to vector<1x896xf32>
    %c19 = arith.constant 19 : index
    %c0_83 = arith.constant 0 : index
    %c0_84 = arith.constant 0 : index
    %155 = vector.load %arg2[%c19, %c0_83, %c0_84] : memref<25x8x1xf32, #tpu.memory_space<vmem>>, vector<1x8x1xf32>
    %156 = vector.shape_cast %155 : vector<1x8x1xf32> to vector<8x1xf32>
    %157 = vector.broadcast %156 : vector<8x1xf32> to vector<8x896xf32>
    %158 = vector.broadcast %154 : vector<1x896xf32> to vector<8x896xf32>
    %159 = arith.mulf %157, %158 : vector<8x896xf32>
    %160 = arith.addf %152, %159 : vector<8x896xf32>
    %c0_85 = arith.constant 0 : index
    %c0_86 = arith.constant 0 : index
    %c128 = arith.constant 128 : index
    %161 = vector.load %arg1[%c0_85, %c0_86, %c128] : memref<1x1x1152xf32, #tpu.memory_space<vmem>>, vector<1x1x896xf32>
    %162 = vector.shape_cast %161 : vector<1x1x896xf32> to vector<1x896xf32>
    %c20 = arith.constant 20 : index
    %c0_87 = arith.constant 0 : index
    %c0_88 = arith.constant 0 : index
    %163 = vector.load %arg2[%c20, %c0_87, %c0_88] : memref<25x8x1xf32, #tpu.memory_space<vmem>>, vector<1x8x1xf32>
    %164 = vector.shape_cast %163 : vector<1x8x1xf32> to vector<8x1xf32>
    %165 = vector.broadcast %164 : vector<8x1xf32> to vector<8x896xf32>
    %166 = vector.broadcast %162 : vector<1x896xf32> to vector<8x896xf32>
    %167 = arith.mulf %165, %166 : vector<8x896xf32>
    %168 = arith.addf %160, %167 : vector<8x896xf32>
    %c0_89 = arith.constant 0 : index
    %c0_90 = arith.constant 0 : index
    %c129 = arith.constant 129 : index
    %169 = vector.load %arg1[%c0_89, %c0_90, %c129] : memref<1x1x1152xf32, #tpu.memory_space<vmem>>, vector<1x1x896xf32>
    %170 = vector.shape_cast %169 : vector<1x1x896xf32> to vector<1x896xf32>
    %c21 = arith.constant 21 : index
    %c0_91 = arith.constant 0 : index
    %c0_92 = arith.constant 0 : index
    %171 = vector.load %arg2[%c21, %c0_91, %c0_92] : memref<25x8x1xf32, #tpu.memory_space<vmem>>, vector<1x8x1xf32>
    %172 = vector.shape_cast %171 : vector<1x8x1xf32> to vector<8x1xf32>
    %173 = vector.broadcast %172 : vector<8x1xf32> to vector<8x896xf32>
    %174 = vector.broadcast %170 : vector<1x896xf32> to vector<8x896xf32>
    %175 = arith.mulf %173, %174 : vector<8x896xf32>
    %176 = arith.addf %168, %175 : vector<8x896xf32>
    %c0_93 = arith.constant 0 : index
    %c0_94 = arith.constant 0 : index
    %c130 = arith.constant 130 : index
    %177 = vector.load %arg1[%c0_93, %c0_94, %c130] : memref<1x1x1152xf32, #tpu.memory_space<vmem>>, vector<1x1x896xf32>
    %178 = vector.shape_cast %177 : vector<1x1x896xf32> to vector<1x896xf32>
    %c22 = arith.constant 22 : index
    %c0_95 = arith.constant 0 : index
    %c0_96 = arith.constant 0 : index
    %179 = vector.load %arg2[%c22, %c0_95, %c0_96] : memref<25x8x1xf32, #tpu.memory_space<vmem>>, vector<1x8x1xf32>
    %180 = vector.shape_cast %179 : vector<1x8x1xf32> to vector<8x1xf32>
    %181 = vector.broadcast %180 : vector<8x1xf32> to vector<8x896xf32>
    %182 = vector.broadcast %178 : vector<1x896xf32> to vector<8x896xf32>
    %183 = arith.mulf %181, %182 : vector<8x896xf32>
    %184 = arith.addf %176, %183 : vector<8x896xf32>
    %c0_97 = arith.constant 0 : index
    %c0_98 = arith.constant 0 : index
    %c131 = arith.constant 131 : index
    %185 = vector.load %arg1[%c0_97, %c0_98, %c131] : memref<1x1x1152xf32, #tpu.memory_space<vmem>>, vector<1x1x896xf32>
    %186 = vector.shape_cast %185 : vector<1x1x896xf32> to vector<1x896xf32>
    %c23 = arith.constant 23 : index
    %c0_99 = arith.constant 0 : index
    %c0_100 = arith.constant 0 : index
    %187 = vector.load %arg2[%c23, %c0_99, %c0_100] : memref<25x8x1xf32, #tpu.memory_space<vmem>>, vector<1x8x1xf32>
    %188 = vector.shape_cast %187 : vector<1x8x1xf32> to vector<8x1xf32>
    %189 = vector.broadcast %188 : vector<8x1xf32> to vector<8x896xf32>
    %190 = vector.broadcast %186 : vector<1x896xf32> to vector<8x896xf32>
    %191 = arith.mulf %189, %190 : vector<8x896xf32>
    %192 = arith.addf %184, %191 : vector<8x896xf32>
    %c0_101 = arith.constant 0 : index
    %c0_102 = arith.constant 0 : index
    %c132 = arith.constant 132 : index
    %193 = vector.load %arg1[%c0_101, %c0_102, %c132] : memref<1x1x1152xf32, #tpu.memory_space<vmem>>, vector<1x1x896xf32>
    %194 = vector.shape_cast %193 : vector<1x1x896xf32> to vector<1x896xf32>
    %c24 = arith.constant 24 : index
    %c0_103 = arith.constant 0 : index
    %c0_104 = arith.constant 0 : index
    %195 = vector.load %arg2[%c24, %c0_103, %c0_104] : memref<25x8x1xf32, #tpu.memory_space<vmem>>, vector<1x8x1xf32>
    %196 = vector.shape_cast %195 : vector<1x8x1xf32> to vector<8x1xf32>
    %197 = vector.broadcast %196 : vector<8x1xf32> to vector<8x896xf32>
    %198 = vector.broadcast %194 : vector<1x896xf32> to vector<8x896xf32>
    %199 = arith.mulf %197, %198 : vector<8x896xf32>
    %200 = arith.addf %192, %199 : vector<8x896xf32>
    %c0_105 = arith.constant 0 : index
    %c0_106 = arith.constant 0 : index
    %201 = vector.load %arg3[%c0_105, %c0_106] : memref<8x1xf32, #tpu.memory_space<vmem>>, vector<8x1xf32>
    %202 = vector.broadcast %201 : vector<8x1xf32> to vector<8x896xf32>
    %203 = arith.addf %200, %202 : vector<8x896xf32>
    %cst_107 = arith.constant 0.000000e+00 : f32
    %204 = vector.broadcast %cst_107 : f32 to vector<8x896xf32>
    %205 = arith.maximumf %203, %204 : vector<8x896xf32>
    %c0_108 = arith.constant 0 : index
    %c0_109 = arith.constant 0 : index
    %206 = vector.load %arg16[%c0_108, %c0_109] : memref<8x1024xf32, #tpu.memory_space<vmem>>, vector<8x896xf32>
    tpu.vector_store %arg16[%c0_108, %c0_109], %205 {strides = array<i32>} : memref<8x1024xf32, #tpu.memory_space<vmem>>, vector<8x896xf32>,
    %cst_110 = arith.constant 0.000000e+00 : f32
    %207 = vector.broadcast %cst_110 : f32 to vector<8x128xf32>
    %c0_111 = arith.constant 0 : index
    %c896 = arith.constant 896 : index
    %208 = vector.load %arg16[%c0_111, %c896] : memref<8x1024xf32, #tpu.memory_space<vmem>>, vector<8x128xf32>
    tpu.vector_store %arg16[%c0_111, %c896], %207 {strides = array<i32>} : memref<8x1024xf32, #tpu.memory_space<vmem>>, vector<8x128xf32>,
    %c0_112 = arith.constant 0 : index
    %c0_113 = arith.constant 0 : index
    %209 = vector.load %arg16[%c0_112, %c0_113] : memref<8x1024xf32, #tpu.memory_space<vmem>>, vector<8x896xf32>
    %c0_114 = arith.constant 0 : index
    %c1_115 = arith.constant 1 : index
    %210 = vector.load %arg16[%c0_114, %c1_115] : memref<8x1024xf32, #tpu.memory_space<vmem>>, vector<8x896xf32>
    %211 = arith.maximumf %209, %210 : vector<8x896xf32>
    %c0_116 = arith.constant 0 : index
    %c32_117 = arith.constant 32 : index
    %212 = vector.load %arg16[%c0_116, %c32_117] : memref<8x1024xf32, #tpu.memory_space<vmem>>, vector<8x896xf32>
    %213 = arith.maximumf %211, %212 : vector<8x896xf32>
    %c0_118 = arith.constant 0 : index
    %c33_119 = arith.constant 33 : index
    %214 = vector.load %arg16[%c0_118, %c33_119] : memref<8x1024xf32, #tpu.memory_space<vmem>>, vector<8x896xf32>
    %215 = arith.maximumf %213, %214 : vector<8x896xf32>
    %c0_120 = arith.constant 0 : index
    %c0_121 = arith.constant 0 : index
    %216 = vector.load %arg4[%c0_120, %c0_121] : memref<896x256xf32, #tpu.memory_space<vmem>>, vector<896x256xf32>
    %cst_122 = arith.constant dense<0.000000e+00> : vector<8x256xf32>
    %217 = tpu.matmul %215, %216, %cst_122 {dimension_numbers = #tpu.dot_dimension_numbers<[1], [0], [0], [1], [0, 0, 1, 1], [], []>} : vector<8x896xf32>, vector<896x256xf32>, vector<8x256xf32> -> vector<8x256xf32>
    %c0_123 = arith.constant 0 : index
    %c0_124 = arith.constant 0 : index
    %218 = vector.load %arg17[%c0_123, %c0_124] : memref<8x384xf32, #tpu.memory_space<vmem>>, vector<8x256xf32>
    tpu.vector_store %arg17[%c0_123, %c0_124], %217 {strides = array<i32>} : memref<8x384xf32, #tpu.memory_space<vmem>>, vector<8x256xf32>,
    %cst_125 = arith.constant 0.000000e+00 : f32
    %219 = vector.broadcast %cst_125 : f32 to vector<8x128xf32>
    %c0_126 = arith.constant 0 : index
    %c256 = arith.constant 256 : index
    %220 = vector.load %arg17[%c0_126, %c256] : memref<8x384xf32, #tpu.memory_space<vmem>>, vector<8x128xf32>
    tpu.vector_store %arg17[%c0_126, %c256], %219 {strides = array<i32>} : memref<8x384xf32, #tpu.memory_space<vmem>>, vector<8x128xf32>,
    %cst_127 = arith.constant 0.000000e+00 : f32
    %221 = vector.broadcast %cst_127 : f32 to vector<16x256xf32>
    %c0_128 = arith.constant 0 : index
    %c0_129 = arith.constant 0 : index
    %222 = vector.load %arg17[%c0_128, %c0_129] : memref<8x384xf32, #tpu.memory_space<vmem>>, vector<8x256xf32>
    %c0_130 = arith.constant 0 : index
    %c0_131 = arith.constant 0 : index
    %c0_132 = arith.constant 0 : index
    %223 = vector.load %arg5[%c0_130, %c0_131, %c0_132] : memref<9x16x8xf32, #tpu.memory_space<vmem>>, vector<1x16x8xf32>
    %224 = vector.shape_cast %223 : vector<1x16x8xf32> to vector<16x8xf32>
    %cst_133 = arith.constant dense<0.000000e+00> : vector<16x256xf32>
    %225 = tpu.matmul %224, %222, %cst_133 {dimension_numbers = #tpu.dot_dimension_numbers<[1], [0], [0], [1], [0, 0, 1, 1], [], []>} : vector<16x8xf32>, vector<8x256xf32>, vector<16x256xf32> -> vector<16x256xf32>
    %226 = arith.addf %221, %225 : vector<16x256xf32>
    %c0_134 = arith.constant 0 : index
    %c1_135 = arith.constant 1 : index
    %227 = vector.load %arg17[%c0_134, %c1_135] : memref<8x384xf32, #tpu.memory_space<vmem>>, vector<8x256xf32>
    %c1_136 = arith.constant 1 : index
    %c0_137 = arith.constant 0 : index
    %c0_138 = arith.constant 0 : index
    %228 = vector.load %arg5[%c1_136, %c0_137, %c0_138] : memref<9x16x8xf32, #tpu.memory_space<vmem>>, vector<1x16x8xf32>
    %229 = vector.shape_cast %228 : vector<1x16x8xf32> to vector<16x8xf32>
    %cst_139 = arith.constant dense<0.000000e+00> : vector<16x256xf32>
    %230 = tpu.matmul %229, %227, %cst_139 {dimension_numbers = #tpu.dot_dimension_numbers<[1], [0], [0], [1], [0, 0, 1, 1], [], []>} : vector<16x8xf32>, vector<8x256xf32>, vector<16x256xf32> -> vector<16x256xf32>
    %231 = arith.addf %226, %230 : vector<16x256xf32>
    %c0_140 = arith.constant 0 : index
    %c2_141 = arith.constant 2 : index
    %232 = vector.load %arg17[%c0_140, %c2_141] : memref<8x384xf32, #tpu.memory_space<vmem>>, vector<8x256xf32>
    %c2_142 = arith.constant 2 : index
    %c0_143 = arith.constant 0 : index
    %c0_144 = arith.constant 0 : index
    %233 = vector.load %arg5[%c2_142, %c0_143, %c0_144] : memref<9x16x8xf32, #tpu.memory_space<vmem>>, vector<1x16x8xf32>
    %234 = vector.shape_cast %233 : vector<1x16x8xf32> to vector<16x8xf32>
    %cst_145 = arith.constant dense<0.000000e+00> : vector<16x256xf32>
    %235 = tpu.matmul %234, %232, %cst_145 {dimension_numbers = #tpu.dot_dimension_numbers<[1], [0], [0], [1], [0, 0, 1, 1], [], []>} : vector<16x8xf32>, vector<8x256xf32>, vector<16x256xf32> -> vector<16x256xf32>
    %236 = arith.addf %231, %235 : vector<16x256xf32>
    %c0_146 = arith.constant 0 : index
    %c14_147 = arith.constant 14 : index
    %237 = vector.load %arg17[%c0_146, %c14_147] : memref<8x384xf32, #tpu.memory_space<vmem>>, vector<8x256xf32>
    %c3_148 = arith.constant 3 : index
    %c0_149 = arith.constant 0 : index
    %c0_150 = arith.constant 0 : index
    %238 = vector.load %arg5[%c3_148, %c0_149, %c0_150] : memref<9x16x8xf32, #tpu.memory_space<vmem>>, vector<1x16x8xf32>
    %239 = vector.shape_cast %238 : vector<1x16x8xf32> to vector<16x8xf32>
    %cst_151 = arith.constant dense<0.000000e+00> : vector<16x256xf32>
    %240 = tpu.matmul %239, %237, %cst_151 {dimension_numbers = #tpu.dot_dimension_numbers<[1], [0], [0], [1], [0, 0, 1, 1], [], []>} : vector<16x8xf32>, vector<8x256xf32>, vector<16x256xf32> -> vector<16x256xf32>
    %241 = arith.addf %236, %240 : vector<16x256xf32>
    %c0_152 = arith.constant 0 : index
    %c15_153 = arith.constant 15 : index
    %242 = vector.load %arg17[%c0_152, %c15_153] : memref<8x384xf32, #tpu.memory_space<vmem>>, vector<8x256xf32>
    %c4_154 = arith.constant 4 : index
    %c0_155 = arith.constant 0 : index
    %c0_156 = arith.constant 0 : index
    %243 = vector.load %arg5[%c4_154, %c0_155, %c0_156] : memref<9x16x8xf32, #tpu.memory_space<vmem>>, vector<1x16x8xf32>
    %244 = vector.shape_cast %243 : vector<1x16x8xf32> to vector<16x8xf32>
    %cst_157 = arith.constant dense<0.000000e+00> : vector<16x256xf32>
    %245 = tpu.matmul %244, %242, %cst_157 {dimension_numbers = #tpu.dot_dimension_numbers<[1], [0], [0], [1], [0, 0, 1, 1], [], []>} : vector<16x8xf32>, vector<8x256xf32>, vector<16x256xf32> -> vector<16x256xf32>
    %246 = arith.addf %241, %245 : vector<16x256xf32>
    %c0_158 = arith.constant 0 : index
    %c16_159 = arith.constant 16 : index
    %247 = vector.load %arg17[%c0_158, %c16_159] : memref<8x384xf32, #tpu.memory_space<vmem>>, vector<8x256xf32>
    %c5_160 = arith.constant 5 : index
    %c0_161 = arith.constant 0 : index
    %c0_162 = arith.constant 0 : index
    %248 = vector.load %arg5[%c5_160, %c0_161, %c0_162] : memref<9x16x8xf32, #tpu.memory_space<vmem>>, vector<1x16x8xf32>
    %249 = vector.shape_cast %248 : vector<1x16x8xf32> to vector<16x8xf32>
    %cst_163 = arith.constant dense<0.000000e+00> : vector<16x256xf32>
    %250 = tpu.matmul %249, %247, %cst_163 {dimension_numbers = #tpu.dot_dimension_numbers<[1], [0], [0], [1], [0, 0, 1, 1], [], []>} : vector<16x8xf32>, vector<8x256xf32>, vector<16x256xf32> -> vector<16x256xf32>
    %251 = arith.addf %246, %250 : vector<16x256xf32>
    %c0_164 = arith.constant 0 : index
    %c28 = arith.constant 28 : index
    %252 = vector.load %arg17[%c0_164, %c28] : memref<8x384xf32, #tpu.memory_space<vmem>>, vector<8x256xf32>
    %c6_165 = arith.constant 6 : index
    %c0_166 = arith.constant 0 : index
    %c0_167 = arith.constant 0 : index
    %253 = vector.load %arg5[%c6_165, %c0_166, %c0_167] : memref<9x16x8xf32, #tpu.memory_space<vmem>>, vector<1x16x8xf32>
    %254 = vector.shape_cast %253 : vector<1x16x8xf32> to vector<16x8xf32>
    %cst_168 = arith.constant dense<0.000000e+00> : vector<16x256xf32>
    %255 = tpu.matmul %254, %252, %cst_168 {dimension_numbers = #tpu.dot_dimension_numbers<[1], [0], [0], [1], [0, 0, 1, 1], [], []>} : vector<16x8xf32>, vector<8x256xf32>, vector<16x256xf32> -> vector<16x256xf32>
    %256 = arith.addf %251, %255 : vector<16x256xf32>
    %c0_169 = arith.constant 0 : index
    %c29 = arith.constant 29 : index
    %257 = vector.load %arg17[%c0_169, %c29] : memref<8x384xf32, #tpu.memory_space<vmem>>, vector<8x256xf32>
    %c7_170 = arith.constant 7 : index
    %c0_171 = arith.constant 0 : index
    %c0_172 = arith.constant 0 : index
    %258 = vector.load %arg5[%c7_170, %c0_171, %c0_172] : memref<9x16x8xf32, #tpu.memory_space<vmem>>, vector<1x16x8xf32>
    %259 = vector.shape_cast %258 : vector<1x16x8xf32> to vector<16x8xf32>
    %cst_173 = arith.constant dense<0.000000e+00> : vector<16x256xf32>
    %260 = tpu.matmul %259, %257, %cst_173 {dimension_numbers = #tpu.dot_dimension_numbers<[1], [0], [0], [1], [0, 0, 1, 1], [], []>} : vector<16x8xf32>, vector<8x256xf32>, vector<16x256xf32> -> vector<16x256xf32>
    %261 = arith.addf %256, %260 : vector<16x256xf32>
    %c0_174 = arith.constant 0 : index
    %c30 = arith.constant 30 : index
    %262 = vector.load %arg17[%c0_174, %c30] : memref<8x384xf32, #tpu.memory_space<vmem>>, vector<8x256xf32>
    %c8_175 = arith.constant 8 : index
    %c0_176 = arith.constant 0 : index
    %c0_177 = arith.constant 0 : index
    %263 = vector.load %arg5[%c8_175, %c0_176, %c0_177] : memref<9x16x8xf32, #tpu.memory_space<vmem>>, vector<1x16x8xf32>
    %264 = vector.shape_cast %263 : vector<1x16x8xf32> to vector<16x8xf32>
    %cst_178 = arith.constant dense<0.000000e+00> : vector<16x256xf32>
    %265 = tpu.matmul %264, %262, %cst_178 {dimension_numbers = #tpu.dot_dimension_numbers<[1], [0], [0], [1], [0, 0, 1, 1], [], []>} : vector<16x8xf32>, vector<8x256xf32>, vector<16x256xf32> -> vector<16x256xf32>
    %266 = arith.addf %261, %265 : vector<16x256xf32>
    %c0_179 = arith.constant 0 : index
    %c0_180 = arith.constant 0 : index
    %267 = vector.load %arg6[%c0_179, %c0_180] : memref<16x1xf32, #tpu.memory_space<vmem>>, vector<16x1xf32>
    %268 = vector.broadcast %267 : vector<16x1xf32> to vector<16x256xf32>
    %269 = arith.addf %266, %268 : vector<16x256xf32>
    %cst_181 = arith.constant 0.000000e+00 : f32
    %270 = vector.broadcast %cst_181 : f32 to vector<16x256xf32>
    %271 = arith.maximumf %269, %270 : vector<16x256xf32>
    %c0_182 = arith.constant 0 : index
    %c0_183 = arith.constant 0 : index
    %272 = vector.load %arg18[%c0_182, %c0_183] : memref<16x384xf32, #tpu.memory_space<vmem>>, vector<16x256xf32>
    tpu.vector_store %arg18[%c0_182, %c0_183], %271 {strides = array<i32>} : memref<16x384xf32, #tpu.memory_space<vmem>>, vector<16x256xf32>,
    %cst_184 = arith.constant 0.000000e+00 : f32
    %273 = vector.broadcast %cst_184 : f32 to vector<16x128xf32>
    %c0_185 = arith.constant 0 : index
    %c256_186 = arith.constant 256 : index
    %274 = vector.load %arg18[%c0_185, %c256_186] : memref<16x384xf32, #tpu.memory_space<vmem>>, vector<16x128xf32>
    tpu.vector_store %arg18[%c0_185, %c256_186], %273 {strides = array<i32>} : memref<16x384xf32, #tpu.memory_space<vmem>>, vector<16x128xf32>,
    %c0_187 = arith.constant 0 : index
    %c0_188 = arith.constant 0 : index
    %275 = vector.load %arg18[%c0_187, %c0_188] : memref<16x384xf32, #tpu.memory_space<vmem>>, vector<16x256xf32>
    %c0_189 = arith.constant 0 : index
    %c1_190 = arith.constant 1 : index
    %276 = vector.load %arg18[%c0_189, %c1_190] : memref<16x384xf32, #tpu.memory_space<vmem>>, vector<16x256xf32>
    %277 = arith.maximumf %275, %276 : vector<16x256xf32>
    %c0_191 = arith.constant 0 : index
    %c14_192 = arith.constant 14 : index
    %278 = vector.load %arg18[%c0_191, %c14_192] : memref<16x384xf32, #tpu.memory_space<vmem>>, vector<16x256xf32>
    %279 = arith.maximumf %277, %278 : vector<16x256xf32>
    %c0_193 = arith.constant 0 : index
    %c15_194 = arith.constant 15 : index
    %280 = vector.load %arg18[%c0_193, %c15_194] : memref<16x384xf32, #tpu.memory_space<vmem>>, vector<16x256xf32>
    %281 = arith.maximumf %279, %280 : vector<16x256xf32>
    %c0_195 = arith.constant 0 : index
    %c0_196 = arith.constant 0 : index
    %282 = vector.load %arg7[%c0_195, %c0_196] : memref<256x576xf32, #tpu.memory_space<vmem>>, vector<256x576xf32>
    %cst_197 = arith.constant dense<0.000000e+00> : vector<16x576xf32>
    %283 = tpu.matmul %281, %282, %cst_197 {dimension_numbers = #tpu.dot_dimension_numbers<[1], [0], [0], [1], [0, 0, 1, 1], [], []>} : vector<16x256xf32>, vector<256x576xf32>, vector<16x576xf32> -> vector<16x576xf32>
    %c0_198 = arith.constant 0 : index
    %c0_199 = arith.constant 0 : index
    %284 = vector.load %arg8[%c0_198, %c0_199] : memref<16x576xf32, #tpu.memory_space<vmem>>, vector<16x576xf32>
    %285 = arith.mulf %283, %284 : vector<16x576xf32>
    %cst_200 = arith.constant dense<0.000000e+00> : vector<576xf32>
    %286 = vector.multi_reduction <add>, %285, %cst_200 [0] : vector<16x576xf32> to vector<576xf32>
    %287 = vector.shape_cast %286 : vector<576xf32> to vector<1x576xf32>
    %c0_201 = arith.constant 0 : index
    %c0_202 = arith.constant 0 : index
    %288 = vector.load %arg19[%c0_201, %c0_202] : memref<1x576xf32, #tpu.memory_space<vmem>>, vector<1x576xf32>
    tpu.vector_store %arg19[%c0_201, %c0_202], %287 {strides = array<i32>} : memref<1x576xf32, #tpu.memory_space<vmem>>, vector<1x576xf32>,
    %c0_203 = arith.constant 0 : index
    %c0_204 = arith.constant 0 : index
    %289 = vector.load %arg19[%c0_203, %c0_204] : memref<1x576xf32, #tpu.memory_space<vmem>>, vector<1x576xf32>
    %290 = arith.truncf %289 : vector<1x576xf32> to vector<1x576xbf16>
    %c0_205 = arith.constant 0 : index
    %c0_206 = arith.constant 0 : index
    %291 = vector.load %arg9[%c0_205, %c0_206] : memref<576x640xbf16, #tpu.memory_space<vmem>>, vector<576x640xbf16>
    %cst_207 = arith.constant dense<0.000000e+00> : vector<1x640xf32>
    %292 = tpu.matmul %290, %291, %cst_207 {dimension_numbers = #tpu.dot_dimension_numbers<[1], [0], [0], [1], [0, 0, 1, 1], [], []>} : vector<1x576xbf16>, vector<576x640xbf16>, vector<1x640xf32> -> vector<1x640xf32>
    %c0_208 = arith.constant 0 : index
    %c0_209 = arith.constant 0 : index
    %293 = vector.load %arg10[%c0_208, %c0_209] : memref<1x640xf32, #tpu.memory_space<vmem>>, vector<1x640xf32>
    %294 = arith.addf %292, %293 : vector<1x640xf32>
    %cst_210 = arith.constant 0.000000e+00 : f32
    %295 = vector.broadcast %cst_210 : f32 to vector<1x640xf32>
    %296 = arith.maximumf %294, %295 : vector<1x640xf32>
    %297 = arith.truncf %296 : vector<1x640xf32> to vector<1x640xbf16>
    %c0_211 = arith.constant 0 : index
    %c0_212 = arith.constant 0 : index
    %298 = vector.load %arg11[%c0_211, %c0_212] : memref<640x128xbf16, #tpu.memory_space<vmem>>, vector<640x128xbf16>
    %cst_213 = arith.constant dense<0.000000e+00> : vector<1x128xf32>
    %299 = tpu.matmul %297, %298, %cst_213 {dimension_numbers = #tpu.dot_dimension_numbers<[1], [0], [0], [1], [0, 0, 1, 1], [], []>} : vector<1x640xbf16>, vector<640x128xbf16>, vector<1x128xf32> -> vector<1x128xf32>
    %c0_214 = arith.constant 0 : index
    %c0_215 = arith.constant 0 : index
    %300 = vector.load %arg12[%c0_214, %c0_215] : memref<1x128xf32, #tpu.memory_space<vmem>>, vector<1x128xf32>
    %301 = arith.addf %299, %300 : vector<1x128xf32>
    %cst_216 = arith.constant 0.000000e+00 : f32
    %302 = vector.broadcast %cst_216 : f32 to vector<1x128xf32>
    %303 = arith.maximumf %301, %302 : vector<1x128xf32>
    %304 = arith.truncf %303 : vector<1x128xf32> to vector<1x128xbf16>
    %c0_217 = arith.constant 0 : index
    %c0_218 = arith.constant 0 : index
    %305 = vector.load %arg13[%c0_217, %c0_218] : memref<128x128xbf16, #tpu.memory_space<vmem>>, vector<128x128xbf16>
    %cst_219 = arith.constant dense<0.000000e+00> : vector<1x128xf32>
    %306 = tpu.matmul %304, %305, %cst_219 {dimension_numbers = #tpu.dot_dimension_numbers<[1], [0], [0], [1], [0, 0, 1, 1], [], []>} : vector<1x128xbf16>, vector<128x128xbf16>, vector<1x128xf32> -> vector<1x128xf32>
    %c0_220 = arith.constant 0 : index
    %c0_221 = arith.constant 0 : index
    %307 = vector.load %arg14[%c0_220, %c0_221] : memref<1x128xf32, #tpu.memory_space<vmem>>, vector<1x128xf32>
    %308 = arith.addf %306, %307 : vector<1x128xf32>
    %309 = tpu.iota {dimensions = array<i32: 1>} : vector<1x128xi32>
    %c10_i32 = arith.constant 10 : i32
    %310 = vector.broadcast %c10_i32 : i32 to vector<1x128xi32>
    %311 = arith.cmpi slt, %309, %310 : vector<1x128xi32>
    %cst_222 = arith.constant -1.000000e+30 : f32
    %312 = vector.broadcast %cst_222 : f32 to vector<1x128xf32>
    %313 = arith.select %311, %308, %312 : vector<1x128xi1>, vector<1x128xf32>
    %cst_223 = arith.constant dense<0xFF800000> : vector<1xf32>
    %314 = vector.multi_reduction <maximumf>, %313, %cst_223 [1] : vector<1x128xf32> to vector<1xf32>
    %315 = vector.shape_cast %314 : vector<1xf32> to vector<1x1xf32>
    %316 = vector.broadcast %315 : vector<1x1xf32> to vector<1x128xf32>
    %317 = arith.subf %313, %316 : vector<1x128xf32>
    %318 = math.exp %317 : vector<1x128xf32>
    %cst_224 = arith.constant dense<0.000000e+00> : vector<1xf32>
    %319 = vector.multi_reduction <add>, %318, %cst_224 [1] : vector<1x128xf32> to vector<1xf32>
    %320 = vector.shape_cast %319 : vector<1xf32> to vector<1x1xf32>
    %321 = math.log %320 : vector<1x1xf32>
    %322 = vector.broadcast %321 : vector<1x1xf32> to vector<1x128xf32>
    %323 = arith.subf %317, %322 : vector<1x128xf32>
    %c0_225 = arith.constant 0 : index
    %c0_226 = arith.constant 0 : index
    %c0_227 = arith.constant 0 : index
    %324 = vector.load %arg15[%c0_225, %c0_226, %c0_227] : memref<1x1x128xf32, #tpu.memory_space<vmem>>, vector<1x1x128xf32>
    %325 = vector.shape_cast %324 : vector<1x1x128xf32> to vector<1x128xf32>
    %326 = vector.shape_cast %323 : vector<1x128xf32> to vector<1x1x128xf32>
    tpu.vector_store %arg15[%c0_225, %c0_226, %c0_227], %326 {strides = array<i32>} : memref<1x1x128xf32, #tpu.memory_space<vmem>>, vector<1x1x128xf32>,
    return
  }
  func.func @transform_0(%arg0: i32) -> (i32, i32, i32) {
    %c0_i32 = arith.constant 0 : i32
    %c0_i32_0 = arith.constant 0 : i32
    %c0_i32_1 = arith.constant 0 : i32
    return %arg0, %c0_i32, %c0_i32_0 : i32, i32, i32
  }
  func.func @transform_1(%arg0: i32) -> (i32, i32, i32) {
    %c0_i32 = arith.constant 0 : i32
    %c0_i32_0 = arith.constant 0 : i32
    %c0_i32_1 = arith.constant 0 : i32
    %c0_i32_2 = arith.constant 0 : i32
    return %c0_i32, %c0_i32_0, %c0_i32_1 : i32, i32, i32
  }
  func.func @transform_2(%arg0: i32) -> (i32, i32) {
    %c0_i32 = arith.constant 0 : i32
    %c0_i32_0 = arith.constant 0 : i32
    %c0_i32_1 = arith.constant 0 : i32
    return %c0_i32, %c0_i32_0 : i32, i32
  }
  func.func @transform_3(%arg0: i32) -> (i32, i32) {
    %c0_i32 = arith.constant 0 : i32
    %c0_i32_0 = arith.constant 0 : i32
    %c0_i32_1 = arith.constant 0 : i32
    return %c0_i32, %c0_i32_0 : i32, i32
  }
  func.func @transform_4(%arg0: i32) -> (i32, i32, i32) {
    %c0_i32 = arith.constant 0 : i32
    %c0_i32_0 = arith.constant 0 : i32
    %c0_i32_1 = arith.constant 0 : i32
    %c0_i32_2 = arith.constant 0 : i32
    return %c0_i32, %c0_i32_0, %c0_i32_1 : i32, i32, i32
  }
  func.func @transform_5(%arg0: i32) -> (i32, i32) {
    %c0_i32 = arith.constant 0 : i32
    %c0_i32_0 = arith.constant 0 : i32
    %c0_i32_1 = arith.constant 0 : i32
    return %c0_i32, %c0_i32_0 : i32, i32
  }
  func.func @transform_6(%arg0: i32) -> (i32, i32) {
    %c0_i32 = arith.constant 0 : i32
    %c0_i32_0 = arith.constant 0 : i32
    %c0_i32_1 = arith.constant 0 : i32
    return %c0_i32, %c0_i32_0 : i32, i32
  }
  func.func @transform_7(%arg0: i32) -> (i32, i32) {
    %c0_i32 = arith.constant 0 : i32
    %c0_i32_0 = arith.constant 0 : i32
    %c0_i32_1 = arith.constant 0 : i32
    return %c0_i32, %c0_i32_0 : i32, i32
  }
  func.func @transform_8(%arg0: i32) -> (i32, i32) {
    %c0_i32 = arith.constant 0 : i32
    %c0_i32_0 = arith.constant 0 : i32
    %c0_i32_1 = arith.constant 0 : i32
    return %c0_i32, %c0_i32_0 : i32, i32
  }
  func.func @transform_9(%arg0: i32) -> (i32, i32) {
    %c0_i32 = arith.constant 0 : i32
    %c0_i32_0 = arith.constant 0 : i32
    %c0_i32_1 = arith.constant 0 : i32
    return %c0_i32, %c0_i32_0 : i32, i32
  }
  func.func @transform_10(%arg0: i32) -> (i32, i32) {
    %c0_i32 = arith.constant 0 : i32
    %c0_i32_0 = arith.constant 0 : i32
    %c0_i32_1 = arith.constant 0 : i32
    return %c0_i32, %c0_i32_0 : i32, i32
  }
  func.func @transform_11(%arg0: i32) -> (i32, i32) {
    %c0_i32 = arith.constant 0 : i32
    %c0_i32_0 = arith.constant 0 : i32
    %c0_i32_1 = arith.constant 0 : i32
    return %c0_i32, %c0_i32_0 : i32, i32
  }
  func.func @transform_12(%arg0: i32) -> (i32, i32) {
    %c0_i32 = arith.constant 0 : i32
    %c0_i32_0 = arith.constant 0 : i32
    %c0_i32_1 = arith.constant 0 : i32
    return %c0_i32, %c0_i32_0 : i32, i32
  }
  func.func @transform_13(%arg0: i32) -> (i32, i32) {
    %c0_i32 = arith.constant 0 : i32
    %c0_i32_0 = arith.constant 0 : i32
    %c0_i32_1 = arith.constant 0 : i32
    return %c0_i32, %c0_i32_0 : i32, i32
  }
  func.func @transform_14(%arg0: i32) -> (i32, i32, i32) {
    %c0_i32 = arith.constant 0 : i32
    %c0_i32_0 = arith.constant 0 : i32
    %c0_i32_1 = arith.constant 0 : i32
    return %arg0, %c0_i32, %c0_i32_0 : i32, i32, i32
  }
}

</mosaic_0001>

<llo_original>
// kernel: cnn_forward.1
$region0: #{cnn_forward.1}
  #allocation0 [shape = 'u32[]', space=smem, size = 0x4, offset = 0x4, fixed_abs, tag = 'smem constant byte address 0x4 - core index']
  #allocation1 [shape = 'u32[144,128]{1,0:T(1,128)}', space=vmem, size = 0x12000, scoped, tag = 'internal scratch']
  #allocation2 [shape = 'f32[8,1024]{1,0:T(8,128)}', space=vmem, size = 0x8000, scoped, tag = 'scratch operand']
  #allocation3 [shape = 'f32[8,384]{1,0:T(8,128)}', space=vmem, size = 0x3000, scoped, tag = 'scratch operand']
  #allocation4 [shape = 'f32[16,384]{1,0:T(8,128)}', space=vmem, size = 0x6000, scoped, tag = 'scratch operand']
  #allocation5 [shape = 'f32[1,576]{1,0:T(1,128)}', space=vmem, size = 0xa00, scoped, tag = 'scratch operand']
  %s0 = inlined_call_operand.vmem [shape: f32[2,1,1152], index: 0, kind: input, shape index: {}]
  %s1 = inlined_call_operand.vmem [shape: f32[25,8,1], index: 1, kind: input, shape index: {}]
  %s2 = inlined_call_operand.vmem [shape: f32[8,1], index: 2, kind: input, shape index: {}]
  %s3 = inlined_call_operand.vmem [shape: f32[896,256], index: 3, kind: input, shape index: {}]
  %s4 = inlined_call_operand.vmem [shape: f32[9,16,8], index: 4, kind: input, shape index: {}]
  %s5 = inlined_call_operand.vmem [shape: f32[16,1], index: 5, kind: input, shape index: {}]
  %s6 = inlined_call_operand.vmem [shape: f32[256,576], index: 6, kind: input, shape index: {}]
  %s7 = inlined_call_operand.vmem [shape: f32[16,576], index: 7, kind: input, shape index: {}]
  %s8 = inlined_call_operand.vmem [shape: bf16[576,640], index: 8, kind: input, shape index: {}]
  %s9 = inlined_call_operand.hbm [shape: f32[1,640], index: 9, kind: input, shape index: {}]
  %s10 = inlined_call_operand.hbm [shape: bf16[640,128], index: 10, kind: input, shape index: {}]
  %s11 = inlined_call_operand.vmem [shape: f32[1,128], index: 11, kind: input, shape index: {}]
  %s12 = inlined_call_operand.vmem [shape: bf16[128,128], index: 12, kind: input, shape index: {}]
  %s13 = inlined_call_operand.vmem [shape: f32[1,128], index: 13, kind: input, shape index: {}]
  %s14 = inlined_call_operand.hbm [shape: f32[2,1,128], index: 14, kind: output, shape index: {}]
  %s15 = sld [smem:[#allocation0]]
  $region97: #{cnn_forward.1} parent=0
    _
  %s17 = ssub.s32 1, %s15
  %s18 = scalar_select 0, %s17, %s15
  $region1: #{cnn_forward.1} parent=0
    #allocation6 [shape = 'u8[2560]{0}', space=vmem, size = 0xc00, scoped, tag = 'input window, operand 9, single buffered']
    #allocation7 [shape = 's32[2]{0}', space=sflag, size = 0x8, scoped, tag = 'scoped memory for cnn_forward.1']
    #allocation8 [shape = 's32[2]{0}', space=sflag, size = 0x8, scoped, tag = 'scoped memory for cnn_forward.1']
    #allocation9 [shape = 'u8[163840]{0}', space=vmem, size = 0x28000, scoped, tag = 'input window, operand 10, single buffered']
    #allocation10 [shape = 's32[1]{0}', space=sflag, size = 0x4, scoped, tag = 'scoped memory for cnn_forward.1']
    #allocation11 [shape = 'u8[1024]{0}', space=vmem, size = 0x400, scoped, tag = 'output window, operand 0']
    %19 = vsyncpa [#allocation7], 0
    %20 = vsyncpa [#allocation10], 0
    %21 = vsyncpa [#allocation8], 0
    %s22 = scalar_lea.sflag [#allocation8], 1
    %23 = vsyncpa %s22, 0
    loop: start=0, step=1, limit=4
    $region2: #{cnn_forward.1} parent=1 // loop_pre_header
      _
    $region3: #{cnn_forward.1} parent=1 // loop_header
      %s25 = sphi 0, %s29
      %p26 = scmp.ge.s32.totalorder %s25, 4
      %s35 = sphi 0, %s37
      %s38 = sphi 0, %s35
      %s39 = sphi 0, %s38
      %s55 = sphi 0, %s39
      %s59 = sphi 0, %s59
      %s61 = sphi 0, %s59
      %s62 = sphi 0, %s61
      %s76 = sphi 0, %s62
      %s80 = sphi 0, %s80
      %s82 = sphi 0, %s80
      %s83 = sphi 0, %s82
      %s97 = sphi 0, %s83
      %s101 = sphi 0, %s101
      %s103 = sphi 0, %s101
      %s104 = sphi 0, %s103
      %s118 = sphi 0, %s104
      %s122 = sphi 0, %s122
      %s124 = sphi 0, %s122
      %s125 = sphi 0, %s124
      %s139 = sphi 0, %s125
      %s143 = sphi 0, %s143
      %s145 = sphi 0, %s143
      %s146 = sphi 0, %s145
      %s160 = sphi 0, %s146
      %s164 = sphi 0, %s164
      %s166 = sphi 0, %s164
      %s167 = sphi 0, %s166
      %s181 = sphi 0, %s167
      %s185 = sphi 0, %s185
      %s187 = sphi 0, %s185
      %s188 = sphi 0, %s187
      %s202 = sphi 0, %s188
      %s206 = sphi 0, %s206
      %s208 = sphi 0, %s206
      %s209 = sphi 0, %s208
      %s223 = sphi 0, %s209
      %s227 = sphi 0, %s227
      %s229 = sphi 0, %s227
      %s230 = sphi 0, %s229
      %s244 = sphi 0, %s230
      %s248 = sphi 0, %s248
      %s250 = sphi 0, %s248
      %s251 = sphi 0, %s250
      %s265 = sphi 0, %s251
      %s269 = sphi 0, %s269
      %s271 = sphi 0, %s269
      %s272 = sphi 0, %s271
      %s286 = sphi 0, %s272
      %s290 = sphi 0, %s290
      %s292 = sphi 0, %s290
      %s293 = sphi 0, %s292
      %s307 = sphi 0, %s293
      %s311 = sphi 0, %s311
      %s313 = sphi 0, %s311
      %s314 = sphi 0, %s313
      %s328 = sphi 0, %s314
      %s334 = sphi 0, %s336
      %s337 = sphi 0, %s334
      %s338 = sphi 0, %s337
      %s354 = sphi 0, %s338
    $region4: #{cnn_forward.1} parent=1 // loop_header_branch
      %28 = sbr.rel (%p26) target = $region8
    $region5: #{cnn_forward.1} parent=1 // loop_body
      %s30 = ssub.s32 %s25, 1
      %s31 = ssub.s32 %s25, 2
      %s32 = sadd.s32 %s25, 1
      %s33 = ssub.s32 %s25, %s32
      %p34 = scmp.eq.s32.totalorder %s33, 0
      %s36 = sadd.s32 %s35, 1
      %s37 = scalar_select %p34, %s35, %s36
      %p40 = pneg %p34
      %p41 = scmp.eq.s32.totalorder %s25, 1
      %p42 = por %p40, %p41
      %p43 = scmp.ne.s32.totalorder %s35, %s38
      %p44 = scmp.eq.s32.totalorder %s25, 0
      %p45 = por %p43, %p44
      %p46 = scmp.ne.s32.totalorder %s35, %s38
      %p47 = scmp.eq.s32.totalorder %s30, 1
      %p48 = por %p46, %p47
      %p49 = scmp.ne.s32.totalorder %s38, %s39
      %p50 = scmp.eq.s32.totalorder %s30, 0
      %p51 = por %p49, %p50
      %p52 = scmp.ne.s32.totalorder %s38, %s39
      %p53 = scmp.eq.s32.totalorder %s31, 1
      %p54 = por %p52, %p53
      %p56 = scmp.ne.s32.totalorder %s39, %s55
      %p57 = scmp.eq.s32.totalorder %s31, 0
      %p58 = por %p56, %p57
      %s60 = sadd.s32 %s59, 1
      %p63 = scmp.eq.s32.totalorder %s25, 1
      %p64 = scmp.ne.s32.totalorder %s59, %s61
      %p65 = scmp.eq.s32.totalorder %s25, 0
      %p66 = por %p64, %p65
      %p67 = scmp.ne.s32.totalorder %s59, %s61
      %p68 = scmp.eq.s32.totalorder %s30, 1
      %p69 = por %p67, %p68
      %p70 = scmp.ne.s32.totalorder %s61, %s62
      %p71 = scmp.eq.s32.totalorder %s30, 0
      %p72 = por %p70, %p71
      %p73 = scmp.ne.s32.totalorder %s61, %s62
      %p74 = scmp.eq.s32.totalorder %s31, 1
      %p75 = por %p73, %p74
      %p77 = scmp.ne.s32.totalorder %s62, %s76
      %p78 = scmp.eq.s32.totalorder %s31, 0
      %p79 = por %p77, %p78
      %s81 = sadd.s32 %s80, 1
      %p84 = scmp.eq.s32.totalorder %s25, 1
      %p85 = scmp.ne.s32.totalorder %s80, %s82
      %p86 = scmp.eq.s32.totalorder %s25, 0
      %p87 = por %p85, %p86
      %p88 = scmp.ne.s32.totalorder %s80, %s82
      %p89 = scmp.eq.s32.totalorder %s30, 1
      %p90 = por %p88, %p89
      %p91 = scmp.ne.s32.totalorder %s82, %s83
      %p92 = scmp.eq.s32.totalorder %s30, 0
      %p93 = por %p91, %p92
      %p94 = scmp.ne.s32.totalorder %s82, %s83
      %p95 = scmp.eq.s32.totalorder %s31, 1
      %p96 = por %p94, %p95
      %p98 = scmp.ne.s32.totalorder %s83, %s97
      %p99 = scmp.eq.s32.totalorder %s31, 0
      %p100 = por %p98, %p99
      %s102 = sadd.s32 %s101, 1
      %p105 = scmp.eq.s32.totalorder %s25, 1
      %p106 = scmp.ne.s32.totalorder %s101, %s103
      %p107 = scmp.eq.s32.totalorder %s25, 0
      %p108 = por %p106, %p107
      %p109 = scmp.ne.s32.totalorder %s101, %s103
      %p110 = scmp.eq.s32.totalorder %s30, 1
      %p111 = por %p109, %p110
      %p112 = scmp.ne.s32.totalorder %s103, %s104
      %p113 = scmp.eq.s32.totalorder %s30, 0
      %p114 = por %p112, %p113
      %p115 = scmp.ne.s32.totalorder %s103, %s104
      %p116 = scmp.eq.s32.totalorder %s31, 1
      %p117 = por %p115, %p116
      %p119 = scmp.ne.s32.totalorder %s104, %s118
      %p120 = scmp.eq.s32.totalorder %s31, 0
      %p121 = por %p119, %p120
      %s123 = sadd.s32 %s122, 1
      %p126 = scmp.eq.s32.totalorder %s25, 1
      %p127 = scmp.ne.s32.totalorder %s122, %s124
      %p128 = scmp.eq.s32.totalorder %s25, 0
      %p129 = por %p127, %p128
      %p130 = scmp.ne.s32.totalorder %s122, %s124
      %p131 = scmp.eq.s32.totalorder %s30, 1
      %p132 = por %p130, %p131
      %p133 = scmp.ne.s32.totalorder %s124, %s125
      %p134 = scmp.eq.s32.totalorder %s30, 0
      %p135 = por %p133, %p134
      %p136 = scmp.ne.s32.totalorder %s124, %s125
      %p137 = scmp.eq.s32.totalorder %s31, 1
      %p138 = por %p136, %p137
      %p140 = scmp.ne.s32.totalorder %s125, %s139
      %p141 = scmp.eq.s32.totalorder %s31, 0
      %p142 = por %p140, %p141
      %s144 = sadd.s32 %s143, 1
      %p147 = scmp.eq.s32.totalorder %s25, 1
      %p148 = scmp.ne.s32.totalorder %s143, %s145
      %p149 = scmp.eq.s32.totalorder %s25, 0
      %p150 = por %p148, %p149
      %p151 = scmp.ne.s32.totalorder %s143, %s145
      %p152 = scmp.eq.s32.totalorder %s30, 1
      %p153 = por %p151, %p152
      %p154 = scmp.ne.s32.totalorder %s145, %s146
      %p155 = scmp.eq.s32.totalorder %s30, 0
      %p156 = por %p154, %p155
      %p157 = scmp.ne.s32.totalorder %s145, %s146
      %p158 = scmp.eq.s32.totalorder %s31, 1
      %p159 = por %p157, %p158
      %p161 = scmp.ne.s32.totalorder %s146, %s160
      %p162 = scmp.eq.s32.totalorder %s31, 0
      %p163 = por %p161, %p162
      %s165 = sadd.s32 %s164, 1
      %p168 = scmp.eq.s32.totalorder %s25, 1
      %p169 = scmp.ne.s32.totalorder %s164, %s166
      %p170 = scmp.eq.s32.totalorder %s25, 0
      %p171 = por %p169, %p170
      %p172 = scmp.ne.s32.totalorder %s164, %s166
      %p173 = scmp.eq.s32.totalorder %s30, 1
      %p174 = por %p172, %p173
      %p175 = scmp.ne.s32.totalorder %s166, %s167
      %p176 = scmp.eq.s32.totalorder %s30, 0
      %p177 = por %p175, %p176
      %p178 = scmp.ne.s32.totalorder %s166, %s167
      %p179 = scmp.eq.s32.totalorder %s31, 1
      %p180 = por %p178, %p179
      %p182 = scmp.ne.s32.totalorder %s167, %s181
      %p183 = scmp.eq.s32.totalorder %s31, 0
      %p184 = por %p182, %p183
      %s186 = sadd.s32 %s185, 1
      %p189 = scmp.eq.s32.totalorder %s25, 1
      %p190 = scmp.ne.s32.totalorder %s185, %s187
      %p191 = scmp.eq.s32.totalorder %s25, 0
      %p192 = por %p190, %p191
      %p193 = scmp.ne.s32.totalorder %s185, %s187
      %p194 = scmp.eq.s32.totalorder %s30, 1
      %p195 = por %p193, %p194
      %p196 = scmp.ne.s32.totalorder %s187, %s188
      %p197 = scmp.eq.s32.totalorder %s30, 0
      %p198 = por %p196, %p197
      %p199 = scmp.ne.s32.totalorder %s187, %s188
      %p200 = scmp.eq.s32.totalorder %s31, 1
      %p201 = por %p199, %p200
      %p203 = scmp.ne.s32.totalorder %s188, %s202
      %p204 = scmp.eq.s32.totalorder %s31, 0
      %p205 = por %p203, %p204
      %s207 = sadd.s32 %s206, 1
      %p210 = scmp.eq.s32.totalorder %s25, 1
      %p211 = scmp.ne.s32.totalorder %s206, %s208
      %p212 = scmp.eq.s32.totalorder %s25, 0
      %p213 = por %p211, %p212
      %p214 = scmp.ne.s32.totalorder %s206, %s208
      %p215 = scmp.eq.s32.totalorder %s30, 1
      %p216 = por %p214, %p215
      %p217 = scmp.ne.s32.totalorder %s208, %s209
      %p218 = scmp.eq.s32.totalorder %s30, 0
      %p219 = por %p217, %p218
      %p220 = scmp.ne.s32.totalorder %s208, %s209
      %p221 = scmp.eq.s32.totalorder %s31, 1
      %p222 = por %p220, %p221
      %p224 = scmp.ne.s32.totalorder %s209, %s223
      %p225 = scmp.eq.s32.totalorder %s31, 0
      %p226 = por %p224, %p225
      %s228 = sadd.s32 %s227, 1
      %p231 = scmp.eq.s32.totalorder %s25, 1
      %p232 = scmp.ne.s32.totalorder %s227, %s229
      %p233 = scmp.eq.s32.totalorder %s25, 0
      %p234 = por %p232, %p233
      %p235 = scmp.ne.s32.totalorder %s227, %s229
      %p236 = scmp.eq.s32.totalorder %s30, 1
      %p237 = por %p235, %p236
      %p238 = scmp.ne.s32.totalorder %s229, %s230
      %p239 = scmp.eq.s32.totalorder %s30, 0
      %p240 = por %p238, %p239
      %p241 = scmp.ne.s32.totalorder %s229, %s230
      %p242 = scmp.eq.s32.totalorder %s31, 1
      %p243 = por %p241, %p242
      %p245 = scmp.ne.s32.totalorder %s230, %s244
      %p246 = scmp.eq.s32.totalorder %s31, 0
      %p247 = por %p245, %p246
      %s249 = sadd.s32 %s248, 1
      %p252 = scmp.eq.s32.totalorder %s25, 1
      %p253 = scmp.ne.s32.totalorder %s248, %s250
      %p254 = scmp.eq.s32.totalorder %s25, 0
      %p255 = por %p253, %p254
      %p256 = scmp.ne.s32.totalorder %s248, %s250
      %p257 = scmp.eq.s32.totalorder %s30, 1
      %p258 = por %p256, %p257
      %p259 = scmp.ne.s32.totalorder %s250, %s251
      %p260 = scmp.eq.s32.totalorder %s30, 0
      %p261 = por %p259, %p260
      %p262 = scmp.ne.s32.totalorder %s250, %s251
      %p263 = scmp.eq.s32.totalorder %s31, 1
      %p264 = por %p262, %p263
      %p266 = scmp.ne.s32.totalorder %s251, %s265
      %p267 = scmp.eq.s32.totalorder %s31, 0
      %p268 = por %p266, %p267
      %s270 = sadd.s32 %s269, 1
      %p273 = scmp.eq.s32.totalorder %s25, 1
      %p274 = scmp.ne.s32.totalorder %s269, %s271
      %p275 = scmp.eq.s32.totalorder %s25, 0
      %p276 = por %p274, %p275
      %p277 = scmp.ne.s32.totalorder %s269, %s271
      %p278 = scmp.eq.s32.totalorder %s30, 1
      %p279 = por %p277, %p278
      %p280 = scmp.ne.s32.totalorder %s271, %s272
      %p281 = scmp.eq.s32.totalorder %s30, 0
      %p282 = por %p280, %p281
      %p283 = scmp.ne.s32.totalorder %s271, %s272
      %p284 = scmp.eq.s32.totalorder %s31, 1
      %p285 = por %p283, %p284
      %p287 = scmp.ne.s32.totalorder %s272, %s286
      %p288 = scmp.eq.s32.totalorder %s31, 0
      %p289 = por %p287, %p288
      %s291 = sadd.s32 %s290, 1
      %p294 = scmp.eq.s32.totalorder %s25, 1
      %p295 = scmp.ne.s32.totalorder %s290, %s292
      %p296 = scmp.eq.s32.totalorder %s25, 0
      %p297 = por %p295, %p296
      %p298 = scmp.ne.s32.totalorder %s290, %s292
      %p299 = scmp.eq.s32.totalorder %s30, 1
      %p300 = por %p298, %p299
      %p301 = scmp.ne.s32.totalorder %s292, %s293
      %p302 = scmp.eq.s32.totalorder %s30, 0
      %p303 = por %p301, %p302
      %p304 = scmp.ne.s32.totalorder %s292, %s293
      %p305 = scmp.eq.s32.totalorder %s31, 1
      %p306 = por %p304, %p305
      %p308 = scmp.ne.s32.totalorder %s293, %s307
      %p309 = scmp.eq.s32.totalorder %s31, 0
      %p310 = por %p308, %p309
      %s312 = sadd.s32 %s311, 1
      %p315 = scmp.eq.s32.totalorder %s25, 1
      %p316 = scmp.ne.s32.totalorder %s311, %s313
      %p317 = scmp.eq.s32.totalorder %s25, 0
      %p318 = por %p316, %p317
      %p319 = scmp.ne.s32.totalorder %s311, %s313
      %p320 = scmp.eq.s32.totalorder %s30, 1
      %p321 = por %p319, %p320
      %p322 = scmp.ne.s32.totalorder %s313, %s314
      %p323 = scmp.eq.s32.totalorder %s30, 0
      %p324 = por %p322, %p323
      %p325 = scmp.ne.s32.totalorder %s313, %s314
      %p326 = scmp.eq.s32.totalorder %s31, 1
      %p327 = por %p325, %p326
      %p329 = scmp.ne.s32.totalorder %s314, %s328
      %p330 = scmp.eq.s32.totalorder %s31, 0
      %p331 = por %p329, %p330
      %s332 = ssub.s32 %s25, %s32
      %p333 = scmp.eq.s32.totalorder %s332, 0
      %s335 = sadd.s32 %s334, 1
      %s336 = scalar_select %p333, %s334, %s335
      %p339 = pneg %p333
      %p340 = scmp.eq.s32.totalorder %s25, 1
      %p341 = por %p339, %p340
      %p342 = scmp.ne.s32.totalorder %s334, %s337
      %p343 = scmp.eq.s32.totalorder %s25, 0
      %p344 = por %p342, %p343
      %p345 = scmp.ne.s32.totalorder %s334, %s337
      %p346 = scmp.eq.s32.totalorder %s30, 1
      %p347 = por %p345, %p346
      %p348 = scmp.ne.s32.totalorder %s337, %s338
      %p349 = scmp.eq.s32.totalorder %s30, 0
      %p350 = por %p348, %p349
      %p351 = scmp.ne.s32.totalorder %s337, %s338
      %p352 = scmp.eq.s32.totalorder %s31, 1
      %p353 = por %p351, %p352
      %p355 = scmp.ne.s32.totalorder %s338, %s354
      %p356 = scmp.eq.s32.totalorder %s31, 0
      %p357 = por %p355, %p356
      %p358 = scmp.le.s32.totalorder 1, %s25
      %p359 = scmp.lt.s32.totalorder %s25, 3
      %p360 = pnand %p358, %p359
      %p361 = pneg %p360
      // Predicated region
      $region9: #{cnn_forward.1} parent=5 // pred_check
        _
      $region10: #{cnn_forward.1} parent=5 // pred_check_branch
        %363 = sbr.rel (%p360) target = $region12
      $region11: #{cnn_forward.1} parent=5 // pred_region
        %s364 = ssub.s32 %s25, 1
        // Predicated region
        $region13: #{cnn_forward.1} parent=11 // pred_check
          %p365 = pneg %p72
        $region14: #{cnn_forward.1} parent=11 // pred_check_branch
          %367 = sbr.rel (%p365) target = $region16
        $region15: #{cnn_forward.1} parent=11 // pred_region
          _
        $region16: #{cnn_forward.1} parent=11 // pred_fallthru
          _
        // Predicated region
        $region17: #{cnn_forward.1} parent=11 // pred_check
          %p368 = pneg %p93
        $region18: #{cnn_forward.1} parent=11 // pred_check_branch
          %370 = sbr.rel (%p368) target = $region20
        $region19: #{cnn_forward.1} parent=11 // pred_region
          _
        $region20: #{cnn_forward.1} parent=11 // pred_fallthru
          _
        // Predicated region
        $region21: #{cnn_forward.1} parent=11 // pred_check
          %p371 = pneg %p114
        $region22: #{cnn_forward.1} parent=11 // pred_check_branch
          %373 = sbr.rel (%p371) target = $region24
        $region23: #{cnn_forward.1} parent=11 // pred_region
          _
        $region24: #{cnn_forward.1} parent=11 // pred_fallthru
          _
        // Predicated region
        $region25: #{cnn_forward.1} parent=11 // pred_check
          %p374 = pneg %p135
        $region26: #{cnn_forward.1} parent=11 // pred_check_branch
          %376 = sbr.rel (%p374) target = $region28
        $region27: #{cnn_forward.1} parent=11 // pred_region
          _
        $region28: #{cnn_forward.1} parent=11 // pred_fallthru
          _
        // Predicated region
        $region29: #{cnn_forward.1} parent=11 // pred_check
          %p377 = pneg %p156
        $region30: #{cnn_forward.1} parent=11 // pred_check_branch
          %379 = sbr.rel (%p377) target = $region32
        $region31: #{cnn_forward.1} parent=11 // pred_region
          _
        $region32: #{cnn_forward.1} parent=11 // pred_fallthru
          _
        // Predicated region
        $region33: #{cnn_forward.1} parent=11 // pred_check
          %p380 = pneg %p177
        $region34: #{cnn_forward.1} parent=11 // pred_check_branch
          %382 = sbr.rel (%p380) target = $region36
        $region35: #{cnn_forward.1} parent=11 // pred_region
          _
        $region36: #{cnn_forward.1} parent=11 // pred_fallthru
          _
        // Predicated region
        $region37: #{cnn_forward.1} parent=11 // pred_check
          %p383 = pneg %p198
        $region38: #{cnn_forward.1} parent=11 // pred_check_branch
          %385 = sbr.rel (%p383) target = $region40
        $region39: #{cnn_forward.1} parent=11 // pred_region
          _
        $region40: #{cnn_forward.1} parent=11 // pred_fallthru
          _
        // Predicated region
        $region41: #{cnn_forward.1} parent=11 // pred_check
          %p386 = pneg %p219
        $region42: #{cnn_forward.1} parent=11 // pred_check_branch
          %388 = sbr.rel (%p386) target = $region44
        $region43: #{cnn_forward.1} parent=11 // pred_region
          _
        $region44: #{cnn_forward.1} parent=11 // pred_fallthru
          _
        // Predicated region
        $region45: #{cnn_forward.1} parent=11 // pred_check
          %p389 = pneg %p240
        $region46: #{cnn_forward.1} parent=11 // pred_check_branch
          %391 = sbr.rel (%p389) target = $region48
        $region47: #{cnn_forward.1} parent=11 // pred_region
          %s393 = ssub.s32 80, 80
          %394 = vsyncadd [#allocation7], %s393
          %s396 = sshll.u32 [#allocation6], 4
          %s397 = int_to_ptr.vmem [resolvable:$true] %s396
          %399 = dma.hbm_to_vmem [thread:$0]  %s9, 80, %s397, [#allocation7]
        $region48: #{cnn_forward.1} parent=11 // pred_fallthru
          _
        // Predicated region
        $region49: #{cnn_forward.1} parent=11 // pred_check
          %p400 = pneg %p261
        $region50: #{cnn_forward.1} parent=11 // pred_check_branch
          %402 = sbr.rel (%p400) target = $region52
        $region51: #{cnn_forward.1} parent=11 // pred_region
          %s404 = ssub.s32 5120, 5120
          %405 = vsyncadd [#allocation10], %s404
          %s406 = sshll.u32 [#allocation9], 4
          %s407 = int_to_ptr.vmem [resolvable:$true] %s406
          %412 = dma.hbm_to_vmem [thread:$0]  %s10, 5120, %s407, [#allocation10], 64, 64, 4
        $region52: #{cnn_forward.1} parent=11 // pred_fallthru
          _
        // Predicated region
        $region53: #{cnn_forward.1} parent=11 // pred_check
          %p413 = pneg %p282
        $region54: #{cnn_forward.1} parent=11 // pred_check_branch
          %415 = sbr.rel (%p413) target = $region56
        $region55: #{cnn_forward.1} parent=11 // pred_region
          _
        $region56: #{cnn_forward.1} parent=11 // pred_fallthru
          _
        // Predicated region
        $region57: #{cnn_forward.1} parent=11 // pred_check
          %p416 = pneg %p303
        $region58: #{cnn_forward.1} parent=11 // pred_check_branch
          %418 = sbr.rel (%p416) target = $region60
        $region59: #{cnn_forward.1} parent=11 // pred_region
          _
        $region60: #{cnn_forward.1} parent=11 // pred_fallthru
          _
        // Predicated region
        $region61: #{cnn_forward.1} parent=11 // pred_check
          %p419 = pneg %p324
        $region62: #{cnn_forward.1} parent=11 // pred_check_branch
          %421 = sbr.rel (%p419) target = $region64
        $region63: #{cnn_forward.1} parent=11 // pred_region
          _
        $region64: #{cnn_forward.1} parent=11 // pred_fallthru
          _
      $region12: #{cnn_forward.1} parent=5 // pred_fallthru
        _
      %p422 = scmp.lt.s32.totalorder %s25, 2
      // Predicated region
      $region65: #{cnn_forward.1} parent=5 // pred_check
        %p423 = pneg %p422
      $region66: #{cnn_forward.1} parent=5 // pred_check_branch
        %425 = sbr.rel (%p423) target = $region68
      $region67: #{cnn_forward.1} parent=5 // pred_region
        // Predicated region
        $region69: #{cnn_forward.1} parent=67 // pred_check
          %p426 = pneg %p45
        $region70: #{cnn_forward.1} parent=67 // pred_check_branch
          %428 = sbr.rel (%p426) target = $region72
        $region71: #{cnn_forward.1} parent=67 // pred_region
          %p429 = scmp.lt.s32.totalorder %s25, 1
          %s430 = scalar_select %p429, %s25, 1
          %s431 = smul.addr %s430, 9
          %s432 = scalar_lea.vmem %s0, %s431
        $region72: #{cnn_forward.1} parent=67 // pred_fallthru
          _
      $region68: #{cnn_forward.1} parent=5 // pred_fallthru
        _
      %p433 = scmp.le.s32.totalorder 1, %s25
      %p434 = scmp.lt.s32.totalorder %s25, 3
      %p435 = pnand %p433, %p434
      %p436 = pneg %p435
      // Predicated region
      $region73: #{cnn_forward.1} parent=5 // pred_check
        _
      $region74: #{cnn_forward.1} parent=5 // pred_check_branch
        %438 = sbr.rel (%p435) target = $region76
      $region75: #{cnn_forward.1} parent=5 // pred_region
        %s439 = ssub.s32 %s25, 1
        // Predicated region
        $region77: #{cnn_forward.1} parent=75 // pred_check
          %p440 = pneg %p240
        $region78: #{cnn_forward.1} parent=75 // pred_check_branch
          %442 = sbr.rel (%p440) target = $region80
        $region79: #{cnn_forward.1} parent=75 // pred_region
          %443 = dma.done [#allocation7], 80
        $region80: #{cnn_forward.1} parent=75 // pred_fallthru
          _
        // Predicated region
        $region81: #{cnn_forward.1} parent=75 // pred_check
          %p444 = pneg %p261
        $region82: #{cnn_forward.1} parent=75 // pred_check_branch
          %446 = sbr.rel (%p444) target = $region84
        $region83: #{cnn_forward.1} parent=75 // pred_region
          %447 = dma.done [#allocation10], 5120
        $region84: #{cnn_forward.1} parent=75 // pred_fallthru
          _
        %p448 = scmp.lt.s32.totalorder %s30, 1
        %s449 = scalar_select %p448, %s30, 1
        %s450 = smul.addr %s449, 9
        %s451 = scalar_lea.vmem %s0, %s450
        %p452 = pneg %p51
        %p453 = pneg %p48
        %p454 = pneg %p72
        %p455 = pneg %p69
        %p456 = pneg %p93
        %p457 = pneg %p90
        %p458 = pneg %p114
        %p459 = pneg %p111
        %p460 = pneg %p135
        %p461 = pneg %p132
        %p462 = pneg %p156
        %p463 = pneg %p153
        %p464 = pneg %p177
        %p465 = pneg %p174
        %p466 = pneg %p198
        %p467 = pneg %p195
        %p468 = pneg %p219
        %p469 = pneg %p216
        %p470 = pneg %p240
        %p471 = pneg %p237
        %p472 = pneg %p261
        %p473 = pneg %p258
        %p474 = pneg %p282
        %p475 = pneg %p279
        %p476 = pneg %p303
        %p477 = pneg %p300
        %p478 = pneg %p324
        %p479 = pneg %p321
        %p480 = pneg %p350
        %p481 = pneg %p347
        %s482 = sand.u32 %s337, 1
        %s483 = scalar_lea.sflag [#allocation8], %s482
        %s484 = sand.u32 %s337, 1
        %s485 = scalar_lea.vmem [#allocation11], %s484
        %p486 = scmp.lt.s32.totalorder %s30, 1
        %s487 = scalar_select %p486, %s30, 1
        %s488 = smul.addr %s487, 9
        %s489 = scalar_lea.vmem %s0, %s488
        %v491 = vld [vmem:[%s489] sm:$0xff]
        %v492 = vld [vmem:[%s1] sm:$0xff]
        %494 = vset.pattern.permute.xlu0 0
        %495 = vperm.xlu0 %494, %v492
        %v496 = vpop.permute.xlu0 %495
        %v499 = vlaneseq
        %v500 = vshrl.u32 %v499, 7
        %v501 = vsub.s32 0, %v500
        %v502 = vrot.slane %v491, %v501
        %v503 = vlaneseq
        %v504 = vshrl.u32 %v503, 7
        %v505 = vsub.s32 1, %v504
        %v506 = vrot.slane %v491, %v505
        %v507 = vlaneseq
        %v508 = vshrl.u32 %v507, 7
        %v509 = vsub.s32 2, %v508
        %v510 = vrot.slane %v491, %v509
        %v511 = vlaneseq
        %v512 = vshrl.u32 %v511, 7
        %v513 = vsub.s32 3, %v512
        %v514 = vrot.slane %v491, %v513
        %v515 = vlaneseq
        %v516 = vshrl.u32 %v515, 7
        %v517 = vsub.s32 4, %v516
        %v518 = vrot.slane %v491, %v517
        %v519 = vlaneseq
        %v520 = vshrl.u32 %v519, 7
        %v521 = vsub.s32 5, %v520
        %v522 = vrot.slane %v491, %v521
        %v523 = vlaneseq
        %v524 = vshrl.u32 %v523, 7
        %v525 = vsub.s32 6, %v524
        %v526 = vrot.slane %v491, %v525
        %v534 = vmul.f32 %v496, %v502
        %v535 = vmul.f32 %v496, %v506
        %v536 = vmul.f32 %v496, %v510
        %v537 = vmul.f32 %v496, %v514
        %v538 = vmul.f32 %v496, %v518
        %v539 = vmul.f32 %v496, %v522
        %v540 = vmul.f32 %v496, %v526
        %v541 = vadd.f32 %v534, 0.0
        %v542 = vadd.f32 %v535, 0.0
        %v543 = vadd.f32 %v536, 0.0
        %v544 = vadd.f32 %v537, 0.0
        %v545 = vadd.f32 %v538, 0.0
        %v546 = vadd.f32 %v539, 0.0
        %v547 = vadd.f32 %v540, 0.0
        %v548 = vld [vmem:[%s489] sm:$0xff]
        %s549 = scalar_lea.vmem %s1, 8
        %v550 = vld [vmem:[%s549] sm:$0xff]
        %552 = vset.pattern.permute.xlu0 0
        %553 = vperm.xlu0 %552, %v550
        %v554 = vpop.permute.xlu0 %553
        %v557 = vlaneseq
        %v558 = vshrl.u32 %v557, 7
        %v559 = vsub.s32 0, %v558
        %v560 = vrot.slane %v548, %v559
        %v561 = vlaneseq
        %v562 = vshrl.u32 %v561, 7
        %v563 = vsub.s32 1, %v562
        %v564 = vrot.slane %v548, %v563
        %v565 = vlaneseq
        %v566 = vshrl.u32 %v565, 7
        %v567 = vsub.s32 2, %v566
        %v568 = vrot.slane %v548, %v567
        %v569 = vlaneseq
        %v570 = vshrl.u32 %v569, 7
        %v571 = vsub.s32 3, %v570
        %v572 = vrot.slane %v548, %v571
        %v573 = vlaneseq
        %v574 = vshrl.u32 %v573, 7
        %v575 = vsub.s32 4, %v574
        %v576 = vrot.slane %v548, %v575
        %v577 = vlaneseq
        %v578 = vshrl.u32 %v577, 7
        %v579 = vsub.s32 5, %v578
        %v580 = vrot.slane %v548, %v579
        %v581 = vlaneseq
        %v582 = vshrl.u32 %v581, 7
        %v583 = vsub.s32 6, %v582
        %v584 = vrot.slane %v548, %v583
        %v585 = vlaneseq
        %v586 = vshrl.u32 %v585, 7
        %v587 = vsub.s32 7, %v586
        %v588 = vrot.slane %v548, %v587
        %v597 = vmul.f32 %v554, %v560
        %v598 = vmul.f32 %v554, %v564
        %v599 = vmul.f32 %v554, %v568
        %v600 = vmul.f32 %v554, %v572
        %v601 = vmul.f32 %v554, %v576
        %v602 = vmul.f32 %v554, %v580
        %v603 = vmul.f32 %v554, %v584
        %v604 = vmul.f32 %v554, %v588
        %613 = vrot.lane.b32.xlu0 %v597, 127
        %v614 = vpop.permute.xlu0 %613
        %615 = vrot.lane.b32.xlu0 %v598, 127
        %v616 = vpop.permute.xlu0 %615
        %617 = vrot.lane.b32.xlu0 %v599, 127
        %v618 = vpop.permute.xlu0 %617
        %619 = vrot.lane.b32.xlu0 %v600, 127
        %v620 = vpop.permute.xlu0 %619
        %621 = vrot.lane.b32.xlu0 %v601, 127
        %v622 = vpop.permute.xlu0 %621
        %623 = vrot.lane.b32.xlu0 %v602, 127
        %v624 = vpop.permute.xlu0 %623
        %625 = vrot.lane.b32.xlu0 %v603, 127
        %v626 = vpop.permute.xlu0 %625
        %627 = vrot.lane.b32.xlu0 %v604, 127
        %v628 = vpop.permute.xlu0 %627
        %vm629 = vcmask 1039360
        %v630 = vsel %vm629, %v614, %v616
        %v631 = vsel %vm629, %v616, %v618
        %v632 = vsel %vm629, %v618, %v620
        %v633 = vsel %vm629, %v620, %v622
        %v634 = vsel %vm629, %v622, %v624
        %v635 = vsel %vm629, %v624, %v626
        %v636 = vsel %vm629, %v626, %v628
        %v644 = vadd.f32 %v541, %v630
        %v645 = vadd.f32 %v542, %v631
        %v646 = vadd.f32 %v543, %v632
        %v647 = vadd.f32 %v544, %v633
        %v648 = vadd.f32 %v545, %v634
        %v649 = vadd.f32 %v546, %v635
        %v650 = vadd.f32 %v547, %v636
        %s651 = scalar_lea.vmem %s1, 16
        %v652 = vld [vmem:[%s651] sm:$0xff]
        %654 = vset.pattern.permute.xlu0 0
        %655 = vperm.xlu0 %654, %v652
        %v656 = vpop.permute.xlu0 %655
        %v658 = vmul.f32 %v656, %v560
        %v659 = vmul.f32 %v656, %v564
        %v660 = vmul.f32 %v656, %v568
        %v661 = vmul.f32 %v656, %v572
        %v662 = vmul.f32 %v656, %v576
        %v663 = vmul.f32 %v656, %v580
        %v664 = vmul.f32 %v656, %v584
        %v665 = vmul.f32 %v656, %v588
        %674 = vrot.lane.b32.xlu0 %v658, 126
        %v675 = vpop.permute.xlu0 %674
        %676 = vrot.lane.b32.xlu0 %v659, 126
        %v677 = vpop.permute.xlu0 %676
        %678 = vrot.lane.b32.xlu0 %v660, 126
        %v679 = vpop.permute.xlu0 %678
        %680 = vrot.lane.b32.xlu0 %v661, 126
        %v681 = vpop.permute.xlu0 %680
        %682 = vrot.lane.b32.xlu0 %v662, 126
        %v683 = vpop.permute.xlu0 %682
        %684 = vrot.lane.b32.xlu0 %v663, 126
        %v685 = vpop.permute.xlu0 %684
        %686 = vrot.lane.b32.xlu0 %v664, 126
        %v687 = vpop.permute.xlu0 %686
        %688 = vrot.lane.b32.xlu0 %v665, 126
        %v689 = vpop.permute.xlu0 %688
        %vm690 = vcmask 1031168
        %v691 = vsel %vm690, %v675, %v677
        %v692 = vsel %vm690, %v677, %v679
        %v693 = vsel %vm690, %v679, %v681
        %v694 = vsel %vm690, %v681, %v683
        %v695 = vsel %vm690, %v683, %v685
        %v696 = vsel %vm690, %v685, %v687
        %v697 = vsel %vm690, %v687, %v689
        %v705 = vadd.f32 %v644, %v691
        %v706 = vadd.f32 %v645, %v692
        %v707 = vadd.f32 %v646, %v693
        %v708 = vadd.f32 %v647, %v694
        %v709 = vadd.f32 %v648, %v695
        %v710 = vadd.f32 %v649, %v696
        %v711 = vadd.f32 %v650, %v697
        %s712 = scalar_lea.vmem %s1, 24
        %v713 = vld [vmem:[%s712] sm:$0xff]
        %715 = vset.pattern.permute.xlu0 0
        %716 = vperm.xlu0 %715, %v713
        %v717 = vpop.permute.xlu0 %716
        %v719 = vmul.f32 %v717, %v560
        %v720 = vmul.f32 %v717, %v564
        %v721 = vmul.f32 %v717, %v568
        %v722 = vmul.f32 %v717, %v572
        %v723 = vmul.f32 %v717, %v576
        %v724 = vmul.f32 %v717, %v580
        %v725 = vmul.f32 %v717, %v584
        %v726 = vmul.f32 %v717, %v588
        %735 = vrot.lane.b32.xlu0 %v719, 125
        %v736 = vpop.permute.xlu0 %735
        %737 = vrot.lane.b32.xlu0 %v720, 125
        %v738 = vpop.permute.xlu0 %737
        %739 = vrot.lane.b32.xlu0 %v721, 125
        %v740 = vpop.permute.xlu0 %739
        %741 = vrot.lane.b32.xlu0 %v722, 125
        %v742 = vpop.permute.xlu0 %741
        %743 = vrot.lane.b32.xlu0 %v723, 125
        %v744 = vpop.permute.xlu0 %743
        %745 = vrot.lane.b32.xlu0 %v724, 125
        %v746 = vpop.permute.xlu0 %745
        %747 = vrot.lane.b32.xlu0 %v725, 125
        %v748 = vpop.permute.xlu0 %747
        %749 = vrot.lane.b32.xlu0 %v726, 125
        %v750 = vpop.permute.xlu0 %749
        %vm751 = vcmask 1022976
        %v752 = vsel %vm751, %v736, %v738
        %v753 = vsel %vm751, %v738, %v740
        %v754 = vsel %vm751, %v740, %v742
        %v755 = vsel %vm751, %v742, %v744
        %v756 = vsel %vm751, %v744, %v746
        %v757 = vsel %vm751, %v746, %v748
        %v758 = vsel %vm751, %v748, %v750
        %v766 = vadd.f32 %v705, %v752
        %v767 = vadd.f32 %v706, %v753
        %v768 = vadd.f32 %v707, %v754
        %v769 = vadd.f32 %v708, %v755
        %v770 = vadd.f32 %v709, %v756
        %v771 = vadd.f32 %v710, %v757
        %v772 = vadd.f32 %v711, %v758
        %s773 = scalar_lea.vmem %s1, 32
        %v774 = vld [vmem:[%s773] sm:$0xff]
        %776 = vset.pattern.permute.xlu0 0
        %777 = vperm.xlu0 %776, %v774
        %v778 = vpop.permute.xlu0 %777
        %v780 = vmul.f32 %v778, %v560
        %v781 = vmul.f32 %v778, %v564
        %v782 = vmul.f32 %v778, %v568
        %v783 = vmul.f32 %v778, %v572
        %v784 = vmul.f32 %v778, %v576
        %v785 = vmul.f32 %v778, %v580
        %v786 = vmul.f32 %v778, %v584
        %v787 = vmul.f32 %v778, %v588
        %796 = vrot.lane.b32.xlu0 %v780, 124
        %v797 = vpop.permute.xlu0 %796
        %798 = vrot.lane.b32.xlu0 %v781, 124
        %v799 = vpop.permute.xlu0 %798
        %800 = vrot.lane.b32.xlu0 %v782, 124
        %v801 = vpop.permute.xlu0 %800
        %802 = vrot.lane.b32.xlu0 %v783, 124
        %v803 = vpop.permute.xlu0 %802
        %804 = vrot.lane.b32.xlu0 %v784, 124
        %v805 = vpop.permute.xlu0 %804
        %806 = vrot.lane.b32.xlu0 %v785, 124
        %v807 = vpop.permute.xlu0 %806
        %808 = vrot.lane.b32.xlu0 %v786, 124
        %v809 = vpop.permute.xlu0 %808
        %810 = vrot.lane.b32.xlu0 %v787, 124
        %v811 = vpop.permute.xlu0 %810
        %vm812 = vcmask 1014784
        %v813 = vsel %vm812, %v797, %v799
        %v814 = vsel %vm812, %v799, %v801
        %v815 = vsel %vm812, %v801, %v803
        %v816 = vsel %vm812, %v803, %v805
        %v817 = vsel %vm812, %v805, %v807
        %v818 = vsel %vm812, %v807, %v809
        %v819 = vsel %vm812, %v809, %v811
        %v827 = vadd.f32 %v766, %v813
        %v828 = vadd.f32 %v767, %v814
        %v829 = vadd.f32 %v768, %v815
        %v830 = vadd.f32 %v769, %v816
        %v831 = vadd.f32 %v770, %v817
        %v832 = vadd.f32 %v771, %v818
        %v833 = vadd.f32 %v772, %v819
        %s834 = scalar_lea.vmem %s1, 40
        %v835 = vld [vmem:[%s834] sm:$0xff]
        %837 = vset.pattern.permute.xlu0 0
        %838 = vperm.xlu0 %837, %v835
        %v839 = vpop.permute.xlu0 %838
        %v841 = vmul.f32 %v839, %v560
        %v842 = vmul.f32 %v839, %v564
        %v843 = vmul.f32 %v839, %v568
        %v844 = vmul.f32 %v839, %v572
        %v845 = vmul.f32 %v839, %v576
        %v846 = vmul.f32 %v839, %v580
        %v847 = vmul.f32 %v839, %v584
        %v848 = vmul.f32 %v839, %v588
        %857 = vrot.lane.b32.xlu0 %v841, 96
        %v858 = vpop.permute.xlu0 %857
        %859 = vrot.lane.b32.xlu0 %v842, 96
        %v860 = vpop.permute.xlu0 %859
        %861 = vrot.lane.b32.xlu0 %v843, 96
        %v862 = vpop.permute.xlu0 %861
        %863 = vrot.lane.b32.xlu0 %v844, 96
        %v864 = vpop.permute.xlu0 %863
        %865 = vrot.lane.b32.xlu0 %v845, 96
        %v866 = vpop.permute.xlu0 %865
        %867 = vrot.lane.b32.xlu0 %v846, 96
        %v868 = vpop.permute.xlu0 %867
        %869 = vrot.lane.b32.xlu0 %v847, 96
        %v870 = vpop.permute.xlu0 %869
        %871 = vrot.lane.b32.xlu0 %v848, 96
        %v872 = vpop.permute.xlu0 %871
        %vm873 = vcmask 785408
        %v874 = vsel %vm873, %v858, %v860
        %v875 = vsel %vm873, %v860, %v862
        %v876 = vsel %vm873, %v862, %v864
        %v877 = vsel %vm873, %v864, %v866
        %v878 = vsel %vm873, %v866, %v868
        %v879 = vsel %vm873, %v868, %v870
        %v880 = vsel %vm873, %v870, %v872
        %v888 = vadd.f32 %v827, %v874
        %v889 = vadd.f32 %v828, %v875
        %v890 = vadd.f32 %v829, %v876
        %v891 = vadd.f32 %v830, %v877
        %v892 = vadd.f32 %v831, %v878
        %v893 = vadd.f32 %v832, %v879
        %v894 = vadd.f32 %v833, %v880
        %s895 = scalar_lea.vmem %s1, 48
        %v896 = vld [vmem:[%s895] sm:$0xff]
        %898 = vset.pattern.permute.xlu0 0
        %899 = vperm.xlu0 %898, %v896
        %v900 = vpop.permute.xlu0 %899
        %v902 = vmul.f32 %v900, %v560
        %v903 = vmul.f32 %v900, %v564
        %v904 = vmul.f32 %v900, %v568
        %v905 = vmul.f32 %v900, %v572
        %v906 = vmul.f32 %v900, %v576
        %v907 = vmul.f32 %v900, %v580
        %v908 = vmul.f32 %v900, %v584
        %v909 = vmul.f32 %v900, %v588
        %918 = vrot.lane.b32.xlu0 %v902, 95
        %v919 = vpop.permute.xlu0 %918
        %920 = vrot.lane.b32.xlu0 %v903, 95
        %v921 = vpop.permute.xlu0 %920
        %922 = vrot.lane.b32.xlu0 %v904, 95
        %v923 = vpop.permute.xlu0 %922
        %924 = vrot.lane.b32.xlu0 %v905, 95
        %v925 = vpop.permute.xlu0 %924
        %926 = vrot.lane.b32.xlu0 %v906, 95
        %v927 = vpop.permute.xlu0 %926
        %928 = vrot.lane.b32.xlu0 %v907, 95
        %v929 = vpop.permute.xlu0 %928
        %930 = vrot.lane.b32.xlu0 %v908, 95
        %v931 = vpop.permute.xlu0 %930
        %932 = vrot.lane.b32.xlu0 %v909, 95
        %v933 = vpop.permute.xlu0 %932
        %vm934 = vcmask 777216
        %v935 = vsel %vm934, %v919, %v921
        %v936 = vsel %vm934, %v921, %v923
        %v937 = vsel %vm934, %v923, %v925
        %v938 = vsel %vm934, %v925, %v927
        %v939 = vsel %vm934, %v927, %v929
        %v940 = vsel %vm934, %v929, %v931
        %v941 = vsel %vm934, %v931, %v933
        %v949 = vadd.f32 %v888, %v935
        %v950 = vadd.f32 %v889, %v936
        %v951 = vadd.f32 %v890, %v937
        %v952 = vadd.f32 %v891, %v938
        %v953 = vadd.f32 %v892, %v939
        %v954 = vadd.f32 %v893, %v940
        %v955 = vadd.f32 %v894, %v941
        %s956 = scalar_lea.vmem %s1, 56
        %v957 = vld [vmem:[%s956] sm:$0xff]
        %959 = vset.pattern.permute.xlu0 0
        %960 = vperm.xlu0 %959, %v957
        %v961 = vpop.permute.xlu0 %960
        %v963 = vmul.f32 %v961, %v560
        %v964 = vmul.f32 %v961, %v564
        %v965 = vmul.f32 %v961, %v568
        %v966 = vmul.f32 %v961, %v572
        %v967 = vmul.f32 %v961, %v576
        %v968 = vmul.f32 %v961, %v580
        %v969 = vmul.f32 %v961, %v584
        %v970 = vmul.f32 %v961, %v588
        %979 = vrot.lane.b32.xlu0 %v963, 94
        %v980 = vpop.permute.xlu0 %979
        %981 = vrot.lane.b32.xlu0 %v964, 94
        %v982 = vpop.permute.xlu0 %981
        %983 = vrot.lane.b32.xlu0 %v965, 94
        %v984 = vpop.permute.xlu0 %983
        %985 = vrot.lane.b32.xlu0 %v966, 94
        %v986 = vpop.permute.xlu0 %985
        %987 = vrot.lane.b32.xlu0 %v967, 94
        %v988 = vpop.permute.xlu0 %987
        %989 = vrot.lane.b32.xlu0 %v968, 94
        %v990 = vpop.permute.xlu0 %989
        %991 = vrot.lane.b32.xlu0 %v969, 94
        %v992 = vpop.permute.xlu0 %991
        %993 = vrot.lane.b32.xlu0 %v970, 94
        %v994 = vpop.permute.xlu0 %993
        %vm995 = vcmask 769024
        %v996 = vsel %vm995, %v980, %v982
        %v997 = vsel %vm995, %v982, %v984
        %v998 = vsel %vm995, %v984, %v986
        %v999 = vsel %vm995, %v986, %v988
        %v1000 = vsel %vm995, %v988, %v990
        %v1001 = vsel %vm995, %v990, %v992
        %v1002 = vsel %vm995, %v992, %v994
        %v1010 = vadd.f32 %v949, %v996
        %v1011 = vadd.f32 %v950, %v997
        %v1012 = vadd.f32 %v951, %v998
        %v1013 = vadd.f32 %v952, %v999
        %v1014 = vadd.f32 %v953, %v1000
        %v1015 = vadd.f32 %v954, %v1001
        %v1016 = vadd.f32 %v955, %v1002
        %s1017 = scalar_lea.vmem %s1, 64
        %v1018 = vld [vmem:[%s1017] sm:$0xff]
        %1020 = vset.pattern.permute.xlu0 0
        %1021 = vperm.xlu0 %1020, %v1018
        %v1022 = vpop.permute.xlu0 %1021
        %v1024 = vmul.f32 %v1022, %v560
        %v1025 = vmul.f32 %v1022, %v564
        %v1026 = vmul.f32 %v1022, %v568
        %v1027 = vmul.f32 %v1022, %v572
        %v1028 = vmul.f32 %v1022, %v576
        %v1029 = vmul.f32 %v1022, %v580
        %v1030 = vmul.f32 %v1022, %v584
        %v1031 = vmul.f32 %v1022, %v588
        %1040 = vrot.lane.b32.xlu0 %v1024, 93
        %v1041 = vpop.permute.xlu0 %1040
        %1042 = vrot.lane.b32.xlu0 %v1025, 93
        %v1043 = vpop.permute.xlu0 %1042
        %1044 = vrot.lane.b32.xlu0 %v1026, 93
        %v1045 = vpop.permute.xlu0 %1044
        %1046 = vrot.lane.b32.xlu0 %v1027, 93
        %v1047 = vpop.permute.xlu0 %1046
        %1048 = vrot.lane.b32.xlu0 %v1028, 93
        %v1049 = vpop.permute.xlu0 %1048
        %1050 = vrot.lane.b32.xlu0 %v1029, 93
        %v1051 = vpop.permute.xlu0 %1050
        %1052 = vrot.lane.b32.xlu0 %v1030, 93
        %v1053 = vpop.permute.xlu0 %1052
        %1054 = vrot.lane.b32.xlu0 %v1031, 93
        %v1055 = vpop.permute.xlu0 %1054
        %vm1056 = vcmask 760832
        %v1057 = vsel %vm1056, %v1041, %v1043
        %v1058 = vsel %vm1056, %v1043, %v1045
        %v1059 = vsel %vm1056, %v1045, %v1047
        %v1060 = vsel %vm1056, %v1047, %v1049
        %v1061 = vsel %vm1056, %v1049, %v1051
        %v1062 = vsel %vm1056, %v1051, %v1053
        %v1063 = vsel %vm1056, %v1053, %v1055
        %v1071 = vadd.f32 %v1010, %v1057
        %v1072 = vadd.f32 %v1011, %v1058
        %v1073 = vadd.f32 %v1012, %v1059
        %v1074 = vadd.f32 %v1013, %v1060
        %v1075 = vadd.f32 %v1014, %v1061
        %v1076 = vadd.f32 %v1015, %v1062
        %v1077 = vadd.f32 %v1016, %v1063
        %s1078 = scalar_lea.vmem %s1, 72
        %v1079 = vld [vmem:[%s1078] sm:$0xff]
        %1081 = vset.pattern.permute.xlu0 0
        %1082 = vperm.xlu0 %1081, %v1079
        %v1083 = vpop.permute.xlu0 %1082
        %v1085 = vmul.f32 %v1083, %v560
        %v1086 = vmul.f32 %v1083, %v564
        %v1087 = vmul.f32 %v1083, %v568
        %v1088 = vmul.f32 %v1083, %v572
        %v1089 = vmul.f32 %v1083, %v576
        %v1090 = vmul.f32 %v1083, %v580
        %v1091 = vmul.f32 %v1083, %v584
        %v1092 = vmul.f32 %v1083, %v588
        %1101 = vrot.lane.b32.xlu0 %v1085, 92
        %v1102 = vpop.permute.xlu0 %1101
        %1103 = vrot.lane.b32.xlu0 %v1086, 92
        %v1104 = vpop.permute.xlu0 %1103
        %1105 = vrot.lane.b32.xlu0 %v1087, 92
        %v1106 = vpop.permute.xlu0 %1105
        %1107 = vrot.lane.b32.xlu0 %v1088, 92
        %v1108 = vpop.permute.xlu0 %1107
        %1109 = vrot.lane.b32.xlu0 %v1089, 92
        %v1110 = vpop.permute.xlu0 %1109
        %1111 = vrot.lane.b32.xlu0 %v1090, 92
        %v1112 = vpop.permute.xlu0 %1111
        %1113 = vrot.lane.b32.xlu0 %v1091, 92
        %v1114 = vpop.permute.xlu0 %1113
        %1115 = vrot.lane.b32.xlu0 %v1092, 92
        %v1116 = vpop.permute.xlu0 %1115
        %vm1117 = vcmask 752640
        %v1118 = vsel %vm1117, %v1102, %v1104
        %v1119 = vsel %vm1117, %v1104, %v1106
        %v1120 = vsel %vm1117, %v1106, %v1108
        %v1121 = vsel %vm1117, %v1108, %v1110
        %v1122 = vsel %vm1117, %v1110, %v1112
        %v1123 = vsel %vm1117, %v1112, %v1114
        %v1124 = vsel %vm1117, %v1114, %v1116
        %v1132 = vadd.f32 %v1071, %v1118
        %v1133 = vadd.f32 %v1072, %v1119
        %v1134 = vadd.f32 %v1073, %v1120
        %v1135 = vadd.f32 %v1074, %v1121
        %v1136 = vadd.f32 %v1075, %v1122
        %v1137 = vadd.f32 %v1076, %v1123
        %v1138 = vadd.f32 %v1077, %v1124
        %s1139 = scalar_lea.vmem %s1, 80
        %v1140 = vld [vmem:[%s1139] sm:$0xff]
        %1142 = vset.pattern.permute.xlu0 0
        %1143 = vperm.xlu0 %1142, %v1140
        %v1144 = vpop.permute.xlu0 %1143
        %v1146 = vmul.f32 %v1144, %v560
        %v1147 = vmul.f32 %v1144, %v564
        %v1148 = vmul.f32 %v1144, %v568
        %v1149 = vmul.f32 %v1144, %v572
        %v1150 = vmul.f32 %v1144, %v576
        %v1151 = vmul.f32 %v1144, %v580
        %v1152 = vmul.f32 %v1144, %v584
        %v1153 = vmul.f32 %v1144, %v588
        %1162 = vrot.lane.b32.xlu0 %v1146, 64
        %v1163 = vpop.permute.xlu0 %1162
        %1164 = vrot.lane.b32.xlu0 %v1147, 64
        %v1165 = vpop.permute.xlu0 %1164
        %1166 = vrot.lane.b32.xlu0 %v1148, 64
        %v1167 = vpop.permute.xlu0 %1166
        %1168 = vrot.lane.b32.xlu0 %v1149, 64
        %v1169 = vpop.permute.xlu0 %1168
        %1170 = vrot.lane.b32.xlu0 %v1150, 64
        %v1171 = vpop.permute.xlu0 %1170
        %1172 = vrot.lane.b32.xlu0 %v1151, 64
        %v1173 = vpop.permute.xlu0 %1172
        %1174 = vrot.lane.b32.xlu0 %v1152, 64
        %v1175 = vpop.permute.xlu0 %1174
        %1176 = vrot.lane.b32.xlu0 %v1153, 64
        %v1177 = vpop.permute.xlu0 %1176
        %vm1178 = vcmask 523264
        %v1179 = vsel %vm1178, %v1163, %v1165
        %v1180 = vsel %vm1178, %v1165, %v1167
        %v1181 = vsel %vm1178, %v1167, %v1169
        %v1182 = vsel %vm1178, %v1169, %v1171
        %v1183 = vsel %vm1178, %v1171, %v1173
        %v1184 = vsel %vm1178, %v1173, %v1175
        %v1185 = vsel %vm1178, %v1175, %v1177
        %v1193 = vadd.f32 %v1132, %v1179
        %v1194 = vadd.f32 %v1133, %v1180
        %v1195 = vadd.f32 %v1134, %v1181
        %v1196 = vadd.f32 %v1135, %v1182
        %v1197 = vadd.f32 %v1136, %v1183
        %v1198 = vadd.f32 %v1137, %v1184
        %v1199 = vadd.f32 %v1138, %v1185
        %s1200 = scalar_lea.vmem %s1, 88
        %v1201 = vld [vmem:[%s1200] sm:$0xff]
        %1203 = vset.pattern.permute.xlu0 0
        %1204 = vperm.xlu0 %1203, %v1201
        %v1205 = vpop.permute.xlu0 %1204
        %v1207 = vmul.f32 %v1205, %v560
        %v1208 = vmul.f32 %v1205, %v564
        %v1209 = vmul.f32 %v1205, %v568
        %v1210 = vmul.f32 %v1205, %v572
        %v1211 = vmul.f32 %v1205, %v576
        %v1212 = vmul.f32 %v1205, %v580
        %v1213 = vmul.f32 %v1205, %v584
        %v1214 = vmul.f32 %v1205, %v588
        %1223 = vrot.lane.b32.xlu0 %v1207, 63
        %v1224 = vpop.permute.xlu0 %1223
        %1225 = vrot.lane.b32.xlu0 %v1208, 63
        %v1226 = vpop.permute.xlu0 %1225
        %1227 = vrot.lane.b32.xlu0 %v1209, 63
        %v1228 = vpop.permute.xlu0 %1227
        %1229 = vrot.lane.b32.xlu0 %v1210, 63
        %v1230 = vpop.permute.xlu0 %1229
        %1231 = vrot.lane.b32.xlu0 %v1211, 63
        %v1232 = vpop.permute.xlu0 %1231
        %1233 = vrot.lane.b32.xlu0 %v1212, 63
        %v1234 = vpop.permute.xlu0 %1233
        %1235 = vrot.lane.b32.xlu0 %v1213, 63
        %v1236 = vpop.permute.xlu0 %1235
        %1237 = vrot.lane.b32.xlu0 %v1214, 63
        %v1238 = vpop.permute.xlu0 %1237
        %vm1239 = vcmask 515072
        %v1240 = vsel %vm1239, %v1224, %v1226
        %v1241 = vsel %vm1239, %v1226, %v1228
        %v1242 = vsel %vm1239, %v1228, %v1230
        %v1243 = vsel %vm1239, %v1230, %v1232
        %v1244 = vsel %vm1239, %v1232, %v1234
        %v1245 = vsel %vm1239, %v1234, %v1236
        %v1246 = vsel %vm1239, %v1236, %v1238
        %v1254 = vadd.f32 %v1193, %v1240
        %v1255 = vadd.f32 %v1194, %v1241
        %v1256 = vadd.f32 %v1195, %v1242
        %v1257 = vadd.f32 %v1196, %v1243
        %v1258 = vadd.f32 %v1197, %v1244
        %v1259 = vadd.f32 %v1198, %v1245
        %v1260 = vadd.f32 %v1199, %v1246
        %s1261 = scalar_lea.vmem %s1, 96
        %v1262 = vld [vmem:[%s1261] sm:$0xff]
        %1264 = vset.pattern.permute.xlu0 0
        %1265 = vperm.xlu0 %1264, %v1262
        %v1266 = vpop.permute.xlu0 %1265
        %v1268 = vmul.f32 %v1266, %v560
        %v1269 = vmul.f32 %v1266, %v564
        %v1270 = vmul.f32 %v1266, %v568
        %v1271 = vmul.f32 %v1266, %v572
        %v1272 = vmul.f32 %v1266, %v576
        %v1273 = vmul.f32 %v1266, %v580
        %v1274 = vmul.f32 %v1266, %v584
        %v1275 = vmul.f32 %v1266, %v588
        %1284 = vrot.lane.b32.xlu0 %v1268, 62
        %v1285 = vpop.permute.xlu0 %1284
        %1286 = vrot.lane.b32.xlu0 %v1269, 62
        %v1287 = vpop.permute.xlu0 %1286
        %1288 = vrot.lane.b32.xlu0 %v1270, 62
        %v1289 = vpop.permute.xlu0 %1288
        %1290 = vrot.lane.b32.xlu0 %v1271, 62
        %v1291 = vpop.permute.xlu0 %1290
        %1292 = vrot.lane.b32.xlu0 %v1272, 62
        %v1293 = vpop.permute.xlu0 %1292
        %1294 = vrot.lane.b32.xlu0 %v1273, 62
        %v1295 = vpop.permute.xlu0 %1294
        %1296 = vrot.lane.b32.xlu0 %v1274, 62
        %v1297 = vpop.permute.xlu0 %1296
        %1298 = vrot.lane.b32.xlu0 %v1275, 62
        %v1299 = vpop.permute.xlu0 %1298
        %vm1300 = vcmask 506880
        %v1301 = vsel %vm1300, %v1285, %v1287
        %v1302 = vsel %vm1300, %v1287, %v1289
        %v1303 = vsel %vm1300, %v1289, %v1291
        %v1304 = vsel %vm1300, %v1291, %v1293
        %v1305 = vsel %vm1300, %v1293, %v1295
        %v1306 = vsel %vm1300, %v1295, %v1297
        %v1307 = vsel %vm1300, %v1297, %v1299
        %v1315 = vadd.f32 %v1254, %v1301
        %v1316 = vadd.f32 %v1255, %v1302
        %v1317 = vadd.f32 %v1256, %v1303
        %v1318 = vadd.f32 %v1257, %v1304
        %v1319 = vadd.f32 %v1258, %v1305
        %v1320 = vadd.f32 %v1259, %v1306
        %v1321 = vadd.f32 %v1260, %v1307
        %s1322 = scalar_lea.vmem %s1, 104
        %v1323 = vld [vmem:[%s1322] sm:$0xff]
        %1325 = vset.pattern.permute.xlu0 0
        %1326 = vperm.xlu0 %1325, %v1323
        %v1327 = vpop.permute.xlu0 %1326
        %v1329 = vmul.f32 %v1327, %v560
        %v1330 = vmul.f32 %v1327, %v564
        %v1331 = vmul.f32 %v1327, %v568
        %v1332 = vmul.f32 %v1327, %v572
        %v1333 = vmul.f32 %v1327, %v576
        %v1334 = vmul.f32 %v1327, %v580
        %v1335 = vmul.f32 %v1327, %v584
        %v1336 = vmul.f32 %v1327, %v588
        %1345 = vrot.lane.b32.xlu0 %v1329, 61
        %v1346 = vpop.permute.xlu0 %1345
        %1347 = vrot.lane.b32.xlu0 %v1330, 61
        %v1348 = vpop.permute.xlu0 %1347
        %1349 = vrot.lane.b32.xlu0 %v1331, 61
        %v1350 = vpop.permute.xlu0 %1349
        %1351 = vrot.lane.b32.xlu0 %v1332, 61
        %v1352 = vpop.permute.xlu0 %1351
        %1353 = vrot.lane.b32.xlu0 %v1333, 61
        %v1354 = vpop.permute.xlu0 %1353
        %1355 = vrot.lane.b32.xlu0 %v1334, 61
        %v1356 = vpop.permute.xlu0 %1355
        %1357 = vrot.lane.b32.xlu0 %v1335, 61
        %v1358 = vpop.permute.xlu0 %1357
        %1359 = vrot.lane.b32.xlu0 %v1336, 61
        %v1360 = vpop.permute.xlu0 %1359
        %vm1361 = vcmask 498688
        %v1362 = vsel %vm1361, %v1346, %v1348
        %v1363 = vsel %vm1361, %v1348, %v1350
        %v1364 = vsel %vm1361, %v1350, %v1352
        %v1365 = vsel %vm1361, %v1352, %v1354
        %v1366 = vsel %vm1361, %v1354, %v1356
        %v1367 = vsel %vm1361, %v1356, %v1358
        %v1368 = vsel %vm1361, %v1358, %v1360
        %v1376 = vadd.f32 %v1315, %v1362
        %v1377 = vadd.f32 %v1316, %v1363
        %v1378 = vadd.f32 %v1317, %v1364
        %v1379 = vadd.f32 %v1318, %v1365
        %v1380 = vadd.f32 %v1319, %v1366
        %v1381 = vadd.f32 %v1320, %v1367
        %v1382 = vadd.f32 %v1321, %v1368
        %s1383 = scalar_lea.vmem %s1, 112
        %v1384 = vld [vmem:[%s1383] sm:$0xff]
        %1386 = vset.pattern.permute.xlu0 0
        %1387 = vperm.xlu0 %1386, %v1384
        %v1388 = vpop.permute.xlu0 %1387
        %v1390 = vmul.f32 %v1388, %v560
        %v1391 = vmul.f32 %v1388, %v564
        %v1392 = vmul.f32 %v1388, %v568
        %v1393 = vmul.f32 %v1388, %v572
        %v1394 = vmul.f32 %v1388, %v576
        %v1395 = vmul.f32 %v1388, %v580
        %v1396 = vmul.f32 %v1388, %v584
        %v1397 = vmul.f32 %v1388, %v588
        %1406 = vrot.lane.b32.xlu0 %v1390, 60
        %v1407 = vpop.permute.xlu0 %1406
        %1408 = vrot.lane.b32.xlu0 %v1391, 60
        %v1409 = vpop.permute.xlu0 %1408
        %1410 = vrot.lane.b32.xlu0 %v1392, 60
        %v1411 = vpop.permute.xlu0 %1410
        %1412 = vrot.lane.b32.xlu0 %v1393, 60
        %v1413 = vpop.permute.xlu0 %1412
        %1414 = vrot.lane.b32.xlu0 %v1394, 60
        %v1415 = vpop.permute.xlu0 %1414
        %1416 = vrot.lane.b32.xlu0 %v1395, 60
        %v1417 = vpop.permute.xlu0 %1416
        %1418 = vrot.lane.b32.xlu0 %v1396, 60
        %v1419 = vpop.permute.xlu0 %1418
        %1420 = vrot.lane.b32.xlu0 %v1397, 60
        %v1421 = vpop.permute.xlu0 %1420
        %vm1422 = vcmask 490496
        %v1423 = vsel %vm1422, %v1407, %v1409
        %v1424 = vsel %vm1422, %v1409, %v1411
        %v1425 = vsel %vm1422, %v1411, %v1413
        %v1426 = vsel %vm1422, %v1413, %v1415
        %v1427 = vsel %vm1422, %v1415, %v1417
        %v1428 = vsel %vm1422, %v1417, %v1419
        %v1429 = vsel %vm1422, %v1419, %v1421
        %v1437 = vadd.f32 %v1376, %v1423
        %v1438 = vadd.f32 %v1377, %v1424
        %v1439 = vadd.f32 %v1378, %v1425
        %v1440 = vadd.f32 %v1379, %v1426
        %v1441 = vadd.f32 %v1380, %v1427
        %v1442 = vadd.f32 %v1381, %v1428
        %v1443 = vadd.f32 %v1382, %v1429
        %s1444 = scalar_lea.vmem %s1, 120
        %v1445 = vld [vmem:[%s1444] sm:$0xff]
        %1447 = vset.pattern.permute.xlu0 0
        %1448 = vperm.xlu0 %1447, %v1445
        %v1449 = vpop.permute.xlu0 %1448
        %v1451 = vmul.f32 %v1449, %v560
        %v1452 = vmul.f32 %v1449, %v564
        %v1453 = vmul.f32 %v1449, %v568
        %v1454 = vmul.f32 %v1449, %v572
        %v1455 = vmul.f32 %v1449, %v576
        %v1456 = vmul.f32 %v1449, %v580
        %v1457 = vmul.f32 %v1449, %v584
        %v1458 = vmul.f32 %v1449, %v588
        %1467 = vrot.lane.b32.xlu0 %v1451, 32
        %v1468 = vpop.permute.xlu0 %1467
        %1469 = vrot.lane.b32.xlu0 %v1452, 32
        %v1470 = vpop.permute.xlu0 %1469
        %1471 = vrot.lane.b32.xlu0 %v1453, 32
        %v1472 = vpop.permute.xlu0 %1471
        %1473 = vrot.lane.b32.xlu0 %v1454, 32
        %v1474 = vpop.permute.xlu0 %1473
        %1475 = vrot.lane.b32.xlu0 %v1455, 32
        %v1476 = vpop.permute.xlu0 %1475
        %1477 = vrot.lane.b32.xlu0 %v1456, 32
        %v1478 = vpop.permute.xlu0 %1477
        %1479 = vrot.lane.b32.xlu0 %v1457, 32
        %v1480 = vpop.permute.xlu0 %1479
        %1481 = vrot.lane.b32.xlu0 %v1458, 32
        %v1482 = vpop.permute.xlu0 %1481
        %vm1483 = vcmask 261120
        %v1484 = vsel %vm1483, %v1468, %v1470
        %v1485 = vsel %vm1483, %v1470, %v1472
        %v1486 = vsel %vm1483, %v1472, %v1474
        %v1487 = vsel %vm1483, %v1474, %v1476
        %v1488 = vsel %vm1483, %v1476, %v1478
        %v1489 = vsel %vm1483, %v1478, %v1480
        %v1490 = vsel %vm1483, %v1480, %v1482
        %v1498 = vadd.f32 %v1437, %v1484
        %v1499 = vadd.f32 %v1438, %v1485
        %v1500 = vadd.f32 %v1439, %v1486
        %v1501 = vadd.f32 %v1440, %v1487
        %v1502 = vadd.f32 %v1441, %v1488
        %v1503 = vadd.f32 %v1442, %v1489
        %v1504 = vadd.f32 %v1443, %v1490
        %s1505 = scalar_lea.vmem %s1, 128
        %v1506 = vld [vmem:[%s1505] sm:$0xff]
        %1508 = vset.pattern.permute.xlu0 0
        %1509 = vperm.xlu0 %1508, %v1506
        %v1510 = vpop.permute.xlu0 %1509
        %v1512 = vmul.f32 %v1510, %v560
        %v1513 = vmul.f32 %v1510, %v564
        %v1514 = vmul.f32 %v1510, %v568
        %v1515 = vmul.f32 %v1510, %v572
        %v1516 = vmul.f32 %v1510, %v576
        %v1517 = vmul.f32 %v1510, %v580
        %v1518 = vmul.f32 %v1510, %v584
        %v1519 = vmul.f32 %v1510, %v588
        %1528 = vrot.lane.b32.xlu0 %v1512, 31
        %v1529 = vpop.permute.xlu0 %1528
        %1530 = vrot.lane.b32.xlu0 %v1513, 31
        %v1531 = vpop.permute.xlu0 %1530
        %1532 = vrot.lane.b32.xlu0 %v1514, 31
        %v1533 = vpop.permute.xlu0 %1532
        %1534 = vrot.lane.b32.xlu0 %v1515, 31
        %v1535 = vpop.permute.xlu0 %1534
        %1536 = vrot.lane.b32.xlu0 %v1516, 31
        %v1537 = vpop.permute.xlu0 %1536
        %1538 = vrot.lane.b32.xlu0 %v1517, 31
        %v1539 = vpop.permute.xlu0 %1538
        %1540 = vrot.lane.b32.xlu0 %v1518, 31
        %v1541 = vpop.permute.xlu0 %1540
        %1542 = vrot.lane.b32.xlu0 %v1519, 31
        %v1543 = vpop.permute.xlu0 %1542
        %vm1544 = vcmask 252928
        %v1545 = vsel %vm1544, %v1529, %v1531
        %v1546 = vsel %vm1544, %v1531, %v1533
        %v1547 = vsel %vm1544, %v1533, %v1535
        %v1548 = vsel %vm1544, %v1535, %v1537
        %v1549 = vsel %vm1544, %v1537, %v1539
        %v1550 = vsel %vm1544, %v1539, %v1541
        %v1551 = vsel %vm1544, %v1541, %v1543
        %v1559 = vadd.f32 %v1498, %v1545
        %v1560 = vadd.f32 %v1499, %v1546
        %v1561 = vadd.f32 %v1500, %v1547
        %v1562 = vadd.f32 %v1501, %v1548
        %v1563 = vadd.f32 %v1502, %v1549
        %v1564 = vadd.f32 %v1503, %v1550
        %v1565 = vadd.f32 %v1504, %v1551
        %s1566 = scalar_lea.vmem %s1, 136
        %v1567 = vld [vmem:[%s1566] sm:$0xff]
        %1569 = vset.pattern.permute.xlu0 0
        %1570 = vperm.xlu0 %1569, %v1567
        %v1571 = vpop.permute.xlu0 %1570
        %v1573 = vmul.f32 %v1571, %v560
        %v1574 = vmul.f32 %v1571, %v564
        %v1575 = vmul.f32 %v1571, %v568
        %v1576 = vmul.f32 %v1571, %v572
        %v1577 = vmul.f32 %v1571, %v576
        %v1578 = vmul.f32 %v1571, %v580
        %v1579 = vmul.f32 %v1571, %v584
        %v1580 = vmul.f32 %v1571, %v588
        %1589 = vrot.lane.b32.xlu0 %v1573, 30
        %v1590 = vpop.permute.xlu0 %1589
        %1591 = vrot.lane.b32.xlu0 %v1574, 30
        %v1592 = vpop.permute.xlu0 %1591
        %1593 = vrot.lane.b32.xlu0 %v1575, 30
        %v1594 = vpop.permute.xlu0 %1593
        %1595 = vrot.lane.b32.xlu0 %v1576, 30
        %v1596 = vpop.permute.xlu0 %1595
        %1597 = vrot.lane.b32.xlu0 %v1577, 30
        %v1598 = vpop.permute.xlu0 %1597
        %1599 = vrot.lane.b32.xlu0 %v1578, 30
        %v1600 = vpop.permute.xlu0 %1599
        %1601 = vrot.lane.b32.xlu0 %v1579, 30
        %v1602 = vpop.permute.xlu0 %1601
        %1603 = vrot.lane.b32.xlu0 %v1580, 30
        %v1604 = vpop.permute.xlu0 %1603
        %vm1605 = vcmask 244736
        %v1606 = vsel %vm1605, %v1590, %v1592
        %v1607 = vsel %vm1605, %v1592, %v1594
        %v1608 = vsel %vm1605, %v1594, %v1596
        %v1609 = vsel %vm1605, %v1596, %v1598
        %v1610 = vsel %vm1605, %v1598, %v1600
        %v1611 = vsel %vm1605, %v1600, %v1602
        %v1612 = vsel %vm1605, %v1602, %v1604
        %v1620 = vadd.f32 %v1559, %v1606
        %v1621 = vadd.f32 %v1560, %v1607
        %v1622 = vadd.f32 %v1561, %v1608
        %v1623 = vadd.f32 %v1562, %v1609
        %v1624 = vadd.f32 %v1563, %v1610
        %v1625 = vadd.f32 %v1564, %v1611
        %v1626 = vadd.f32 %v1565, %v1612
        %s1627 = scalar_lea.vmem %s1, 144
        %v1628 = vld [vmem:[%s1627] sm:$0xff]
        %1630 = vset.pattern.permute.xlu0 0
        %1631 = vperm.xlu0 %1630, %v1628
        %v1632 = vpop.permute.xlu0 %1631
        %v1634 = vmul.f32 %v1632, %v560
        %v1635 = vmul.f32 %v1632, %v564
        %v1636 = vmul.f32 %v1632, %v568
        %v1637 = vmul.f32 %v1632, %v572
        %v1638 = vmul.f32 %v1632, %v576
        %v1639 = vmul.f32 %v1632, %v580
        %v1640 = vmul.f32 %v1632, %v584
        %v1641 = vmul.f32 %v1632, %v588
        %1650 = vrot.lane.b32.xlu0 %v1634, 29
        %v1651 = vpop.permute.xlu0 %1650
        %1652 = vrot.lane.b32.xlu0 %v1635, 29
        %v1653 = vpop.permute.xlu0 %1652
        %1654 = vrot.lane.b32.xlu0 %v1636, 29
        %v1655 = vpop.permute.xlu0 %1654
        %1656 = vrot.lane.b32.xlu0 %v1637, 29
        %v1657 = vpop.permute.xlu0 %1656
        %1658 = vrot.lane.b32.xlu0 %v1638, 29
        %v1659 = vpop.permute.xlu0 %1658
        %1660 = vrot.lane.b32.xlu0 %v1639, 29
        %v1661 = vpop.permute.xlu0 %1660
        %1662 = vrot.lane.b32.xlu0 %v1640, 29
        %v1663 = vpop.permute.xlu0 %1662
        %1664 = vrot.lane.b32.xlu0 %v1641, 29
        %v1665 = vpop.permute.xlu0 %1664
        %vm1666 = vcmask 236544
        %v1667 = vsel %vm1666, %v1651, %v1653
        %v1668 = vsel %vm1666, %v1653, %v1655
        %v1669 = vsel %vm1666, %v1655, %v1657
        %v1670 = vsel %vm1666, %v1657, %v1659
        %v1671 = vsel %vm1666, %v1659, %v1661
        %v1672 = vsel %vm1666, %v1661, %v1663
        %v1673 = vsel %vm1666, %v1663, %v1665
        %v1681 = vadd.f32 %v1620, %v1667
        %v1682 = vadd.f32 %v1621, %v1668
        %v1683 = vadd.f32 %v1622, %v1669
        %v1684 = vadd.f32 %v1623, %v1670
        %v1685 = vadd.f32 %v1624, %v1671
        %v1686 = vadd.f32 %v1625, %v1672
        %v1687 = vadd.f32 %v1626, %v1673
        %s1688 = scalar_lea.vmem %s1, 152
        %v1689 = vld [vmem:[%s1688] sm:$0xff]
        %1691 = vset.pattern.permute.xlu0 0
        %1692 = vperm.xlu0 %1691, %v1689
        %v1693 = vpop.permute.xlu0 %1692
        %v1695 = vmul.f32 %v1693, %v560
        %v1696 = vmul.f32 %v1693, %v564
        %v1697 = vmul.f32 %v1693, %v568
        %v1698 = vmul.f32 %v1693, %v572
        %v1699 = vmul.f32 %v1693, %v576
        %v1700 = vmul.f32 %v1693, %v580
        %v1701 = vmul.f32 %v1693, %v584
        %v1702 = vmul.f32 %v1693, %v588
        %1711 = vrot.lane.b32.xlu0 %v1695, 28
        %v1712 = vpop.permute.xlu0 %1711
        %1713 = vrot.lane.b32.xlu0 %v1696, 28
        %v1714 = vpop.permute.xlu0 %1713
        %1715 = vrot.lane.b32.xlu0 %v1697, 28
        %v1716 = vpop.permute.xlu0 %1715
        %1717 = vrot.lane.b32.xlu0 %v1698, 28
        %v1718 = vpop.permute.xlu0 %1717
        %1719 = vrot.lane.b32.xlu0 %v1699, 28
        %v1720 = vpop.permute.xlu0 %1719
        %1721 = vrot.lane.b32.xlu0 %v1700, 28
        %v1722 = vpop.permute.xlu0 %1721
        %1723 = vrot.lane.b32.xlu0 %v1701, 28
        %v1724 = vpop.permute.xlu0 %1723
        %1725 = vrot.lane.b32.xlu0 %v1702, 28
        %v1726 = vpop.permute.xlu0 %1725
        %vm1727 = vcmask 228352
        %v1728 = vsel %vm1727, %v1712, %v1714
        %v1729 = vsel %vm1727, %v1714, %v1716
        %v1730 = vsel %vm1727, %v1716, %v1718
        %v1731 = vsel %vm1727, %v1718, %v1720
        %v1732 = vsel %vm1727, %v1720, %v1722
        %v1733 = vsel %vm1727, %v1722, %v1724
        %v1734 = vsel %vm1727, %v1724, %v1726
        %v1742 = vadd.f32 %v1681, %v1728
        %v1743 = vadd.f32 %v1682, %v1729
        %v1744 = vadd.f32 %v1683, %v1730
        %v1745 = vadd.f32 %v1684, %v1731
        %v1746 = vadd.f32 %v1685, %v1732
        %v1747 = vadd.f32 %v1686, %v1733
        %v1748 = vadd.f32 %v1687, %v1734
        %v1749 = vld [vmem:[%s489 + $0x1] sm:$0xff]
        %s1750 = scalar_lea.vmem %s1, 160
        %v1751 = vld [vmem:[%s1750] sm:$0xff]
        %1753 = vset.pattern.permute.xlu0 0
        %1754 = vperm.xlu0 %1753, %v1751
        %v1755 = vpop.permute.xlu0 %1754
        %v1758 = vlaneseq
        %v1759 = vshrl.u32 %v1758, 7
        %v1760 = vsub.s32 0, %v1759
        %v1761 = vrot.slane %v1749, %v1760
        %v1762 = vlaneseq
        %v1763 = vshrl.u32 %v1762, 7
        %v1764 = vsub.s32 1, %v1763
        %v1765 = vrot.slane %v1749, %v1764
        %v1766 = vlaneseq
        %v1767 = vshrl.u32 %v1766, 7
        %v1768 = vsub.s32 2, %v1767
        %v1769 = vrot.slane %v1749, %v1768
        %v1770 = vlaneseq
        %v1771 = vshrl.u32 %v1770, 7
        %v1772 = vsub.s32 3, %v1771
        %v1773 = vrot.slane %v1749, %v1772
        %v1774 = vlaneseq
        %v1775 = vshrl.u32 %v1774, 7
        %v1776 = vsub.s32 4, %v1775
        %v1777 = vrot.slane %v1749, %v1776
        %v1778 = vlaneseq
        %v1779 = vshrl.u32 %v1778, 7
        %v1780 = vsub.s32 5, %v1779
        %v1781 = vrot.slane %v1749, %v1780
        %v1782 = vlaneseq
        %v1783 = vshrl.u32 %v1782, 7
        %v1784 = vsub.s32 6, %v1783
        %v1785 = vrot.slane %v1749, %v1784
        %v1793 = vmul.f32 %v1755, %v1761
        %v1794 = vmul.f32 %v1755, %v1765
        %v1795 = vmul.f32 %v1755, %v1769
        %v1796 = vmul.f32 %v1755, %v1773
        %v1797 = vmul.f32 %v1755, %v1777
        %v1798 = vmul.f32 %v1755, %v1781
        %v1799 = vmul.f32 %v1755, %v1785
        %v1800 = vadd.f32 %v1742, %v1793
        %v1801 = vadd.f32 %v1743, %v1794
        %v1802 = vadd.f32 %v1744, %v1795
        %v1803 = vadd.f32 %v1745, %v1796
        %v1804 = vadd.f32 %v1746, %v1797
        %v1805 = vadd.f32 %v1747, %v1798
        %v1806 = vadd.f32 %v1748, %v1799
        %v1807 = vld [vmem:[%s489 + $0x1] sm:$0xff]
        %s1808 = scalar_lea.vmem %s1, 168
        %v1809 = vld [vmem:[%s1808] sm:$0xff]
        %1811 = vset.pattern.permute.xlu0 0
        %1812 = vperm.xlu0 %1811, %v1809
        %v1813 = vpop.permute.xlu0 %1812
        %v1816 = vlaneseq
        %v1817 = vshrl.u32 %v1816, 7
        %v1818 = vsub.s32 0, %v1817
        %v1819 = vrot.slane %v1807, %v1818
        %v1820 = vlaneseq
        %v1821 = vshrl.u32 %v1820, 7
        %v1822 = vsub.s32 1, %v1821
        %v1823 = vrot.slane %v1807, %v1822
        %v1824 = vlaneseq
        %v1825 = vshrl.u32 %v1824, 7
        %v1826 = vsub.s32 2, %v1825
        %v1827 = vrot.slane %v1807, %v1826
        %v1828 = vlaneseq
        %v1829 = vshrl.u32 %v1828, 7
        %v1830 = vsub.s32 3, %v1829
        %v1831 = vrot.slane %v1807, %v1830
        %v1832 = vlaneseq
        %v1833 = vshrl.u32 %v1832, 7
        %v1834 = vsub.s32 4, %v1833
        %v1835 = vrot.slane %v1807, %v1834
        %v1836 = vlaneseq
        %v1837 = vshrl.u32 %v1836, 7
        %v1838 = vsub.s32 5, %v1837
        %v1839 = vrot.slane %v1807, %v1838
        %v1840 = vlaneseq
        %v1841 = vshrl.u32 %v1840, 7
        %v1842 = vsub.s32 6, %v1841
        %v1843 = vrot.slane %v1807, %v1842
        %v1844 = vlaneseq
        %v1845 = vshrl.u32 %v1844, 7
        %v1846 = vsub.s32 7, %v1845
        %v1847 = vrot.slane %v1807, %v1846
        %v1856 = vmul.f32 %v1813, %v1819
        %v1857 = vmul.f32 %v1813, %v1823
        %v1858 = vmul.f32 %v1813, %v1827
        %v1859 = vmul.f32 %v1813, %v1831
        %v1860 = vmul.f32 %v1813, %v1835
        %v1861 = vmul.f32 %v1813, %v1839
        %v1862 = vmul.f32 %v1813, %v1843
        %v1863 = vmul.f32 %v1813, %v1847
        %1872 = vrot.lane.b32.xlu0 %v1856, 127
        %v1873 = vpop.permute.xlu0 %1872
        %1874 = vrot.lane.b32.xlu0 %v1857, 127
        %v1875 = vpop.permute.xlu0 %1874
        %1876 = vrot.lane.b32.xlu0 %v1858, 127
        %v1877 = vpop.permute.xlu0 %1876
        %1878 = vrot.lane.b32.xlu0 %v1859, 127
        %v1879 = vpop.permute.xlu0 %1878
        %1880 = vrot.lane.b32.xlu0 %v1860, 127
        %v1881 = vpop.permute.xlu0 %1880
        %1882 = vrot.lane.b32.xlu0 %v1861, 127
        %v1883 = vpop.permute.xlu0 %1882
        %1884 = vrot.lane.b32.xlu0 %v1862, 127
        %v1885 = vpop.permute.xlu0 %1884
        %1886 = vrot.lane.b32.xlu0 %v1863, 127
        %v1887 = vpop.permute.xlu0 %1886
        %v1888 = vsel %vm629, %v1873, %v1875
        %v1889 = vsel %vm629, %v1875, %v1877
        %v1890 = vsel %vm629, %v1877, %v1879
        %v1891 = vsel %vm629, %v1879, %v1881
        %v1892 = vsel %vm629, %v1881, %v1883
        %v1893 = vsel %vm629, %v1883, %v1885
        %v1894 = vsel %vm629, %v1885, %v1887
        %v1902 = vadd.f32 %v1800, %v1888
        %v1903 = vadd.f32 %v1801, %v1889
        %v1904 = vadd.f32 %v1802, %v1890
        %v1905 = vadd.f32 %v1803, %v1891
        %v1906 = vadd.f32 %v1804, %v1892
        %v1907 = vadd.f32 %v1805, %v1893
        %v1908 = vadd.f32 %v1806, %v1894
        %s1909 = scalar_lea.vmem %s1, 176
        %v1910 = vld [vmem:[%s1909] sm:$0xff]
        %1912 = vset.pattern.permute.xlu0 0
        %1913 = vperm.xlu0 %1912, %v1910
        %v1914 = vpop.permute.xlu0 %1913
        %v1916 = vmul.f32 %v1914, %v1819
        %v1917 = vmul.f32 %v1914, %v1823
        %v1918 = vmul.f32 %v1914, %v1827
        %v1919 = vmul.f32 %v1914, %v1831
        %v1920 = vmul.f32 %v1914, %v1835
        %v1921 = vmul.f32 %v1914, %v1839
        %v1922 = vmul.f32 %v1914, %v1843
        %v1923 = vmul.f32 %v1914, %v1847
        %1932 = vrot.lane.b32.xlu0 %v1916, 126
        %v1933 = vpop.permute.xlu0 %1932
        %1934 = vrot.lane.b32.xlu0 %v1917, 126
        %v1935 = vpop.permute.xlu0 %1934
        %1936 = vrot.lane.b32.xlu0 %v1918, 126
        %v1937 = vpop.permute.xlu0 %1936
        %1938 = vrot.lane.b32.xlu0 %v1919, 126
        %v1939 = vpop.permute.xlu0 %1938
        %1940 = vrot.lane.b32.xlu0 %v1920, 126
        %v1941 = vpop.permute.xlu0 %1940
        %1942 = vrot.lane.b32.xlu0 %v1921, 126
        %v1943 = vpop.permute.xlu0 %1942
        %1944 = vrot.lane.b32.xlu0 %v1922, 126
        %v1945 = vpop.permute.xlu0 %1944
        %1946 = vrot.lane.b32.xlu0 %v1923, 126
        %v1947 = vpop.permute.xlu0 %1946
        %v1948 = vsel %vm690, %v1933, %v1935
        %v1949 = vsel %vm690, %v1935, %v1937
        %v1950 = vsel %vm690, %v1937, %v1939
        %v1951 = vsel %vm690, %v1939, %v1941
        %v1952 = vsel %vm690, %v1941, %v1943
        %v1953 = vsel %vm690, %v1943, %v1945
        %v1954 = vsel %vm690, %v1945, %v1947
        %v1962 = vadd.f32 %v1902, %v1948
        %v1963 = vadd.f32 %v1903, %v1949
        %v1964 = vadd.f32 %v1904, %v1950
        %v1965 = vadd.f32 %v1905, %v1951
        %v1966 = vadd.f32 %v1906, %v1952
        %v1967 = vadd.f32 %v1907, %v1953
        %v1968 = vadd.f32 %v1908, %v1954
        %s1969 = scalar_lea.vmem %s1, 184
        %v1970 = vld [vmem:[%s1969] sm:$0xff]
        %1972 = vset.pattern.permute.xlu0 0
        %1973 = vperm.xlu0 %1972, %v1970
        %v1974 = vpop.permute.xlu0 %1973
        %v1976 = vmul.f32 %v1974, %v1819
        %v1977 = vmul.f32 %v1974, %v1823
        %v1978 = vmul.f32 %v1974, %v1827
        %v1979 = vmul.f32 %v1974, %v1831
        %v1980 = vmul.f32 %v1974, %v1835
        %v1981 = vmul.f32 %v1974, %v1839
        %v1982 = vmul.f32 %v1974, %v1843
        %v1983 = vmul.f32 %v1974, %v1847
        %1992 = vrot.lane.b32.xlu0 %v1976, 125
        %v1993 = vpop.permute.xlu0 %1992
        %1994 = vrot.lane.b32.xlu0 %v1977, 125
        %v1995 = vpop.permute.xlu0 %1994
        %1996 = vrot.lane.b32.xlu0 %v1978, 125
        %v1997 = vpop.permute.xlu0 %1996
        %1998 = vrot.lane.b32.xlu0 %v1979, 125
        %v1999 = vpop.permute.xlu0 %1998
        %2000 = vrot.lane.b32.xlu0 %v1980, 125
        %v2001 = vpop.permute.xlu0 %2000
        %2002 = vrot.lane.b32.xlu0 %v1981, 125
        %v2003 = vpop.permute.xlu0 %2002
        %2004 = vrot.lane.b32.xlu0 %v1982, 125
        %v2005 = vpop.permute.xlu0 %2004
        %2006 = vrot.lane.b32.xlu0 %v1983, 125
        %v2007 = vpop.permute.xlu0 %2006
        %v2008 = vsel %vm751, %v1993, %v1995
        %v2009 = vsel %vm751, %v1995, %v1997
        %v2010 = vsel %vm751, %v1997, %v1999
        %v2011 = vsel %vm751, %v1999, %v2001
        %v2012 = vsel %vm751, %v2001, %v2003
        %v2013 = vsel %vm751, %v2003, %v2005
        %v2014 = vsel %vm751, %v2005, %v2007
        %v2022 = vadd.f32 %v1962, %v2008
        %v2023 = vadd.f32 %v1963, %v2009
        %v2024 = vadd.f32 %v1964, %v2010
        %v2025 = vadd.f32 %v1965, %v2011
        %v2026 = vadd.f32 %v1966, %v2012
        %v2027 = vadd.f32 %v1967, %v2013
        %v2028 = vadd.f32 %v1968, %v2014
        %s2029 = scalar_lea.vmem %s1, 192
        %v2030 = vld [vmem:[%s2029] sm:$0xff]
        %2032 = vset.pattern.permute.xlu0 0
        %2033 = vperm.xlu0 %2032, %v2030
        %v2034 = vpop.permute.xlu0 %2033
        %v2036 = vmul.f32 %v2034, %v1819
        %v2037 = vmul.f32 %v2034, %v1823
        %v2038 = vmul.f32 %v2034, %v1827
        %v2039 = vmul.f32 %v2034, %v1831
        %v2040 = vmul.f32 %v2034, %v1835
        %v2041 = vmul.f32 %v2034, %v1839
        %v2042 = vmul.f32 %v2034, %v1843
        %v2043 = vmul.f32 %v2034, %v1847
        %2052 = vrot.lane.b32.xlu0 %v2036, 124
        %v2053 = vpop.permute.xlu0 %2052
        %2054 = vrot.lane.b32.xlu0 %v2037, 124
        %v2055 = vpop.permute.xlu0 %2054
        %2056 = vrot.lane.b32.xlu0 %v2038, 124
        %v2057 = vpop.permute.xlu0 %2056
        %2058 = vrot.lane.b32.xlu0 %v2039, 124
        %v2059 = vpop.permute.xlu0 %2058
        %2060 = vrot.lane.b32.xlu0 %v2040, 124
        %v2061 = vpop.permute.xlu0 %2060
        %2062 = vrot.lane.b32.xlu0 %v2041, 124
        %v2063 = vpop.permute.xlu0 %2062
        %2064 = vrot.lane.b32.xlu0 %v2042, 124
        %v2065 = vpop.permute.xlu0 %2064
        %2066 = vrot.lane.b32.xlu0 %v2043, 124
        %v2067 = vpop.permute.xlu0 %2066
        %v2068 = vsel %vm812, %v2053, %v2055
        %v2069 = vsel %vm812, %v2055, %v2057
        %v2070 = vsel %vm812, %v2057, %v2059
        %v2071 = vsel %vm812, %v2059, %v2061
        %v2072 = vsel %vm812, %v2061, %v2063
        %v2073 = vsel %vm812, %v2063, %v2065
        %v2074 = vsel %vm812, %v2065, %v2067
        %v2082 = vadd.f32 %v2022, %v2068
        %v2083 = vadd.f32 %v2023, %v2069
        %v2084 = vadd.f32 %v2024, %v2070
        %v2085 = vadd.f32 %v2025, %v2071
        %v2086 = vadd.f32 %v2026, %v2072
        %v2087 = vadd.f32 %v2027, %v2073
        %v2088 = vadd.f32 %v2028, %v2074
        %v2089 = vld [vmem:[%s2] sm:$0xff]
        %2091 = vset.pattern.permute.xlu0 0
        %2092 = vperm.xlu0 %2091, %v2089
        %v2093 = vpop.permute.xlu0 %2092
        %v2095 = vadd.f32 %v2082, %v2093
        %v2096 = vadd.f32 %v2083, %v2093
        %v2097 = vadd.f32 %v2084, %v2093
        %v2098 = vadd.f32 %v2085, %v2093
        %v2099 = vadd.f32 %v2086, %v2093
        %v2100 = vadd.f32 %v2087, %v2093
        %v2101 = vadd.f32 %v2088, %v2093
        %v2102 = vmax.f32 %v2095, 0.0
        %v2103 = vmax.f32 %v2096, 0.0
        %v2104 = vmax.f32 %v2097, 0.0
        %v2105 = vmax.f32 %v2098, 0.0
        %v2106 = vmax.f32 %v2099, 0.0
        %v2107 = vmax.f32 %v2100, 0.0
        %v2108 = vmax.f32 %v2101, 0.0
        %2109 = vst [vmem:[#allocation2] sm:$0xff] %v2102
        %2110 = vst [vmem:[#allocation2 + $0x8] sm:$0xff] %v2103
        %2111 = vst [vmem:[#allocation2 + $0x10] sm:$0xff] %v2104
        %2112 = vst [vmem:[#allocation2 + $0x18] sm:$0xff] %v2105
        %2113 = vst [vmem:[#allocation2 + $0x20] sm:$0xff] %v2106
        %2114 = vst [vmem:[#allocation2 + $0x28] sm:$0xff] %v2107
        %2115 = vst [vmem:[#allocation2 + $0x30] sm:$0xff] %v2108
        %2116 = vst [vmem:[#allocation2 + $0x38] sm:$0xff] 0.0
        %v2117 = vld [vmem:[#allocation2] sm:$0xff]
        %v2118 = vld [vmem:[#allocation2 + $0x8] sm:$0xff]
        %v2119 = vld [vmem:[#allocation2 + $0x10] sm:$0xff]
        %v2120 = vld [vmem:[#allocation2 + $0x18] sm:$0xff]
        %v2121 = vld [vmem:[#allocation2 + $0x20] sm:$0xff]
        %v2122 = vld [vmem:[#allocation2 + $0x28] sm:$0xff]
        %v2123 = vld [vmem:[#allocation2 + $0x30] sm:$0xff]
        %v2124 = vld [vmem:[#allocation2] sm:$0xff]
        %v2125 = vld [vmem:[#allocation2 + $0x8] sm:$0xff]
        %v2126 = vld [vmem:[#allocation2 + $0x10] sm:$0xff]
        %v2127 = vld [vmem:[#allocation2 + $0x18] sm:$0xff]
        %v2128 = vld [vmem:[#allocation2 + $0x20] sm:$0xff]
        %v2129 = vld [vmem:[#allocation2 + $0x28] sm:$0xff]
        %v2130 = vld [vmem:[#allocation2 + $0x30] sm:$0xff]
        %v2131 = vld [vmem:[#allocation2 + $0x38] sm:$0xff]
        %2140 = vrot.lane.b32.xlu0 %v2124, 127
        %v2141 = vpop.permute.xlu0 %2140
        %2142 = vrot.lane.b32.xlu0 %v2125, 127
        %v2143 = vpop.permute.xlu0 %2142
        %2144 = vrot.lane.b32.xlu0 %v2126, 127
        %v2145 = vpop.permute.xlu0 %2144
        %2146 = vrot.lane.b32.xlu0 %v2127, 127
        %v2147 = vpop.permute.xlu0 %2146
        %2148 = vrot.lane.b32.xlu0 %v2128, 127
        %v2149 = vpop.permute.xlu0 %2148
        %2150 = vrot.lane.b32.xlu0 %v2129, 127
        %v2151 = vpop.permute.xlu0 %2150
        %2152 = vrot.lane.b32.xlu0 %v2130, 127
        %v2153 = vpop.permute.xlu0 %2152
        %2154 = vrot.lane.b32.xlu0 %v2131, 127
        %v2155 = vpop.permute.xlu0 %2154
        %v2156 = vsel %vm629, %v2141, %v2143
        %v2157 = vsel %vm629, %v2143, %v2145
        %v2158 = vsel %vm629, %v2145, %v2147
        %v2159 = vsel %vm629, %v2147, %v2149
        %v2160 = vsel %vm629, %v2149, %v2151
        %v2161 = vsel %vm629, %v2151, %v2153
        %v2162 = vsel %vm629, %v2153, %v2155
        %v2170 = vmax.f32 %v2117, %v2156
        %v2171 = vmax.f32 %v2118, %v2157
        %v2172 = vmax.f32 %v2119, %v2158
        %v2173 = vmax.f32 %v2120, %v2159
        %v2174 = vmax.f32 %v2121, %v2160
        %v2175 = vmax.f32 %v2122, %v2161
        %v2176 = vmax.f32 %v2123, %v2162
        %2177 = vrot.lane.b32.xlu0 %v2124, 96
        %v2178 = vpop.permute.xlu0 %2177
        %2179 = vrot.lane.b32.xlu0 %v2125, 96
        %v2180 = vpop.permute.xlu0 %2179
        %2181 = vrot.lane.b32.xlu0 %v2126, 96
        %v2182 = vpop.permute.xlu0 %2181
        %2183 = vrot.lane.b32.xlu0 %v2127, 96
        %v2184 = vpop.permute.xlu0 %2183
        %2185 = vrot.lane.b32.xlu0 %v2128, 96
        %v2186 = vpop.permute.xlu0 %2185
        %2187 = vrot.lane.b32.xlu0 %v2129, 96
        %v2188 = vpop.permute.xlu0 %2187
        %2189 = vrot.lane.b32.xlu0 %v2130, 96
        %v2190 = vpop.permute.xlu0 %2189
        %2191 = vrot.lane.b32.xlu0 %v2131, 96
        %v2192 = vpop.permute.xlu0 %2191
        %v2193 = vsel %vm873, %v2178, %v2180
        %v2194 = vsel %vm873, %v2180, %v2182
        %v2195 = vsel %vm873, %v2182, %v2184
        %v2196 = vsel %vm873, %v2184, %v2186
        %v2197 = vsel %vm873, %v2186, %v2188
        %v2198 = vsel %vm873, %v2188, %v2190
        %v2199 = vsel %vm873, %v2190, %v2192
        %v2207 = vmax.f32 %v2170, %v2193
        %v2208 = vmax.f32 %v2171, %v2194
        %v2209 = vmax.f32 %v2172, %v2195
        %v2210 = vmax.f32 %v2173, %v2196
        %v2211 = vmax.f32 %v2174, %v2197
        %v2212 = vmax.f32 %v2175, %v2198
        %v2213 = vmax.f32 %v2176, %v2199
        %2214 = vrot.lane.b32.xlu0 %v2124, 95
        %v2215 = vpop.permute.xlu0 %2214
        %2216 = vrot.lane.b32.xlu0 %v2125, 95
        %v2217 = vpop.permute.xlu0 %2216
        %2218 = vrot.lane.b32.xlu0 %v2126, 95
        %v2219 = vpop.permute.xlu0 %2218
        %2220 = vrot.lane.b32.xlu0 %v2127, 95
        %v2221 = vpop.permute.xlu0 %2220
        %2222 = vrot.lane.b32.xlu0 %v2128, 95
        %v2223 = vpop.permute.xlu0 %2222
        %2224 = vrot.lane.b32.xlu0 %v2129, 95
        %v2225 = vpop.permute.xlu0 %2224
        %2226 = vrot.lane.b32.xlu0 %v2130, 95
        %v2227 = vpop.permute.xlu0 %2226
        %2228 = vrot.lane.b32.xlu0 %v2131, 95
        %v2229 = vpop.permute.xlu0 %2228
        %v2230 = vsel %vm934, %v2215, %v2217
        %v2231 = vsel %vm934, %v2217, %v2219
        %v2232 = vsel %vm934, %v2219, %v2221
        %v2233 = vsel %vm934, %v2221, %v2223
        %v2234 = vsel %vm934, %v2223, %v2225
        %v2235 = vsel %vm934, %v2225, %v2227
        %v2236 = vsel %vm934, %v2227, %v2229
        %v2244 = vmax.f32 %v2207, %v2230
        %v2245 = vmax.f32 %v2208, %v2231
        %v2246 = vmax.f32 %v2209, %v2232
        %v2247 = vmax.f32 %v2210, %v2233
        %v2248 = vmax.f32 %v2211, %v2234
        %v2249 = vmax.f32 %v2212, %v2235
        %v2250 = vmax.f32 %v2213, %v2236
        %v2251 = vld [vmem:[%s3] sm:$0xff]
        %v2252 = vld [vmem:[%s3 + $0x8] sm:$0xff]
        %v2253 = vld [vmem:[%s3 + $0x10] sm:$0xff]
        %v2254 = vld [vmem:[%s3 + $0x18] sm:$0xff]
        %v2255 = vld [vmem:[%s3 + $0x20] sm:$0xff]
        %v2256 = vld [vmem:[%s3 + $0x28] sm:$0xff]
        %v2257 = vld [vmem:[%s3 + $0x30] sm:$0xff]
        %v2258 = vld [vmem:[%s3 + $0x38] sm:$0xff]
        %v2259 = vld [vmem:[%s3 + $0x40] sm:$0xff]
        %v2260 = vld [vmem:[%s3 + $0x48] sm:$0xff]
        %v2261 = vld [vmem:[%s3 + $0x50] sm:$0xff]
        %v2262 = vld [vmem:[%s3 + $0x58] sm:$0xff]
        %v2263 = vld [vmem:[%s3 + $0x60] sm:$0xff]
        %v2264 = vld [vmem:[%s3 + $0x68] sm:$0xff]
        %v2265 = vld [vmem:[%s3 + $0x70] sm:$0xff]
        %v2266 = vld [vmem:[%s3 + $0x78] sm:$0xff]
        %v2267 = vld [vmem:[%s3 + $0x80] sm:$0xff]
        %v2268 = vld [vmem:[%s3 + $0x88] sm:$0xff]
        %v2269 = vld [vmem:[%s3 + $0x90] sm:$0xff]
        %v2270 = vld [vmem:[%s3 + $0x98] sm:$0xff]
        %v2271 = vld [vmem:[%s3 + $0xa0] sm:$0xff]
        %v2272 = vld [vmem:[%s3 + $0xa8] sm:$0xff]
        %v2273 = vld [vmem:[%s3 + $0xb0] sm:$0xff]
        %v2274 = vld [vmem:[%s3 + $0xb8] sm:$0xff]
        %v2275 = vld [vmem:[%s3 + $0xc0] sm:$0xff]
        %v2276 = vld [vmem:[%s3 + $0xc8] sm:$0xff]
        %v2277 = vld [vmem:[%s3 + $0xd0] sm:$0xff]
        %v2278 = vld [vmem:[%s3 + $0xd8] sm:$0xff]
        %v2279 = vld [vmem:[%s3 + $0xe0] sm:$0xff]
        %v2280 = vld [vmem:[%s3 + $0xe8] sm:$0xff]
        %v2281 = vld [vmem:[%s3 + $0xf0] sm:$0xff]
        %v2282 = vld [vmem:[%s3 + $0xf8] sm:$0xff]
        %v2283 = vld [vmem:[%s3 + $0x100] sm:$0xff]
        %v2284 = vld [vmem:[%s3 + $0x108] sm:$0xff]
        %v2285 = vld [vmem:[%s3 + $0x110] sm:$0xff]
        %v2286 = vld [vmem:[%s3 + $0x118] sm:$0xff]
        %v2287 = vld [vmem:[%s3 + $0x120] sm:$0xff]
        %v2288 = vld [vmem:[%s3 + $0x128] sm:$0xff]
        %v2289 = vld [vmem:[%s3 + $0x130] sm:$0xff]
        %v2290 = vld [vmem:[%s3 + $0x138] sm:$0xff]
        %v2291 = vld [vmem:[%s3 + $0x140] sm:$0xff]
        %v2292 = vld [vmem:[%s3 + $0x148] sm:$0xff]
        %v2293 = vld [vmem:[%s3 + $0x150] sm:$0xff]
        %v2294 = vld [vmem:[%s3 + $0x158] sm:$0xff]
        %v2295 = vld [vmem:[%s3 + $0x160] sm:$0xff]
        %v2296 = vld [vmem:[%s3 + $0x168] sm:$0xff]
        %v2297 = vld [vmem:[%s3 + $0x170] sm:$0xff]
        %v2298 = vld [vmem:[%s3 + $0x178] sm:$0xff]
        %v2299 = vld [vmem:[%s3 + $0x180] sm:$0xff]
        %v2300 = vld [vmem:[%s3 + $0x188] sm:$0xff]
        %v2301 = vld [vmem:[%s3 + $0x190] sm:$0xff]
        %v2302 = vld [vmem:[%s3 + $0x198] sm:$0xff]
        %v2303 = vld [vmem:[%s3 + $0x1a0] sm:$0xff]
        %v2304 = vld [vmem:[%s3 + $0x1a8] sm:$0xff]
        %v2305 = vld [vmem:[%s3 + $0x1b0] sm:$0xff]
        %v2306 = vld [vmem:[%s3 + $0x1b8] sm:$0xff]
        %v2307 = vld [vmem:[%s3 + $0x1c0] sm:$0xff]
        %v2308 = vld [vmem:[%s3 + $0x1c8] sm:$0xff]
        %v2309 = vld [vmem:[%s3 + $0x1d0] sm:$0xff]
        %v2310 = vld [vmem:[%s3 + $0x1d8] sm:$0xff]
        %v2311 = vld [vmem:[%s3 + $0x1e0] sm:$0xff]
        %v2312 = vld [vmem:[%s3 + $0x1e8] sm:$0xff]
        %v2313 = vld [vmem:[%s3 + $0x1f0] sm:$0xff]
        %v2314 = vld [vmem:[%s3 + $0x1f8] sm:$0xff]
        %v2315 = vld [vmem:[%s3 + $0x200] sm:$0xff]
        %v2316 = vld [vmem:[%s3 + $0x208] sm:$0xff]
        %v2317 = vld [vmem:[%s3 + $0x210] sm:$0xff]
        %v2318 = vld [vmem:[%s3 + $0x218] sm:$0xff]
        %v2319 = vld [vmem:[%s3 + $0x220] sm:$0xff]
        %v2320 = vld [vmem:[%s3 + $0x228] sm:$0xff]
        %v2321 = vld [vmem:[%s3 + $0x230] sm:$0xff]
        %v2322 = vld [vmem:[%s3 + $0x238] sm:$0xff]
        %v2323 = vld [vmem:[%s3 + $0x240] sm:$0xff]
        %v2324 = vld [vmem:[%s3 + $0x248] sm:$0xff]
        %v2325 = vld [vmem:[%s3 + $0x250] sm:$0xff]
        %v2326 = vld [vmem:[%s3 + $0x258] sm:$0xff]
        %v2327 = vld [vmem:[%s3 + $0x260] sm:$0xff]
        %v2328 = vld [vmem:[%s3 + $0x268] sm:$0xff]
        %v2329 = vld [vmem:[%s3 + $0x270] sm:$0xff]
        %v2330 = vld [vmem:[%s3 + $0x278] sm:$0xff]
        %v2331 = vld [vmem:[%s3 + $0x280] sm:$0xff]
        %v2332 = vld [vmem:[%s3 + $0x288] sm:$0xff]
        %v2333 = vld [vmem:[%s3 + $0x290] sm:$0xff]
        %v2334 = vld [vmem:[%s3 + $0x298] sm:$0xff]
        %v2335 = vld [vmem:[%s3 + $0x2a0] sm:$0xff]
        %v2336 = vld [vmem:[%s3 + $0x2a8] sm:$0xff]
        %v2337 = vld [vmem:[%s3 + $0x2b0] sm:$0xff]
        %v2338 = vld [vmem:[%s3 + $0x2b8] sm:$0xff]
        %v2339 = vld [vmem:[%s3 + $0x2c0] sm:$0xff]
        %v2340 = vld [vmem:[%s3 + $0x2c8] sm:$0xff]
        %v2341 = vld [vmem:[%s3 + $0x2d0] sm:$0xff]
        %v2342 = vld [vmem:[%s3 + $0x2d8] sm:$0xff]
        %v2343 = vld [vmem:[%s3 + $0x2e0] sm:$0xff]
        %v2344 = vld [vmem:[%s3 + $0x2e8] sm:$0xff]
        %v2345 = vld [vmem:[%s3 + $0x2f0] sm:$0xff]
        %v2346 = vld [vmem:[%s3 + $0x2f8] sm:$0xff]
        %v2347 = vld [vmem:[%s3 + $0x300] sm:$0xff]
        %v2348 = vld [vmem:[%s3 + $0x308] sm:$0xff]
        %v2349 = vld [vmem:[%s3 + $0x310] sm:$0xff]
        %v2350 = vld [vmem:[%s3 + $0x318] sm:$0xff]
        %v2351 = vld [vmem:[%s3 + $0x320] sm:$0xff]
        %v2352 = vld [vmem:[%s3 + $0x328] sm:$0xff]
        %v2353 = vld [vmem:[%s3 + $0x330] sm:$0xff]
        %v2354 = vld [vmem:[%s3 + $0x338] sm:$0xff]
        %v2355 = vld [vmem:[%s3 + $0x340] sm:$0xff]
        %v2356 = vld [vmem:[%s3 + $0x348] sm:$0xff]
        %v2357 = vld [vmem:[%s3 + $0x350] sm:$0xff]
        %v2358 = vld [vmem:[%s3 + $0x358] sm:$0xff]
        %v2359 = vld [vmem:[%s3 + $0x360] sm:$0xff]
        %v2360 = vld [vmem:[%s3 + $0x368] sm:$0xff]
        %v2361 = vld [vmem:[%s3 + $0x370] sm:$0xff]
        %v2362 = vld [vmem:[%s3 + $0x378] sm:$0xff]
        %v2363 = vld [vmem:[%s3 + $0x380] sm:$0xff]
        %v2364 = vld [vmem:[%s3 + $0x388] sm:$0xff]
        %v2365 = vld [vmem:[%s3 + $0x390] sm:$0xff]
        %v2366 = vld [vmem:[%s3 + $0x398] sm:$0xff]
        %v2367 = vld [vmem:[%s3 + $0x3a0] sm:$0xff]
        %v2368 = vld [vmem:[%s3 + $0x3a8] sm:$0xff]
        %v2369 = vld [vmem:[%s3 + $0x3b0] sm:$0xff]
        %v2370 = vld [vmem:[%s3 + $0x3b8] sm:$0xff]
        %v2371 = vld [vmem:[%s3 + $0x3c0] sm:$0xff]
        %v2372 = vld [vmem:[%s3 + $0x3c8] sm:$0xff]
        %v2373 = vld [vmem:[%s3 + $0x3d0] sm:$0xff]
        %v2374 = vld [vmem:[%s3 + $0x3d8] sm:$0xff]
        %v2375 = vld [vmem:[%s3 + $0x3e0] sm:$0xff]
        %v2376 = vld [vmem:[%s3 + $0x3e8] sm:$0xff]
        %v2377 = vld [vmem:[%s3 + $0x3f0] sm:$0xff]
        %v2378 = vld [vmem:[%s3 + $0x3f8] sm:$0xff]
        %v2379 = vld [vmem:[%s3 + $0x400] sm:$0xff]
        %v2380 = vld [vmem:[%s3 + $0x408] sm:$0xff]
        %v2381 = vld [vmem:[%s3 + $0x410] sm:$0xff]
        %v2382 = vld [vmem:[%s3 + $0x418] sm:$0xff]
        %v2383 = vld [vmem:[%s3 + $0x420] sm:$0xff]
        %v2384 = vld [vmem:[%s3 + $0x428] sm:$0xff]
        %v2385 = vld [vmem:[%s3 + $0x430] sm:$0xff]
        %v2386 = vld [vmem:[%s3 + $0x438] sm:$0xff]
        %v2387 = vld [vmem:[%s3 + $0x440] sm:$0xff]
        %v2388 = vld [vmem:[%s3 + $0x448] sm:$0xff]
        %v2389 = vld [vmem:[%s3 + $0x450] sm:$0xff]
        %v2390 = vld [vmem:[%s3 + $0x458] sm:$0xff]
        %v2391 = vld [vmem:[%s3 + $0x460] sm:$0xff]
        %v2392 = vld [vmem:[%s3 + $0x468] sm:$0xff]
        %v2393 = vld [vmem:[%s3 + $0x470] sm:$0xff]
        %v2394 = vld [vmem:[%s3 + $0x478] sm:$0xff]
        %v2395 = vld [vmem:[%s3 + $0x480] sm:$0xff]
        %v2396 = vld [vmem:[%s3 + $0x488] sm:$0xff]
        %v2397 = vld [vmem:[%s3 + $0x490] sm:$0xff]
        %v2398 = vld [vmem:[%s3 + $0x498] sm:$0xff]
        %v2399 = vld [vmem:[%s3 + $0x4a0] sm:$0xff]
        %v2400 = vld [vmem:[%s3 + $0x4a8] sm:$0xff]
        %v2401 = vld [vmem:[%s3 + $0x4b0] sm:$0xff]
        %v2402 = vld [vmem:[%s3 + $0x4b8] sm:$0xff]
        %v2403 = vld [vmem:[%s3 + $0x4c0] sm:$0xff]
        %v2404 = vld [vmem:[%s3 + $0x4c8] sm:$0xff]
        %v2405 = vld [vmem:[%s3 + $0x4d0] sm:$0xff]
        %v2406 = vld [vmem:[%s3 + $0x4d8] sm:$0xff]
        %v2407 = vld [vmem:[%s3 + $0x4e0] sm:$0xff]
        %v2408 = vld [vmem:[%s3 + $0x4e8] sm:$0xff]
        %v2409 = vld [vmem:[%s3 + $0x4f0] sm:$0xff]
        %v2410 = vld [vmem:[%s3 + $0x4f8] sm:$0xff]
        %v2411 = vld [vmem:[%s3 + $0x500] sm:$0xff]
        %v2412 = vld [vmem:[%s3 + $0x508] sm:$0xff]
        %v2413 = vld [vmem:[%s3 + $0x510] sm:$0xff]
        %v2414 = vld [vmem:[%s3 + $0x518] sm:$0xff]
        %v2415 = vld [vmem:[%s3 + $0x520] sm:$0xff]
        %v2416 = vld [vmem:[%s3 + $0x528] sm:$0xff]
        %v2417 = vld [vmem:[%s3 + $0x530] sm:$0xff]
        %v2418 = vld [vmem:[%s3 + $0x538] sm:$0xff]
        %v2419 = vld [vmem:[%s3 + $0x540] sm:$0xff]
        %v2420 = vld [vmem:[%s3 + $0x548] sm:$0xff]
        %v2421 = vld [vmem:[%s3 + $0x550] sm:$0xff]
        %v2422 = vld [vmem:[%s3 + $0x558] sm:$0xff]
        %v2423 = vld [vmem:[%s3 + $0x560] sm:$0xff]
        %v2424 = vld [vmem:[%s3 + $0x568] sm:$0xff]
        %v2425 = vld [vmem:[%s3 + $0x570] sm:$0xff]
        %v2426 = vld [vmem:[%s3 + $0x578] sm:$0xff]
        %v2427 = vld [vmem:[%s3 + $0x580] sm:$0xff]
        %v2428 = vld [vmem:[%s3 + $0x588] sm:$0xff]
        %v2429 = vld [vmem:[%s3 + $0x590] sm:$0xff]
        %v2430 = vld [vmem:[%s3 + $0x598] sm:$0xff]
        %v2431 = vld [vmem:[%s3 + $0x5a0] sm:$0xff]
        %v2432 = vld [vmem:[%s3 + $0x5a8] sm:$0xff]
        %v2433 = vld [vmem:[%s3 + $0x5b0] sm:$0xff]
        %v2434 = vld [vmem:[%s3 + $0x5b8] sm:$0xff]
        %v2435 = vld [vmem:[%s3 + $0x5c0] sm:$0xff]
        %v2436 = vld [vmem:[%s3 + $0x5c8] sm:$0xff]
        %v2437 = vld [vmem:[%s3 + $0x5d0] sm:$0xff]
        %v2438 = vld [vmem:[%s3 + $0x5d8] sm:$0xff]
        %v2439 = vld [vmem:[%s3 + $0x5e0] sm:$0xff]
        %v2440 = vld [vmem:[%s3 + $0x5e8] sm:$0xff]
        %v2441 = vld [vmem:[%s3 + $0x5f0] sm:$0xff]
        %v2442 = vld [vmem:[%s3 + $0x5f8] sm:$0xff]
        %v2443 = vld [vmem:[%s3 + $0x600] sm:$0xff]
        %v2444 = vld [vmem:[%s3 + $0x608] sm:$0xff]
        %v2445 = vld [vmem:[%s3 + $0x610] sm:$0xff]
        %v2446 = vld [vmem:[%s3 + $0x618] sm:$0xff]
        %v2447 = vld [vmem:[%s3 + $0x620] sm:$0xff]
        %v2448 = vld [vmem:[%s3 + $0x628] sm:$0xff]
        %v2449 = vld [vmem:[%s3 + $0x630] sm:$0xff]
        %v2450 = vld [vmem:[%s3 + $0x638] sm:$0xff]
        %v2451 = vld [vmem:[%s3 + $0x640] sm:$0xff]
        %v2452 = vld [vmem:[%s3 + $0x648] sm:$0xff]
        %v2453 = vld [vmem:[%s3 + $0x650] sm:$0xff]
        %v2454 = vld [vmem:[%s3 + $0x658] sm:$0xff]
        %v2455 = vld [vmem:[%s3 + $0x660] sm:$0xff]
        %v2456 = vld [vmem:[%s3 + $0x668] sm:$0xff]
        %v2457 = vld [vmem:[%s3 + $0x670] sm:$0xff]
        %v2458 = vld [vmem:[%s3 + $0x678] sm:$0xff]
        %v2459 = vld [vmem:[%s3 + $0x680] sm:$0xff]
        %v2460 = vld [vmem:[%s3 + $0x688] sm:$0xff]
        %v2461 = vld [vmem:[%s3 + $0x690] sm:$0xff]
        %v2462 = vld [vmem:[%s3 + $0x698] sm:$0xff]
        %v2463 = vld [vmem:[%s3 + $0x6a0] sm:$0xff]
        %v2464 = vld [vmem:[%s3 + $0x6a8] sm:$0xff]
        %v2465 = vld [vmem:[%s3 + $0x6b0] sm:$0xff]
        %v2466 = vld [vmem:[%s3 + $0x6b8] sm:$0xff]
        %v2467 = vld [vmem:[%s3 + $0x6c0] sm:$0xff]
        %v2468 = vld [vmem:[%s3 + $0x6c8] sm:$0xff]
        %v2469 = vld [vmem:[%s3 + $0x6d0] sm:$0xff]
        %v2470 = vld [vmem:[%s3 + $0x6d8] sm:$0xff]
        %v2471 = vld [vmem:[%s3 + $0x6e0] sm:$0xff]
        %v2472 = vld [vmem:[%s3 + $0x6e8] sm:$0xff]
        %v2473 = vld [vmem:[%s3 + $0x6f0] sm:$0xff]
        %v2474 = vld [vmem:[%s3 + $0x6f8] sm:$0xff]
        %2475 = vmatprep.subr.mxu0 %v2282
        %2476 = vmatpush1.msra.mxu0 %v2281
        %2477 = vmatprep.subr.mxu0 %v2280
        %2478 = vmatpush1.msra.mxu0 %v2279
        %2479 = vmatprep.subr.mxu0 %v2278
        %2480 = vmatpush1.msra.mxu0 %v2277
        %2481 = vmatprep.subr.mxu0 %v2276
        %2482 = vmatpush1.msra.mxu0 %v2275
        %2483 = vmatprep.subr.mxu0 %v2274
        %2484 = vmatpush1.msra.mxu0 %v2273
        %2485 = vmatprep.subr.mxu0 %v2272
        %2486 = vmatpush1.msra.mxu0 %v2271
        %2487 = vmatprep.subr.mxu0 %v2270
        %2488 = vmatpush1.msra.mxu0 %v2269
        %2489 = vmatprep.subr.mxu0 %v2268
        %2490 = vmatpush1.msra.mxu0 %v2267
        %2491 = vmatprep.subr.mxu0 %v2266
        %2492 = vmatpush1.msra.mxu0 %v2265
        %2493 = vmatprep.subr.mxu0 %v2264
        %2494 = vmatpush1.msra.mxu0 %v2263
        %2495 = vmatprep.subr.mxu0 %v2262
        %2496 = vmatpush1.msra.mxu0 %v2261
        %2497 = vmatprep.subr.mxu0 %v2260
        %2498 = vmatpush1.msra.mxu0 %v2259
        %2499 = vmatprep.subr.mxu0 %v2258
        %2500 = vmatpush1.msra.mxu0 %v2257
        %2501 = vmatprep.subr.mxu0 %v2256
        %2502 = vmatpush1.msra.mxu0 %v2255
        %2503 = vmatprep.subr.mxu0 %v2254
        %2504 = vmatpush1.msra.mxu0 %v2253
        %2505 = vmatprep.subr.mxu0 %v2252
        %2506 = vmatpush1.msra.mxu0 %v2251
        %2507 = vmatprep.subr.mxu0 %v2314
        %2508 = vmatpush2.msra.mxu0 %v2313
        %2509 = vmatprep.subr.mxu0 %v2312
        %2510 = vmatpush2.msra.mxu0 %v2311
        %2511 = vmatprep.subr.mxu0 %v2310
        %2512 = vmatpush2.msra.mxu0 %v2309
        %2513 = vmatprep.subr.mxu0 %v2308
        %2514 = vmatpush2.msra.mxu0 %v2307
        %2515 = vmatprep.subr.mxu0 %v2306
        %2516 = vmatpush2.msra.mxu0 %v2305
        %2517 = vmatprep.subr.mxu0 %v2304
        %2518 = vmatpush2.msra.mxu0 %v2303
        %2519 = vmatprep.subr.mxu0 %v2302
        %2520 = vmatpush2.msra.mxu0 %v2301
        %2521 = vmatprep.subr.mxu0 %v2300
        %2522 = vmatpush2.msra.mxu0 %v2299
        %2523 = vmatprep.subr.mxu0 %v2298
        %2524 = vmatpush2.msra.mxu0 %v2297
        %2525 = vmatprep.subr.mxu0 %v2296
        %2526 = vmatpush2.msra.mxu0 %v2295
        %2527 = vmatprep.subr.mxu0 %v2294
        %2528 = vmatpush2.msra.mxu0 %v2293
        %2529 = vmatprep.subr.mxu0 %v2292
        %2530 = vmatpush2.msra.mxu0 %v2291
        %2531 = vmatprep.subr.mxu0 %v2290
        %2532 = vmatpush2.msra.mxu0 %v2289
        %2533 = vmatprep.subr.mxu0 %v2288
        %2534 = vmatpush2.msra.mxu0 %v2287
        %2535 = vmatprep.subr.mxu0 %v2286
        %2536 = vmatpush2.msra.mxu0 %v2285
        %2537 = vmatprep.subr.mxu0 %v2284
        %2538 = vmatpush2.msra.mxu0 %v2283
        %2539 = vmatprep.mubr.f32.mxu0 %v2245
        %2540 = vmatmul.mubr.f32.gmra.mxu0 %v2244
        %v2541 = vpop.f32.mrf.mxu0
        %v2542 = vadd.f32 0.0, %v2541
        %v2543 = vpop.f32.mrf.mxu0
        %v2544 = vadd.f32 0.0, %v2543
        %2545 = vdwg.mxu0
        %2546 = vmatprep.subr.mxu0 %v2346
        %2547 = vmatpush1.msra.mxu0 %v2345
        %2548 = vmatprep.subr.mxu0 %v2344
        %2549 = vmatpush1.msra.mxu0 %v2343
        %2550 = vmatprep.subr.mxu0 %v2342
        %2551 = vmatpush1.msra.mxu0 %v2341
        %2552 = vmatprep.subr.mxu0 %v2340
        %2553 = vmatpush1.msra.mxu0 %v2339
        %2554 = vmatprep.subr.mxu0 %v2338
        %2555 = vmatpush1.msra.mxu0 %v2337
        %2556 = vmatprep.subr.mxu0 %v2336
        %2557 = vmatpush1.msra.mxu0 %v2335
        %2558 = vmatprep.subr.mxu0 %v2334
        %2559 = vmatpush1.msra.mxu0 %v2333
        %2560 = vmatprep.subr.mxu0 %v2332
        %2561 = vmatpush1.msra.mxu0 %v2331
        %2562 = vmatprep.subr.mxu0 %v2330
        %2563 = vmatpush1.msra.mxu0 %v2329
        %2564 = vmatprep.subr.mxu0 %v2328
        %2565 = vmatpush1.msra.mxu0 %v2327
        %2566 = vmatprep.subr.mxu0 %v2326
        %2567 = vmatpush1.msra.mxu0 %v2325
        %2568 = vmatprep.subr.mxu0 %v2324
        %2569 = vmatpush1.msra.mxu0 %v2323
        %2570 = vmatprep.subr.mxu0 %v2322
        %2571 = vmatpush1.msra.mxu0 %v2321
        %2572 = vmatprep.subr.mxu0 %v2320
        %2573 = vmatpush1.msra.mxu0 %v2319
        %2574 = vmatprep.subr.mxu0 %v2318
        %2575 = vmatpush1.msra.mxu0 %v2317
        %2576 = vmatprep.subr.mxu0 %v2316
        %2577 = vmatpush1.msra.mxu0 %v2315
        %2578 = vmatprep.subr.mxu0 %v2378
        %2579 = vmatpush2.msra.mxu0 %v2377
        %2580 = vmatprep.subr.mxu0 %v2376
        %2581 = vmatpush2.msra.mxu0 %v2375
        %2582 = vmatprep.subr.mxu0 %v2374
        %2583 = vmatpush2.msra.mxu0 %v2373
        %2584 = vmatprep.subr.mxu0 %v2372
        %2585 = vmatpush2.msra.mxu0 %v2371
        %2586 = vmatprep.subr.mxu0 %v2370
        %2587 = vmatpush2.msra.mxu0 %v2369
        %2588 = vmatprep.subr.mxu0 %v2368
        %2589 = vmatpush2.msra.mxu0 %v2367
        %2590 = vmatprep.subr.mxu0 %v2366
        %2591 = vmatpush2.msra.mxu0 %v2365
        %2592 = vmatprep.subr.mxu0 %v2364
        %2593 = vmatpush2.msra.mxu0 %v2363
        %2594 = vmatprep.subr.mxu0 %v2362
        %2595 = vmatpush2.msra.mxu0 %v2361
        %2596 = vmatprep.subr.mxu0 %v2360
        %2597 = vmatpush2.msra.mxu0 %v2359
        %2598 = vmatprep.subr.mxu0 %v2358
        %2599 = vmatpush2.msra.mxu0 %v2357
        %2600 = vmatprep.subr.mxu0 %v2356
        %2601 = vmatpush2.msra.mxu0 %v2355
        %2602 = vmatprep.subr.mxu0 %v2354
        %2603 = vmatpush2.msra.mxu0 %v2353
        %2604 = vmatprep.subr.mxu0 %v2352
        %2605 = vmatpush2.msra.mxu0 %v2351
        %2606 = vmatprep.subr.mxu0 %v2350
        %2607 = vmatpush2.msra.mxu0 %v2349
        %2608 = vmatprep.subr.mxu0 %v2348
        %2609 = vmatpush2.msra.mxu0 %v2347
        %2610 = vmatprep.mubr.f32.mxu0 %v2247
        %2611 = vmatmul.mubr.f32.gmra.mxu0 %v2246
        %v2612 = vpop.f32.mrf.mxu0
        %v2613 = vadd.f32 %v2542, %v2612
        %v2614 = vpop.f32.mrf.mxu0
        %v2615 = vadd.f32 %v2544, %v2614
        %2616 = vdwg.mxu0
        %2617 = vmatprep.subr.mxu0 %v2410
        %2618 = vmatpush1.msra.mxu0 %v2409
        %2619 = vmatprep.subr.mxu0 %v2408
        %2620 = vmatpush1.msra.mxu0 %v2407
        %2621 = vmatprep.subr.mxu0 %v2406
        %2622 = vmatpush1.msra.mxu0 %v2405
        %2623 = vmatprep.subr.mxu0 %v2404
        %2624 = vmatpush1.msra.mxu0 %v2403
        %2625 = vmatprep.subr.mxu0 %v2402
        %2626 = vmatpush1.msra.mxu0 %v2401
        %2627 = vmatprep.subr.mxu0 %v2400
        %2628 = vmatpush1.msra.mxu0 %v2399
        %2629 = vmatprep.subr.mxu0 %v2398
        %2630 = vmatpush1.msra.mxu0 %v2397
        %2631 = vmatprep.subr.mxu0 %v2396
        %2632 = vmatpush1.msra.mxu0 %v2395
        %2633 = vmatprep.subr.mxu0 %v2394
        %2634 = vmatpush1.msra.mxu0 %v2393
        %2635 = vmatprep.subr.mxu0 %v2392
        %2636 = vmatpush1.msra.mxu0 %v2391
        %2637 = vmatprep.subr.mxu0 %v2390
        %2638 = vmatpush1.msra.mxu0 %v2389
        %2639 = vmatprep.subr.mxu0 %v2388
        %2640 = vmatpush1.msra.mxu0 %v2387
        %2641 = vmatprep.subr.mxu0 %v2386
        %2642 = vmatpush1.msra.mxu0 %v2385
        %2643 = vmatprep.subr.mxu0 %v2384
        %2644 = vmatpush1.msra.mxu0 %v2383
        %2645 = vmatprep.subr.mxu0 %v2382
        %2646 = vmatpush1.msra.mxu0 %v2381
        %2647 = vmatprep.subr.mxu0 %v2380
        %2648 = vmatpush1.msra.mxu0 %v2379
        %2649 = vmatprep.subr.mxu0 %v2442
        %2650 = vmatpush2.msra.mxu0 %v2441
        %2651 = vmatprep.subr.mxu0 %v2440
        %2652 = vmatpush2.msra.mxu0 %v2439
        %2653 = vmatprep.subr.mxu0 %v2438
        %2654 = vmatpush2.msra.mxu0 %v2437
        %2655 = vmatprep.subr.mxu0 %v2436
        %2656 = vmatpush2.msra.mxu0 %v2435
        %2657 = vmatprep.subr.mxu0 %v2434
        %2658 = vmatpush2.msra.mxu0 %v2433
        %2659 = vmatprep.subr.mxu0 %v2432
        %2660 = vmatpush2.msra.mxu0 %v2431
        %2661 = vmatprep.subr.mxu0 %v2430
        %2662 = vmatpush2.msra.mxu0 %v2429
        %2663 = vmatprep.subr.mxu0 %v2428
        %2664 = vmatpush2.msra.mxu0 %v2427
        %2665 = vmatprep.subr.mxu0 %v2426
        %2666 = vmatpush2.msra.mxu0 %v2425
        %2667 = vmatprep.subr.mxu0 %v2424
        %2668 = vmatpush2.msra.mxu0 %v2423
        %2669 = vmatprep.subr.mxu0 %v2422
        %2670 = vmatpush2.msra.mxu0 %v2421
        %2671 = vmatprep.subr.mxu0 %v2420
        %2672 = vmatpush2.msra.mxu0 %v2419
        %2673 = vmatprep.subr.mxu0 %v2418
        %2674 = vmatpush2.msra.mxu0 %v2417
        %2675 = vmatprep.subr.mxu0 %v2416
        %2676 = vmatpush2.msra.mxu0 %v2415
        %2677 = vmatprep.subr.mxu0 %v2414
        %2678 = vmatpush2.msra.mxu0 %v2413
        %2679 = vmatprep.subr.mxu0 %v2412
        %2680 = vmatpush2.msra.mxu0 %v2411
        %2681 = vmatprep.mubr.f32.mxu0 %v2249
        %2682 = vmatmul.mubr.f32.gmra.mxu0 %v2248
        %v2683 = vpop.f32.mrf.mxu0
        %v2684 = vadd.f32 %v2613, %v2683
        %v2685 = vpop.f32.mrf.mxu0
        %v2686 = vadd.f32 %v2615, %v2685
        %2687 = vdwg.mxu0
        %2688 = vmatprep.subr.mxu0 %v2474
        %2689 = vmatpush1.msra.mxu0 %v2473
        %2690 = vmatprep.subr.mxu0 %v2472
        %2691 = vmatpush1.msra.mxu0 %v2471
        %2692 = vmatprep.subr.mxu0 %v2470
        %2693 = vmatpush1.msra.mxu0 %v2469
        %2694 = vmatprep.subr.mxu0 %v2468
        %2695 = vmatpush1.msra.mxu0 %v2467
        %2696 = vmatprep.subr.mxu0 %v2466
        %2697 = vmatpush1.msra.mxu0 %v2465
        %2698 = vmatprep.subr.mxu0 %v2464
        %2699 = vmatpush1.msra.mxu0 %v2463
        %2700 = vmatprep.subr.mxu0 %v2462
        %2701 = vmatpush1.msra.mxu0 %v2461
        %2702 = vmatprep.subr.mxu0 %v2460
        %2703 = vmatpush1.msra.mxu0 %v2459
        %2704 = vmatprep.subr.mxu0 %v2458
        %2705 = vmatpush1.msra.mxu0 %v2457
        %2706 = vmatprep.subr.mxu0 %v2456
        %2707 = vmatpush1.msra.mxu0 %v2455
        %2708 = vmatprep.subr.mxu0 %v2454
        %2709 = vmatpush1.msra.mxu0 %v2453
        %2710 = vmatprep.subr.mxu0 %v2452
        %2711 = vmatpush1.msra.mxu0 %v2451
        %2712 = vmatprep.subr.mxu0 %v2450
        %2713 = vmatpush1.msra.mxu0 %v2449
        %2714 = vmatprep.subr.mxu0 %v2448
        %2715 = vmatpush1.msra.mxu0 %v2447
        %2716 = vmatprep.subr.mxu0 %v2446
        %2717 = vmatpush1.msra.mxu0 %v2445
        %2718 = vmatprep.subr.mxu0 %v2444
        %2719 = vmatpush1.msra.mxu0 %v2443
        %2720 = vmatprep.subr.mxu0 0.0
        %2721 = vmatpush2.msra.mxu0 0.0
        %2722 = vmatprep.subr.mxu0 0.0
        %2723 = vmatpush2.msra.mxu0 0.0
        %2724 = vmatprep.subr.mxu0 0.0
        %2725 = vmatpush2.msra.mxu0 0.0
        %2726 = vmatprep.subr.mxu0 0.0
        %2727 = vmatpush2.msra.mxu0 0.0
        %2728 = vmatprep.subr.mxu0 0.0
        %2729 = vmatpush2.msra.mxu0 0.0
        %2730 = vmatprep.subr.mxu0 0.0
        %2731 = vmatpush2.msra.mxu0 0.0
        %2732 = vmatprep.subr.mxu0 0.0
        %2733 = vmatpush2.msra.mxu0 0.0
        %2734 = vmatprep.subr.mxu0 0.0
        %2735 = vmatpush2.msra.mxu0 0.0
        %2736 = vmatprep.subr.mxu0 0.0
        %2737 = vmatpush2.msra.mxu0 0.0
        %2738 = vmatprep.subr.mxu0 0.0
        %2739 = vmatpush2.msra.mxu0 0.0
        %2740 = vmatprep.subr.mxu0 0.0
        %2741 = vmatpush2.msra.mxu0 0.0
        %2742 = vmatprep.subr.mxu0 0.0
        %2743 = vmatpush2.msra.mxu0 0.0
        %2744 = vmatprep.subr.mxu0 0.0
        %2745 = vmatpush2.msra.mxu0 0.0
        %2746 = vmatprep.subr.mxu0 0.0
        %2747 = vmatpush2.msra.mxu0 0.0
        %2748 = vmatprep.subr.mxu0 0.0
        %2749 = vmatpush2.msra.mxu0 0.0
        %2750 = vmatprep.subr.mxu0 0.0
        %2751 = vmatpush2.msra.mxu0 0.0
        %2752 = vmatprep.mubr.f32.mxu0 0.0
        %2753 = vmatmul.mubr.f32.gmra.mxu0 %v2250
        %v2754 = vpop.f32.mrf.mxu0
        %v2755 = vadd.f32 %v2684, %v2754
        %v2756 = vpop.f32.mrf.mxu0
        %v2757 = vadd.f32 %v2686, %v2756
        %2758 = vdwg.mxu0
        %2759 = vst [vmem:[#allocation3] sm:$0xff] %v2755
        %2760 = vst [vmem:[#allocation3 + $0x8] sm:$0xff] %v2757
        %2761 = vst [vmem:[#allocation3 + $0x10] sm:$0xff] 0.0
        %v2762 = vld [vmem:[#allocation3] sm:$0xff]
        %v2763 = vld [vmem:[#allocation3 + $0x8] sm:$0xff]
        %v2764 = vld [vmem:[%s4] sm:$0xff]
        %v2765 = vld [vmem:[%s4 + $0x8] sm:$0xff]
        %v2766 = vld [vmem:[#allocation3] sm:$0xff]
        %v2767 = vld [vmem:[#allocation3 + $0x8] sm:$0xff]
        %v2768 = vld [vmem:[#allocation3 + $0x10] sm:$0xff]
        %s2769 = scalar_lea.vmem %s4, 16
        %v2770 = vld [vmem:[%s2769] sm:$0xff]
        %v2771 = vld [vmem:[%s2769 + $0x8] sm:$0xff]
        %2775 = vrot.lane.b32.xlu0 %v2766, 127
        %v2776 = vpop.permute.xlu0 %2775
        %2777 = vrot.lane.b32.xlu0 %v2767, 127
        %v2778 = vpop.permute.xlu0 %2777
        %2779 = vrot.lane.b32.xlu0 %v2768, 127
        %v2780 = vpop.permute.xlu0 %2779
        %v2781 = vsel %vm629, %v2776, %v2778
        %v2782 = vsel %vm629, %v2778, %v2780
        %vm2785 = vcmask 64512
        %v2787 = vsel %vm2785, %v2770, 0
        %v2790 = vsel %vm2785, %v2771, 0
        %2792 = vmatprep.subr.mxu0 0.0
        %2793 = vmatpush1.msra.mxu0 0.0
        %2794 = vmatprep.subr.mxu0 0.0
        %2795 = vmatpush1.msra.mxu0 0.0
        %2796 = vmatprep.subr.mxu0 0.0
        %2797 = vmatpush1.msra.mxu0 0.0
        %2798 = vmatprep.subr.mxu0 0.0
        %2799 = vmatpush1.msra.mxu0 0.0
        %2800 = vmatprep.subr.mxu0 0.0
        %2801 = vmatpush1.msra.mxu0 0.0
        %2802 = vmatprep.subr.mxu0 0.0
        %2803 = vmatpush1.msra.mxu0 0.0
        %2804 = vmatprep.subr.mxu0 0.0
        %2805 = vmatpush1.msra.mxu0 0.0
        %2806 = vmatprep.subr.mxu0 0.0
        %2807 = vmatpush1.msra.mxu0 0.0
        %2808 = vmatprep.subr.mxu0 0.0
        %2809 = vmatpush1.msra.mxu0 0.0
        %2810 = vmatprep.subr.mxu0 0.0
        %2811 = vmatpush1.msra.mxu0 0.0
        %2812 = vmatprep.subr.mxu0 0.0
        %2813 = vmatpush1.msra.mxu0 0.0
        %2814 = vmatprep.subr.mxu0 0.0
        %2815 = vmatpush1.msra.mxu0 0.0
        %2816 = vmatprep.subr.mxu0 0.0
        %2817 = vmatpush1.msra.mxu0 0.0
        %2818 = vmatprep.subr.mxu0 0.0
        %2819 = vmatpush1.msra.mxu0 0.0
        %2820 = vmatprep.subr.mxu0 0.0
        %2821 = vmatpush1.msra.mxu0 0.0
        %2822 = vmatprep.subr.mxu0 %v2782
        %2823 = vmatpush1.msra.mxu0 %v2781
        %2824 = vmatprep.subr.mxu0 0.0
        %2825 = vmatpush2.msra.mxu0 0.0
        %2826 = vmatprep.subr.mxu0 0.0
        %2827 = vmatpush2.msra.mxu0 0.0
        %2828 = vmatprep.subr.mxu0 0.0
        %2829 = vmatpush2.msra.mxu0 0.0
        %2830 = vmatprep.subr.mxu0 0.0
        %2831 = vmatpush2.msra.mxu0 0.0
        %2832 = vmatprep.subr.mxu0 0.0
        %2833 = vmatpush2.msra.mxu0 0.0
        %2834 = vmatprep.subr.mxu0 0.0
        %2835 = vmatpush2.msra.mxu0 0.0
        %2836 = vmatprep.subr.mxu0 0.0
        %2837 = vmatpush2.msra.mxu0 0.0
        %2838 = vmatprep.subr.mxu0 0.0
        %2839 = vmatpush2.msra.mxu0 0.0
        %2840 = vmatprep.subr.mxu0 0.0
        %2841 = vmatpush2.msra.mxu0 0.0
        %2842 = vmatprep.subr.mxu0 0.0
        %2843 = vmatpush2.msra.mxu0 0.0
        %2844 = vmatprep.subr.mxu0 0.0
        %2845 = vmatpush2.msra.mxu0 0.0
        %2846 = vmatprep.subr.mxu0 0.0
        %2847 = vmatpush2.msra.mxu0 0.0
        %2848 = vmatprep.subr.mxu0 0.0
        %2849 = vmatpush2.msra.mxu0 0.0
        %2850 = vmatprep.subr.mxu0 0.0
        %2851 = vmatpush2.msra.mxu0 0.0
        %2852 = vmatprep.subr.mxu0 0.0
        %2853 = vmatpush2.msra.mxu0 0.0
        %2854 = vmatprep.subr.mxu0 0.0
        %2855 = vmatpush2.msra.mxu0 0.0
        %2856 = vmatprep.mubr.f32.mxu0 0.0
        %2857 = vmatmul.mubr.f32.gmra.mxu0 %v2787
        %v2858 = vpop.f32.mrf.mxu0
        %v2859 = vadd.f32 0.0, %v2858
        %v2860 = vpop.f32.mrf.mxu0
        %v2861 = vadd.f32 0.0, %v2860
        %2862 = vmatprep.mubr.f32.mxu0 0.0
        %2863 = vmatmul.mubr.f32.gmra.mxu0 %v2790
        %v2864 = vpop.f32.mrf.mxu0
        %v2865 = vadd.f32 0.0, %v2864
        %v2866 = vpop.f32.mrf.mxu0
        %v2867 = vadd.f32 0.0, %v2866
        %2868 = vdwg.mxu0
        %v2870 = vsel %vm2785, %v2764, 0
        %v2873 = vsel %vm2785, %v2765, 0
        %2875 = vmatprep.subr.mxu0 0.0
        %2876 = vmatpush1.msra.mxu0 0.0
        %2877 = vmatprep.subr.mxu0 0.0
        %2878 = vmatpush1.msra.mxu0 0.0
        %2879 = vmatprep.subr.mxu0 0.0
        %2880 = vmatpush1.msra.mxu0 0.0
        %2881 = vmatprep.subr.mxu0 0.0
        %2882 = vmatpush1.msra.mxu0 0.0
        %2883 = vmatprep.subr.mxu0 0.0
        %2884 = vmatpush1.msra.mxu0 0.0
        %2885 = vmatprep.subr.mxu0 0.0
        %2886 = vmatpush1.msra.mxu0 0.0
        %2887 = vmatprep.subr.mxu0 0.0
        %2888 = vmatpush1.msra.mxu0 0.0
        %2889 = vmatprep.subr.mxu0 0.0
        %2890 = vmatpush1.msra.mxu0 0.0
        %2891 = vmatprep.subr.mxu0 0.0
        %2892 = vmatpush1.msra.mxu0 0.0
        %2893 = vmatprep.subr.mxu0 0.0
        %2894 = vmatpush1.msra.mxu0 0.0
        %2895 = vmatprep.subr.mxu0 0.0
        %2896 = vmatpush1.msra.mxu0 0.0
        %2897 = vmatprep.subr.mxu0 0.0
        %2898 = vmatpush1.msra.mxu0 0.0
        %2899 = vmatprep.subr.mxu0 0.0
        %2900 = vmatpush1.msra.mxu0 0.0
        %2901 = vmatprep.subr.mxu0 0.0
        %2902 = vmatpush1.msra.mxu0 0.0
        %2903 = vmatprep.subr.mxu0 0.0
        %2904 = vmatpush1.msra.mxu0 0.0
        %2905 = vmatprep.subr.mxu0 %v2763
        %2906 = vmatpush1.msra.mxu0 %v2762
        %2907 = vmatprep.subr.mxu0 0.0
        %2908 = vmatpush2.msra.mxu0 0.0
        %2909 = vmatprep.subr.mxu0 0.0
        %2910 = vmatpush2.msra.mxu0 0.0
        %2911 = vmatprep.subr.mxu0 0.0
        %2912 = vmatpush2.msra.mxu0 0.0
        %2913 = vmatprep.subr.mxu0 0.0
        %2914 = vmatpush2.msra.mxu0 0.0
        %2915 = vmatprep.subr.mxu0 0.0
        %2916 = vmatpush2.msra.mxu0 0.0
        %2917 = vmatprep.subr.mxu0 0.0
        %2918 = vmatpush2.msra.mxu0 0.0
        %2919 = vmatprep.subr.mxu0 0.0
        %2920 = vmatpush2.msra.mxu0 0.0
        %2921 = vmatprep.subr.mxu0 0.0
        %2922 = vmatpush2.msra.mxu0 0.0
        %2923 = vmatprep.subr.mxu0 0.0
        %2924 = vmatpush2.msra.mxu0 0.0
        %2925 = vmatprep.subr.mxu0 0.0
        %2926 = vmatpush2.msra.mxu0 0.0
        %2927 = vmatprep.subr.mxu0 0.0
        %2928 = vmatpush2.msra.mxu0 0.0
        %2929 = vmatprep.subr.mxu0 0.0
        %2930 = vmatpush2.msra.mxu0 0.0
        %2931 = vmatprep.subr.mxu0 0.0
        %2932 = vmatpush2.msra.mxu0 0.0
        %2933 = vmatprep.subr.mxu0 0.0
        %2934 = vmatpush2.msra.mxu0 0.0
        %2935 = vmatprep.subr.mxu0 0.0
        %2936 = vmatpush2.msra.mxu0 0.0
        %2937 = vmatprep.subr.mxu0 0.0
        %2938 = vmatpush2.msra.mxu0 0.0
        %2939 = vmatprep.mubr.f32.mxu0 0.0
        %2940 = vmatmul.mubr.f32.gmra.mxu0 %v2870
        %v2941 = vpop.f32.mrf.mxu0
        %v2942 = vadd.f32 %v2859, %v2941
        %v2943 = vpop.f32.mrf.mxu0
        %v2944 = vadd.f32 %v2861, %v2943
        %2945 = vmatprep.mubr.f32.mxu0 0.0
        %2946 = vmatmul.mubr.f32.gmra.mxu0 %v2873
        %v2947 = vpop.f32.mrf.mxu0
        %v2948 = vadd.f32 %v2865, %v2947
        %v2949 = vpop.f32.mrf.mxu0
        %v2950 = vadd.f32 %v2867, %v2949
        %2951 = vdwg.mxu0
        %s2952 = scalar_lea.vmem %s4, 32
        %v2953 = vld [vmem:[%s2952] sm:$0xff]
        %v2954 = vld [vmem:[%s2952 + $0x8] sm:$0xff]
        %2955 = vrot.lane.b32.xlu0 %v2766, 126
        %v2956 = vpop.permute.xlu0 %2955
        %2957 = vrot.lane.b32.xlu0 %v2767, 126
        %v2958 = vpop.permute.xlu0 %2957
        %2959 = vrot.lane.b32.xlu0 %v2768, 126
        %v2960 = vpop.permute.xlu0 %2959
        %v2961 = vsel %vm690, %v2956, %v2958
        %v2962 = vsel %vm690, %v2958, %v2960
        %v2966 = vsel %vm2785, %v2953, 0
        %v2969 = vsel %vm2785, %v2954, 0
        %2971 = vmatprep.subr.mxu0 0.0
        %2972 = vmatpush1.msra.mxu0 0.0
        %2973 = vmatprep.subr.mxu0 0.0
        %2974 = vmatpush1.msra.mxu0 0.0
        %2975 = vmatprep.subr.mxu0 0.0
        %2976 = vmatpush1.msra.mxu0 0.0
        %2977 = vmatprep.subr.mxu0 0.0
        %2978 = vmatpush1.msra.mxu0 0.0
        %2979 = vmatprep.subr.mxu0 0.0
        %2980 = vmatpush1.msra.mxu0 0.0
        %2981 = vmatprep.subr.mxu0 0.0
        %2982 = vmatpush1.msra.mxu0 0.0
        %2983 = vmatprep.subr.mxu0 0.0
        %2984 = vmatpush1.msra.mxu0 0.0
        %2985 = vmatprep.subr.mxu0 0.0
        %2986 = vmatpush1.msra.mxu0 0.0
        %2987 = vmatprep.subr.mxu0 0.0
        %2988 = vmatpush1.msra.mxu0 0.0
        %2989 = vmatprep.subr.mxu0 0.0
        %2990 = vmatpush1.msra.mxu0 0.0
        %2991 = vmatprep.subr.mxu0 0.0
        %2992 = vmatpush1.msra.mxu0 0.0
        %2993 = vmatprep.subr.mxu0 0.0
        %2994 = vmatpush1.msra.mxu0 0.0
        %2995 = vmatprep.subr.mxu0 0.0
        %2996 = vmatpush1.msra.mxu0 0.0
        %2997 = vmatprep.subr.mxu0 0.0
        %2998 = vmatpush1.msra.mxu0 0.0
        %2999 = vmatprep.subr.mxu0 0.0
        %3000 = vmatpush1.msra.mxu0 0.0
        %3001 = vmatprep.subr.mxu0 %v2962
        %3002 = vmatpush1.msra.mxu0 %v2961
        %3003 = vmatprep.subr.mxu0 0.0
        %3004 = vmatpush2.msra.mxu0 0.0
        %3005 = vmatprep.subr.mxu0 0.0
        %3006 = vmatpush2.msra.mxu0 0.0
        %3007 = vmatprep.subr.mxu0 0.0
        %3008 = vmatpush2.msra.mxu0 0.0
        %3009 = vmatprep.subr.mxu0 0.0
        %3010 = vmatpush2.msra.mxu0 0.0
        %3011 = vmatprep.subr.mxu0 0.0
        %3012 = vmatpush2.msra.mxu0 0.0
        %3013 = vmatprep.subr.mxu0 0.0
        %3014 = vmatpush2.msra.mxu0 0.0
        %3015 = vmatprep.subr.mxu0 0.0
        %3016 = vmatpush2.msra.mxu0 0.0
        %3017 = vmatprep.subr.mxu0 0.0
        %3018 = vmatpush2.msra.mxu0 0.0
        %3019 = vmatprep.subr.mxu0 0.0
        %3020 = vmatpush2.msra.mxu0 0.0
        %3021 = vmatprep.subr.mxu0 0.0
        %3022 = vmatpush2.msra.mxu0 0.0
        %3023 = vmatprep.subr.mxu0 0.0
        %3024 = vmatpush2.msra.mxu0 0.0
        %3025 = vmatprep.subr.mxu0 0.0
        %3026 = vmatpush2.msra.mxu0 0.0
        %3027 = vmatprep.subr.mxu0 0.0
        %3028 = vmatpush2.msra.mxu0 0.0
        %3029 = vmatprep.subr.mxu0 0.0
        %3030 = vmatpush2.msra.mxu0 0.0
        %3031 = vmatprep.subr.mxu0 0.0
        %3032 = vmatpush2.msra.mxu0 0.0
        %3033 = vmatprep.subr.mxu0 0.0
        %3034 = vmatpush2.msra.mxu0 0.0
        %3035 = vmatprep.mubr.f32.mxu0 0.0
        %3036 = vmatmul.mubr.f32.gmra.mxu0 %v2966
        %v3037 = vpop.f32.mrf.mxu0
        %v3038 = vadd.f32 0.0, %v3037
        %v3039 = vpop.f32.mrf.mxu0
        %v3040 = vadd.f32 0.0, %v3039
        %3041 = vmatprep.mubr.f32.mxu0 0.0
        %3042 = vmatmul.mubr.f32.gmra.mxu0 %v2969
        %v3043 = vpop.f32.mrf.mxu0
        %v3044 = vadd.f32 0.0, %v3043
        %v3045 = vpop.f32.mrf.mxu0
        %v3046 = vadd.f32 0.0, %v3045
        %3047 = vdwg.mxu0
        %v3048 = vadd.f32 %v2942, %v3038
        %v3049 = vadd.f32 %v2944, %v3040
        %v3050 = vadd.f32 %v2948, %v3044
        %v3051 = vadd.f32 %v2950, %v3046
        %s3052 = scalar_lea.vmem %s4, 48
        %v3053 = vld [vmem:[%s3052] sm:$0xff]
        %v3054 = vld [vmem:[%s3052 + $0x8] sm:$0xff]
        %3055 = vrot.lane.b32.xlu0 %v2766, 114
        %v3056 = vpop.permute.xlu0 %3055
        %3057 = vrot.lane.b32.xlu0 %v2767, 114
        %v3058 = vpop.permute.xlu0 %3057
        %3059 = vrot.lane.b32.xlu0 %v2768, 114
        %v3060 = vpop.permute.xlu0 %3059
        %vm3061 = vcmask 932864
        %v3062 = vsel %vm3061, %v3056, %v3058
        %v3063 = vsel %vm3061, %v3058, %v3060
        %v3067 = vsel %vm2785, %v3053, 0
        %v3070 = vsel %vm2785, %v3054, 0
        %3072 = vmatprep.subr.mxu0 0.0
        %3073 = vmatpush1.msra.mxu0 0.0
        %3074 = vmatprep.subr.mxu0 0.0
        %3075 = vmatpush1.msra.mxu0 0.0
        %3076 = vmatprep.subr.mxu0 0.0
        %3077 = vmatpush1.msra.mxu0 0.0
        %3078 = vmatprep.subr.mxu0 0.0
        %3079 = vmatpush1.msra.mxu0 0.0
        %3080 = vmatprep.subr.mxu0 0.0
        %3081 = vmatpush1.msra.mxu0 0.0
        %3082 = vmatprep.subr.mxu0 0.0
        %3083 = vmatpush1.msra.mxu0 0.0
        %3084 = vmatprep.subr.mxu0 0.0
        %3085 = vmatpush1.msra.mxu0 0.0
        %3086 = vmatprep.subr.mxu0 0.0
        %3087 = vmatpush1.msra.mxu0 0.0
        %3088 = vmatprep.subr.mxu0 0.0
        %3089 = vmatpush1.msra.mxu0 0.0
        %3090 = vmatprep.subr.mxu0 0.0
        %3091 = vmatpush1.msra.mxu0 0.0
        %3092 = vmatprep.subr.mxu0 0.0
        %3093 = vmatpush1.msra.mxu0 0.0
        %3094 = vmatprep.subr.mxu0 0.0
        %3095 = vmatpush1.msra.mxu0 0.0
        %3096 = vmatprep.subr.mxu0 0.0
        %3097 = vmatpush1.msra.mxu0 0.0
        %3098 = vmatprep.subr.mxu0 0.0
        %3099 = vmatpush1.msra.mxu0 0.0
        %3100 = vmatprep.subr.mxu0 0.0
        %3101 = vmatpush1.msra.mxu0 0.0
        %3102 = vmatprep.subr.mxu0 %v3063
        %3103 = vmatpush1.msra.mxu0 %v3062
        %3104 = vmatprep.subr.mxu0 0.0
        %3105 = vmatpush2.msra.mxu0 0.0
        %3106 = vmatprep.subr.mxu0 0.0
        %3107 = vmatpush2.msra.mxu0 0.0
        %3108 = vmatprep.subr.mxu0 0.0
        %3109 = vmatpush2.msra.mxu0 0.0
        %3110 = vmatprep.subr.mxu0 0.0
        %3111 = vmatpush2.msra.mxu0 0.0
        %3112 = vmatprep.subr.mxu0 0.0
        %3113 = vmatpush2.msra.mxu0 0.0
        %3114 = vmatprep.subr.mxu0 0.0
        %3115 = vmatpush2.msra.mxu0 0.0
        %3116 = vmatprep.subr.mxu0 0.0
        %3117 = vmatpush2.msra.mxu0 0.0
        %3118 = vmatprep.subr.mxu0 0.0
        %3119 = vmatpush2.msra.mxu0 0.0
        %3120 = vmatprep.subr.mxu0 0.0
        %3121 = vmatpush2.msra.mxu0 0.0
        %3122 = vmatprep.subr.mxu0 0.0
        %3123 = vmatpush2.msra.mxu0 0.0
        %3124 = vmatprep.subr.mxu0 0.0
        %3125 = vmatpush2.msra.mxu0 0.0
        %3126 = vmatprep.subr.mxu0 0.0
        %3127 = vmatpush2.msra.mxu0 0.0
        %3128 = vmatprep.subr.mxu0 0.0
        %3129 = vmatpush2.msra.mxu0 0.0
        %3130 = vmatprep.subr.mxu0 0.0
        %3131 = vmatpush2.msra.mxu0 0.0
        %3132 = vmatprep.subr.mxu0 0.0
        %3133 = vmatpush2.msra.mxu0 0.0
        %3134 = vmatprep.subr.mxu0 0.0
        %3135 = vmatpush2.msra.mxu0 0.0
        %3136 = vmatprep.mubr.f32.mxu0 0.0
        %3137 = vmatmul.mubr.f32.gmra.mxu0 %v3067
        %v3138 = vpop.f32.mrf.mxu0
        %v3139 = vadd.f32 0.0, %v3138
        %v3140 = vpop.f32.mrf.mxu0
        %v3141 = vadd.f32 0.0, %v3140
        %3142 = vmatprep.mubr.f32.mxu0 0.0
        %3143 = vmatmul.mubr.f32.gmra.mxu0 %v3070
        %v3144 = vpop.f32.mrf.mxu0
        %v3145 = vadd.f32 0.0, %v3144
        %v3146 = vpop.f32.mrf.mxu0
        %v3147 = vadd.f32 0.0, %v3146
        %3148 = vdwg.mxu0
        %v3149 = vadd.f32 %v3048, %v3139
        %v3150 = vadd.f32 %v3049, %v3141
        %v3151 = vadd.f32 %v3050, %v3145
        %v3152 = vadd.f32 %v3051, %v3147
        %s3153 = scalar_lea.vmem %s4, 64
        %v3154 = vld [vmem:[%s3153] sm:$0xff]
        %v3155 = vld [vmem:[%s3153 + $0x8] sm:$0xff]
        %3156 = vrot.lane.b32.xlu0 %v2766, 113
        %v3157 = vpop.permute.xlu0 %3156
        %3158 = vrot.lane.b32.xlu0 %v2767, 113
        %v3159 = vpop.permute.xlu0 %3158
        %3160 = vrot.lane.b32.xlu0 %v2768, 113
        %v3161 = vpop.permute.xlu0 %3160
        %vm3162 = vcmask 924672
        %v3163 = vsel %vm3162, %v3157, %v3159
        %v3164 = vsel %vm3162, %v3159, %v3161
        %v3168 = vsel %vm2785, %v3154, 0
        %v3171 = vsel %vm2785, %v3155, 0
        %3173 = vmatprep.subr.mxu0 0.0
        %3174 = vmatpush1.msra.mxu0 0.0
        %3175 = vmatprep.subr.mxu0 0.0
        %3176 = vmatpush1.msra.mxu0 0.0
        %3177 = vmatprep.subr.mxu0 0.0
        %3178 = vmatpush1.msra.mxu0 0.0
        %3179 = vmatprep.subr.mxu0 0.0
        %3180 = vmatpush1.msra.mxu0 0.0
        %3181 = vmatprep.subr.mxu0 0.0
        %3182 = vmatpush1.msra.mxu0 0.0
        %3183 = vmatprep.subr.mxu0 0.0
        %3184 = vmatpush1.msra.mxu0 0.0
        %3185 = vmatprep.subr.mxu0 0.0
        %3186 = vmatpush1.msra.mxu0 0.0
        %3187 = vmatprep.subr.mxu0 0.0
        %3188 = vmatpush1.msra.mxu0 0.0
        %3189 = vmatprep.subr.mxu0 0.0
        %3190 = vmatpush1.msra.mxu0 0.0
        %3191 = vmatprep.subr.mxu0 0.0
        %3192 = vmatpush1.msra.mxu0 0.0
        %3193 = vmatprep.subr.mxu0 0.0
        %3194 = vmatpush1.msra.mxu0 0.0
        %3195 = vmatprep.subr.mxu0 0.0
        %3196 = vmatpush1.msra.mxu0 0.0
        %3197 = vmatprep.subr.mxu0 0.0
        %3198 = vmatpush1.msra.mxu0 0.0
        %3199 = vmatprep.subr.mxu0 0.0
        %3200 = vmatpush1.msra.mxu0 0.0
        %3201 = vmatprep.subr.mxu0 0.0
        %3202 = vmatpush1.msra.mxu0 0.0
        %3203 = vmatprep.subr.mxu0 %v3164
        %3204 = vmatpush1.msra.mxu0 %v3163
        %3205 = vmatprep.subr.mxu0 0.0
        %3206 = vmatpush2.msra.mxu0 0.0
        %3207 = vmatprep.subr.mxu0 0.0
        %3208 = vmatpush2.msra.mxu0 0.0
        %3209 = vmatprep.subr.mxu0 0.0
        %3210 = vmatpush2.msra.mxu0 0.0
        %3211 = vmatprep.subr.mxu0 0.0
        %3212 = vmatpush2.msra.mxu0 0.0
        %3213 = vmatprep.subr.mxu0 0.0
        %3214 = vmatpush2.msra.mxu0 0.0
        %3215 = vmatprep.subr.mxu0 0.0
        %3216 = vmatpush2.msra.mxu0 0.0
        %3217 = vmatprep.subr.mxu0 0.0
        %3218 = vmatpush2.msra.mxu0 0.0
        %3219 = vmatprep.subr.mxu0 0.0
        %3220 = vmatpush2.msra.mxu0 0.0
        %3221 = vmatprep.subr.mxu0 0.0
        %3222 = vmatpush2.msra.mxu0 0.0
        %3223 = vmatprep.subr.mxu0 0.0
        %3224 = vmatpush2.msra.mxu0 0.0
        %3225 = vmatprep.subr.mxu0 0.0
        %3226 = vmatpush2.msra.mxu0 0.0
        %3227 = vmatprep.subr.mxu0 0.0
        %3228 = vmatpush2.msra.mxu0 0.0
        %3229 = vmatprep.subr.mxu0 0.0
        %3230 = vmatpush2.msra.mxu0 0.0
        %3231 = vmatprep.subr.mxu0 0.0
        %3232 = vmatpush2.msra.mxu0 0.0
        %3233 = vmatprep.subr.mxu0 0.0
        %3234 = vmatpush2.msra.mxu0 0.0
        %3235 = vmatprep.subr.mxu0 0.0
        %3236 = vmatpush2.msra.mxu0 0.0
        %3237 = vmatprep.mubr.f32.mxu0 0.0
        %3238 = vmatmul.mubr.f32.gmra.mxu0 %v3168
        %v3239 = vpop.f32.mrf.mxu0
        %v3240 = vadd.f32 0.0, %v3239
        %v3241 = vpop.f32.mrf.mxu0
        %v3242 = vadd.f32 0.0, %v3241
        %3243 = vmatprep.mubr.f32.mxu0 0.0
        %3244 = vmatmul.mubr.f32.gmra.mxu0 %v3171
        %v3245 = vpop.f32.mrf.mxu0
        %v3246 = vadd.f32 0.0, %v3245
        %v3247 = vpop.f32.mrf.mxu0
        %v3248 = vadd.f32 0.0, %v3247
        %3249 = vdwg.mxu0
        %v3250 = vadd.f32 %v3149, %v3240
        %v3251 = vadd.f32 %v3150, %v3242
        %v3252 = vadd.f32 %v3151, %v3246
        %v3253 = vadd.f32 %v3152, %v3248
        %s3254 = scalar_lea.vmem %s4, 80
        %v3255 = vld [vmem:[%s3254] sm:$0xff]
        %v3256 = vld [vmem:[%s3254 + $0x8] sm:$0xff]
        %3257 = vrot.lane.b32.xlu0 %v2766, 112
        %v3258 = vpop.permute.xlu0 %3257
        %3259 = vrot.lane.b32.xlu0 %v2767, 112
        %v3260 = vpop.permute.xlu0 %3259
        %3261 = vrot.lane.b32.xlu0 %v2768, 112
        %v3262 = vpop.permute.xlu0 %3261
        %vm3263 = vcmask 916480
        %v3264 = vsel %vm3263, %v3258, %v3260
        %v3265 = vsel %vm3263, %v3260, %v3262
        %v3269 = vsel %vm2785, %v3255, 0
        %v3272 = vsel %vm2785, %v3256, 0
        %3274 = vmatprep.subr.mxu0 0.0
        %3275 = vmatpush1.msra.mxu0 0.0
        %3276 = vmatprep.subr.mxu0 0.0
        %3277 = vmatpush1.msra.mxu0 0.0
        %3278 = vmatprep.subr.mxu0 0.0
        %3279 = vmatpush1.msra.mxu0 0.0
        %3280 = vmatprep.subr.mxu0 0.0
        %3281 = vmatpush1.msra.mxu0 0.0
        %3282 = vmatprep.subr.mxu0 0.0
        %3283 = vmatpush1.msra.mxu0 0.0
        %3284 = vmatprep.subr.mxu0 0.0
        %3285 = vmatpush1.msra.mxu0 0.0
        %3286 = vmatprep.subr.mxu0 0.0
        %3287 = vmatpush1.msra.mxu0 0.0
        %3288 = vmatprep.subr.mxu0 0.0
        %3289 = vmatpush1.msra.mxu0 0.0
        %3290 = vmatprep.subr.mxu0 0.0
        %3291 = vmatpush1.msra.mxu0 0.0
        %3292 = vmatprep.subr.mxu0 0.0
        %3293 = vmatpush1.msra.mxu0 0.0
        %3294 = vmatprep.subr.mxu0 0.0
        %3295 = vmatpush1.msra.mxu0 0.0
        %3296 = vmatprep.subr.mxu0 0.0
        %3297 = vmatpush1.msra.mxu0 0.0
        %3298 = vmatprep.subr.mxu0 0.0
        %3299 = vmatpush1.msra.mxu0 0.0
        %3300 = vmatprep.subr.mxu0 0.0
        %3301 = vmatpush1.msra.mxu0 0.0
        %3302 = vmatprep.subr.mxu0 0.0
        %3303 = vmatpush1.msra.mxu0 0.0
        %3304 = vmatprep.subr.mxu0 %v3265
        %3305 = vmatpush1.msra.mxu0 %v3264
        %3306 = vmatprep.subr.mxu0 0.0
        %3307 = vmatpush2.msra.mxu0 0.0
        %3308 = vmatprep.subr.mxu0 0.0
        %3309 = vmatpush2.msra.mxu0 0.0
        %3310 = vmatprep.subr.mxu0 0.0
        %3311 = vmatpush2.msra.mxu0 0.0
        %3312 = vmatprep.subr.mxu0 0.0
        %3313 = vmatpush2.msra.mxu0 0.0
        %3314 = vmatprep.subr.mxu0 0.0
        %3315 = vmatpush2.msra.mxu0 0.0
        %3316 = vmatprep.subr.mxu0 0.0
        %3317 = vmatpush2.msra.mxu0 0.0
        %3318 = vmatprep.subr.mxu0 0.0
        %3319 = vmatpush2.msra.mxu0 0.0
        %3320 = vmatprep.subr.mxu0 0.0
        %3321 = vmatpush2.msra.mxu0 0.0
        %3322 = vmatprep.subr.mxu0 0.0
        %3323 = vmatpush2.msra.mxu0 0.0
        %3324 = vmatprep.subr.mxu0 0.0
        %3325 = vmatpush2.msra.mxu0 0.0
        %3326 = vmatprep.subr.mxu0 0.0
        %3327 = vmatpush2.msra.mxu0 0.0
        %3328 = vmatprep.subr.mxu0 0.0
        %3329 = vmatpush2.msra.mxu0 0.0
        %3330 = vmatprep.subr.mxu0 0.0
        %3331 = vmatpush2.msra.mxu0 0.0
        %3332 = vmatprep.subr.mxu0 0.0
        %3333 = vmatpush2.msra.mxu0 0.0
        %3334 = vmatprep.subr.mxu0 0.0
        %3335 = vmatpush2.msra.mxu0 0.0
        %3336 = vmatprep.subr.mxu0 0.0
        %3337 = vmatpush2.msra.mxu0 0.0
        %3338 = vmatprep.mubr.f32.mxu0 0.0
        %3339 = vmatmul.mubr.f32.gmra.mxu0 %v3269
        %v3340 = vpop.f32.mrf.mxu0
        %v3341 = vadd.f32 0.0, %v3340
        %v3342 = vpop.f32.mrf.mxu0
        %v3343 = vadd.f32 0.0, %v3342
        %3344 = vmatprep.mubr.f32.mxu0 0.0
        %3345 = vmatmul.mubr.f32.gmra.mxu0 %v3272
        %v3346 = vpop.f32.mrf.mxu0
        %v3347 = vadd.f32 0.0, %v3346
        %v3348 = vpop.f32.mrf.mxu0
        %v3349 = vadd.f32 0.0, %v3348
        %3350 = vdwg.mxu0
        %v3351 = vadd.f32 %v3250, %v3341
        %v3352 = vadd.f32 %v3251, %v3343
        %v3353 = vadd.f32 %v3252, %v3347
        %v3354 = vadd.f32 %v3253, %v3349
        %s3355 = scalar_lea.vmem %s4, 96
        %v3356 = vld [vmem:[%s3355] sm:$0xff]
        %v3357 = vld [vmem:[%s3355 + $0x8] sm:$0xff]
        %3358 = vrot.lane.b32.xlu0 %v2766, 100
        %v3359 = vpop.permute.xlu0 %3358
        %3360 = vrot.lane.b32.xlu0 %v2767, 100
        %v3361 = vpop.permute.xlu0 %3360
        %3362 = vrot.lane.b32.xlu0 %v2768, 100
        %v3363 = vpop.permute.xlu0 %3362
        %vm3364 = vcmask 818176
        %v3365 = vsel %vm3364, %v3359, %v3361
        %v3366 = vsel %vm3364, %v3361, %v3363
        %v3370 = vsel %vm2785, %v3356, 0
        %v3373 = vsel %vm2785, %v3357, 0
        %3375 = vmatprep.subr.mxu0 0.0
        %3376 = vmatpush1.msra.mxu0 0.0
        %3377 = vmatprep.subr.mxu0 0.0
        %3378 = vmatpush1.msra.mxu0 0.0
        %3379 = vmatprep.subr.mxu0 0.0
        %3380 = vmatpush1.msra.mxu0 0.0
        %3381 = vmatprep.subr.mxu0 0.0
        %3382 = vmatpush1.msra.mxu0 0.0
        %3383 = vmatprep.subr.mxu0 0.0
        %3384 = vmatpush1.msra.mxu0 0.0
        %3385 = vmatprep.subr.mxu0 0.0
        %3386 = vmatpush1.msra.mxu0 0.0
        %3387 = vmatprep.subr.mxu0 0.0
        %3388 = vmatpush1.msra.mxu0 0.0
        %3389 = vmatprep.subr.mxu0 0.0
        %3390 = vmatpush1.msra.mxu0 0.0
        %3391 = vmatprep.subr.mxu0 0.0
        %3392 = vmatpush1.msra.mxu0 0.0
        %3393 = vmatprep.subr.mxu0 0.0
        %3394 = vmatpush1.msra.mxu0 0.0
        %3395 = vmatprep.subr.mxu0 0.0
        %3396 = vmatpush1.msra.mxu0 0.0
        %3397 = vmatprep.subr.mxu0 0.0
        %3398 = vmatpush1.msra.mxu0 0.0
        %3399 = vmatprep.subr.mxu0 0.0
        %3400 = vmatpush1.msra.mxu0 0.0
        %3401 = vmatprep.subr.mxu0 0.0
        %3402 = vmatpush1.msra.mxu0 0.0
        %3403 = vmatprep.subr.mxu0 0.0
        %3404 = vmatpush1.msra.mxu0 0.0
        %3405 = vmatprep.subr.mxu0 %v3366
        %3406 = vmatpush1.msra.mxu0 %v3365
        %3407 = vmatprep.subr.mxu0 0.0
        %3408 = vmatpush2.msra.mxu0 0.0
        %3409 = vmatprep.subr.mxu0 0.0
        %3410 = vmatpush2.msra.mxu0 0.0
        %3411 = vmatprep.subr.mxu0 0.0
        %3412 = vmatpush2.msra.mxu0 0.0
        %3413 = vmatprep.subr.mxu0 0.0
        %3414 = vmatpush2.msra.mxu0 0.0
        %3415 = vmatprep.subr.mxu0 0.0
        %3416 = vmatpush2.msra.mxu0 0.0
        %3417 = vmatprep.subr.mxu0 0.0
        %3418 = vmatpush2.msra.mxu0 0.0
        %3419 = vmatprep.subr.mxu0 0.0
        %3420 = vmatpush2.msra.mxu0 0.0
        %3421 = vmatprep.subr.mxu0 0.0
        %3422 = vmatpush2.msra.mxu0 0.0
        %3423 = vmatprep.subr.mxu0 0.0
        %3424 = vmatpush2.msra.mxu0 0.0
        %3425 = vmatprep.subr.mxu0 0.0
        %3426 = vmatpush2.msra.mxu0 0.0
        %3427 = vmatprep.subr.mxu0 0.0
        %3428 = vmatpush2.msra.mxu0 0.0
        %3429 = vmatprep.subr.mxu0 0.0
        %3430 = vmatpush2.msra.mxu0 0.0
        %3431 = vmatprep.subr.mxu0 0.0
        %3432 = vmatpush2.msra.mxu0 0.0
        %3433 = vmatprep.subr.mxu0 0.0
        %3434 = vmatpush2.msra.mxu0 0.0
        %3435 = vmatprep.subr.mxu0 0.0
        %3436 = vmatpush2.msra.mxu0 0.0
        %3437 = vmatprep.subr.mxu0 0.0
        %3438 = vmatpush2.msra.mxu0 0.0
        %3439 = vmatprep.mubr.f32.mxu0 0.0
        %3440 = vmatmul.mubr.f32.gmra.mxu0 %v3370
        %v3441 = vpop.f32.mrf.mxu0
        %v3442 = vadd.f32 0.0, %v3441
        %v3443 = vpop.f32.mrf.mxu0
        %v3444 = vadd.f32 0.0, %v3443
        %3445 = vmatprep.mubr.f32.mxu0 0.0
        %3446 = vmatmul.mubr.f32.gmra.mxu0 %v3373
        %v3447 = vpop.f32.mrf.mxu0
        %v3448 = vadd.f32 0.0, %v3447
        %v3449 = vpop.f32.mrf.mxu0
        %v3450 = vadd.f32 0.0, %v3449
        %3451 = vdwg.mxu0
        %v3452 = vadd.f32 %v3351, %v3442
        %v3453 = vadd.f32 %v3352, %v3444
        %v3454 = vadd.f32 %v3353, %v3448
        %v3455 = vadd.f32 %v3354, %v3450
        %s3456 = scalar_lea.vmem %s4, 112
        %v3457 = vld [vmem:[%s3456] sm:$0xff]
        %v3458 = vld [vmem:[%s3456 + $0x8] sm:$0xff]
        %3459 = vrot.lane.b32.xlu0 %v2766, 99
        %v3460 = vpop.permute.xlu0 %3459
        %3461 = vrot.lane.b32.xlu0 %v2767, 99
        %v3462 = vpop.permute.xlu0 %3461
        %3463 = vrot.lane.b32.xlu0 %v2768, 99
        %v3464 = vpop.permute.xlu0 %3463
        %vm3465 = vcmask 809984
        %v3466 = vsel %vm3465, %v3460, %v3462
        %v3467 = vsel %vm3465, %v3462, %v3464
        %v3471 = vsel %vm2785, %v3457, 0
        %v3474 = vsel %vm2785, %v3458, 0
        %3476 = vmatprep.subr.mxu0 0.0
        %3477 = vmatpush1.msra.mxu0 0.0
        %3478 = vmatprep.subr.mxu0 0.0
        %3479 = vmatpush1.msra.mxu0 0.0
        %3480 = vmatprep.subr.mxu0 0.0
        %3481 = vmatpush1.msra.mxu0 0.0
        %3482 = vmatprep.subr.mxu0 0.0
        %3483 = vmatpush1.msra.mxu0 0.0
        %3484 = vmatprep.subr.mxu0 0.0
        %3485 = vmatpush1.msra.mxu0 0.0
        %3486 = vmatprep.subr.mxu0 0.0
        %3487 = vmatpush1.msra.mxu0 0.0
        %3488 = vmatprep.subr.mxu0 0.0
        %3489 = vmatpush1.msra.mxu0 0.0
        %3490 = vmatprep.subr.mxu0 0.0
        %3491 = vmatpush1.msra.mxu0 0.0
        %3492 = vmatprep.subr.mxu0 0.0
        %3493 = vmatpush1.msra.mxu0 0.0
        %3494 = vmatprep.subr.mxu0 0.0
        %3495 = vmatpush1.msra.mxu0 0.0
        %3496 = vmatprep.subr.mxu0 0.0
        %3497 = vmatpush1.msra.mxu0 0.0
        %3498 = vmatprep.subr.mxu0 0.0
        %3499 = vmatpush1.msra.mxu0 0.0
        %3500 = vmatprep.subr.mxu0 0.0
        %3501 = vmatpush1.msra.mxu0 0.0
        %3502 = vmatprep.subr.mxu0 0.0
        %3503 = vmatpush1.msra.mxu0 0.0
        %3504 = vmatprep.subr.mxu0 0.0
        %3505 = vmatpush1.msra.mxu0 0.0
        %3506 = vmatprep.subr.mxu0 %v3467
        %3507 = vmatpush1.msra.mxu0 %v3466
        %3508 = vmatprep.subr.mxu0 0.0
        %3509 = vmatpush2.msra.mxu0 0.0
        %3510 = vmatprep.subr.mxu0 0.0
        %3511 = vmatpush2.msra.mxu0 0.0
        %3512 = vmatprep.subr.mxu0 0.0
        %3513 = vmatpush2.msra.mxu0 0.0
        %3514 = vmatprep.subr.mxu0 0.0
        %3515 = vmatpush2.msra.mxu0 0.0
        %3516 = vmatprep.subr.mxu0 0.0
        %3517 = vmatpush2.msra.mxu0 0.0
        %3518 = vmatprep.subr.mxu0 0.0
        %3519 = vmatpush2.msra.mxu0 0.0
        %3520 = vmatprep.subr.mxu0 0.0
        %3521 = vmatpush2.msra.mxu0 0.0
        %3522 = vmatprep.subr.mxu0 0.0
        %3523 = vmatpush2.msra.mxu0 0.0
        %3524 = vmatprep.subr.mxu0 0.0
        %3525 = vmatpush2.msra.mxu0 0.0
        %3526 = vmatprep.subr.mxu0 0.0
        %3527 = vmatpush2.msra.mxu0 0.0
        %3528 = vmatprep.subr.mxu0 0.0
        %3529 = vmatpush2.msra.mxu0 0.0
        %3530 = vmatprep.subr.mxu0 0.0
        %3531 = vmatpush2.msra.mxu0 0.0
        %3532 = vmatprep.subr.mxu0 0.0
        %3533 = vmatpush2.msra.mxu0 0.0
        %3534 = vmatprep.subr.mxu0 0.0
        %3535 = vmatpush2.msra.mxu0 0.0
        %3536 = vmatprep.subr.mxu0 0.0
        %3537 = vmatpush2.msra.mxu0 0.0
        %3538 = vmatprep.subr.mxu0 0.0
        %3539 = vmatpush2.msra.mxu0 0.0
        %3540 = vmatprep.mubr.f32.mxu0 0.0
        %3541 = vmatmul.mubr.f32.gmra.mxu0 %v3471
        %v3542 = vpop.f32.mrf.mxu0
        %v3543 = vadd.f32 0.0, %v3542
        %v3544 = vpop.f32.mrf.mxu0
        %v3545 = vadd.f32 0.0, %v3544
        %3546 = vmatprep.mubr.f32.mxu0 0.0
        %3547 = vmatmul.mubr.f32.gmra.mxu0 %v3474
        %v3548 = vpop.f32.mrf.mxu0
        %v3549 = vadd.f32 0.0, %v3548
        %v3550 = vpop.f32.mrf.mxu0
        %v3551 = vadd.f32 0.0, %v3550
        %3552 = vdwg.mxu0
        %v3553 = vadd.f32 %v3452, %v3543
        %v3554 = vadd.f32 %v3453, %v3545
        %v3555 = vadd.f32 %v3454, %v3549
        %v3556 = vadd.f32 %v3455, %v3551
        %s3557 = scalar_lea.vmem %s4, 128
        %v3558 = vld [vmem:[%s3557] sm:$0xff]
        %v3559 = vld [vmem:[%s3557 + $0x8] sm:$0xff]
        %3560 = vrot.lane.b32.xlu0 %v2766, 98
        %v3561 = vpop.permute.xlu0 %3560
        %3562 = vrot.lane.b32.xlu0 %v2767, 98
        %v3563 = vpop.permute.xlu0 %3562
        %3564 = vrot.lane.b32.xlu0 %v2768, 98
        %v3565 = vpop.permute.xlu0 %3564
        %vm3566 = vcmask 801792
        %v3567 = vsel %vm3566, %v3561, %v3563
        %v3568 = vsel %vm3566, %v3563, %v3565
        %v3572 = vsel %vm2785, %v3558, 0
        %v3575 = vsel %vm2785, %v3559, 0
        %3577 = vmatprep.subr.mxu0 0.0
        %3578 = vmatpush1.msra.mxu0 0.0
        %3579 = vmatprep.subr.mxu0 0.0
        %3580 = vmatpush1.msra.mxu0 0.0
        %3581 = vmatprep.subr.mxu0 0.0
        %3582 = vmatpush1.msra.mxu0 0.0
        %3583 = vmatprep.subr.mxu0 0.0
        %3584 = vmatpush1.msra.mxu0 0.0
        %3585 = vmatprep.subr.mxu0 0.0
        %3586 = vmatpush1.msra.mxu0 0.0
        %3587 = vmatprep.subr.mxu0 0.0
        %3588 = vmatpush1.msra.mxu0 0.0
        %3589 = vmatprep.subr.mxu0 0.0
        %3590 = vmatpush1.msra.mxu0 0.0
        %3591 = vmatprep.subr.mxu0 0.0
        %3592 = vmatpush1.msra.mxu0 0.0
        %3593 = vmatprep.subr.mxu0 0.0
        %3594 = vmatpush1.msra.mxu0 0.0
        %3595 = vmatprep.subr.mxu0 0.0
        %3596 = vmatpush1.msra.mxu0 0.0
        %3597 = vmatprep.subr.mxu0 0.0
        %3598 = vmatpush1.msra.mxu0 0.0
        %3599 = vmatprep.subr.mxu0 0.0
        %3600 = vmatpush1.msra.mxu0 0.0
        %3601 = vmatprep.subr.mxu0 0.0
        %3602 = vmatpush1.msra.mxu0 0.0
        %3603 = vmatprep.subr.mxu0 0.0
        %3604 = vmatpush1.msra.mxu0 0.0
        %3605 = vmatprep.subr.mxu0 0.0
        %3606 = vmatpush1.msra.mxu0 0.0
        %3607 = vmatprep.subr.mxu0 %v3568
        %3608 = vmatpush1.msra.mxu0 %v3567
        %3609 = vmatprep.subr.mxu0 0.0
        %3610 = vmatpush2.msra.mxu0 0.0
        %3611 = vmatprep.subr.mxu0 0.0
        %3612 = vmatpush2.msra.mxu0 0.0
        %3613 = vmatprep.subr.mxu0 0.0
        %3614 = vmatpush2.msra.mxu0 0.0
        %3615 = vmatprep.subr.mxu0 0.0
        %3616 = vmatpush2.msra.mxu0 0.0
        %3617 = vmatprep.subr.mxu0 0.0
        %3618 = vmatpush2.msra.mxu0 0.0
        %3619 = vmatprep.subr.mxu0 0.0
        %3620 = vmatpush2.msra.mxu0 0.0
        %3621 = vmatprep.subr.mxu0 0.0
        %3622 = vmatpush2.msra.mxu0 0.0
        %3623 = vmatprep.subr.mxu0 0.0
        %3624 = vmatpush2.msra.mxu0 0.0
        %3625 = vmatprep.subr.mxu0 0.0
        %3626 = vmatpush2.msra.mxu0 0.0
        %3627 = vmatprep.subr.mxu0 0.0
        %3628 = vmatpush2.msra.mxu0 0.0
        %3629 = vmatprep.subr.mxu0 0.0
        %3630 = vmatpush2.msra.mxu0 0.0
        %3631 = vmatprep.subr.mxu0 0.0
        %3632 = vmatpush2.msra.mxu0 0.0
        %3633 = vmatprep.subr.mxu0 0.0
        %3634 = vmatpush2.msra.mxu0 0.0
        %3635 = vmatprep.subr.mxu0 0.0
        %3636 = vmatpush2.msra.mxu0 0.0
        %3637 = vmatprep.subr.mxu0 0.0
        %3638 = vmatpush2.msra.mxu0 0.0
        %3639 = vmatprep.subr.mxu0 0.0
        %3640 = vmatpush2.msra.mxu0 0.0
        %3641 = vmatprep.mubr.f32.mxu0 0.0
        %3642 = vmatmul.mubr.f32.gmra.mxu0 %v3572
        %v3643 = vpop.f32.mrf.mxu0
        %v3644 = vadd.f32 0.0, %v3643
        %v3645 = vpop.f32.mrf.mxu0
        %v3646 = vadd.f32 0.0, %v3645
        %3647 = vmatprep.mubr.f32.mxu0 0.0
        %3648 = vmatmul.mubr.f32.gmra.mxu0 %v3575
        %v3649 = vpop.f32.mrf.mxu0
        %v3650 = vadd.f32 0.0, %v3649
        %v3651 = vpop.f32.mrf.mxu0
        %v3652 = vadd.f32 0.0, %v3651
        %3653 = vdwg.mxu0
        %v3654 = vadd.f32 %v3553, %v3644
        %v3655 = vadd.f32 %v3554, %v3646
        %v3656 = vadd.f32 %v3555, %v3650
        %v3657 = vadd.f32 %v3556, %v3652
        %v3658 = vld [vmem:[%s5] sm:$0xff]
        %v3659 = vld [vmem:[%s5 + $0x8] sm:$0xff]
        %3661 = vset.pattern.permute.xlu0 0
        %3662 = vperm.xlu0 %3661, %v3658
        %v3663 = vpop.permute.xlu0 %3662
        %3666 = vset.pattern.permute.xlu0 0
        %3667 = vperm.xlu0 %3666, %v3659
        %v3668 = vpop.permute.xlu0 %3667
        %v3670 = vadd.f32 %v3654, %v3663
        %v3671 = vadd.f32 %v3655, %v3663
        %v3672 = vadd.f32 %v3656, %v3668
        %v3673 = vadd.f32 %v3657, %v3668
        %v3674 = vmax.f32 %v3670, 0.0
        %v3675 = vmax.f32 %v3671, 0.0
        %v3676 = vmax.f32 %v3672, 0.0
        %v3677 = vmax.f32 %v3673, 0.0
        %3678 = vst [vmem:[#allocation4] sm:$0xff] %v3674
        %3679 = vst [vmem:[#allocation4 + $0x8] sm:$0xff] %v3675
        %3680 = vst [vmem:[#allocation4 + $0x18] sm:$0xff] %v3676
        %3681 = vst [vmem:[#allocation4 + $0x20] sm:$0xff] %v3677
        %3682 = vst [vmem:[#allocation4 + $0x10] sm:$0xff] 0.0
        %3683 = vst [vmem:[#allocation4 + $0x28] sm:$0xff] 0.0
        %v3684 = vld [vmem:[#allocation4] sm:$0xff]
        %v3685 = vld [vmem:[#allocation4 + $0x8] sm:$0xff]
        %v3686 = vld [vmem:[#allocation4 + $0x18] sm:$0xff]
        %v3687 = vld [vmem:[#allocation4 + $0x20] sm:$0xff]
        %v3688 = vld [vmem:[#allocation4] sm:$0xff]
        %v3689 = vld [vmem:[#allocation4 + $0x8] sm:$0xff]
        %v3690 = vld [vmem:[#allocation4 + $0x10] sm:$0xff]
        %v3691 = vld [vmem:[#allocation4 + $0x18] sm:$0xff]
        %v3692 = vld [vmem:[#allocation4 + $0x20] sm:$0xff]
        %v3693 = vld [vmem:[#allocation4 + $0x28] sm:$0xff]
        %3700 = vrot.lane.b32.xlu0 %v3688, 127
        %v3701 = vpop.permute.xlu0 %3700
        %3702 = vrot.lane.b32.xlu0 %v3689, 127
        %v3703 = vpop.permute.xlu0 %3702
        %3704 = vrot.lane.b32.xlu0 %v3690, 127
        %v3705 = vpop.permute.xlu0 %3704
        %3706 = vrot.lane.b32.xlu0 %v3691, 127
        %v3707 = vpop.permute.xlu0 %3706
        %3708 = vrot.lane.b32.xlu0 %v3692, 127
        %v3709 = vpop.permute.xlu0 %3708
        %3710 = vrot.lane.b32.xlu0 %v3693, 127
        %v3711 = vpop.permute.xlu0 %3710
        %v3712 = vsel %vm629, %v3701, %v3703
        %v3713 = vsel %vm629, %v3703, %v3705
        %v3714 = vsel %vm629, %v3707, %v3709
        %v3715 = vsel %vm629, %v3709, %v3711
        %v3720 = vmax.f32 %v3684, %v3712
        %v3721 = vmax.f32 %v3685, %v3713
        %v3722 = vmax.f32 %v3686, %v3714
        %v3723 = vmax.f32 %v3687, %v3715
        %3724 = vrot.lane.b32.xlu0 %v3688, 114
        %v3725 = vpop.permute.xlu0 %3724
        %3726 = vrot.lane.b32.xlu0 %v3689, 114
        %v3727 = vpop.permute.xlu0 %3726
        %3728 = vrot.lane.b32.xlu0 %v3690, 114
        %v3729 = vpop.permute.xlu0 %3728
        %3730 = vrot.lane.b32.xlu0 %v3691, 114
        %v3731 = vpop.permute.xlu0 %3730
        %3732 = vrot.lane.b32.xlu0 %v3692, 114
        %v3733 = vpop.permute.xlu0 %3732
        %3734 = vrot.lane.b32.xlu0 %v3693, 114
        %v3735 = vpop.permute.xlu0 %3734
        %v3736 = vsel %vm3061, %v3725, %v3727
        %v3737 = vsel %vm3061, %v3727, %v3729
        %v3738 = vsel %vm3061, %v3731, %v3733
        %v3739 = vsel %vm3061, %v3733, %v3735
        %v3744 = vmax.f32 %v3720, %v3736
        %v3745 = vmax.f32 %v3721, %v3737
        %v3746 = vmax.f32 %v3722, %v3738
        %v3747 = vmax.f32 %v3723, %v3739
        %3748 = vrot.lane.b32.xlu0 %v3688, 113
        %v3749 = vpop.permute.xlu0 %3748
        %3750 = vrot.lane.b32.xlu0 %v3689, 113
        %v3751 = vpop.permute.xlu0 %3750
        %3752 = vrot.lane.b32.xlu0 %v3690, 113
        %v3753 = vpop.permute.xlu0 %3752
        %3754 = vrot.lane.b32.xlu0 %v3691, 113
        %v3755 = vpop.permute.xlu0 %3754
        %3756 = vrot.lane.b32.xlu0 %v3692, 113
        %v3757 = vpop.permute.xlu0 %3756
        %3758 = vrot.lane.b32.xlu0 %v3693, 113
        %v3759 = vpop.permute.xlu0 %3758
        %v3760 = vsel %vm3162, %v3749, %v3751
        %v3761 = vsel %vm3162, %v3751, %v3753
        %v3762 = vsel %vm3162, %v3755, %v3757
        %v3763 = vsel %vm3162, %v3757, %v3759
        %v3768 = vmax.f32 %v3744, %v3760
        %v3769 = vmax.f32 %v3745, %v3761
        %v3770 = vmax.f32 %v3746, %v3762
        %v3771 = vmax.f32 %v3747, %v3763
        %v3772 = vld [vmem:[%s6] sm:$0xff]
        %v3773 = vld [vmem:[%s6 + $0x8] sm:$0xff]
        %v3774 = vld [vmem:[%s6 + $0x10] sm:$0xff]
        %v3775 = vld [vmem:[%s6 + $0x18] sm:$0xff]
        %v3776 = vld [vmem:[%s6 + $0x20] sm:$0xff]
        %v3777 = vld [vmem:[%s6 + $0x28] sm:$0xff]
        %v3778 = vld [vmem:[%s6 + $0x30] sm:$0xff]
        %v3779 = vld [vmem:[%s6 + $0x38] sm:$0xff]
        %v3780 = vld [vmem:[%s6 + $0x40] sm:$0xff]
        %v3781 = vld [vmem:[%s6 + $0x48] sm:$0xff]
        %v3782 = vld [vmem:[%s6 + $0x50] sm:$0xff]
        %v3783 = vld [vmem:[%s6 + $0x58] sm:$0xff]
        %v3784 = vld [vmem:[%s6 + $0x60] sm:$0xff]
        %v3785 = vld [vmem:[%s6 + $0x68] sm:$0xff]
        %v3786 = vld [vmem:[%s6 + $0x70] sm:$0xff]
        %v3787 = vld [vmem:[%s6 + $0x78] sm:$0xff]
        %v3788 = vld [vmem:[%s6 + $0x80] sm:$0xff]
        %v3789 = vld [vmem:[%s6 + $0x88] sm:$0xff]
        %v3790 = vld [vmem:[%s6 + $0x90] sm:$0xff]
        %v3791 = vld [vmem:[%s6 + $0x98] sm:$0xff]
        %v3792 = vld [vmem:[%s6 + $0xa0] sm:$0xff]
        %v3793 = vld [vmem:[%s6 + $0xa8] sm:$0xff]
        %v3794 = vld [vmem:[%s6 + $0xb0] sm:$0xff]
        %v3795 = vld [vmem:[%s6 + $0xb8] sm:$0xff]
        %v3796 = vld [vmem:[%s6 + $0xc0] sm:$0xff]
        %v3797 = vld [vmem:[%s6 + $0xc8] sm:$0xff]
        %v3798 = vld [vmem:[%s6 + $0xd0] sm:$0xff]
        %v3799 = vld [vmem:[%s6 + $0xd8] sm:$0xff]
        %v3800 = vld [vmem:[%s6 + $0xe0] sm:$0xff]
        %v3801 = vld [vmem:[%s6 + $0xe8] sm:$0xff]
        %v3802 = vld [vmem:[%s6 + $0xf0] sm:$0xff]
        %v3803 = vld [vmem:[%s6 + $0xf8] sm:$0xff]
        %v3804 = vld [vmem:[%s6 + $0x100] sm:$0xff]
        %v3805 = vld [vmem:[%s6 + $0x108] sm:$0xff]
        %v3806 = vld [vmem:[%s6 + $0x110] sm:$0xff]
        %v3807 = vld [vmem:[%s6 + $0x118] sm:$0xff]
        %v3808 = vld [vmem:[%s6 + $0x120] sm:$0xff]
        %v3809 = vld [vmem:[%s6 + $0x128] sm:$0xff]
        %v3810 = vld [vmem:[%s6 + $0x130] sm:$0xff]
        %v3811 = vld [vmem:[%s6 + $0x138] sm:$0xff]
        %v3812 = vld [vmem:[%s6 + $0x140] sm:$0xff]
        %v3813 = vld [vmem:[%s6 + $0x148] sm:$0xff]
        %v3814 = vld [vmem:[%s6 + $0x150] sm:$0xff]
        %v3815 = vld [vmem:[%s6 + $0x158] sm:$0xff]
        %v3816 = vld [vmem:[%s6 + $0x160] sm:$0xff]
        %v3817 = vld [vmem:[%s6 + $0x168] sm:$0xff]
        %v3818 = vld [vmem:[%s6 + $0x170] sm:$0xff]
        %v3819 = vld [vmem:[%s6 + $0x178] sm:$0xff]
        %v3820 = vld [vmem:[%s6 + $0x180] sm:$0xff]
        %v3821 = vld [vmem:[%s6 + $0x188] sm:$0xff]
        %v3822 = vld [vmem:[%s6 + $0x190] sm:$0xff]
        %v3823 = vld [vmem:[%s6 + $0x198] sm:$0xff]
        %v3824 = vld [vmem:[%s6 + $0x1a0] sm:$0xff]
        %v3825 = vld [vmem:[%s6 + $0x1a8] sm:$0xff]
        %v3826 = vld [vmem:[%s6 + $0x1b0] sm:$0xff]
        %v3827 = vld [vmem:[%s6 + $0x1b8] sm:$0xff]
        %v3828 = vld [vmem:[%s6 + $0x1c0] sm:$0xff]
        %v3829 = vld [vmem:[%s6 + $0x1c8] sm:$0xff]
        %v3830 = vld [vmem:[%s6 + $0x1d0] sm:$0xff]
        %v3831 = vld [vmem:[%s6 + $0x1d8] sm:$0xff]
        %v3832 = vld [vmem:[%s6 + $0x1e0] sm:$0xff]
        %v3833 = vld [vmem:[%s6 + $0x1e8] sm:$0xff]
        %v3834 = vld [vmem:[%s6 + $0x1f0] sm:$0xff]
        %v3835 = vld [vmem:[%s6 + $0x1f8] sm:$0xff]
        %v3836 = vld [vmem:[%s6 + $0x200] sm:$0xff]
        %v3837 = vld [vmem:[%s6 + $0x208] sm:$0xff]
        %v3838 = vld [vmem:[%s6 + $0x210] sm:$0xff]
        %v3839 = vld [vmem:[%s6 + $0x218] sm:$0xff]
        %v3840 = vld [vmem:[%s6 + $0x220] sm:$0xff]
        %v3841 = vld [vmem:[%s6 + $0x228] sm:$0xff]
        %v3842 = vld [vmem:[%s6 + $0x230] sm:$0xff]
        %v3843 = vld [vmem:[%s6 + $0x238] sm:$0xff]
        %v3844 = vld [vmem:[%s6 + $0x240] sm:$0xff]
        %v3845 = vld [vmem:[%s6 + $0x248] sm:$0xff]
        %v3846 = vld [vmem:[%s6 + $0x250] sm:$0xff]
        %v3847 = vld [vmem:[%s6 + $0x258] sm:$0xff]
        %v3848 = vld [vmem:[%s6 + $0x260] sm:$0xff]
        %v3849 = vld [vmem:[%s6 + $0x268] sm:$0xff]
        %v3850 = vld [vmem:[%s6 + $0x270] sm:$0xff]
        %v3851 = vld [vmem:[%s6 + $0x278] sm:$0xff]
        %v3852 = vld [vmem:[%s6 + $0x280] sm:$0xff]
        %v3853 = vld [vmem:[%s6 + $0x288] sm:$0xff]
        %v3854 = vld [vmem:[%s6 + $0x290] sm:$0xff]
        %v3855 = vld [vmem:[%s6 + $0x298] sm:$0xff]
        %v3856 = vld [vmem:[%s6 + $0x2a0] sm:$0xff]
        %v3857 = vld [vmem:[%s6 + $0x2a8] sm:$0xff]
        %v3858 = vld [vmem:[%s6 + $0x2b0] sm:$0xff]
        %v3859 = vld [vmem:[%s6 + $0x2b8] sm:$0xff]
        %v3860 = vld [vmem:[%s6 + $0x2c0] sm:$0xff]
        %v3861 = vld [vmem:[%s6 + $0x2c8] sm:$0xff]
        %v3862 = vld [vmem:[%s6 + $0x2d0] sm:$0xff]
        %v3863 = vld [vmem:[%s6 + $0x2d8] sm:$0xff]
        %v3864 = vld [vmem:[%s6 + $0x2e0] sm:$0xff]
        %v3865 = vld [vmem:[%s6 + $0x2e8] sm:$0xff]
        %v3866 = vld [vmem:[%s6 + $0x2f0] sm:$0xff]
        %v3867 = vld [vmem:[%s6 + $0x2f8] sm:$0xff]
        %v3868 = vld [vmem:[%s6 + $0x300] sm:$0xff]
        %v3869 = vld [vmem:[%s6 + $0x308] sm:$0xff]
        %v3870 = vld [vmem:[%s6 + $0x310] sm:$0xff]
        %v3871 = vld [vmem:[%s6 + $0x318] sm:$0xff]
        %v3872 = vld [vmem:[%s6 + $0x320] sm:$0xff]
        %v3873 = vld [vmem:[%s6 + $0x328] sm:$0xff]
        %v3874 = vld [vmem:[%s6 + $0x330] sm:$0xff]
        %v3875 = vld [vmem:[%s6 + $0x338] sm:$0xff]
        %v3876 = vld [vmem:[%s6 + $0x340] sm:$0xff]
        %v3877 = vld [vmem:[%s6 + $0x348] sm:$0xff]
        %v3878 = vld [vmem:[%s6 + $0x350] sm:$0xff]
        %v3879 = vld [vmem:[%s6 + $0x358] sm:$0xff]
        %v3880 = vld [vmem:[%s6 + $0x360] sm:$0xff]
        %v3881 = vld [vmem:[%s6 + $0x368] sm:$0xff]
        %v3882 = vld [vmem:[%s6 + $0x370] sm:$0xff]
        %v3883 = vld [vmem:[%s6 + $0x378] sm:$0xff]
        %v3884 = vld [vmem:[%s6 + $0x380] sm:$0xff]
        %v3885 = vld [vmem:[%s6 + $0x388] sm:$0xff]
        %v3886 = vld [vmem:[%s6 + $0x390] sm:$0xff]
        %v3887 = vld [vmem:[%s6 + $0x398] sm:$0xff]
        %v3888 = vld [vmem:[%s6 + $0x3a0] sm:$0xff]
        %v3889 = vld [vmem:[%s6 + $0x3a8] sm:$0xff]
        %v3890 = vld [vmem:[%s6 + $0x3b0] sm:$0xff]
        %v3891 = vld [vmem:[%s6 + $0x3b8] sm:$0xff]
        %v3892 = vld [vmem:[%s6 + $0x3c0] sm:$0xff]
        %v3893 = vld [vmem:[%s6 + $0x3c8] sm:$0xff]
        %v3894 = vld [vmem:[%s6 + $0x3d0] sm:$0xff]
        %v3895 = vld [vmem:[%s6 + $0x3d8] sm:$0xff]
        %v3896 = vld [vmem:[%s6 + $0x3e0] sm:$0xff]
        %v3897 = vld [vmem:[%s6 + $0x3e8] sm:$0xff]
        %v3898 = vld [vmem:[%s6 + $0x3f0] sm:$0xff]
        %v3899 = vld [vmem:[%s6 + $0x3f8] sm:$0xff]
        %v3900 = vld [vmem:[%s6 + $0x400] sm:$0xff]
        %v3901 = vld [vmem:[%s6 + $0x408] sm:$0xff]
        %v3902 = vld [vmem:[%s6 + $0x410] sm:$0xff]
        %v3903 = vld [vmem:[%s6 + $0x418] sm:$0xff]
        %v3904 = vld [vmem:[%s6 + $0x420] sm:$0xff]
        %v3905 = vld [vmem:[%s6 + $0x428] sm:$0xff]
        %v3906 = vld [vmem:[%s6 + $0x430] sm:$0xff]
        %v3907 = vld [vmem:[%s6 + $0x438] sm:$0xff]
        %v3908 = vld [vmem:[%s6 + $0x440] sm:$0xff]
        %v3909 = vld [vmem:[%s6 + $0x448] sm:$0xff]
        %v3910 = vld [vmem:[%s6 + $0x450] sm:$0xff]
        %v3911 = vld [vmem:[%s6 + $0x458] sm:$0xff]
        %v3912 = vld [vmem:[%s6 + $0x460] sm:$0xff]
        %v3913 = vld [vmem:[%s6 + $0x468] sm:$0xff]
        %v3914 = vld [vmem:[%s6 + $0x470] sm:$0xff]
        %v3915 = vld [vmem:[%s6 + $0x478] sm:$0xff]
        %v3916 = vld [vmem:[%s6 + $0x480] sm:$0xff]
        %v3917 = vld [vmem:[%s6 + $0x488] sm:$0xff]
        %v3918 = vld [vmem:[%s6 + $0x490] sm:$0xff]
        %v3919 = vld [vmem:[%s6 + $0x498] sm:$0xff]
        %v3920 = vld [vmem:[%s6 + $0x4a0] sm:$0xff]
        %v3921 = vld [vmem:[%s6 + $0x4a8] sm:$0xff]
        %v3922 = vld [vmem:[%s6 + $0x4b0] sm:$0xff]
        %v3923 = vld [vmem:[%s6 + $0x4b8] sm:$0xff]
        %v3924 = vld [vmem:[%s6 + $0x4c0] sm:$0xff]
        %v3925 = vld [vmem:[%s6 + $0x4c8] sm:$0xff]
        %v3926 = vld [vmem:[%s6 + $0x4d0] sm:$0xff]
        %v3927 = vld [vmem:[%s6 + $0x4d8] sm:$0xff]
        %v3928 = vld [vmem:[%s6 + $0x4e0] sm:$0xff]
        %v3929 = vld [vmem:[%s6 + $0x4e8] sm:$0xff]
        %v3930 = vld [vmem:[%s6 + $0x4f0] sm:$0xff]
        %v3931 = vld [vmem:[%s6 + $0x4f8] sm:$0xff]
        %3932 = vmatprep.subr.mxu0 %v3848
        %3933 = vmatpush1.msra.mxu0 %v3847
        %3934 = vmatprep.subr.mxu0 %v3843
        %3935 = vmatpush1.msra.mxu0 %v3842
        %3936 = vmatprep.subr.mxu0 %v3838
        %3937 = vmatpush1.msra.mxu0 %v3837
        %3938 = vmatprep.subr.mxu0 %v3833
        %3939 = vmatpush1.msra.mxu0 %v3832
        %3940 = vmatprep.subr.mxu0 %v3828
        %3941 = vmatpush1.msra.mxu0 %v3827
        %3942 = vmatprep.subr.mxu0 %v3823
        %3943 = vmatpush1.msra.mxu0 %v3822
        %3944 = vmatprep.subr.mxu0 %v3818
        %3945 = vmatpush1.msra.mxu0 %v3817
        %3946 = vmatprep.subr.mxu0 %v3813
        %3947 = vmatpush1.msra.mxu0 %v3812
        %3948 = vmatprep.subr.mxu0 %v3808
        %3949 = vmatpush1.msra.mxu0 %v3807
        %3950 = vmatprep.subr.mxu0 %v3803
        %3951 = vmatpush1.msra.mxu0 %v3802
        %3952 = vmatprep.subr.mxu0 %v3798
        %3953 = vmatpush1.msra.mxu0 %v3797
        %3954 = vmatprep.subr.mxu0 %v3793
        %3955 = vmatpush1.msra.mxu0 %v3792
        %3956 = vmatprep.subr.mxu0 %v3788
        %3957 = vmatpush1.msra.mxu0 %v3787
        %3958 = vmatprep.subr.mxu0 %v3783
        %3959 = vmatpush1.msra.mxu0 %v3782
        %3960 = vmatprep.subr.mxu0 %v3778
        %3961 = vmatpush1.msra.mxu0 %v3777
        %3962 = vmatprep.subr.mxu0 %v3773
        %3963 = vmatpush1.msra.mxu0 %v3772
        %3964 = vmatprep.subr.mxu0 %v3928
        %3965 = vmatpush2.msra.mxu0 %v3927
        %3966 = vmatprep.subr.mxu0 %v3923
        %3967 = vmatpush2.msra.mxu0 %v3922
        %3968 = vmatprep.subr.mxu0 %v3918
        %3969 = vmatpush2.msra.mxu0 %v3917
        %3970 = vmatprep.subr.mxu0 %v3913
        %3971 = vmatpush2.msra.mxu0 %v3912
        %3972 = vmatprep.subr.mxu0 %v3908
        %3973 = vmatpush2.msra.mxu0 %v3907
        %3974 = vmatprep.subr.mxu0 %v3903
        %3975 = vmatpush2.msra.mxu0 %v3902
        %3976 = vmatprep.subr.mxu0 %v3898
        %3977 = vmatpush2.msra.mxu0 %v3897
        %3978 = vmatprep.subr.mxu0 %v3893
        %3979 = vmatpush2.msra.mxu0 %v3892
        %3980 = vmatprep.subr.mxu0 %v3888
        %3981 = vmatpush2.msra.mxu0 %v3887
        %3982 = vmatprep.subr.mxu0 %v3883
        %3983 = vmatpush2.msra.mxu0 %v3882
        %3984 = vmatprep.subr.mxu0 %v3878
        %3985 = vmatpush2.msra.mxu0 %v3877
        %3986 = vmatprep.subr.mxu0 %v3873
        %3987 = vmatpush2.msra.mxu0 %v3872
        %3988 = vmatprep.subr.mxu0 %v3868
        %3989 = vmatpush2.msra.mxu0 %v3867
        %3990 = vmatprep.subr.mxu0 %v3863
        %3991 = vmatpush2.msra.mxu0 %v3862
        %3992 = vmatprep.subr.mxu0 %v3858
        %3993 = vmatpush2.msra.mxu0 %v3857
        %3994 = vmatprep.subr.mxu0 %v3853
        %3995 = vmatpush2.msra.mxu0 %v3852
        %3996 = vmatprep.mubr.f32.mxu0 %v3769
        %3997 = vmatmul.mubr.f32.gmra.mxu0 %v3768
        %v3998 = vpop.f32.mrf.mxu0
        %v3999 = vadd.f32 0.0, %v3998
        %v4000 = vpop.f32.mrf.mxu0
        %v4001 = vadd.f32 0.0, %v4000
        %4002 = vmatprep.mubr.f32.mxu0 %v3771
        %4003 = vmatmul.mubr.f32.gmra.mxu0 %v3770
        %v4004 = vpop.f32.mrf.mxu0
        %v4005 = vadd.f32 0.0, %v4004
        %v4006 = vpop.f32.mrf.mxu0
        %v4007 = vadd.f32 0.0, %v4006
        %4008 = vdwg.mxu0
        %4009 = vmatprep.subr.mxu0 %v3850
        %4010 = vmatpush1.msra.mxu0 %v3849
        %4011 = vmatprep.subr.mxu0 %v3845
        %4012 = vmatpush1.msra.mxu0 %v3844
        %4013 = vmatprep.subr.mxu0 %v3840
        %4014 = vmatpush1.msra.mxu0 %v3839
        %4015 = vmatprep.subr.mxu0 %v3835
        %4016 = vmatpush1.msra.mxu0 %v3834
        %4017 = vmatprep.subr.mxu0 %v3830
        %4018 = vmatpush1.msra.mxu0 %v3829
        %4019 = vmatprep.subr.mxu0 %v3825
        %4020 = vmatpush1.msra.mxu0 %v3824
        %4021 = vmatprep.subr.mxu0 %v3820
        %4022 = vmatpush1.msra.mxu0 %v3819
        %4023 = vmatprep.subr.mxu0 %v3815
        %4024 = vmatpush1.msra.mxu0 %v3814
        %4025 = vmatprep.subr.mxu0 %v3810
        %4026 = vmatpush1.msra.mxu0 %v3809
        %4027 = vmatprep.subr.mxu0 %v3805
        %4028 = vmatpush1.msra.mxu0 %v3804
        %4029 = vmatprep.subr.mxu0 %v3800
        %4030 = vmatpush1.msra.mxu0 %v3799
        %4031 = vmatprep.subr.mxu0 %v3795
        %4032 = vmatpush1.msra.mxu0 %v3794
        %4033 = vmatprep.subr.mxu0 %v3790
        %4034 = vmatpush1.msra.mxu0 %v3789
        %4035 = vmatprep.subr.mxu0 %v3785
        %4036 = vmatpush1.msra.mxu0 %v3784
        %4037 = vmatprep.subr.mxu0 %v3780
        %4038 = vmatpush1.msra.mxu0 %v3779
        %4039 = vmatprep.subr.mxu0 %v3775
        %4040 = vmatpush1.msra.mxu0 %v3774
        %4041 = vmatprep.subr.mxu0 %v3930
        %4042 = vmatpush2.msra.mxu0 %v3929
        %4043 = vmatprep.subr.mxu0 %v3925
        %4044 = vmatpush2.msra.mxu0 %v3924
        %4045 = vmatprep.subr.mxu0 %v3920
        %4046 = vmatpush2.msra.mxu0 %v3919
        %4047 = vmatprep.subr.mxu0 %v3915
        %4048 = vmatpush2.msra.mxu0 %v3914
        %4049 = vmatprep.subr.mxu0 %v3910
        %4050 = vmatpush2.msra.mxu0 %v3909
        %4051 = vmatprep.subr.mxu0 %v3905
        %4052 = vmatpush2.msra.mxu0 %v3904
        %4053 = vmatprep.subr.mxu0 %v3900
        %4054 = vmatpush2.msra.mxu0 %v3899
        %4055 = vmatprep.subr.mxu0 %v3895
        %4056 = vmatpush2.msra.mxu0 %v3894
        %4057 = vmatprep.subr.mxu0 %v3890
        %4058 = vmatpush2.msra.mxu0 %v3889
        %4059 = vmatprep.subr.mxu0 %v3885
        %4060 = vmatpush2.msra.mxu0 %v3884
        %4061 = vmatprep.subr.mxu0 %v3880
        %4062 = vmatpush2.msra.mxu0 %v3879
        %4063 = vmatprep.subr.mxu0 %v3875
        %4064 = vmatpush2.msra.mxu0 %v3874
        %4065 = vmatprep.subr.mxu0 %v3870
        %4066 = vmatpush2.msra.mxu0 %v3869
        %4067 = vmatprep.subr.mxu0 %v3865
        %4068 = vmatpush2.msra.mxu0 %v3864
        %4069 = vmatprep.subr.mxu0 %v3860
        %4070 = vmatpush2.msra.mxu0 %v3859
        %4071 = vmatprep.subr.mxu0 %v3855
        %4072 = vmatpush2.msra.mxu0 %v3854
        %4073 = vmatprep.mubr.f32.mxu0 %v3769
        %4074 = vmatmul.mubr.f32.gmra.mxu0 %v3768
        %v4075 = vpop.f32.mrf.mxu0
        %v4076 = vadd.f32 0.0, %v4075
        %v4077 = vpop.f32.mrf.mxu0
        %v4078 = vadd.f32 0.0, %v4077
        %4079 = vmatprep.mubr.f32.mxu0 %v3771
        %4080 = vmatmul.mubr.f32.gmra.mxu0 %v3770
        %v4081 = vpop.f32.mrf.mxu0
        %v4082 = vadd.f32 0.0, %v4081
        %v4083 = vpop.f32.mrf.mxu0
        %v4084 = vadd.f32 0.0, %v4083
        %4085 = vdwg.mxu0
        %4086 = vmatprep.subr.mxu0 0.0
        %4087 = vmatpush1.msra.mxu0 %v3851
        %4088 = vmatprep.subr.mxu0 0.0
        %4089 = vmatpush1.msra.mxu0 %v3846
        %4090 = vmatprep.subr.mxu0 0.0
        %4091 = vmatpush1.msra.mxu0 %v3841
        %4092 = vmatprep.subr.mxu0 0.0
        %4093 = vmatpush1.msra.mxu0 %v3836
        %4094 = vmatprep.subr.mxu0 0.0
        %4095 = vmatpush1.msra.mxu0 %v3831
        %4096 = vmatprep.subr.mxu0 0.0
        %4097 = vmatpush1.msra.mxu0 %v3826
        %4098 = vmatprep.subr.mxu0 0.0
        %4099 = vmatpush1.msra.mxu0 %v3821
        %4100 = vmatprep.subr.mxu0 0.0
        %4101 = vmatpush1.msra.mxu0 %v3816
        %4102 = vmatprep.subr.mxu0 0.0
        %4103 = vmatpush1.msra.mxu0 %v3811
        %4104 = vmatprep.subr.mxu0 0.0
        %4105 = vmatpush1.msra.mxu0 %v3806
        %4106 = vmatprep.subr.mxu0 0.0
        %4107 = vmatpush1.msra.mxu0 %v3801
        %4108 = vmatprep.subr.mxu0 0.0
        %4109 = vmatpush1.msra.mxu0 %v3796
        %4110 = vmatprep.subr.mxu0 0.0
        %4111 = vmatpush1.msra.mxu0 %v3791
        %4112 = vmatprep.subr.mxu0 0.0
        %4113 = vmatpush1.msra.mxu0 %v3786
        %4114 = vmatprep.subr.mxu0 0.0
        %4115 = vmatpush1.msra.mxu0 %v3781
        %4116 = vmatprep.subr.mxu0 0.0
        %4117 = vmatpush1.msra.mxu0 %v3776
        %4118 = vmatprep.subr.mxu0 0.0
        %4119 = vmatpush2.msra.mxu0 %v3931
        %4120 = vmatprep.subr.mxu0 0.0
        %4121 = vmatpush2.msra.mxu0 %v3926
        %4122 = vmatprep.subr.mxu0 0.0
        %4123 = vmatpush2.msra.mxu0 %v3921
        %4124 = vmatprep.subr.mxu0 0.0
        %4125 = vmatpush2.msra.mxu0 %v3916
        %4126 = vmatprep.subr.mxu0 0.0
        %4127 = vmatpush2.msra.mxu0 %v3911
        %4128 = vmatprep.subr.mxu0 0.0
        %4129 = vmatpush2.msra.mxu0 %v3906
        %4130 = vmatprep.subr.mxu0 0.0
        %4131 = vmatpush2.msra.mxu0 %v3901
        %4132 = vmatprep.subr.mxu0 0.0
        %4133 = vmatpush2.msra.mxu0 %v3896
        %4134 = vmatprep.subr.mxu0 0.0
        %4135 = vmatpush2.msra.mxu0 %v3891
        %4136 = vmatprep.subr.mxu0 0.0
        %4137 = vmatpush2.msra.mxu0 %v3886
        %4138 = vmatprep.subr.mxu0 0.0
        %4139 = vmatpush2.msra.mxu0 %v3881
        %4140 = vmatprep.subr.mxu0 0.0
        %4141 = vmatpush2.msra.mxu0 %v3876
        %4142 = vmatprep.subr.mxu0 0.0
        %4143 = vmatpush2.msra.mxu0 %v3871
        %4144 = vmatprep.subr.mxu0 0.0
        %4145 = vmatpush2.msra.mxu0 %v3866
        %4146 = vmatprep.subr.mxu0 0.0
        %4147 = vmatpush2.msra.mxu0 %v3861
        %4148 = vmatprep.subr.mxu0 0.0
        %4149 = vmatpush2.msra.mxu0 %v3856
        %4150 = vmatprep.mubr.f32.mxu0 %v3769
        %4151 = vmatmul.mubr.f32.gmra.mxu0 %v3768
        %v4152 = vpop.f32.mrf.mxu0
        %v4153 = vadd.f32 0.0, %v4152
        %v4154 = vpop.f32.mrf.mxu0
        %4155 = vmatprep.mubr.f32.mxu0 %v3771
        %4156 = vmatmul.mubr.f32.gmra.mxu0 %v3770
        %v4157 = vpop.f32.mrf.mxu0
        %v4158 = vadd.f32 0.0, %v4157
        %v4159 = vpop.f32.mrf.mxu0
        %4160 = vdwg.mxu0
        %v4161 = vld [vmem:[%s7] sm:$0xff]
        %v4162 = vld [vmem:[%s7 + $0x8] sm:$0xff]
        %v4163 = vld [vmem:[%s7 + $0x10] sm:$0xff]
        %v4164 = vld [vmem:[%s7 + $0x18] sm:$0xff]
        %v4165 = vld [vmem:[%s7 + $0x20] sm:$0xff]
        %v4166 = vld [vmem:[%s7 + $0x28] sm:$0xff]
        %v4167 = vld [vmem:[%s7 + $0x30] sm:$0xff]
        %v4168 = vld [vmem:[%s7 + $0x38] sm:$0xff]
        %v4169 = vld [vmem:[%s7 + $0x40] sm:$0xff]
        %v4170 = vld [vmem:[%s7 + $0x48] sm:$0xff]
        %v4171 = vmul.f32 %v3999, %v4161
        %v4172 = vmul.f32 %v4001, %v4162
        %v4173 = vmul.f32 %v4076, %v4163
        %v4174 = vmul.f32 %v4078, %v4164
        %v4175 = vmul.f32 %v4153, %v4165
        %v4176 = vmul.f32 %v4005, %v4166
        %v4177 = vmul.f32 %v4007, %v4167
        %v4178 = vmul.f32 %v4082, %v4168
        %v4179 = vmul.f32 %v4084, %v4169
        %v4180 = vmul.f32 %v4158, %v4170
        %v4181 = vadd.f32 %v4171, %v4176
        %v4182 = vrot.slane %v4181, 4
        %v4183 = vadd.f32 %v4181, %v4182
        %v4184 = vrot.slane %v4183, 2
        %v4185 = vadd.f32 %v4183, %v4184
        %v4186 = vrot.slane %v4185, 1
        %v4187 = vadd.f32 %v4185, %v4186
        %v4188 = vadd.f32 %v4172, %v4177
        %v4189 = vrot.slane %v4188, 4
        %v4190 = vadd.f32 %v4188, %v4189
        %v4191 = vrot.slane %v4190, 2
        %v4192 = vadd.f32 %v4190, %v4191
        %v4193 = vrot.slane %v4192, 1
        %v4194 = vadd.f32 %v4192, %v4193
        %v4195 = vadd.f32 %v4173, %v4178
        %v4196 = vrot.slane %v4195, 4
        %v4197 = vadd.f32 %v4195, %v4196
        %v4198 = vrot.slane %v4197, 2
        %v4199 = vadd.f32 %v4197, %v4198
        %v4200 = vrot.slane %v4199, 1
        %v4201 = vadd.f32 %v4199, %v4200
        %v4202 = vadd.f32 %v4174, %v4179
        %v4203 = vrot.slane %v4202, 4
        %v4204 = vadd.f32 %v4202, %v4203
        %v4205 = vrot.slane %v4204, 2
        %v4206 = vadd.f32 %v4204, %v4205
        %v4207 = vrot.slane %v4206, 1
        %v4208 = vadd.f32 %v4206, %v4207
        %v4209 = vsel %vm1178, %v4175, 0.0
        %v4210 = vsel %vm1178, %v4180, 0.0
        %v4211 = vadd.f32 %v4209, %v4210
        %v4212 = vrot.slane %v4211, 4
        %v4213 = vadd.f32 %v4211, %v4212
        %v4214 = vrot.slane %v4213, 2
        %v4215 = vadd.f32 %v4213, %v4214
        %v4216 = vrot.slane %v4215, 1
        %v4217 = vadd.f32 %v4215, %v4216
        %v4223 = vcombine.low %v4187, %v4194
        %v4224 = vcombine.low %v4201, %v4208
        %v4226 = vunpack.c.l.s4 1966171168
        %v4227 = vunpack.c.0.s8 %v4226
        %v4228 = vlaneseq
        %v4229 = vshrl.u32 %v4228, 7
        %v4230 = vsub.s32 %v4227, %v4229
        %v4231 = vrot.slane %v4223, %v4230
        %v4233 = vunpack.c.l.s4 1966171168
        %v4234 = vunpack.c.0.s8 %v4233
        %v4235 = vlaneseq
        %v4236 = vshrl.u32 %v4235, 7
        %v4237 = vsub.s32 %v4234, %v4236
        %v4238 = vrot.slane %v4224, %v4237
        %v4240 = vunpack.c.l.s4 1966171168
        %v4241 = vunpack.c.0.s8 %v4240
        %v4242 = vlaneseq
        %v4243 = vshrl.u32 %v4242, 7
        %v4244 = vsub.s32 %v4241, %v4243
        %v4245 = vrot.slane %v4217, %v4244
        %v4246 = vcombine.low %v4231, %v4238
        %v4248 = vunpack.c.l.s4 1966171168
        %v4249 = vunpack.c.0.s8 %v4248
        %v4250 = vlaneseq
        %v4251 = vshrl.u32 %v4250, 7
        %v4252 = vsub.s32 %v4249, %v4251
        %v4253 = vrot.slane %v4246, %v4252
        %v4255 = vunpack.c.l.s4 1966171168
        %v4256 = vunpack.c.0.s8 %v4255
        %v4257 = vlaneseq
        %v4258 = vshrl.u32 %v4257, 7
        %v4259 = vsub.s32 %v4256, %v4258
        %v4260 = vrot.slane %v4245, %v4259
        %v4261 = vcombine.low %v4253, %v4260
        %v4263 = vlaneseq
        %vm4264 = vcmp.ge.s32.totalorder %v4263, 0
        %vm4265 = vcmp.lt.s32.totalorder %v4263, 576
        %vm4266 = vmand %vm4264, %vm4265
        %4267 = vst.msk [vmem:[#allocation5] sm:$0x1f] %vm4266, %v4261
        %v4268 = vld [vmem:[#allocation5] sm:$0x1f]
        %v4270 = vlaneseq
        %v4271 = vshrl.u32 %v4270, 7
        %v4272 = vsub.s32 0, %v4271
        %v4273 = vrot.slane %v4268, %v4272
        %v4274 = vlaneseq
        %v4275 = vshrl.u32 %v4274, 7
        %v4276 = vsub.s32 1, %v4275
        %v4277 = vrot.slane %v4268, %v4276
        %v4278 = vlaneseq
        %v4279 = vshrl.u32 %v4278, 7
        %v4280 = vsub.s32 2, %v4279
        %v4281 = vrot.slane %v4268, %v4280
        %v4282 = vlaneseq
        %v4283 = vshrl.u32 %v4282, 7
        %v4284 = vsub.s32 3, %v4283
        %v4285 = vrot.slane %v4268, %v4284
        %v4286 = vlaneseq
        %v4287 = vshrl.u32 %v4286, 7
        %v4288 = vsub.s32 4, %v4287
        %v4289 = vrot.slane %v4268, %v4288
        %v4295 = vpack.c.bf16 %v4273, %v4273
        %v4296 = vpack.c.bf16 %v4277, %v4277
        %v4297 = vpack.c.bf16 %v4281, %v4281
        %v4298 = vpack.c.bf16 %v4285, %v4285
        %v4299 = vpack.c.bf16 %v4289, %v4289
        %v4300 = vld [vmem:[%s8] sm:$0xff]
        %v4301 = vld [vmem:[%s8 + $0x8] sm:$0xff]
        %v4302 = vld [vmem:[%s8 + $0x10] sm:$0xf]
        %v4303 = vld [vmem:[%s8 + $0x14] sm:$0xff]
        %v4304 = vld [vmem:[%s8 + $0x1c] sm:$0xff]
        %v4305 = vld [vmem:[%s8 + $0x24] sm:$0xf]
        %v4306 = vld [vmem:[%s8 + $0x28] sm:$0xff]
        %v4307 = vld [vmem:[%s8 + $0x30] sm:$0xff]
        %v4308 = vld [vmem:[%s8 + $0x38] sm:$0xf]
        %v4309 = vld [vmem:[%s8 + $0x3c] sm:$0xff]
        %v4310 = vld [vmem:[%s8 + $0x44] sm:$0xff]
        %v4311 = vld [vmem:[%s8 + $0x4c] sm:$0xf]
        %v4312 = vld [vmem:[%s8 + $0x50] sm:$0xff]
        %v4313 = vld [vmem:[%s8 + $0x58] sm:$0xff]
        %v4314 = vld [vmem:[%s8 + $0x60] sm:$0xf]
        %v4315 = vld [vmem:[%s8 + $0x64] sm:$0xff]
        %v4316 = vld [vmem:[%s8 + $0x6c] sm:$0xff]
        %v4317 = vld [vmem:[%s8 + $0x74] sm:$0xf]
        %v4318 = vld [vmem:[%s8 + $0x78] sm:$0xff]
        %v4319 = vld [vmem:[%s8 + $0x80] sm:$0xff]
        %v4320 = vld [vmem:[%s8 + $0x88] sm:$0xf]
        %v4321 = vld [vmem:[%s8 + $0x8c] sm:$0xff]
        %v4322 = vld [vmem:[%s8 + $0x94] sm:$0xff]
        %v4323 = vld [vmem:[%s8 + $0x9c] sm:$0xf]
        %v4324 = vld [vmem:[%s8 + $0xa0] sm:$0xff]
        %v4325 = vld [vmem:[%s8 + $0xa8] sm:$0xff]
        %v4326 = vld [vmem:[%s8 + $0xb0] sm:$0xf]
        %v4327 = vld [vmem:[%s8 + $0xb4] sm:$0xff]
        %v4328 = vld [vmem:[%s8 + $0xbc] sm:$0xff]
        %v4329 = vld [vmem:[%s8 + $0xc4] sm:$0xf]
        %v4330 = vld [vmem:[%s8 + $0xc8] sm:$0xff]
        %v4331 = vld [vmem:[%s8 + $0xd0] sm:$0xff]
        %v4332 = vld [vmem:[%s8 + $0xd8] sm:$0xf]
        %v4333 = vld [vmem:[%s8 + $0xdc] sm:$0xff]
        %v4334 = vld [vmem:[%s8 + $0xe4] sm:$0xff]
        %v4335 = vld [vmem:[%s8 + $0xec] sm:$0xf]
        %v4336 = vld [vmem:[%s8 + $0xf0] sm:$0xff]
        %v4337 = vld [vmem:[%s8 + $0xf8] sm:$0xff]
        %v4338 = vld [vmem:[%s8 + $0x100] sm:$0xf]
        %v4339 = vld [vmem:[%s8 + $0x104] sm:$0xff]
        %v4340 = vld [vmem:[%s8 + $0x10c] sm:$0xff]
        %v4341 = vld [vmem:[%s8 + $0x114] sm:$0xf]
        %v4342 = vld [vmem:[%s8 + $0x118] sm:$0xff]
        %v4343 = vld [vmem:[%s8 + $0x120] sm:$0xff]
        %v4344 = vld [vmem:[%s8 + $0x128] sm:$0xf]
        %v4345 = vld [vmem:[%s8 + $0x12c] sm:$0xff]
        %v4346 = vld [vmem:[%s8 + $0x134] sm:$0xff]
        %v4347 = vld [vmem:[%s8 + $0x13c] sm:$0xf]
        %v4348 = vld [vmem:[%s8 + $0x140] sm:$0xff]
        %v4349 = vld [vmem:[%s8 + $0x148] sm:$0xff]
        %v4350 = vld [vmem:[%s8 + $0x150] sm:$0xf]
        %v4351 = vld [vmem:[%s8 + $0x154] sm:$0xff]
        %v4352 = vld [vmem:[%s8 + $0x15c] sm:$0xff]
        %v4353 = vld [vmem:[%s8 + $0x164] sm:$0xf]
        %v4354 = vld [vmem:[%s8 + $0x168] sm:$0xff]
        %v4355 = vld [vmem:[%s8 + $0x170] sm:$0xff]
        %v4356 = vld [vmem:[%s8 + $0x178] sm:$0xf]
        %v4357 = vld [vmem:[%s8 + $0x17c] sm:$0xff]
        %v4358 = vld [vmem:[%s8 + $0x184] sm:$0xff]
        %v4359 = vld [vmem:[%s8 + $0x18c] sm:$0xf]
        %v4360 = vld [vmem:[%s8 + $0x190] sm:$0xff]
        %v4361 = vld [vmem:[%s8 + $0x198] sm:$0xff]
        %v4362 = vld [vmem:[%s8 + $0x1a0] sm:$0xf]
        %v4363 = vld [vmem:[%s8 + $0x1a4] sm:$0xff]
        %v4364 = vld [vmem:[%s8 + $0x1ac] sm:$0xff]
        %v4365 = vld [vmem:[%s8 + $0x1b4] sm:$0xf]
        %v4366 = vld [vmem:[%s8 + $0x1b8] sm:$0xff]
        %v4367 = vld [vmem:[%s8 + $0x1c0] sm:$0xff]
        %v4368 = vld [vmem:[%s8 + $0x1c8] sm:$0xf]
        %v4369 = vld [vmem:[%s8 + $0x1cc] sm:$0xff]
        %v4370 = vld [vmem:[%s8 + $0x1d4] sm:$0xff]
        %v4371 = vld [vmem:[%s8 + $0x1dc] sm:$0xf]
        %v4372 = vld [vmem:[%s8 + $0x1e0] sm:$0xff]
        %v4373 = vld [vmem:[%s8 + $0x1e8] sm:$0xff]
        %v4374 = vld [vmem:[%s8 + $0x1f0] sm:$0xf]
        %v4375 = vld [vmem:[%s8 + $0x1f4] sm:$0xff]
        %v4376 = vld [vmem:[%s8 + $0x1fc] sm:$0xff]
        %v4377 = vld [vmem:[%s8 + $0x204] sm:$0xf]
        %v4378 = vld [vmem:[%s8 + $0x208] sm:$0xff]
        %v4379 = vld [vmem:[%s8 + $0x210] sm:$0xff]
        %v4380 = vld [vmem:[%s8 + $0x218] sm:$0xf]
        %v4381 = vld [vmem:[%s8 + $0x21c] sm:$0xff]
        %v4382 = vld [vmem:[%s8 + $0x224] sm:$0xff]
        %v4383 = vld [vmem:[%s8 + $0x22c] sm:$0xf]
        %v4384 = vld [vmem:[%s8 + $0x230] sm:$0xff]
        %v4385 = vld [vmem:[%s8 + $0x238] sm:$0xff]
        %v4386 = vld [vmem:[%s8 + $0x240] sm:$0xf]
        %v4387 = vld [vmem:[%s8 + $0x244] sm:$0xff]
        %v4388 = vld [vmem:[%s8 + $0x24c] sm:$0xff]
        %v4389 = vld [vmem:[%s8 + $0x254] sm:$0xf]
        %v4390 = vld [vmem:[%s8 + $0x258] sm:$0xff]
        %v4391 = vld [vmem:[%s8 + $0x260] sm:$0xff]
        %v4392 = vld [vmem:[%s8 + $0x268] sm:$0xf]
        %v4393 = vld [vmem:[%s8 + $0x26c] sm:$0xff]
        %v4394 = vld [vmem:[%s8 + $0x274] sm:$0xff]
        %v4395 = vld [vmem:[%s8 + $0x27c] sm:$0xf]
        %v4396 = vld [vmem:[%s8 + $0x280] sm:$0xff]
        %v4397 = vld [vmem:[%s8 + $0x288] sm:$0xff]
        %v4398 = vld [vmem:[%s8 + $0x290] sm:$0xf]
        %v4399 = vld [vmem:[%s8 + $0x294] sm:$0xff]
        %v4400 = vld [vmem:[%s8 + $0x29c] sm:$0xff]
        %v4401 = vld [vmem:[%s8 + $0x2a4] sm:$0xf]
        %v4402 = vld [vmem:[%s8 + $0x2a8] sm:$0xff]
        %v4403 = vld [vmem:[%s8 + $0x2b0] sm:$0xff]
        %v4404 = vld [vmem:[%s8 + $0x2b8] sm:$0xf]
        %v4405 = vld [vmem:[%s8 + $0x2bc] sm:$0xff]
        %v4406 = vld [vmem:[%s8 + $0x2c4] sm:$0xff]
        %v4407 = vld [vmem:[%s8 + $0x2cc] sm:$0xf]
        %v4408 = vld [vmem:[%s8 + $0x2d0] sm:$0xff]
        %v4409 = vld [vmem:[%s8 + $0x2d8] sm:$0xff]
        %v4410 = vld [vmem:[%s8 + $0x2e0] sm:$0xf]
        %v4411 = vld [vmem:[%s8 + $0x2e4] sm:$0xff]
        %v4412 = vld [vmem:[%s8 + $0x2ec] sm:$0xff]
        %v4413 = vld [vmem:[%s8 + $0x2f4] sm:$0xf]
        %v4414 = vld [vmem:[%s8 + $0x2f8] sm:$0xff]
        %v4415 = vld [vmem:[%s8 + $0x300] sm:$0xff]
        %v4416 = vld [vmem:[%s8 + $0x308] sm:$0xf]
        %v4417 = vld [vmem:[%s8 + $0x30c] sm:$0xff]
        %v4418 = vld [vmem:[%s8 + $0x314] sm:$0xff]
        %v4419 = vld [vmem:[%s8 + $0x31c] sm:$0xf]
        %v4420 = vld [vmem:[%s8 + $0x320] sm:$0xff]
        %v4421 = vld [vmem:[%s8 + $0x328] sm:$0xff]
        %v4422 = vld [vmem:[%s8 + $0x330] sm:$0xf]
        %v4423 = vld [vmem:[%s8 + $0x334] sm:$0xff]
        %v4424 = vld [vmem:[%s8 + $0x33c] sm:$0xff]
        %v4425 = vld [vmem:[%s8 + $0x344] sm:$0xf]
        %v4426 = vld [vmem:[%s8 + $0x348] sm:$0xff]
        %v4427 = vld [vmem:[%s8 + $0x350] sm:$0xff]
        %v4428 = vld [vmem:[%s8 + $0x358] sm:$0xf]
        %v4429 = vld [vmem:[%s8 + $0x35c] sm:$0xff]
        %v4430 = vld [vmem:[%s8 + $0x364] sm:$0xff]
        %v4431 = vld [vmem:[%s8 + $0x36c] sm:$0xf]
        %v4432 = vld [vmem:[%s8 + $0x370] sm:$0xff]
        %v4433 = vld [vmem:[%s8 + $0x378] sm:$0xff]
        %v4434 = vld [vmem:[%s8 + $0x380] sm:$0xf]
        %v4435 = vld [vmem:[%s8 + $0x384] sm:$0xff]
        %v4436 = vld [vmem:[%s8 + $0x38c] sm:$0xff]
        %v4437 = vld [vmem:[%s8 + $0x394] sm:$0xf]
        %v4438 = vld [vmem:[%s8 + $0x398] sm:$0xff]
        %v4439 = vld [vmem:[%s8 + $0x3a0] sm:$0xff]
        %v4440 = vld [vmem:[%s8 + $0x3a8] sm:$0xf]
        %v4441 = vld [vmem:[%s8 + $0x3ac] sm:$0xff]
        %v4442 = vld [vmem:[%s8 + $0x3b4] sm:$0xff]
        %v4443 = vld [vmem:[%s8 + $0x3bc] sm:$0xf]
        %v4444 = vld [vmem:[%s8 + $0x3c0] sm:$0xff]
        %v4445 = vld [vmem:[%s8 + $0x3c8] sm:$0xff]
        %v4446 = vld [vmem:[%s8 + $0x3d0] sm:$0xf]
        %v4447 = vld [vmem:[%s8 + $0x3d4] sm:$0xff]
        %v4448 = vld [vmem:[%s8 + $0x3dc] sm:$0xff]
        %v4449 = vld [vmem:[%s8 + $0x3e4] sm:$0xf]
        %v4450 = vld [vmem:[%s8 + $0x3e8] sm:$0xff]
        %v4451 = vld [vmem:[%s8 + $0x3f0] sm:$0xff]
        %v4452 = vld [vmem:[%s8 + $0x3f8] sm:$0xf]
        %v4453 = vld [vmem:[%s8 + $0x3fc] sm:$0xff]
        %v4454 = vld [vmem:[%s8 + $0x404] sm:$0xff]
        %v4455 = vld [vmem:[%s8 + $0x40c] sm:$0xf]
        %v4456 = vld [vmem:[%s8 + $0x410] sm:$0xff]
        %v4457 = vld [vmem:[%s8 + $0x418] sm:$0xff]
        %v4458 = vld [vmem:[%s8 + $0x420] sm:$0xf]
        %v4459 = vld [vmem:[%s8 + $0x424] sm:$0xff]
        %v4460 = vld [vmem:[%s8 + $0x42c] sm:$0xff]
        %v4461 = vld [vmem:[%s8 + $0x434] sm:$0xf]
        %v4462 = vld [vmem:[%s8 + $0x438] sm:$0xff]
        %v4463 = vld [vmem:[%s8 + $0x440] sm:$0xff]
        %v4464 = vld [vmem:[%s8 + $0x448] sm:$0xf]
        %v4465 = vld [vmem:[%s8 + $0x44c] sm:$0xff]
        %v4466 = vld [vmem:[%s8 + $0x454] sm:$0xff]
        %v4467 = vld [vmem:[%s8 + $0x45c] sm:$0xf]
        %v4468 = vld [vmem:[%s8 + $0x460] sm:$0xff]
        %v4469 = vld [vmem:[%s8 + $0x468] sm:$0xff]
        %v4470 = vld [vmem:[%s8 + $0x470] sm:$0xf]
        %v4471 = vld [vmem:[%s8 + $0x474] sm:$0xff]
        %v4472 = vld [vmem:[%s8 + $0x47c] sm:$0xff]
        %v4473 = vld [vmem:[%s8 + $0x484] sm:$0xf]
        %v4474 = vld [vmem:[%s8 + $0x488] sm:$0xff]
        %v4475 = vld [vmem:[%s8 + $0x490] sm:$0xff]
        %v4476 = vld [vmem:[%s8 + $0x498] sm:$0xf]
        %v4477 = vld [vmem:[%s8 + $0x49c] sm:$0xff]
        %v4478 = vld [vmem:[%s8 + $0x4a4] sm:$0xff]
        %v4479 = vld [vmem:[%s8 + $0x4ac] sm:$0xf]
        %v4480 = vld [vmem:[%s8 + $0x4b0] sm:$0xff]
        %v4481 = vld [vmem:[%s8 + $0x4b8] sm:$0xff]
        %v4482 = vld [vmem:[%s8 + $0x4c0] sm:$0xf]
        %v4483 = vld [vmem:[%s8 + $0x4c4] sm:$0xff]
        %v4484 = vld [vmem:[%s8 + $0x4cc] sm:$0xff]
        %v4485 = vld [vmem:[%s8 + $0x4d4] sm:$0xf]
        %v4486 = vld [vmem:[%s8 + $0x4d8] sm:$0xff]
        %v4487 = vld [vmem:[%s8 + $0x4e0] sm:$0xff]
        %v4488 = vld [vmem:[%s8 + $0x4e8] sm:$0xf]
        %v4489 = vld [vmem:[%s8 + $0x4ec] sm:$0xff]
        %v4490 = vld [vmem:[%s8 + $0x4f4] sm:$0xff]
        %v4491 = vld [vmem:[%s8 + $0x4fc] sm:$0xf]
        %v4492 = vld [vmem:[%s8 + $0x500] sm:$0xff]
        %v4493 = vld [vmem:[%s8 + $0x508] sm:$0xff]
        %v4494 = vld [vmem:[%s8 + $0x510] sm:$0xf]
        %v4495 = vld [vmem:[%s8 + $0x514] sm:$0xff]
        %v4496 = vld [vmem:[%s8 + $0x51c] sm:$0xff]
        %v4497 = vld [vmem:[%s8 + $0x524] sm:$0xf]
        %v4498 = vld [vmem:[%s8 + $0x528] sm:$0xff]
        %v4499 = vld [vmem:[%s8 + $0x530] sm:$0xff]
        %v4500 = vld [vmem:[%s8 + $0x538] sm:$0xf]
        %v4501 = vld [vmem:[%s8 + $0x53c] sm:$0xff]
        %v4502 = vld [vmem:[%s8 + $0x544] sm:$0xff]
        %v4503 = vld [vmem:[%s8 + $0x54c] sm:$0xf]
        %v4504 = vld [vmem:[%s8 + $0x550] sm:$0xff]
        %v4505 = vld [vmem:[%s8 + $0x558] sm:$0xff]
        %v4506 = vld [vmem:[%s8 + $0x560] sm:$0xf]
        %v4507 = vld [vmem:[%s8 + $0x564] sm:$0xff]
        %v4508 = vld [vmem:[%s8 + $0x56c] sm:$0xff]
        %v4509 = vld [vmem:[%s8 + $0x574] sm:$0xf]
        %v4510 = vld [vmem:[%s8 + $0x578] sm:$0xff]
        %v4511 = vld [vmem:[%s8 + $0x580] sm:$0xff]
        %v4512 = vld [vmem:[%s8 + $0x588] sm:$0xf]
        %v4513 = vld [vmem:[%s8 + $0x58c] sm:$0xff]
        %v4514 = vld [vmem:[%s8 + $0x594] sm:$0xff]
        %v4515 = vld [vmem:[%s8 + $0x59c] sm:$0xf]
        %v4516 = vld [vmem:[#allocation6] sm:$0x1f]
        %v4733 = vunpack.c.l.b16 %v4300
        %v4734 = vunpack.c.h.b16 %v4300
        %v4735 = vunpack.c.l.b16 %v4301
        %v4736 = vunpack.c.h.b16 %v4301
        %v4737 = vunpack.c.l.b16 %v4302
        %v4738 = vunpack.c.l.b16 %v4303
        %v4739 = vunpack.c.h.b16 %v4303
        %v4740 = vunpack.c.l.b16 %v4304
        %v4741 = vunpack.c.h.b16 %v4304
        %v4742 = vunpack.c.l.b16 %v4305
        %v4743 = vunpack.c.l.b16 %v4306
        %v4744 = vunpack.c.h.b16 %v4306
        %v4745 = vunpack.c.l.b16 %v4307
        %v4746 = vunpack.c.h.b16 %v4307
        %v4747 = vunpack.c.l.b16 %v4308
        %v4748 = vunpack.c.l.b16 %v4309
        %v4749 = vunpack.c.h.b16 %v4309
        %v4750 = vunpack.c.l.b16 %v4310
        %v4751 = vunpack.c.h.b16 %v4310
        %v4752 = vunpack.c.l.b16 %v4311
        %v4753 = vunpack.c.l.b16 %v4312
        %v4754 = vunpack.c.h.b16 %v4312
        %v4755 = vunpack.c.l.b16 %v4313
        %v4756 = vunpack.c.h.b16 %v4313
        %v4757 = vunpack.c.l.b16 %v4314
        %v4758 = vunpack.c.l.b16 %v4315
        %v4759 = vunpack.c.h.b16 %v4315
        %v4760 = vunpack.c.l.b16 %v4316
        %v4761 = vunpack.c.h.b16 %v4316
        %v4762 = vunpack.c.l.b16 %v4317
        %v4763 = vunpack.c.l.b16 %v4318
        %v4764 = vunpack.c.h.b16 %v4318
        %v4765 = vunpack.c.l.b16 %v4319
        %v4766 = vunpack.c.h.b16 %v4319
        %v4767 = vunpack.c.l.b16 %v4320
        %v4768 = vunpack.c.l.b16 %v4321
        %v4769 = vunpack.c.h.b16 %v4321
        %v4770 = vunpack.c.l.b16 %v4322
        %v4771 = vunpack.c.h.b16 %v4322
        %v4772 = vunpack.c.l.b16 %v4323
        %v4773 = vunpack.c.l.b16 %v4324
        %v4774 = vunpack.c.h.b16 %v4324
        %v4775 = vunpack.c.l.b16 %v4325
        %v4776 = vunpack.c.h.b16 %v4325
        %v4777 = vunpack.c.l.b16 %v4326
        %v4778 = vunpack.c.l.b16 %v4327
        %v4779 = vunpack.c.h.b16 %v4327
        %v4780 = vunpack.c.l.b16 %v4328
        %v4781 = vunpack.c.h.b16 %v4328
        %v4782 = vunpack.c.l.b16 %v4329
        %v4783 = vunpack.c.l.b16 %v4330
        %v4784 = vunpack.c.h.b16 %v4330
        %v4785 = vunpack.c.l.b16 %v4331
        %v4786 = vunpack.c.h.b16 %v4331
        %v4787 = vunpack.c.l.b16 %v4332
        %v4788 = vunpack.c.l.b16 %v4333
        %v4789 = vunpack.c.h.b16 %v4333
        %v4790 = vunpack.c.l.b16 %v4334
        %v4791 = vunpack.c.h.b16 %v4334
        %v4792 = vunpack.c.l.b16 %v4335
        %v4793 = vunpack.c.l.b16 %v4336
        %v4794 = vunpack.c.h.b16 %v4336
        %v4795 = vunpack.c.l.b16 %v4337
        %v4796 = vunpack.c.h.b16 %v4337
        %v4797 = vunpack.c.l.b16 %v4338
        %v4798 = vunpack.c.l.b16 %v4339
        %v4799 = vunpack.c.h.b16 %v4339
        %v4800 = vunpack.c.l.b16 %v4340
        %v4801 = vunpack.c.h.b16 %v4340
        %v4802 = vunpack.c.l.b16 %v4341
        %v4803 = vunpack.c.l.b16 %v4342
        %v4804 = vunpack.c.h.b16 %v4342
        %v4805 = vunpack.c.l.b16 %v4343
        %v4806 = vunpack.c.h.b16 %v4343
        %v4807 = vunpack.c.l.b16 %v4344
        %v4808 = vunpack.c.l.b16 %v4345
        %v4809 = vunpack.c.h.b16 %v4345
        %v4810 = vunpack.c.l.b16 %v4346
        %v4811 = vunpack.c.h.b16 %v4346
        %v4812 = vunpack.c.l.b16 %v4347
        %v4813 = vunpack.c.l.b16 %v4348
        %v4814 = vunpack.c.h.b16 %v4348
        %v4815 = vunpack.c.l.b16 %v4349
        %v4816 = vunpack.c.h.b16 %v4349
        %v4817 = vunpack.c.l.b16 %v4350
        %v4818 = vunpack.c.l.b16 %v4351
        %v4819 = vunpack.c.h.b16 %v4351
        %v4820 = vunpack.c.l.b16 %v4352
        %v4821 = vunpack.c.h.b16 %v4352
        %v4822 = vunpack.c.l.b16 %v4353
        %v4823 = vunpack.c.l.b16 %v4354
        %v4824 = vunpack.c.h.b16 %v4354
        %v4825 = vunpack.c.l.b16 %v4355
        %v4826 = vunpack.c.h.b16 %v4355
        %v4827 = vunpack.c.l.b16 %v4356
        %v4828 = vunpack.c.l.b16 %v4357
        %v4829 = vunpack.c.h.b16 %v4357
        %v4830 = vunpack.c.l.b16 %v4358
        %v4831 = vunpack.c.h.b16 %v4358
        %v4832 = vunpack.c.l.b16 %v4359
        %v4833 = vunpack.c.l.b16 %v4360
        %v4834 = vunpack.c.h.b16 %v4360
        %v4835 = vunpack.c.l.b16 %v4361
        %v4836 = vunpack.c.h.b16 %v4361
        %v4837 = vunpack.c.l.b16 %v4362
        %v4838 = vunpack.c.l.b16 %v4363
        %v4839 = vunpack.c.h.b16 %v4363
        %v4840 = vunpack.c.l.b16 %v4364
        %v4841 = vunpack.c.h.b16 %v4364
        %v4842 = vunpack.c.l.b16 %v4365
        %v4843 = vunpack.c.l.b16 %v4366
        %v4844 = vunpack.c.h.b16 %v4366
        %v4845 = vunpack.c.l.b16 %v4367
        %v4846 = vunpack.c.h.b16 %v4367
        %v4847 = vunpack.c.l.b16 %v4368
        %v4848 = vunpack.c.l.b16 %v4369
        %v4849 = vunpack.c.h.b16 %v4369
        %v4850 = vunpack.c.l.b16 %v4370
        %v4851 = vunpack.c.h.b16 %v4370
        %v4852 = vunpack.c.l.b16 %v4371
        %v4853 = vunpack.c.l.b16 %v4372
        %v4854 = vunpack.c.h.b16 %v4372
        %v4855 = vunpack.c.l.b16 %v4373
        %v4856 = vunpack.c.h.b16 %v4373
        %v4857 = vunpack.c.l.b16 %v4374
        %v4858 = vunpack.c.l.b16 %v4375
        %v4859 = vunpack.c.h.b16 %v4375
        %v4860 = vunpack.c.l.b16 %v4376
        %v4861 = vunpack.c.h.b16 %v4376
        %v4862 = vunpack.c.l.b16 %v4377
        %v4863 = vunpack.c.l.b16 %v4378
        %v4864 = vunpack.c.h.b16 %v4378
        %v4865 = vunpack.c.l.b16 %v4379
        %v4866 = vunpack.c.h.b16 %v4379
        %v4867 = vunpack.c.l.b16 %v4380
        %v4868 = vunpack.c.l.b16 %v4381
        %v4869 = vunpack.c.h.b16 %v4381
        %v4870 = vunpack.c.l.b16 %v4382
        %v4871 = vunpack.c.h.b16 %v4382
        %v4872 = vunpack.c.l.b16 %v4383
        %v4873 = vunpack.c.l.b16 %v4384
        %v4874 = vunpack.c.h.b16 %v4384
        %v4875 = vunpack.c.l.b16 %v4385
        %v4876 = vunpack.c.h.b16 %v4385
        %v4877 = vunpack.c.l.b16 %v4386
        %v4878 = vunpack.c.l.b16 %v4387
        %v4879 = vunpack.c.h.b16 %v4387
        %v4880 = vunpack.c.l.b16 %v4388
        %v4881 = vunpack.c.h.b16 %v4388
        %v4882 = vunpack.c.l.b16 %v4389
        %v4883 = vunpack.c.l.b16 %v4390
        %v4884 = vunpack.c.h.b16 %v4390
        %v4885 = vunpack.c.l.b16 %v4391
        %v4886 = vunpack.c.h.b16 %v4391
        %v4887 = vunpack.c.l.b16 %v4392
        %v4888 = vunpack.c.l.b16 %v4393
        %v4889 = vunpack.c.h.b16 %v4393
        %v4890 = vunpack.c.l.b16 %v4394
        %v4891 = vunpack.c.h.b16 %v4394
        %v4892 = vunpack.c.l.b16 %v4395
        %v4893 = vunpack.c.l.b16 %v4396
        %v4894 = vunpack.c.h.b16 %v4396
        %v4895 = vunpack.c.l.b16 %v4397
        %v4896 = vunpack.c.h.b16 %v4397
        %v4897 = vunpack.c.l.b16 %v4398
        %v4898 = vunpack.c.l.b16 %v4399
        %v4899 = vunpack.c.h.b16 %v4399
        %v4900 = vunpack.c.l.b16 %v4400
        %v4901 = vunpack.c.h.b16 %v4400
        %v4902 = vunpack.c.l.b16 %v4401
        %v4903 = vunpack.c.l.b16 %v4402
        %v4904 = vunpack.c.h.b16 %v4402
        %v4905 = vunpack.c.l.b16 %v4403
        %v4906 = vunpack.c.h.b16 %v4403
        %v4907 = vunpack.c.l.b16 %v4404
        %v4908 = vunpack.c.l.b16 %v4405
        %v4909 = vunpack.c.h.b16 %v4405
        %v4910 = vunpack.c.l.b16 %v4406
        %v4911 = vunpack.c.h.b16 %v4406
        %v4912 = vunpack.c.l.b16 %v4407
        %v4913 = vunpack.c.l.b16 %v4408
        %v4914 = vunpack.c.h.b16 %v4408
        %v4915 = vunpack.c.l.b16 %v4409
        %v4916 = vunpack.c.h.b16 %v4409
        %v4917 = vunpack.c.l.b16 %v4410
        %v4918 = vunpack.c.l.b16 %v4411
        %v4919 = vunpack.c.h.b16 %v4411
        %v4920 = vunpack.c.l.b16 %v4412
        %v4921 = vunpack.c.h.b16 %v4412
        %v4922 = vunpack.c.l.b16 %v4413
        %v4923 = vunpack.c.l.b16 %v4414
        %v4924 = vunpack.c.h.b16 %v4414
        %v4925 = vunpack.c.l.b16 %v4415
        %v4926 = vunpack.c.h.b16 %v4415
        %v4927 = vunpack.c.l.b16 %v4416
        %v4928 = vunpack.c.l.b16 %v4417
        %v4929 = vunpack.c.h.b16 %v4417
        %v4930 = vunpack.c.l.b16 %v4418
        %v4931 = vunpack.c.h.b16 %v4418
        %v4932 = vunpack.c.l.b16 %v4419
        %v4933 = vunpack.c.l.b16 %v4420
        %v4934 = vunpack.c.h.b16 %v4420
        %v4935 = vunpack.c.l.b16 %v4421
        %v4936 = vunpack.c.h.b16 %v4421
        %v4937 = vunpack.c.l.b16 %v4422
        %v4938 = vunpack.c.l.b16 %v4423
        %v4939 = vunpack.c.h.b16 %v4423
        %v4940 = vunpack.c.l.b16 %v4424
        %v4941 = vunpack.c.h.b16 %v4424
        %v4942 = vunpack.c.l.b16 %v4425
        %v4943 = vunpack.c.l.b16 %v4426
        %v4944 = vunpack.c.h.b16 %v4426
        %v4945 = vunpack.c.l.b16 %v4427
        %v4946 = vunpack.c.h.b16 %v4427
        %v4947 = vunpack.c.l.b16 %v4428
        %v4948 = vunpack.c.l.b16 %v4429
        %v4949 = vunpack.c.h.b16 %v4429
        %v4950 = vunpack.c.l.b16 %v4430
        %v4951 = vunpack.c.h.b16 %v4430
        %v4952 = vunpack.c.l.b16 %v4431
        %v4953 = vunpack.c.l.b16 %v4432
        %v4954 = vunpack.c.h.b16 %v4432
        %v4955 = vunpack.c.l.b16 %v4433
        %v4956 = vunpack.c.h.b16 %v4433
        %v4957 = vunpack.c.l.b16 %v4434
        %v4958 = vunpack.c.l.b16 %v4435
        %v4959 = vunpack.c.h.b16 %v4435
        %v4960 = vunpack.c.l.b16 %v4436
        %v4961 = vunpack.c.h.b16 %v4436
        %v4962 = vunpack.c.l.b16 %v4437
        %v4963 = vunpack.c.l.b16 %v4438
        %v4964 = vunpack.c.h.b16 %v4438
        %v4965 = vunpack.c.l.b16 %v4439
        %v4966 = vunpack.c.h.b16 %v4439
        %v4967 = vunpack.c.l.b16 %v4440
        %v4968 = vunpack.c.l.b16 %v4441
        %v4969 = vunpack.c.h.b16 %v4441
        %v4970 = vunpack.c.l.b16 %v4442
        %v4971 = vunpack.c.h.b16 %v4442
        %v4972 = vunpack.c.l.b16 %v4443
        %v4973 = vunpack.c.l.b16 %v4444
        %v4974 = vunpack.c.h.b16 %v4444
        %v4975 = vunpack.c.l.b16 %v4445
        %v4976 = vunpack.c.h.b16 %v4445
        %v4977 = vunpack.c.l.b16 %v4446
        %v4978 = vunpack.c.l.b16 %v4447
        %v4979 = vunpack.c.h.b16 %v4447
        %v4980 = vunpack.c.l.b16 %v4448
        %v4981 = vunpack.c.h.b16 %v4448
        %v4982 = vunpack.c.l.b16 %v4449
        %v4983 = vunpack.c.l.b16 %v4450
        %v4984 = vunpack.c.h.b16 %v4450
        %v4985 = vunpack.c.l.b16 %v4451
        %v4986 = vunpack.c.h.b16 %v4451
        %v4987 = vunpack.c.l.b16 %v4452
        %v4988 = vunpack.c.l.b16 %v4453
        %v4989 = vunpack.c.h.b16 %v4453
        %v4990 = vunpack.c.l.b16 %v4454
        %v4991 = vunpack.c.h.b16 %v4454
        %v4992 = vunpack.c.l.b16 %v4455
        %v4993 = vunpack.c.l.b16 %v4456
        %v4994 = vunpack.c.h.b16 %v4456
        %v4995 = vunpack.c.l.b16 %v4457
        %v4996 = vunpack.c.h.b16 %v4457
        %v4997 = vunpack.c.l.b16 %v4458
        %v4998 = vunpack.c.l.b16 %v4459
        %v4999 = vunpack.c.h.b16 %v4459
        %v5000 = vunpack.c.l.b16 %v4460
        %v5001 = vunpack.c.h.b16 %v4460
        %v5002 = vunpack.c.l.b16 %v4461
        %v5003 = vunpack.c.l.b16 %v4462
        %v5004 = vunpack.c.h.b16 %v4462
        %v5005 = vunpack.c.l.b16 %v4463
        %v5006 = vunpack.c.h.b16 %v4463
        %v5007 = vunpack.c.l.b16 %v4464
        %v5008 = vunpack.c.l.b16 %v4465
        %v5009 = vunpack.c.h.b16 %v4465
        %v5010 = vunpack.c.l.b16 %v4466
        %v5011 = vunpack.c.h.b16 %v4466
        %v5012 = vunpack.c.l.b16 %v4467
        %v5013 = vunpack.c.l.b16 %v4468
        %v5014 = vunpack.c.h.b16 %v4468
        %v5015 = vunpack.c.l.b16 %v4469
        %v5016 = vunpack.c.h.b16 %v4469
        %v5017 = vunpack.c.l.b16 %v4470
        %v5018 = vunpack.c.l.b16 %v4471
        %v5019 = vunpack.c.h.b16 %v4471
        %v5020 = vunpack.c.l.b16 %v4472
        %v5021 = vunpack.c.h.b16 %v4472
        %v5022 = vunpack.c.l.b16 %v4473
        %v5023 = vunpack.c.l.b16 %v4474
        %v5024 = vunpack.c.h.b16 %v4474
        %v5025 = vunpack.c.l.b16 %v4475
        %v5026 = vunpack.c.h.b16 %v4475
        %v5027 = vunpack.c.l.b16 %v4476
        %v5028 = vunpack.c.l.b16 %v4477
        %v5029 = vunpack.c.h.b16 %v4477
        %v5030 = vunpack.c.l.b16 %v4478
        %v5031 = vunpack.c.h.b16 %v4478
        %v5032 = vunpack.c.l.b16 %v4479
        %v5033 = vunpack.c.l.b16 %v4480
        %v5034 = vunpack.c.h.b16 %v4480
        %v5035 = vunpack.c.l.b16 %v4481
        %v5036 = vunpack.c.h.b16 %v4481
        %v5037 = vunpack.c.l.b16 %v4482
        %v5038 = vunpack.c.l.b16 %v4483
        %v5039 = vunpack.c.h.b16 %v4483
        %v5040 = vunpack.c.l.b16 %v4484
        %v5041 = vunpack.c.h.b16 %v4484
        %v5042 = vunpack.c.l.b16 %v4485
        %v5043 = vunpack.c.l.b16 %v4486
        %v5044 = vunpack.c.h.b16 %v4486
        %v5045 = vunpack.c.l.b16 %v4487
        %v5046 = vunpack.c.h.b16 %v4487
        %v5047 = vunpack.c.l.b16 %v4488
        %v5048 = vunpack.c.l.b16 %v4489
        %v5049 = vunpack.c.h.b16 %v4489
        %v5050 = vunpack.c.l.b16 %v4490
        %v5051 = vunpack.c.h.b16 %v4490
        %v5052 = vunpack.c.l.b16 %v4491
        %v5053 = vunpack.c.l.b16 %v4492
        %v5054 = vunpack.c.h.b16 %v4492
        %v5055 = vunpack.c.l.b16 %v4493
        %v5056 = vunpack.c.h.b16 %v4493
        %v5057 = vunpack.c.l.b16 %v4494
        %v5058 = vunpack.c.l.b16 %v4495
        %v5059 = vunpack.c.h.b16 %v4495
        %v5060 = vunpack.c.l.b16 %v4496
        %v5061 = vunpack.c.h.b16 %v4496
        %v5062 = vunpack.c.l.b16 %v4497
        %v5063 = vunpack.c.l.b16 %v4498
        %v5064 = vunpack.c.h.b16 %v4498
        %v5065 = vunpack.c.l.b16 %v4499
        %v5066 = vunpack.c.h.b16 %v4499
        %v5067 = vunpack.c.l.b16 %v4500
        %v5068 = vunpack.c.l.b16 %v4501
        %v5069 = vunpack.c.h.b16 %v4501
        %v5070 = vunpack.c.l.b16 %v4502
        %v5071 = vunpack.c.h.b16 %v4502
        %v5072 = vunpack.c.l.b16 %v4503
        %v5073 = vunpack.c.l.b16 %v4504
        %v5074 = vunpack.c.h.b16 %v4504
        %v5075 = vunpack.c.l.b16 %v4505
        %v5076 = vunpack.c.h.b16 %v4505
        %v5077 = vunpack.c.l.b16 %v4506
        %v5078 = vunpack.c.l.b16 %v4507
        %v5079 = vunpack.c.h.b16 %v4507
        %v5080 = vunpack.c.l.b16 %v4508
        %v5081 = vunpack.c.h.b16 %v4508
        %v5082 = vunpack.c.l.b16 %v4509
        %v5083 = vunpack.c.l.b16 %v4510
        %v5084 = vunpack.c.h.b16 %v4510
        %v5085 = vunpack.c.l.b16 %v4511
        %v5086 = vunpack.c.h.b16 %v4511
        %v5087 = vunpack.c.l.b16 %v4512
        %v5088 = vunpack.c.l.b16 %v4513
        %v5089 = vunpack.c.h.b16 %v4513
        %v5090 = vunpack.c.l.b16 %v4514
        %v5091 = vunpack.c.h.b16 %v4514
        %v5092 = vunpack.c.l.b16 %v4515
        %v5093 = vpack.c.b16 %v4738, %v4733
        %v5094 = vpack.c.b16 %v4739, %v4734
        %v5095 = vpack.c.b16 %v4740, %v4735
        %v5096 = vpack.c.b16 %v4741, %v4736
        %v5097 = vpack.c.b16 %v4742, %v4737
        %v5098 = vpack.c.b16 %v4748, %v4743
        %v5099 = vpack.c.b16 %v4749, %v4744
        %v5100 = vpack.c.b16 %v4750, %v4745
        %v5101 = vpack.c.b16 %v4751, %v4746
        %v5102 = vpack.c.b16 %v4752, %v4747
        %v5103 = vpack.c.b16 %v4758, %v4753
        %v5104 = vpack.c.b16 %v4759, %v4754
        %v5105 = vpack.c.b16 %v4760, %v4755
        %v5106 = vpack.c.b16 %v4761, %v4756
        %v5107 = vpack.c.b16 %v4762, %v4757
        %v5108 = vpack.c.b16 %v4768, %v4763
        %v5109 = vpack.c.b16 %v4769, %v4764
        %v5110 = vpack.c.b16 %v4770, %v4765
        %v5111 = vpack.c.b16 %v4771, %v4766
        %v5112 = vpack.c.b16 %v4772, %v4767
        %v5113 = vpack.c.b16 %v4778, %v4773
        %v5114 = vpack.c.b16 %v4779, %v4774
        %v5115 = vpack.c.b16 %v4780, %v4775
        %v5116 = vpack.c.b16 %v4781, %v4776
        %v5117 = vpack.c.b16 %v4782, %v4777
        %v5118 = vpack.c.b16 %v4788, %v4783
        %v5119 = vpack.c.b16 %v4789, %v4784
        %v5120 = vpack.c.b16 %v4790, %v4785
        %v5121 = vpack.c.b16 %v4791, %v4786
        %v5122 = vpack.c.b16 %v4792, %v4787
        %v5123 = vpack.c.b16 %v4798, %v4793
        %v5124 = vpack.c.b16 %v4799, %v4794
        %v5125 = vpack.c.b16 %v4800, %v4795
        %v5126 = vpack.c.b16 %v4801, %v4796
        %v5127 = vpack.c.b16 %v4802, %v4797
        %v5128 = vpack.c.b16 %v4808, %v4803
        %v5129 = vpack.c.b16 %v4809, %v4804
        %v5130 = vpack.c.b16 %v4810, %v4805
        %v5131 = vpack.c.b16 %v4811, %v4806
        %v5132 = vpack.c.b16 %v4812, %v4807
        %v5133 = vpack.c.b16 %v4818, %v4813
        %v5134 = vpack.c.b16 %v4819, %v4814
        %v5135 = vpack.c.b16 %v4820, %v4815
        %v5136 = vpack.c.b16 %v4821, %v4816
        %v5137 = vpack.c.b16 %v4822, %v4817
        %v5138 = vpack.c.b16 %v4828, %v4823
        %v5139 = vpack.c.b16 %v4829, %v4824
        %v5140 = vpack.c.b16 %v4830, %v4825
        %v5141 = vpack.c.b16 %v4831, %v4826
        %v5142 = vpack.c.b16 %v4832, %v4827
        %v5143 = vpack.c.b16 %v4838, %v4833
        %v5144 = vpack.c.b16 %v4839, %v4834
        %v5145 = vpack.c.b16 %v4840, %v4835
        %v5146 = vpack.c.b16 %v4841, %v4836
        %v5147 = vpack.c.b16 %v4842, %v4837
        %v5148 = vpack.c.b16 %v4848, %v4843
        %v5149 = vpack.c.b16 %v4849, %v4844
        %v5150 = vpack.c.b16 %v4850, %v4845
        %v5151 = vpack.c.b16 %v4851, %v4846
        %v5152 = vpack.c.b16 %v4852, %v4847
        %v5153 = vpack.c.b16 %v4858, %v4853
        %v5154 = vpack.c.b16 %v4859, %v4854
        %v5155 = vpack.c.b16 %v4860, %v4855
        %v5156 = vpack.c.b16 %v4861, %v4856
        %v5157 = vpack.c.b16 %v4862, %v4857
        %v5158 = vpack.c.b16 %v4868, %v4863
        %v5159 = vpack.c.b16 %v4869, %v4864
        %v5160 = vpack.c.b16 %v4870, %v4865
        %v5161 = vpack.c.b16 %v4871, %v4866
        %v5162 = vpack.c.b16 %v4872, %v4867
        %v5163 = vpack.c.b16 %v4878, %v4873
        %v5164 = vpack.c.b16 %v4879, %v4874
        %v5165 = vpack.c.b16 %v4880, %v4875
        %v5166 = vpack.c.b16 %v4881, %v4876
        %v5167 = vpack.c.b16 %v4882, %v4877
        %v5168 = vpack.c.b16 %v4888, %v4883
        %v5169 = vpack.c.b16 %v4889, %v4884
        %v5170 = vpack.c.b16 %v4890, %v4885
        %v5171 = vpack.c.b16 %v4891, %v4886
        %v5172 = vpack.c.b16 %v4892, %v4887
        %v5173 = vpack.c.b16 %v4898, %v4893
        %v5174 = vpack.c.b16 %v4899, %v4894
        %v5175 = vpack.c.b16 %v4900, %v4895
        %v5176 = vpack.c.b16 %v4901, %v4896
        %v5177 = vpack.c.b16 %v4902, %v4897
        %v5178 = vpack.c.b16 %v4908, %v4903
        %v5179 = vpack.c.b16 %v4909, %v4904
        %v5180 = vpack.c.b16 %v4910, %v4905
        %v5181 = vpack.c.b16 %v4911, %v4906
        %v5182 = vpack.c.b16 %v4912, %v4907
        %v5183 = vpack.c.b16 %v4918, %v4913
        %v5184 = vpack.c.b16 %v4919, %v4914
        %v5185 = vpack.c.b16 %v4920, %v4915
        %v5186 = vpack.c.b16 %v4921, %v4916
        %v5187 = vpack.c.b16 %v4922, %v4917
        %v5188 = vpack.c.b16 %v4928, %v4923
        %v5189 = vpack.c.b16 %v4929, %v4924
        %v5190 = vpack.c.b16 %v4930, %v4925
        %v5191 = vpack.c.b16 %v4931, %v4926
        %v5192 = vpack.c.b16 %v4932, %v4927
        %v5193 = vpack.c.b16 %v4938, %v4933
        %v5194 = vpack.c.b16 %v4939, %v4934
        %v5195 = vpack.c.b16 %v4940, %v4935
        %v5196 = vpack.c.b16 %v4941, %v4936
        %v5197 = vpack.c.b16 %v4942, %v4937
        %v5198 = vpack.c.b16 %v4948, %v4943
        %v5199 = vpack.c.b16 %v4949, %v4944
        %v5200 = vpack.c.b16 %v4950, %v4945
        %v5201 = vpack.c.b16 %v4951, %v4946
        %v5202 = vpack.c.b16 %v4952, %v4947
        %v5203 = vpack.c.b16 %v4958, %v4953
        %v5204 = vpack.c.b16 %v4959, %v4954
        %v5205 = vpack.c.b16 %v4960, %v4955
        %v5206 = vpack.c.b16 %v4961, %v4956
        %v5207 = vpack.c.b16 %v4962, %v4957
        %v5208 = vpack.c.b16 %v4968, %v4963
        %v5209 = vpack.c.b16 %v4969, %v4964
        %v5210 = vpack.c.b16 %v4970, %v4965
        %v5211 = vpack.c.b16 %v4971, %v4966
        %v5212 = vpack.c.b16 %v4972, %v4967
        %v5213 = vpack.c.b16 %v4978, %v4973
        %v5214 = vpack.c.b16 %v4979, %v4974
        %v5215 = vpack.c.b16 %v4980, %v4975
        %v5216 = vpack.c.b16 %v4981, %v4976
        %v5217 = vpack.c.b16 %v4982, %v4977
        %v5218 = vpack.c.b16 %v4988, %v4983
        %v5219 = vpack.c.b16 %v4989, %v4984
        %v5220 = vpack.c.b16 %v4990, %v4985
        %v5221 = vpack.c.b16 %v4991, %v4986
        %v5222 = vpack.c.b16 %v4992, %v4987
        %v5223 = vpack.c.b16 %v4998, %v4993
        %v5224 = vpack.c.b16 %v4999, %v4994
        %v5225 = vpack.c.b16 %v5000, %v4995
        %v5226 = vpack.c.b16 %v5001, %v4996
        %v5227 = vpack.c.b16 %v5002, %v4997
        %v5228 = vpack.c.b16 %v5008, %v5003
        %v5229 = vpack.c.b16 %v5009, %v5004
        %v5230 = vpack.c.b16 %v5010, %v5005
        %v5231 = vpack.c.b16 %v5011, %v5006
        %v5232 = vpack.c.b16 %v5012, %v5007
        %v5233 = vpack.c.b16 %v5018, %v5013
        %v5234 = vpack.c.b16 %v5019, %v5014
        %v5235 = vpack.c.b16 %v5020, %v5015
        %v5236 = vpack.c.b16 %v5021, %v5016
        %v5237 = vpack.c.b16 %v5022, %v5017
        %v5238 = vpack.c.b16 %v5028, %v5023
        %v5239 = vpack.c.b16 %v5029, %v5024
        %v5240 = vpack.c.b16 %v5030, %v5025
        %v5241 = vpack.c.b16 %v5031, %v5026
        %v5242 = vpack.c.b16 %v5032, %v5027
        %v5243 = vpack.c.b16 %v5038, %v5033
        %v5244 = vpack.c.b16 %v5039, %v5034
        %v5245 = vpack.c.b16 %v5040, %v5035
        %v5246 = vpack.c.b16 %v5041, %v5036
        %v5247 = vpack.c.b16 %v5042, %v5037
        %v5248 = vpack.c.b16 %v5048, %v5043
        %v5249 = vpack.c.b16 %v5049, %v5044
        %v5250 = vpack.c.b16 %v5050, %v5045
        %v5251 = vpack.c.b16 %v5051, %v5046
        %v5252 = vpack.c.b16 %v5052, %v5047
        %v5253 = vpack.c.b16 %v5058, %v5053
        %v5254 = vpack.c.b16 %v5059, %v5054
        %v5255 = vpack.c.b16 %v5060, %v5055
        %v5256 = vpack.c.b16 %v5061, %v5056
        %v5257 = vpack.c.b16 %v5062, %v5057
        %v5258 = vpack.c.b16 %v5068, %v5063
        %v5259 = vpack.c.b16 %v5069, %v5064
        %v5260 = vpack.c.b16 %v5070, %v5065
        %v5261 = vpack.c.b16 %v5071, %v5066
        %v5262 = vpack.c.b16 %v5072, %v5067
        %v5263 = vpack.c.b16 %v5078, %v5073
        %v5264 = vpack.c.b16 %v5079, %v5074
        %v5265 = vpack.c.b16 %v5080, %v5075
        %v5266 = vpack.c.b16 %v5081, %v5076
        %v5267 = vpack.c.b16 %v5082, %v5077
        %v5268 = vpack.c.b16 %v5088, %v5083
        %v5269 = vpack.c.b16 %v5089, %v5084
        %v5270 = vpack.c.b16 %v5090, %v5085
        %v5271 = vpack.c.b16 %v5091, %v5086
        %v5272 = vpack.c.b16 %v5092, %v5087
        %v5454 = vlaneseq
        %v5455 = vshrl.u32 %v5454, 7
        %v5456 = vsub.s32 0, %v5455
        %v5457 = vrot.slane %v4516, %v5456
        %v5458 = vlaneseq
        %v5459 = vshrl.u32 %v5458, 7
        %v5460 = vsub.s32 1, %v5459
        %v5461 = vrot.slane %v4516, %v5460
        %v5462 = vlaneseq
        %v5463 = vshrl.u32 %v5462, 7
        %v5464 = vsub.s32 2, %v5463
        %v5465 = vrot.slane %v4516, %v5464
        %v5466 = vlaneseq
        %v5467 = vshrl.u32 %v5466, 7
        %v5468 = vsub.s32 3, %v5467
        %v5469 = vrot.slane %v4516, %v5468
        %v5470 = vlaneseq
        %v5471 = vshrl.u32 %v5470, 7
        %v5472 = vsub.s32 4, %v5471
        %v5473 = vrot.slane %v4516, %v5472
        %v5480 = vsel %vm1178, %v4299, 0
        %5482 = vmatprep.subr.bf16.mxu0 %v5129
        %5483 = vmatpush1.bf16.msra.mxu0 %v5128
        %5484 = vmatprep.subr.bf16.mxu0 %v5124
        %5485 = vmatpush1.bf16.msra.mxu0 %v5123
        %5486 = vmatprep.subr.bf16.mxu0 %v5119
        %5487 = vmatpush1.bf16.msra.mxu0 %v5118
        %5488 = vmatprep.subr.bf16.mxu0 %v5114
        %5489 = vmatpush1.bf16.msra.mxu0 %v5113
        %5490 = vmatprep.subr.bf16.mxu0 %v5109
        %5491 = vmatpush1.bf16.msra.mxu0 %v5108
        %5492 = vmatprep.subr.bf16.mxu0 %v5104
        %5493 = vmatpush1.bf16.msra.mxu0 %v5103
        %5494 = vmatprep.subr.bf16.mxu0 %v5099
        %5495 = vmatpush1.bf16.msra.mxu0 %v5098
        %5496 = vmatprep.subr.bf16.mxu0 %v5094
        %5497 = vmatpush1.bf16.msra.mxu0 %v5093
        %5498 = vmatprep.subr.bf16.mxu0 %v5169
        %5499 = vmatpush2.bf16.msra.mxu0 %v5168
        %5500 = vmatprep.subr.bf16.mxu0 %v5164
        %5501 = vmatpush2.bf16.msra.mxu0 %v5163
        %5502 = vmatprep.subr.bf16.mxu0 %v5159
        %5503 = vmatpush2.bf16.msra.mxu0 %v5158
        %5504 = vmatprep.subr.bf16.mxu0 %v5154
        %5505 = vmatpush2.bf16.msra.mxu0 %v5153
        %5506 = vmatprep.subr.bf16.mxu0 %v5149
        %5507 = vmatpush2.bf16.msra.mxu0 %v5148
        %5508 = vmatprep.subr.bf16.mxu0 %v5144
        %5509 = vmatpush2.bf16.msra.mxu0 %v5143
        %5510 = vmatprep.subr.bf16.mxu0 %v5139
        %5511 = vmatpush2.bf16.msra.mxu0 %v5138
        %5512 = vmatprep.subr.bf16.mxu0 %v5134
        %5513 = vmatpush2.bf16.msra.mxu0 %v5133
        %5514 = vmatprep.mubr.bf16.mxu0 %v4296
        %5515 = vmatmul.mubr.bf16.gmra.mxu0 %v4295
        %v5516 = vpop.f32.mrf.mxu0
        %v5517 = vadd.f32 %v5457, %v5516
        %v5518 = vpop.f32.mrf.mxu0
        %v5519 = vadd.f32 %v5461, %v5518
        %v5520 = vpop.f32.mrf.mxu0
        %v5521 = vpop.f32.mrf.mxu0
        %5522 = vdwg.mxu0
        %5523 = vmatprep.subr.bf16.mxu0 %v5209
        %5524 = vmatpush1.bf16.msra.mxu0 %v5208
        %5525 = vmatprep.subr.bf16.mxu0 %v5204
        %5526 = vmatpush1.bf16.msra.mxu0 %v5203
        %5527 = vmatprep.subr.bf16.mxu0 %v5199
        %5528 = vmatpush1.bf16.msra.mxu0 %v5198
        %5529 = vmatprep.subr.bf16.mxu0 %v5194
        %5530 = vmatpush1.bf16.msra.mxu0 %v5193
        %5531 = vmatprep.subr.bf16.mxu0 %v5189
        %5532 = vmatpush1.bf16.msra.mxu0 %v5188
        %5533 = vmatprep.subr.bf16.mxu0 %v5184
        %5534 = vmatpush1.bf16.msra.mxu0 %v5183
        %5535 = vmatprep.subr.bf16.mxu0 %v5179
        %5536 = vmatpush1.bf16.msra.mxu0 %v5178
        %5537 = vmatprep.subr.bf16.mxu0 %v5174
        %5538 = vmatpush1.bf16.msra.mxu0 %v5173
        %5539 = vmatprep.subr.bf16.mxu0 %v5249
        %5540 = vmatpush2.bf16.msra.mxu0 %v5248
        %5541 = vmatprep.subr.bf16.mxu0 %v5244
        %5542 = vmatpush2.bf16.msra.mxu0 %v5243
        %5543 = vmatprep.subr.bf16.mxu0 %v5239
        %5544 = vmatpush2.bf16.msra.mxu0 %v5238
        %5545 = vmatprep.subr.bf16.mxu0 %v5234
        %5546 = vmatpush2.bf16.msra.mxu0 %v5233
        %5547 = vmatprep.subr.bf16.mxu0 %v5229
        %5548 = vmatpush2.bf16.msra.mxu0 %v5228
        %5549 = vmatprep.subr.bf16.mxu0 %v5224
        %5550 = vmatpush2.bf16.msra.mxu0 %v5223
        %5551 = vmatprep.subr.bf16.mxu0 %v5219
        %5552 = vmatpush2.bf16.msra.mxu0 %v5218
        %5553 = vmatprep.subr.bf16.mxu0 %v5214
        %5554 = vmatpush2.bf16.msra.mxu0 %v5213
        %5555 = vmatprep.mubr.bf16.mxu0 %v4298
        %5556 = vmatmul.mubr.bf16.gmra.mxu0 %v4297
        %v5557 = vpop.f32.mrf.mxu0
        %v5558 = vadd.f32 %v5517, %v5557
        %v5559 = vpop.f32.mrf.mxu0
        %v5560 = vadd.f32 %v5519, %v5559
        %v5561 = vpop.f32.mrf.mxu0
        %v5562 = vpop.f32.mrf.mxu0
        %5563 = vdwg.mxu0
        %5564 = vmatprep.subr.bf16.mxu0 0
        %5565 = vmatpush1.bf16.msra.mxu0 0
        %5566 = vmatprep.subr.bf16.mxu0 0
        %5567 = vmatpush1.bf16.msra.mxu0 0
        %5568 = vmatprep.subr.bf16.mxu0 0
        %5569 = vmatpush1.bf16.msra.mxu0 0
        %5570 = vmatprep.subr.bf16.mxu0 0
        %5571 = vmatpush1.bf16.msra.mxu0 0
        %5572 = vmatprep.subr.bf16.mxu0 %v5269
        %5573 = vmatpush1.bf16.msra.mxu0 %v5268
        %5574 = vmatprep.subr.bf16.mxu0 %v5264
        %5575 = vmatpush1.bf16.msra.mxu0 %v5263
        %5576 = vmatprep.subr.bf16.mxu0 %v5259
        %5577 = vmatpush1.bf16.msra.mxu0 %v5258
        %5578 = vmatprep.subr.bf16.mxu0 %v5254
        %5579 = vmatpush1.bf16.msra.mxu0 %v5253
        %5580 = vmatprep.subr.bf16.mxu0 0
        %5581 = vmatpush2.bf16.msra.mxu0 0
        %5582 = vmatprep.subr.bf16.mxu0 0
        %5583 = vmatpush2.bf16.msra.mxu0 0
        %5584 = vmatprep.subr.bf16.mxu0 0
        %5585 = vmatpush2.bf16.msra.mxu0 0
        %5586 = vmatprep.subr.bf16.mxu0 0
        %5587 = vmatpush2.bf16.msra.mxu0 0
        %5588 = vmatprep.subr.bf16.mxu0 0
        %5589 = vmatpush2.bf16.msra.mxu0 0
        %5590 = vmatprep.subr.bf16.mxu0 0
        %5591 = vmatpush2.bf16.msra.mxu0 0
        %5592 = vmatprep.subr.bf16.mxu0 0
        %5593 = vmatpush2.bf16.msra.mxu0 0
        %5594 = vmatprep.subr.bf16.mxu0 0
        %5595 = vmatpush2.bf16.msra.mxu0 0
        %5596 = vmatprep.mubr.bf16.mxu0 0
        %5597 = vmatmul.mubr.bf16.gmra.mxu0 %v5480
        %v5598 = vpop.f32.mrf.mxu0
        %v5599 = vadd.f32 %v5558, %v5598
        %v5600 = vpop.f32.mrf.mxu0
        %v5601 = vadd.f32 %v5560, %v5600
        %v5602 = vpop.f32.mrf.mxu0
        %v5603 = vpop.f32.mrf.mxu0
        %5604 = vdwg.mxu0
        %5605 = vmatprep.subr.bf16.mxu0 %v5131
        %5606 = vmatpush1.bf16.msra.mxu0 %v5130
        %5607 = vmatprep.subr.bf16.mxu0 %v5126
        %5608 = vmatpush1.bf16.msra.mxu0 %v5125
        %5609 = vmatprep.subr.bf16.mxu0 %v5121
        %5610 = vmatpush1.bf16.msra.mxu0 %v5120
        %5611 = vmatprep.subr.bf16.mxu0 %v5116
        %5612 = vmatpush1.bf16.msra.mxu0 %v5115
        %5613 = vmatprep.subr.bf16.mxu0 %v5111
        %5614 = vmatpush1.bf16.msra.mxu0 %v5110
        %5615 = vmatprep.subr.bf16.mxu0 %v5106
        %5616 = vmatpush1.bf16.msra.mxu0 %v5105
        %5617 = vmatprep.subr.bf16.mxu0 %v5101
        %5618 = vmatpush1.bf16.msra.mxu0 %v5100
        %5619 = vmatprep.subr.bf16.mxu0 %v5096
        %5620 = vmatpush1.bf16.msra.mxu0 %v5095
        %5621 = vmatprep.subr.bf16.mxu0 %v5171
        %5622 = vmatpush2.bf16.msra.mxu0 %v5170
        %5623 = vmatprep.subr.bf16.mxu0 %v5166
        %5624 = vmatpush2.bf16.msra.mxu0 %v5165
        %5625 = vmatprep.subr.bf16.mxu0 %v5161
        %5626 = vmatpush2.bf16.msra.mxu0 %v5160
        %5627 = vmatprep.subr.bf16.mxu0 %v5156
        %5628 = vmatpush2.bf16.msra.mxu0 %v5155
        %5629 = vmatprep.subr.bf16.mxu0 %v5151
        %5630 = vmatpush2.bf16.msra.mxu0 %v5150
        %5631 = vmatprep.subr.bf16.mxu0 %v5146
        %5632 = vmatpush2.bf16.msra.mxu0 %v5145
        %5633 = vmatprep.subr.bf16.mxu0 %v5141
        %5634 = vmatpush2.bf16.msra.mxu0 %v5140
        %5635 = vmatprep.subr.bf16.mxu0 %v5136
        %5636 = vmatpush2.bf16.msra.mxu0 %v5135
        %5637 = vmatprep.mubr.bf16.mxu0 %v4296
        %5638 = vmatmul.mubr.bf16.gmra.mxu0 %v4295
        %v5639 = vpop.f32.mrf.mxu0
        %v5640 = vadd.f32 %v5465, %v5639
        %v5641 = vpop.f32.mrf.mxu0
        %v5642 = vadd.f32 %v5469, %v5641
        %v5643 = vpop.f32.mrf.mxu0
        %v5644 = vpop.f32.mrf.mxu0
        %5645 = vdwg.mxu0
        %5646 = vmatprep.subr.bf16.mxu0 %v5211
        %5647 = vmatpush1.bf16.msra.mxu0 %v5210
        %5648 = vmatprep.subr.bf16.mxu0 %v5206
        %5649 = vmatpush1.bf16.msra.mxu0 %v5205
        %5650 = vmatprep.subr.bf16.mxu0 %v5201
        %5651 = vmatpush1.bf16.msra.mxu0 %v5200
        %5652 = vmatprep.subr.bf16.mxu0 %v5196
        %5653 = vmatpush1.bf16.msra.mxu0 %v5195
        %5654 = vmatprep.subr.bf16.mxu0 %v5191
        %5655 = vmatpush1.bf16.msra.mxu0 %v5190
        %5656 = vmatprep.subr.bf16.mxu0 %v5186
        %5657 = vmatpush1.bf16.msra.mxu0 %v5185
        %5658 = vmatprep.subr.bf16.mxu0 %v5181
        %5659 = vmatpush1.bf16.msra.mxu0 %v5180
        %5660 = vmatprep.subr.bf16.mxu0 %v5176
        %5661 = vmatpush1.bf16.msra.mxu0 %v5175
        %5662 = vmatprep.subr.bf16.mxu0 %v5251
        %5663 = vmatpush2.bf16.msra.mxu0 %v5250
        %5664 = vmatprep.subr.bf16.mxu0 %v5246
        %5665 = vmatpush2.bf16.msra.mxu0 %v5245
        %5666 = vmatprep.subr.bf16.mxu0 %v5241
        %5667 = vmatpush2.bf16.msra.mxu0 %v5240
        %5668 = vmatprep.subr.bf16.mxu0 %v5236
        %5669 = vmatpush2.bf16.msra.mxu0 %v5235
        %5670 = vmatprep.subr.bf16.mxu0 %v5231
        %5671 = vmatpush2.bf16.msra.mxu0 %v5230
        %5672 = vmatprep.subr.bf16.mxu0 %v5226
        %5673 = vmatpush2.bf16.msra.mxu0 %v5225
        %5674 = vmatprep.subr.bf16.mxu0 %v5221
        %5675 = vmatpush2.bf16.msra.mxu0 %v5220
        %5676 = vmatprep.subr.bf16.mxu0 %v5216
        %5677 = vmatpush2.bf16.msra.mxu0 %v5215
        %5678 = vmatprep.mubr.bf16.mxu0 %v4298
        %5679 = vmatmul.mubr.bf16.gmra.mxu0 %v4297
        %v5680 = vpop.f32.mrf.mxu0
        %v5681 = vadd.f32 %v5640, %v5680
        %v5682 = vpop.f32.mrf.mxu0
        %v5683 = vadd.f32 %v5642, %v5682
        %v5684 = vpop.f32.mrf.mxu0
        %v5685 = vpop.f32.mrf.mxu0
        %5686 = vdwg.mxu0
        %5687 = vmatprep.subr.bf16.mxu0 0
        %5688 = vmatpush1.bf16.msra.mxu0 0
        %5689 = vmatprep.subr.bf16.mxu0 0
        %5690 = vmatpush1.bf16.msra.mxu0 0
        %5691 = vmatprep.subr.bf16.mxu0 0
        %5692 = vmatpush1.bf16.msra.mxu0 0
        %5693 = vmatprep.subr.bf16.mxu0 0
        %5694 = vmatpush1.bf16.msra.mxu0 0
        %5695 = vmatprep.subr.bf16.mxu0 %v5271
        %5696 = vmatpush1.bf16.msra.mxu0 %v5270
        %5697 = vmatprep.subr.bf16.mxu0 %v5266
        %5698 = vmatpush1.bf16.msra.mxu0 %v5265
        %5699 = vmatprep.subr.bf16.mxu0 %v5261
        %5700 = vmatpush1.bf16.msra.mxu0 %v5260
        %5701 = vmatprep.subr.bf16.mxu0 %v5256
        %5702 = vmatpush1.bf16.msra.mxu0 %v5255
        %5703 = vmatprep.subr.bf16.mxu0 0
        %5704 = vmatpush2.bf16.msra.mxu0 0
        %5705 = vmatprep.subr.bf16.mxu0 0
        %5706 = vmatpush2.bf16.msra.mxu0 0
        %5707 = vmatprep.subr.bf16.mxu0 0
        %5708 = vmatpush2.bf16.msra.mxu0 0
        %5709 = vmatprep.subr.bf16.mxu0 0
        %5710 = vmatpush2.bf16.msra.mxu0 0
        %5711 = vmatprep.subr.bf16.mxu0 0
        %5712 = vmatpush2.bf16.msra.mxu0 0
        %5713 = vmatprep.subr.bf16.mxu0 0
        %5714 = vmatpush2.bf16.msra.mxu0 0
        %5715 = vmatprep.subr.bf16.mxu0 0
        %5716 = vmatpush2.bf16.msra.mxu0 0
        %5717 = vmatprep.subr.bf16.mxu0 0
        %5718 = vmatpush2.bf16.msra.mxu0 0
        %5719 = vmatprep.mubr.bf16.mxu0 0
        %5720 = vmatmul.mubr.bf16.gmra.mxu0 %v5480
        %v5721 = vpop.f32.mrf.mxu0
        %v5722 = vadd.f32 %v5681, %v5721
        %v5723 = vpop.f32.mrf.mxu0
        %v5724 = vadd.f32 %v5683, %v5723
        %v5725 = vpop.f32.mrf.mxu0
        %v5726 = vpop.f32.mrf.mxu0
        %5727 = vdwg.mxu0
        %5728 = vmatprep.subr.bf16.mxu0 0
        %5729 = vmatpush1.bf16.msra.mxu0 %v5132
        %5730 = vmatprep.subr.bf16.mxu0 0
        %5731 = vmatpush1.bf16.msra.mxu0 %v5127
        %5732 = vmatprep.subr.bf16.mxu0 0
        %5733 = vmatpush1.bf16.msra.mxu0 %v5122
        %5734 = vmatprep.subr.bf16.mxu0 0
        %5735 = vmatpush1.bf16.msra.mxu0 %v5117
        %5736 = vmatprep.subr.bf16.mxu0 0
        %5737 = vmatpush1.bf16.msra.mxu0 %v5112
        %5738 = vmatprep.subr.bf16.mxu0 0
        %5739 = vmatpush1.bf16.msra.mxu0 %v5107
        %5740 = vmatprep.subr.bf16.mxu0 0
        %5741 = vmatpush1.bf16.msra.mxu0 %v5102
        %5742 = vmatprep.subr.bf16.mxu0 0
        %5743 = vmatpush1.bf16.msra.mxu0 %v5097
        %5744 = vmatprep.subr.bf16.mxu0 0
        %5745 = vmatpush2.bf16.msra.mxu0 %v5172
        %5746 = vmatprep.subr.bf16.mxu0 0
        %5747 = vmatpush2.bf16.msra.mxu0 %v5167
        %5748 = vmatprep.subr.bf16.mxu0 0
        %5749 = vmatpush2.bf16.msra.mxu0 %v5162
        %5750 = vmatprep.subr.bf16.mxu0 0
        %5751 = vmatpush2.bf16.msra.mxu0 %v5157
        %5752 = vmatprep.subr.bf16.mxu0 0
        %5753 = vmatpush2.bf16.msra.mxu0 %v5152
        %5754 = vmatprep.subr.bf16.mxu0 0
        %5755 = vmatpush2.bf16.msra.mxu0 %v5147
        %5756 = vmatprep.subr.bf16.mxu0 0
        %5757 = vmatpush2.bf16.msra.mxu0 %v5142
        %5758 = vmatprep.subr.bf16.mxu0 0
        %5759 = vmatpush2.bf16.msra.mxu0 %v5137
        %5760 = vmatprep.mubr.bf16.mxu0 %v4296
        %5761 = vmatmul.mubr.bf16.gmra.mxu0 %v4295
        %v5762 = vpop.f32.mrf.mxu0
        %v5763 = vadd.f32 %v5473, %v5762
        %v5764 = vpop.f32.mrf.mxu0
        %v5765 = vpop.f32.mrf.mxu0
        %v5766 = vpop.f32.mrf.mxu0
        %5767 = vdwg.mxu0
        %5768 = vmatprep.subr.bf16.mxu0 0
        %5769 = vmatpush1.bf16.msra.mxu0 %v5212
        %5770 = vmatprep.subr.bf16.mxu0 0
        %5771 = vmatpush1.bf16.msra.mxu0 %v5207
        %5772 = vmatprep.subr.bf16.mxu0 0
        %5773 = vmatpush1.bf16.msra.mxu0 %v5202
        %5774 = vmatprep.subr.bf16.mxu0 0
        %5775 = vmatpush1.bf16.msra.mxu0 %v5197
        %5776 = vmatprep.subr.bf16.mxu0 0
        %5777 = vmatpush1.bf16.msra.mxu0 %v5192
        %5778 = vmatprep.subr.bf16.mxu0 0
        %5779 = vmatpush1.bf16.msra.mxu0 %v5187
        %5780 = vmatprep.subr.bf16.mxu0 0
        %5781 = vmatpush1.bf16.msra.mxu0 %v5182
        %5782 = vmatprep.subr.bf16.mxu0 0
        %5783 = vmatpush1.bf16.msra.mxu0 %v5177
        %5784 = vmatprep.subr.bf16.mxu0 0
        %5785 = vmatpush2.bf16.msra.mxu0 %v5252
        %5786 = vmatprep.subr.bf16.mxu0 0
        %5787 = vmatpush2.bf16.msra.mxu0 %v5247
        %5788 = vmatprep.subr.bf16.mxu0 0
        %5789 = vmatpush2.bf16.msra.mxu0 %v5242
        %5790 = vmatprep.subr.bf16.mxu0 0
        %5791 = vmatpush2.bf16.msra.mxu0 %v5237
        %5792 = vmatprep.subr.bf16.mxu0 0
        %5793 = vmatpush2.bf16.msra.mxu0 %v5232
        %5794 = vmatprep.subr.bf16.mxu0 0
        %5795 = vmatpush2.bf16.msra.mxu0 %v5227
        %5796 = vmatprep.subr.bf16.mxu0 0
        %5797 = vmatpush2.bf16.msra.mxu0 %v5222
        %5798 = vmatprep.subr.bf16.mxu0 0
        %5799 = vmatpush2.bf16.msra.mxu0 %v5217
        %5800 = vmatprep.mubr.bf16.mxu0 %v4298
        %5801 = vmatmul.mubr.bf16.gmra.mxu0 %v4297
        %v5802 = vpop.f32.mrf.mxu0
        %v5803 = vadd.f32 %v5763, %v5802
        %v5804 = vpop.f32.mrf.mxu0
        %v5805 = vpop.f32.mrf.mxu0
        %v5806 = vpop.f32.mrf.mxu0
        %5807 = vdwg.mxu0
        %5808 = vmatprep.subr.bf16.mxu0 0
        %5809 = vmatpush1.bf16.msra.mxu0 0
        %5810 = vmatprep.subr.bf16.mxu0 0
        %5811 = vmatpush1.bf16.msra.mxu0 0
        %5812 = vmatprep.subr.bf16.mxu0 0
        %5813 = vmatpush1.bf16.msra.mxu0 0
        %5814 = vmatprep.subr.bf16.mxu0 0
        %5815 = vmatpush1.bf16.msra.mxu0 0
        %5816 = vmatprep.subr.bf16.mxu0 0
        %5817 = vmatpush1.bf16.msra.mxu0 %v5272
        %5818 = vmatprep.subr.bf16.mxu0 0
        %5819 = vmatpush1.bf16.msra.mxu0 %v5267
        %5820 = vmatprep.subr.bf16.mxu0 0
        %5821 = vmatpush1.bf16.msra.mxu0 %v5262
        %5822 = vmatprep.subr.bf16.mxu0 0
        %5823 = vmatpush1.bf16.msra.mxu0 %v5257
        %5824 = vmatprep.subr.bf16.mxu0 0
        %5825 = vmatpush2.bf16.msra.mxu0 0
        %5826 = vmatprep.subr.bf16.mxu0 0
        %5827 = vmatpush2.bf16.msra.mxu0 0
        %5828 = vmatprep.subr.bf16.mxu0 0
        %5829 = vmatpush2.bf16.msra.mxu0 0
        %5830 = vmatprep.subr.bf16.mxu0 0
        %5831 = vmatpush2.bf16.msra.mxu0 0
        %5832 = vmatprep.subr.bf16.mxu0 0
        %5833 = vmatpush2.bf16.msra.mxu0 0
        %5834 = vmatprep.subr.bf16.mxu0 0
        %5835 = vmatpush2.bf16.msra.mxu0 0
        %5836 = vmatprep.subr.bf16.mxu0 0
        %5837 = vmatpush2.bf16.msra.mxu0 0
        %5838 = vmatprep.subr.bf16.mxu0 0
        %5839 = vmatpush2.bf16.msra.mxu0 0
        %5840 = vmatprep.mubr.bf16.mxu0 0
        %5841 = vmatmul.mubr.bf16.gmra.mxu0 %v5480
        %v5842 = vpop.f32.mrf.mxu0
        %v5843 = vadd.f32 %v5803, %v5842
        %v5844 = vpop.f32.mrf.mxu0
        %v5845 = vpop.f32.mrf.mxu0
        %v5846 = vpop.f32.mrf.mxu0
        %5847 = vdwg.mxu0
        %v5848 = vmax.f32 %v5599, 0.0
        %v5849 = vmax.f32 %v5601, 0.0
        %v5850 = vmax.f32 %v5722, 0.0
        %v5851 = vmax.f32 %v5724, 0.0
        %v5852 = vmax.f32 %v5843, 0.0
        %v5853 = vpack.c.bf16 %v5848, %v5848
        %v5854 = vpack.c.bf16 %v5849, %v5849
        %v5855 = vpack.c.bf16 %v5850, %v5850
        %v5856 = vpack.c.bf16 %v5851, %v5851
        %v5857 = vpack.c.bf16 %v5852, %v5852
        %v5858 = vld [vmem:[#allocation9] sm:$0xf]
        %v5859 = vld [vmem:[#allocation9 + $0x4] sm:$0xf]
        %v5860 = vld [vmem:[#allocation9 + $0x8] sm:$0xf]
        %v5861 = vld [vmem:[#allocation9 + $0xc] sm:$0xf]
        %v5862 = vld [vmem:[#allocation9 + $0x10] sm:$0xf]
        %v5863 = vld [vmem:[#allocation9 + $0x14] sm:$0xf]
        %v5864 = vld [vmem:[#allocation9 + $0x18] sm:$0xf]
        %v5865 = vld [vmem:[#allocation9 + $0x1c] sm:$0xf]
        %v5866 = vld [vmem:[#allocation9 + $0x20] sm:$0xf]
        %v5867 = vld [vmem:[#allocation9 + $0x24] sm:$0xf]
        %v5868 = vld [vmem:[#allocation9 + $0x28] sm:$0xf]
        %v5869 = vld [vmem:[#allocation9 + $0x2c] sm:$0xf]
        %v5870 = vld [vmem:[#allocation9 + $0x30] sm:$0xf]
        %v5871 = vld [vmem:[#allocation9 + $0x34] sm:$0xf]
        %v5872 = vld [vmem:[#allocation9 + $0x38] sm:$0xf]
        %v5873 = vld [vmem:[#allocation9 + $0x3c] sm:$0xf]
        %v5874 = vld [vmem:[#allocation9 + $0x40] sm:$0xf]
        %v5875 = vld [vmem:[#allocation9 + $0x44] sm:$0xf]
        %v5876 = vld [vmem:[#allocation9 + $0x48] sm:$0xf]
        %v5877 = vld [vmem:[#allocation9 + $0x4c] sm:$0xf]
        %v5878 = vld [vmem:[#allocation9 + $0x50] sm:$0xf]
        %v5879 = vld [vmem:[#allocation9 + $0x54] sm:$0xf]
        %v5880 = vld [vmem:[#allocation9 + $0x58] sm:$0xf]
        %v5881 = vld [vmem:[#allocation9 + $0x5c] sm:$0xf]
        %v5882 = vld [vmem:[#allocation9 + $0x60] sm:$0xf]
        %v5883 = vld [vmem:[#allocation9 + $0x64] sm:$0xf]
        %v5884 = vld [vmem:[#allocation9 + $0x68] sm:$0xf]
        %v5885 = vld [vmem:[#allocation9 + $0x6c] sm:$0xf]
        %v5886 = vld [vmem:[#allocation9 + $0x70] sm:$0xf]
        %v5887 = vld [vmem:[#allocation9 + $0x74] sm:$0xf]
        %v5888 = vld [vmem:[#allocation9 + $0x78] sm:$0xf]
        %v5889 = vld [vmem:[#allocation9 + $0x7c] sm:$0xf]
        %v5890 = vld [vmem:[#allocation9 + $0x80] sm:$0xf]
        %v5891 = vld [vmem:[#allocation9 + $0x84] sm:$0xf]
        %v5892 = vld [vmem:[#allocation9 + $0x88] sm:$0xf]
        %v5893 = vld [vmem:[#allocation9 + $0x8c] sm:$0xf]
        %v5894 = vld [vmem:[#allocation9 + $0x90] sm:$0xf]
        %v5895 = vld [vmem:[#allocation9 + $0x94] sm:$0xf]
        %v5896 = vld [vmem:[#allocation9 + $0x98] sm:$0xf]
        %v5897 = vld [vmem:[#allocation9 + $0x9c] sm:$0xf]
        %v5898 = vld [vmem:[#allocation9 + $0xa0] sm:$0xf]
        %v5899 = vld [vmem:[#allocation9 + $0xa4] sm:$0xf]
        %v5900 = vld [vmem:[#allocation9 + $0xa8] sm:$0xf]
        %v5901 = vld [vmem:[#allocation9 + $0xac] sm:$0xf]
        %v5902 = vld [vmem:[#allocation9 + $0xb0] sm:$0xf]
        %v5903 = vld [vmem:[#allocation9 + $0xb4] sm:$0xf]
        %v5904 = vld [vmem:[#allocation9 + $0xb8] sm:$0xf]
        %v5905 = vld [vmem:[#allocation9 + $0xbc] sm:$0xf]
        %v5906 = vld [vmem:[#allocation9 + $0xc0] sm:$0xf]
        %v5907 = vld [vmem:[#allocation9 + $0xc4] sm:$0xf]
        %v5908 = vld [vmem:[#allocation9 + $0xc8] sm:$0xf]
        %v5909 = vld [vmem:[#allocation9 + $0xcc] sm:$0xf]
        %v5910 = vld [vmem:[#allocation9 + $0xd0] sm:$0xf]
        %v5911 = vld [vmem:[#allocation9 + $0xd4] sm:$0xf]
        %v5912 = vld [vmem:[#allocation9 + $0xd8] sm:$0xf]
        %v5913 = vld [vmem:[#allocation9 + $0xdc] sm:$0xf]
        %v5914 = vld [vmem:[#allocation9 + $0xe0] sm:$0xf]
        %v5915 = vld [vmem:[#allocation9 + $0xe4] sm:$0xf]
        %v5916 = vld [vmem:[#allocation9 + $0xe8] sm:$0xf]
        %v5917 = vld [vmem:[#allocation9 + $0xec] sm:$0xf]
        %v5918 = vld [vmem:[#allocation9 + $0xf0] sm:$0xf]
        %v5919 = vld [vmem:[#allocation9 + $0xf4] sm:$0xf]
        %v5920 = vld [vmem:[#allocation9 + $0xf8] sm:$0xf]
        %v5921 = vld [vmem:[#allocation9 + $0xfc] sm:$0xf]
        %v5922 = vld [vmem:[#allocation9 + $0x100] sm:$0xf]
        %v5923 = vld [vmem:[#allocation9 + $0x104] sm:$0xf]
        %v5924 = vld [vmem:[#allocation9 + $0x108] sm:$0xf]
        %v5925 = vld [vmem:[#allocation9 + $0x10c] sm:$0xf]
        %v5926 = vld [vmem:[#allocation9 + $0x110] sm:$0xf]
        %v5927 = vld [vmem:[#allocation9 + $0x114] sm:$0xf]
        %v5928 = vld [vmem:[#allocation9 + $0x118] sm:$0xf]
        %v5929 = vld [vmem:[#allocation9 + $0x11c] sm:$0xf]
        %v5930 = vld [vmem:[#allocation9 + $0x120] sm:$0xf]
        %v5931 = vld [vmem:[#allocation9 + $0x124] sm:$0xf]
        %v5932 = vld [vmem:[#allocation9 + $0x128] sm:$0xf]
        %v5933 = vld [vmem:[#allocation9 + $0x12c] sm:$0xf]
        %v5934 = vld [vmem:[#allocation9 + $0x130] sm:$0xf]
        %v5935 = vld [vmem:[#allocation9 + $0x134] sm:$0xf]
        %v5936 = vld [vmem:[#allocation9 + $0x138] sm:$0xf]
        %v5937 = vld [vmem:[#allocation9 + $0x13c] sm:$0xf]
        %v5938 = vld [vmem:[%s11] sm:$0x1]
        %v6019 = vunpack.c.l.b16 %v5858
        %v6020 = vunpack.c.l.b16 %v5859
        %v6021 = vunpack.c.l.b16 %v5860
        %v6022 = vunpack.c.l.b16 %v5861
        %v6023 = vunpack.c.l.b16 %v5862
        %v6024 = vunpack.c.l.b16 %v5863
        %v6025 = vunpack.c.l.b16 %v5864
        %v6026 = vunpack.c.l.b16 %v5865
        %v6027 = vunpack.c.l.b16 %v5866
        %v6028 = vunpack.c.l.b16 %v5867
        %v6029 = vunpack.c.l.b16 %v5868
        %v6030 = vunpack.c.l.b16 %v5869
        %v6031 = vunpack.c.l.b16 %v5870
        %v6032 = vunpack.c.l.b16 %v5871
        %v6033 = vunpack.c.l.b16 %v5872
        %v6034 = vunpack.c.l.b16 %v5873
        %v6035 = vunpack.c.l.b16 %v5874
        %v6036 = vunpack.c.l.b16 %v5875
        %v6037 = vunpack.c.l.b16 %v5876
        %v6038 = vunpack.c.l.b16 %v5877
        %v6039 = vunpack.c.l.b16 %v5878
        %v6040 = vunpack.c.l.b16 %v5879
        %v6041 = vunpack.c.l.b16 %v5880
        %v6042 = vunpack.c.l.b16 %v5881
        %v6043 = vunpack.c.l.b16 %v5882
        %v6044 = vunpack.c.l.b16 %v5883
        %v6045 = vunpack.c.l.b16 %v5884
        %v6046 = vunpack.c.l.b16 %v5885
        %v6047 = vunpack.c.l.b16 %v5886
        %v6048 = vunpack.c.l.b16 %v5887
        %v6049 = vunpack.c.l.b16 %v5888
        %v6050 = vunpack.c.l.b16 %v5889
        %v6051 = vunpack.c.l.b16 %v5890
        %v6052 = vunpack.c.l.b16 %v5891
        %v6053 = vunpack.c.l.b16 %v5892
        %v6054 = vunpack.c.l.b16 %v5893
        %v6055 = vunpack.c.l.b16 %v5894
        %v6056 = vunpack.c.l.b16 %v5895
        %v6057 = vunpack.c.l.b16 %v5896
        %v6058 = vunpack.c.l.b16 %v5897
        %v6059 = vunpack.c.l.b16 %v5898
        %v6060 = vunpack.c.l.b16 %v5899
        %v6061 = vunpack.c.l.b16 %v5900
        %v6062 = vunpack.c.l.b16 %v5901
        %v6063 = vunpack.c.l.b16 %v5902
        %v6064 = vunpack.c.l.b16 %v5903
        %v6065 = vunpack.c.l.b16 %v5904
        %v6066 = vunpack.c.l.b16 %v5905
        %v6067 = vunpack.c.l.b16 %v5906
        %v6068 = vunpack.c.l.b16 %v5907
        %v6069 = vunpack.c.l.b16 %v5908
        %v6070 = vunpack.c.l.b16 %v5909
        %v6071 = vunpack.c.l.b16 %v5910
        %v6072 = vunpack.c.l.b16 %v5911
        %v6073 = vunpack.c.l.b16 %v5912
        %v6074 = vunpack.c.l.b16 %v5913
        %v6075 = vunpack.c.l.b16 %v5914
        %v6076 = vunpack.c.l.b16 %v5915
        %v6077 = vunpack.c.l.b16 %v5916
        %v6078 = vunpack.c.l.b16 %v5917
        %v6079 = vunpack.c.l.b16 %v5918
        %v6080 = vunpack.c.l.b16 %v5919
        %v6081 = vunpack.c.l.b16 %v5920
        %v6082 = vunpack.c.l.b16 %v5921
        %v6083 = vunpack.c.l.b16 %v5922
        %v6084 = vunpack.c.l.b16 %v5923
        %v6085 = vunpack.c.l.b16 %v5924
        %v6086 = vunpack.c.l.b16 %v5925
        %v6087 = vunpack.c.l.b16 %v5926
        %v6088 = vunpack.c.l.b16 %v5927
        %v6089 = vunpack.c.l.b16 %v5928
        %v6090 = vunpack.c.l.b16 %v5929
        %v6091 = vunpack.c.l.b16 %v5930
        %v6092 = vunpack.c.l.b16 %v5931
        %v6093 = vunpack.c.l.b16 %v5932
        %v6094 = vunpack.c.l.b16 %v5933
        %v6095 = vunpack.c.l.b16 %v5934
        %v6096 = vunpack.c.l.b16 %v5935
        %v6097 = vunpack.c.l.b16 %v5936
        %v6098 = vunpack.c.l.b16 %v5937
        %v6099 = vpack.c.b16 %v6020, %v6019
        %v6100 = vpack.c.b16 %v6022, %v6021
        %v6101 = vpack.c.b16 %v6024, %v6023
        %v6102 = vpack.c.b16 %v6026, %v6025
        %v6103 = vpack.c.b16 %v6028, %v6027
        %v6104 = vpack.c.b16 %v6030, %v6029
        %v6105 = vpack.c.b16 %v6032, %v6031
        %v6106 = vpack.c.b16 %v6034, %v6033
        %v6107 = vpack.c.b16 %v6036, %v6035
        %v6108 = vpack.c.b16 %v6038, %v6037
        %v6109 = vpack.c.b16 %v6040, %v6039
        %v6110 = vpack.c.b16 %v6042, %v6041
        %v6111 = vpack.c.b16 %v6044, %v6043
        %v6112 = vpack.c.b16 %v6046, %v6045
        %v6113 = vpack.c.b16 %v6048, %v6047
        %v6114 = vpack.c.b16 %v6050, %v6049
        %v6115 = vpack.c.b16 %v6052, %v6051
        %v6116 = vpack.c.b16 %v6054, %v6053
        %v6117 = vpack.c.b16 %v6056, %v6055
        %v6118 = vpack.c.b16 %v6058, %v6057
        %v6119 = vpack.c.b16 %v6060, %v6059
        %v6120 = vpack.c.b16 %v6062, %v6061
        %v6121 = vpack.c.b16 %v6064, %v6063
        %v6122 = vpack.c.b16 %v6066, %v6065
        %v6123 = vpack.c.b16 %v6068, %v6067
        %v6124 = vpack.c.b16 %v6070, %v6069
        %v6125 = vpack.c.b16 %v6072, %v6071
        %v6126 = vpack.c.b16 %v6074, %v6073
        %v6127 = vpack.c.b16 %v6076, %v6075
        %v6128 = vpack.c.b16 %v6078, %v6077
        %v6129 = vpack.c.b16 %v6080, %v6079
        %v6130 = vpack.c.b16 %v6082, %v6081
        %v6131 = vpack.c.b16 %v6084, %v6083
        %v6132 = vpack.c.b16 %v6086, %v6085
        %v6133 = vpack.c.b16 %v6088, %v6087
        %v6134 = vpack.c.b16 %v6090, %v6089
        %v6135 = vpack.c.b16 %v6092, %v6091
        %v6136 = vpack.c.b16 %v6094, %v6093
        %v6137 = vpack.c.b16 %v6096, %v6095
        %v6138 = vpack.c.b16 %v6098, %v6097
        %6179 = vmatprep.subr.bf16.mxu0 0
        %6180 = vmatpush1.bf16.msra.mxu0 %v6106
        %6181 = vmatprep.subr.bf16.mxu0 0
        %6182 = vmatpush1.bf16.msra.mxu0 %v6105
        %6183 = vmatprep.subr.bf16.mxu0 0
        %6184 = vmatpush1.bf16.msra.mxu0 %v6104
        %6185 = vmatprep.subr.bf16.mxu0 0
        %6186 = vmatpush1.bf16.msra.mxu0 %v6103
        %6187 = vmatprep.subr.bf16.mxu0 0
        %6188 = vmatpush1.bf16.msra.mxu0 %v6102
        %6189 = vmatprep.subr.bf16.mxu0 0
        %6190 = vmatpush1.bf16.msra.mxu0 %v6101
        %6191 = vmatprep.subr.bf16.mxu0 0
        %6192 = vmatpush1.bf16.msra.mxu0 %v6100
        %6193 = vmatprep.subr.bf16.mxu0 0
        %6194 = vmatpush1.bf16.msra.mxu0 %v6099
        %6195 = vmatprep.subr.bf16.mxu0 0
        %6196 = vmatpush2.bf16.msra.mxu0 %v6114
        %6197 = vmatprep.subr.bf16.mxu0 0
        %6198 = vmatpush2.bf16.msra.mxu0 %v6113
        %6199 = vmatprep.subr.bf16.mxu0 0
        %6200 = vmatpush2.bf16.msra.mxu0 %v6112
        %6201 = vmatprep.subr.bf16.mxu0 0
        %6202 = vmatpush2.bf16.msra.mxu0 %v6111
        %6203 = vmatprep.subr.bf16.mxu0 0
        %6204 = vmatpush2.bf16.msra.mxu0 %v6110
        %6205 = vmatprep.subr.bf16.mxu0 0
        %6206 = vmatpush2.bf16.msra.mxu0 %v6109
        %6207 = vmatprep.subr.bf16.mxu0 0
        %6208 = vmatpush2.bf16.msra.mxu0 %v6108
        %6209 = vmatprep.subr.bf16.mxu0 0
        %6210 = vmatpush2.bf16.msra.mxu0 %v6107
        %6211 = vmatprep.mubr.bf16.mxu0 %v5854
        %6212 = vmatmul.mubr.bf16.gmra.mxu0 %v5853
        %v6213 = vpop.f32.mrf.mxu0
        %v6214 = vadd.f32 %v5938, %v6213
        %v6215 = vpop.f32.mrf.mxu0
        %v6216 = vpop.f32.mrf.mxu0
        %v6217 = vpop.f32.mrf.mxu0
        %6218 = vdwg.mxu0
        %6219 = vmatprep.subr.bf16.mxu0 0
        %6220 = vmatpush1.bf16.msra.mxu0 %v6122
        %6221 = vmatprep.subr.bf16.mxu0 0
        %6222 = vmatpush1.bf16.msra.mxu0 %v6121
        %6223 = vmatprep.subr.bf16.mxu0 0
        %6224 = vmatpush1.bf16.msra.mxu0 %v6120
        %6225 = vmatprep.subr.bf16.mxu0 0
        %6226 = vmatpush1.bf16.msra.mxu0 %v6119
        %6227 = vmatprep.subr.bf16.mxu0 0
        %6228 = vmatpush1.bf16.msra.mxu0 %v6118
        %6229 = vmatprep.subr.bf16.mxu0 0
        %6230 = vmatpush1.bf16.msra.mxu0 %v6117
        %6231 = vmatprep.subr.bf16.mxu0 0
        %6232 = vmatpush1.bf16.msra.mxu0 %v6116
        %6233 = vmatprep.subr.bf16.mxu0 0
        %6234 = vmatpush1.bf16.msra.mxu0 %v6115
        %6235 = vmatprep.subr.bf16.mxu0 0
        %6236 = vmatpush2.bf16.msra.mxu0 %v6130
        %6237 = vmatprep.subr.bf16.mxu0 0
        %6238 = vmatpush2.bf16.msra.mxu0 %v6129
        %6239 = vmatprep.subr.bf16.mxu0 0
        %6240 = vmatpush2.bf16.msra.mxu0 %v6128
        %6241 = vmatprep.subr.bf16.mxu0 0
        %6242 = vmatpush2.bf16.msra.mxu0 %v6127
        %6243 = vmatprep.subr.bf16.mxu0 0
        %6244 = vmatpush2.bf16.msra.mxu0 %v6126
        %6245 = vmatprep.subr.bf16.mxu0 0
        %6246 = vmatpush2.bf16.msra.mxu0 %v6125
        %6247 = vmatprep.subr.bf16.mxu0 0
        %6248 = vmatpush2.bf16.msra.mxu0 %v6124
        %6249 = vmatprep.subr.bf16.mxu0 0
        %6250 = vmatpush2.bf16.msra.mxu0 %v6123
        %6251 = vmatprep.mubr.bf16.mxu0 %v5856
        %6252 = vmatmul.mubr.bf16.gmra.mxu0 %v5855
        %v6253 = vpop.f32.mrf.mxu0
        %v6254 = vadd.f32 %v6214, %v6253
        %v6255 = vpop.f32.mrf.mxu0
        %v6256 = vpop.f32.mrf.mxu0
        %v6257 = vpop.f32.mrf.mxu0
        %6258 = vdwg.mxu0
        %6259 = vmatprep.subr.bf16.mxu0 0
        %6260 = vmatpush1.bf16.msra.mxu0 %v6138
        %6261 = vmatprep.subr.bf16.mxu0 0
        %6262 = vmatpush1.bf16.msra.mxu0 %v6137
        %6263 = vmatprep.subr.bf16.mxu0 0
        %6264 = vmatpush1.bf16.msra.mxu0 %v6136
        %6265 = vmatprep.subr.bf16.mxu0 0
        %6266 = vmatpush1.bf16.msra.mxu0 %v6135
        %6267 = vmatprep.subr.bf16.mxu0 0
        %6268 = vmatpush1.bf16.msra.mxu0 %v6134
        %6269 = vmatprep.subr.bf16.mxu0 0
        %6270 = vmatpush1.bf16.msra.mxu0 %v6133
        %6271 = vmatprep.subr.bf16.mxu0 0
        %6272 = vmatpush1.bf16.msra.mxu0 %v6132
        %6273 = vmatprep.subr.bf16.mxu0 0
        %6274 = vmatpush1.bf16.msra.mxu0 %v6131
        %6275 = vmatprep.subr.bf16.mxu0 0
        %6276 = vmatpush2.bf16.msra.mxu0 0
        %6277 = vmatprep.subr.bf16.mxu0 0
        %6278 = vmatpush2.bf16.msra.mxu0 0
        %6279 = vmatprep.subr.bf16.mxu0 0
        %6280 = vmatpush2.bf16.msra.mxu0 0
        %6281 = vmatprep.subr.bf16.mxu0 0
        %6282 = vmatpush2.bf16.msra.mxu0 0
        %6283 = vmatprep.subr.bf16.mxu0 0
        %6284 = vmatpush2.bf16.msra.mxu0 0
        %6285 = vmatprep.subr.bf16.mxu0 0
        %6286 = vmatpush2.bf16.msra.mxu0 0
        %6287 = vmatprep.subr.bf16.mxu0 0
        %6288 = vmatpush2.bf16.msra.mxu0 0
        %6289 = vmatprep.subr.bf16.mxu0 0
        %6290 = vmatpush2.bf16.msra.mxu0 0
        %6291 = vmatprep.mubr.bf16.mxu0 0
        %6292 = vmatmul.mubr.bf16.gmra.mxu0 %v5857
        %v6293 = vpop.f32.mrf.mxu0
        %v6294 = vadd.f32 %v6254, %v6293
        %v6295 = vpop.f32.mrf.mxu0
        %v6296 = vpop.f32.mrf.mxu0
        %v6297 = vpop.f32.mrf.mxu0
        %6298 = vdwg.mxu0
        %v6299 = vmax.f32 %v6294, 0.0
        %v6300 = vpack.c.bf16 %v6299, %v6299
        %v6301 = vld [vmem:[%s12] sm:$0xf]
        %v6302 = vld [vmem:[%s12 + $0x4] sm:$0xf]
        %v6303 = vld [vmem:[%s12 + $0x8] sm:$0xf]
        %v6304 = vld [vmem:[%s12 + $0xc] sm:$0xf]
        %v6305 = vld [vmem:[%s12 + $0x10] sm:$0xf]
        %v6306 = vld [vmem:[%s12 + $0x14] sm:$0xf]
        %v6307 = vld [vmem:[%s12 + $0x18] sm:$0xf]
        %v6308 = vld [vmem:[%s12 + $0x1c] sm:$0xf]
        %v6309 = vld [vmem:[%s12 + $0x20] sm:$0xf]
        %v6310 = vld [vmem:[%s12 + $0x24] sm:$0xf]
        %v6311 = vld [vmem:[%s12 + $0x28] sm:$0xf]
        %v6312 = vld [vmem:[%s12 + $0x2c] sm:$0xf]
        %v6313 = vld [vmem:[%s12 + $0x30] sm:$0xf]
        %v6314 = vld [vmem:[%s12 + $0x34] sm:$0xf]
        %v6315 = vld [vmem:[%s12 + $0x38] sm:$0xf]
        %v6316 = vld [vmem:[%s12 + $0x3c] sm:$0xf]
        %v6317 = vld [vmem:[%s13] sm:$0x1]
        %v6334 = vunpack.c.l.b16 %v6301
        %v6335 = vunpack.c.l.b16 %v6302
        %v6336 = vunpack.c.l.b16 %v6303
        %v6337 = vunpack.c.l.b16 %v6304
        %v6338 = vunpack.c.l.b16 %v6305
        %v6339 = vunpack.c.l.b16 %v6306
        %v6340 = vunpack.c.l.b16 %v6307
        %v6341 = vunpack.c.l.b16 %v6308
        %v6342 = vunpack.c.l.b16 %v6309
        %v6343 = vunpack.c.l.b16 %v6310
        %v6344 = vunpack.c.l.b16 %v6311
        %v6345 = vunpack.c.l.b16 %v6312
        %v6346 = vunpack.c.l.b16 %v6313
        %v6347 = vunpack.c.l.b16 %v6314
        %v6348 = vunpack.c.l.b16 %v6315
        %v6349 = vunpack.c.l.b16 %v6316
        %v6350 = vpack.c.b16 %v6335, %v6334
        %v6351 = vpack.c.b16 %v6337, %v6336
        %v6352 = vpack.c.b16 %v6339, %v6338
        %v6353 = vpack.c.b16 %v6341, %v6340
        %v6354 = vpack.c.b16 %v6343, %v6342
        %v6355 = vpack.c.b16 %v6345, %v6344
        %v6356 = vpack.c.b16 %v6347, %v6346
        %v6357 = vpack.c.b16 %v6349, %v6348
        %6366 = vmatprep.subr.bf16.mxu0 0
        %6367 = vmatpush1.bf16.msra.mxu0 %v6357
        %6368 = vmatprep.subr.bf16.mxu0 0
        %6369 = vmatpush1.bf16.msra.mxu0 %v6356
        %6370 = vmatprep.subr.bf16.mxu0 0
        %6371 = vmatpush1.bf16.msra.mxu0 %v6355
        %6372 = vmatprep.subr.bf16.mxu0 0
        %6373 = vmatpush1.bf16.msra.mxu0 %v6354
        %6374 = vmatprep.subr.bf16.mxu0 0
        %6375 = vmatpush1.bf16.msra.mxu0 %v6353
        %6376 = vmatprep.subr.bf16.mxu0 0
        %6377 = vmatpush1.bf16.msra.mxu0 %v6352
        %6378 = vmatprep.subr.bf16.mxu0 0
        %6379 = vmatpush1.bf16.msra.mxu0 %v6351
        %6380 = vmatprep.subr.bf16.mxu0 0
        %6381 = vmatpush1.bf16.msra.mxu0 %v6350
        %6382 = vmatprep.subr.bf16.mxu0 0
        %6383 = vmatpush2.bf16.msra.mxu0 0
        %6384 = vmatprep.subr.bf16.mxu0 0
        %6385 = vmatpush2.bf16.msra.mxu0 0
        %6386 = vmatprep.subr.bf16.mxu0 0
        %6387 = vmatpush2.bf16.msra.mxu0 0
        %6388 = vmatprep.subr.bf16.mxu0 0
        %6389 = vmatpush2.bf16.msra.mxu0 0
        %6390 = vmatprep.subr.bf16.mxu0 0
        %6391 = vmatpush2.bf16.msra.mxu0 0
        %6392 = vmatprep.subr.bf16.mxu0 0
        %6393 = vmatpush2.bf16.msra.mxu0 0
        %6394 = vmatprep.subr.bf16.mxu0 0
        %6395 = vmatpush2.bf16.msra.mxu0 0
        %6396 = vmatprep.subr.bf16.mxu0 0
        %6397 = vmatpush2.bf16.msra.mxu0 0
        %6398 = vmatprep.mubr.bf16.mxu0 0
        %6399 = vmatmul.mubr.bf16.gmra.mxu0 %v6300
        %v6400 = vpop.f32.mrf.mxu0
        %v6401 = vadd.f32 %v6317, %v6400
        %v6402 = vpop.f32.mrf.mxu0
        %v6403 = vpop.f32.mrf.mxu0
        %v6404 = vpop.f32.mrf.mxu0
        %6405 = vdwg.mxu0
        %v6406 = vlaneseq
        %v6407 = vand.u32 %v6406, 127
        %vm6408 = vcmp.lt.s32.totalorder %v6407, 10
        %v6409 = vsel %vm6408, %v6401, -1e+30
        %vm6410 = vcmask 1040384
        %v6411 = vsel %vm6410, %v6409, -inf
        %6412 = vmax.xlane.f32.xlu0 %v6411
        %v6413 = vpop.xlane.xlu0 %6412
        %v6414 = vsub.f32 %v6409, %v6413
        %v6415 = vmul.f32 %v6414, 1.442695
        %v6416 = vpow.pop %v6415
        %v6417 = vsel %vm6410, %v6416, 0.0
        %6418 = vadd.xlane.f32.xlu0 %v6417
        %v6419 = vpop.xlane.xlu0 %6418
        %v6420 = vlog2.pop %v6419
        %v6421 = vmul.f32 %v6420, 0.6931472
        %v6422 = vsub.f32 %v6414, %v6421
        %6423 = vst [vmem:[%s485] sm:$0x1] %v6422
        %s6424 = sand.u32 %s337, 1
        %s6425 = scalar_lea.sflag [#allocation8], %s6424
        %s6426 = sand.u32 %s337, 1
        %s6427 = scalar_lea.vmem [#allocation11], %s6426
        // Predicated region
        $region85: #{cnn_forward.1} parent=75 // pred_check
          %p6428 = pneg %p347
        $region86: #{cnn_forward.1} parent=75 // pred_check_branch
          %6430 = sbr.rel (%p6428) target = $region88
        $region87: #{cnn_forward.1} parent=75 // pred_region
          %s6432 = ssub.s32 16, 16
          %6433 = vsyncadd %s6425, %s6432
          %s6434 = smul.addr %s30, 16
          %s6435 = scalar_lea.hbm %s14, %s6434
          %s6437 = sshll.u32 %s6427, 4
          %s6438 = int_to_ptr.vmem [resolvable:$true] %s6437
          %6440 = dma.vmem_to_hbm [thread:$0]  %s6438, 16, %s6435, %s6425
        $region88: #{cnn_forward.1} parent=75 // pred_fallthru
          _
      $region76: #{cnn_forward.1} parent=5 // pred_fallthru
        _
      %p6441 = scmp.le.s32.totalorder 2, %s25
      // Predicated region
      $region89: #{cnn_forward.1} parent=5 // pred_check
        %p6442 = pneg %p6441
      $region90: #{cnn_forward.1} parent=5 // pred_check_branch
        %6444 = sbr.rel (%p6442) target = $region92
      $region91: #{cnn_forward.1} parent=5 // pred_region
        %s6445 = ssub.s32 %s25, 2
        // Predicated region
        $region93: #{cnn_forward.1} parent=91 // pred_check
          %p6446 = pneg %p353
        $region94: #{cnn_forward.1} parent=91 // pred_check_branch
          %6448 = sbr.rel (%p6446) target = $region96
        $region95: #{cnn_forward.1} parent=91 // pred_region
          %s6449 = sand.u32 %s338, 1
          %s6450 = scalar_lea.sflag [#allocation8], %s6449
          %s6451 = sand.u32 %s338, 1
          %s6452 = scalar_lea.vmem [#allocation11], %s6451
          %6453 = dma.done %s6450, 16
        $region96: #{cnn_forward.1} parent=91 // pred_fallthru
          _
      $region92: #{cnn_forward.1} parent=5 // pred_fallthru
        _
    $region6: #{cnn_forward.1} parent=1 // loop_footer
      %s29 = sadd.s32 1, %s25
    $region7: #{cnn_forward.1} parent=1 // loop_footer_branch
      %24 = sbr.rel target = $region3
    $region8: #{cnn_forward.1} parent=1 // loop_exit
      _
    %6454 = vsyncpa [#allocation7], 1
    %s6455 = scalar_lea.sflag [#allocation7], 1
    %6456 = vsyncpa %s6455, 1
    %6457 = vsyncpa [#allocation10], 1
    %6458 = vsyncpa [#allocation8], 1
    %s6459 = scalar_lea.sflag [#allocation8], 1
    %6460 = vsyncpa %s6459, 1

</llo_original>
